<compile_context>
chip_gen: v5e
topology: v5e:2x2
jax: 0.10.0
libtpu: 0.0.40
codegen_flags: <defaults>
</compile_context>

<pallas_src>
import jax
import jax.numpy as jnp
from jax.experimental import pallas as pl
from jax.experimental.pallas import tpu as pltpu


def ann_kernel(s_ref,                       # SMEM (scalar prefetch): 5 PReLU slopes + b8
               x_ref,                       # VMEM: (TB, IN) f32
               w0, b0, w1, b1, w2, b2,      # main_block   (weights bf16, biases f32)
               w3, b3, w4, b4,              # res_block_1
               w5, b5, w6, b6,              # res_block_2
               w7, b7, w8,                  # fc_block (w8 is a (1, hidden) bf16 row)
               o_ref):                      # VMEM: (TB, 1) f32
    # Hoist the SMEM scalar reads once per grid step.
    a0, a1, a2, a3, a4 = s_ref[0], s_ref[1], s_ref[2], s_ref[3], s_ref[4]
    b8 = s_ref[5]

    def prelu(y, a):
        return jnp.where(y > 0, y, a * y)

    def lin(h, w_ref, b_ref):
        # bf16 operands on the MXU, f32 accumulation, f32 bias add.
        y = jnp.dot(h.astype(jnp.bfloat16), w_ref[...],
                    preferred_element_type=jnp.float32)
        return y + b_ref[...]

    x = x_ref[...]

    # main_block: Linear -> PReLU -> Linear -> PReLU -> Linear
    h = prelu(lin(x, w0, b0), a0)
    h = prelu(lin(h, w1, b1), a1)
    xm = lin(h, w2, b2)                     # (TB, hidden//4)

    # res_block_1
    h = prelu(lin(xm, w3, b3), a2)
    x1 = lin(h, w4, b4)
    d1 = xm - x1                            # x - x_1

    # res_block_2
    h = prelu(lin(d1, w5, b5), a3)
    x2 = lin(h, w6, b6)
    d2 = d1 - x2                            # x - x_1 - x_2

    # fc_block: Linear -> PReLU -> Linear(hidden -> 1) as a lane reduction (XLU).
    h = prelu(lin(d2, w7, b7), a4)
    o_ref[...] = (jnp.sum(h * w8[...].astype(jnp.float32), axis=-1, keepdims=True)
                  + b8)


def ann_forward(x, params, *, tb=128):
    """x: (B, IN) float32.  params: dict from init_params() (f32 storage)."""
    B, IN = x.shape

    # Weight-byte reduction: bf16 weights (MXU-native), f32 biases.
    wk = ["w0", "w1", "w2", "w3", "w4", "w5", "w6", "w7", "w8"]
    bk = ["b0", "b1", "b2", "b3", "b4", "b5", "b6", "b7"]
    weights = {k: params[k].astype(jnp.bfloat16) for k in wk}
    biases = {k: params[k].astype(jnp.float32) for k in bk}

    # Scalar path (SMEM via scalar prefetch): 5 PReLU slopes + the final bias b8.
    scalars = jnp.concatenate(
        [params["prelu"].astype(jnp.float32),
         params["b8"].reshape(-1).astype(jnp.float32)])

    # Batch tiling: weights stay VMEM-resident (constant index_map); x / out
    # tiles are streamed and double-buffered by BlockSpec.
    TB = min(tb, B)
    n_tiles = pl.cdiv(B, TB)
    Bp = n_tiles * TB
    if Bp != B:
        x = jnp.pad(x, ((0, Bp - B), (0, 0)))

    def row_map(i, s):       # s = scalar-prefetch ref (unused)
        return (i, 0)

    def const_map(i, s):     # weights/biases: same block every grid step
        return (0, 0)

    vmem_args = [
        x,
        weights["w0"], biases["b0"], weights["w1"], biases["b1"],
        weights["w2"], biases["b2"],
        weights["w3"], biases["b3"], weights["w4"], biases["b4"],
        weights["w5"], biases["b5"], weights["w6"], biases["b6"],
        weights["w7"], biases["b7"], weights["w8"],
    ]

    in_specs = [pl.BlockSpec((TB, IN), row_map)]
    in_specs += [pl.BlockSpec(a.shape, const_map) for a in vmem_args[1:]]

    # Size the scoped VMEM limit from what is actually resident (2x for the
    # pipelining buffers plus activation headroom), capped at v7x's 64 MiB.
    param_bytes = sum(int(a.size) * a.dtype.itemsize for a in vmem_args)
    vmem_limit = int(min(64 * 1024 * 1024,
                         2 * param_bytes + 16 * 1024 * 1024))

    out = pl.pallas_call(
        ann_kernel,
        out_shape=jax.ShapeDtypeStruct((Bp, 1), jnp.float32),
        grid_spec=pltpu.PrefetchScalarGridSpec(
            num_scalar_prefetch=1,
            grid=(n_tiles,),
            in_specs=in_specs,
            out_specs=pl.BlockSpec((TB, 1), row_map),
        ),
        compiler_params=pltpu.CompilerParams(
            dimension_semantics=("parallel",),
            vmem_limit_bytes=vmem_limit),
    )(scalars, *vmem_args)
    return out[:B]


def init_params(key, input_dim, hidden):
    """Deterministic synthetic init mirroring the PyTorch module's shapes.
    Linear weights stored already transposed to (in, out), f32."""
    h4 = hidden // 4
    shapes = {
        # main_block
        "w0": (input_dim, hidden), "b0": (1, hidden),
        "w1": (hidden, hidden),    "b1": (1, hidden),
        "w2": (hidden, h4),        "b2": (1, h4),
        # res_block_1
        "w3": (h4, hidden),        "b3": (1, hidden),
        "w4": (hidden, h4),        "b4": (1, h4),
        # res_block_2
        "w5": (h4, hidden),        "b5": (1, hidden),
        "w6": (hidden, h4),        "b6": (1, h4),
        # fc_block (w8 kept as a (1, hidden) row for the lane reduction)
        "w7": (h4, hidden),        "b7": (1, hidden),
        "w8": (1, hidden),         "b8": (1, 1),
    }
    params = {}
    keys = jax.random.split(key, len(shapes))
    for k_rng, (name, shp) in zip(keys, shapes.items()):
        fan_in = shp[0] if name.startswith("w") else shp[-1]
        bound = 1.0 / jnp.sqrt(jnp.float32(max(fan_in, 1)))
        params[name] = jax.random.uniform(
            k_rng, shp, jnp.float32, minval=-bound, maxval=bound)
    # PReLU default init in PyTorch: single slope = 0.25 per PReLU (5 of them).
    params["prelu"] = jnp.full((5,), 0.25, dtype=jnp.float32)
    return params


def ann_reference(x, p):
    """Pure-JAX reference mirroring the kernel's bf16-weight / bf16-activation
    matmuls with f32 accumulation (so only MXU accumulation-order differs)."""
    def prelu(y, a):
        return jnp.where(y > 0, y, a * y)

    def lin(h, w, b):
        return jnp.dot(h.astype(jnp.bfloat16), w.astype(jnp.bfloat16),
                       preferred_element_type=jnp.float32) + b

    a = p["prelu"]
    h = prelu(lin(x, p["w0"], p["b0"]), a[0])
    h = prelu(lin(h, p["w1"], p["b1"]), a[1])
    xm = lin(h, p["w2"], p["b2"])
    h = prelu(lin(xm, p["w3"], p["b3"]), a[2])
    x1 = lin(h, p["w4"], p["b4"])
    d1 = xm - x1
    h = prelu(lin(d1, p["w5"], p["b5"]), a[3])
    x2 = lin(h, p["w6"], p["b6"])
    d2 = d1 - x2
    h = prelu(lin(d2, p["w7"], p["b7"]), a[4])
    w8 = p["w8"].astype(jnp.bfloat16).astype(jnp.float32)
    return jnp.sum(h * w8, axis=-1, keepdims=True) + p["b8"]


if __name__ == "__main__":
    # Small-shape stand-ins for the real (input=775, hidden=2048) module.
    B, INPUT, HIDDEN = 256, 128, 512
    key = jax.random.PRNGKey(0)
    k_x, k_p = jax.random.split(key)
    x = jax.random.normal(k_x, (B, INPUT), dtype=jnp.float32)
    params = init_params(k_p, INPUT, HIDDEN)

    out = ann_forward(x, params, tb=128)     # grid of 2 batch tiles
    out = jax.block_until_ready(out)

    ref = ann_reference(x, params)
    assert out.shape == (B, 1)
    assert jnp.allclose(out, ref, rtol=2e-2, atol=2e-2), (
        float(jnp.max(jnp.abs(out - ref))))

    print("KERNEL_OK")
</pallas_src>

<mosaic_0001>
module attributes {stable_mosaic.version = 11 : i64} {
  func.func @ann_kernel(%arg0: i32, %arg1: memref<6xf32, #tpu.memory_space<smem>>, %arg2: memref<128x128xf32, #tpu.memory_space<vmem>>, %arg3: memref<128x512xbf16, #tpu.memory_space<vmem>>, %arg4: memref<1x512xf32, #tpu.memory_space<vmem>>, %arg5: memref<512x512xbf16, #tpu.memory_space<vmem>>, %arg6: memref<1x512xf32, #tpu.memory_space<vmem>>, %arg7: memref<512x128xbf16, #tpu.memory_space<vmem>>, %arg8: memref<1x128xf32, #tpu.memory_space<vmem>>, %arg9: memref<128x512xbf16, #tpu.memory_space<vmem>>, %arg10: memref<1x512xf32, #tpu.memory_space<vmem>>, %arg11: memref<512x128xbf16, #tpu.memory_space<vmem>>, %arg12: memref<1x128xf32, #tpu.memory_space<vmem>>, %arg13: memref<128x512xbf16, #tpu.memory_space<vmem>>, %arg14: memref<1x512xf32, #tpu.memory_space<vmem>>, %arg15: memref<512x128xbf16, #tpu.memory_space<vmem>>, %arg16: memref<1x128xf32, #tpu.memory_space<vmem>>, %arg17: memref<128x512xbf16, #tpu.memory_space<vmem>>, %arg18: memref<1x512xf32, #tpu.memory_space<vmem>>, %arg19: memref<1x512xbf16, #tpu.memory_space<vmem>>, %arg20: memref<128x1xf32, #tpu.memory_space<vmem>>) attributes {dimension_semantics = [#tpu.dimension_semantics<parallel>], iteration_bounds = array<i64: 2>, scalar_prefetch = 1 : i64, scratch_operands = 0 : i64, tpu.core_type = #tpu.core_type<tc>, window_params = [{transform_indices = @transform_0, window_bounds = array<i64: 128, 128>}, {pipeline_mode = #tpu.pipeline_mode<synchronous>, transform_indices = @transform_1, window_bounds = array<i64: 128, 512>}, {pipeline_mode = #tpu.pipeline_mode<synchronous>, transform_indices = @transform_2, window_bounds = array<i64: 1, 512>}, {pipeline_mode = #tpu.pipeline_mode<synchronous>, transform_indices = @transform_3, window_bounds = array<i64: 512, 512>}, {pipeline_mode = #tpu.pipeline_mode<synchronous>, transform_indices = @transform_4, window_bounds = array<i64: 1, 512>}, {pipeline_mode = #tpu.pipeline_mode<synchronous>, transform_indices = @transform_5, window_bounds = array<i64: 512, 128>}, {pipeline_mode = #tpu.pipeline_mode<synchronous>, transform_indices = @transform_6, window_bounds = array<i64: 1, 128>}, {pipeline_mode = #tpu.pipeline_mode<synchronous>, transform_indices = @transform_7, window_bounds = array<i64: 128, 512>}, {pipeline_mode = #tpu.pipeline_mode<synchronous>, transform_indices = @transform_8, window_bounds = array<i64: 1, 512>}, {pipeline_mode = #tpu.pipeline_mode<synchronous>, transform_indices = @transform_9, window_bounds = array<i64: 512, 128>}, {pipeline_mode = #tpu.pipeline_mode<synchronous>, transform_indices = @transform_10, window_bounds = array<i64: 1, 128>}, {pipeline_mode = #tpu.pipeline_mode<synchronous>, transform_indices = @transform_11, window_bounds = array<i64: 128, 512>}, {pipeline_mode = #tpu.pipeline_mode<synchronous>, transform_indices = @transform_12, window_bounds = array<i64: 1, 512>}, {pipeline_mode = #tpu.pipeline_mode<synchronous>, transform_indices = @transform_13, window_bounds = array<i64: 512, 128>}, {pipeline_mode = #tpu.pipeline_mode<synchronous>, transform_indices = @transform_14, window_bounds = array<i64: 1, 128>}, {pipeline_mode = #tpu.pipeline_mode<synchronous>, transform_indices = @transform_15, window_bounds = array<i64: 128, 512>}, {pipeline_mode = #tpu.pipeline_mode<synchronous>, transform_indices = @transform_16, window_bounds = array<i64: 1, 512>}, {pipeline_mode = #tpu.pipeline_mode<synchronous>, transform_indices = @transform_17, window_bounds = array<i64: 1, 512>}, {transform_indices = @transform_18, window_bounds = array<i64: 128, 1>}]} {
    %c0 = arith.constant 0 : index
    %0 = memref.load %arg1[%c0] : memref<6xf32, #tpu.memory_space<smem>>
    %c1 = arith.constant 1 : index
    %1 = memref.load %arg1[%c1] : memref<6xf32, #tpu.memory_space<smem>>
    %c2 = arith.constant 2 : index
    %2 = memref.load %arg1[%c2] : memref<6xf32, #tpu.memory_space<smem>>
    %c3 = arith.constant 3 : index
    %3 = memref.load %arg1[%c3] : memref<6xf32, #tpu.memory_space<smem>>
    %c4 = arith.constant 4 : index
    %4 = memref.load %arg1[%c4] : memref<6xf32, #tpu.memory_space<smem>>
    %c5 = arith.constant 5 : index
    %5 = memref.load %arg1[%c5] : memref<6xf32, #tpu.memory_space<smem>>
    %c0_0 = arith.constant 0 : index
    %c0_1 = arith.constant 0 : index
    %6 = vector.load %arg2[%c0_0, %c0_1] : memref<128x128xf32, #tpu.memory_space<vmem>>, vector<128x128xf32>
    %7 = arith.truncf %6 : vector<128x128xf32> to vector<128x128xbf16>
    %c0_2 = arith.constant 0 : index
    %c0_3 = arith.constant 0 : index
    %8 = vector.load %arg3[%c0_2, %c0_3] : memref<128x512xbf16, #tpu.memory_space<vmem>>, vector<128x512xbf16>
    %cst = arith.constant dense<0.000000e+00> : vector<128x512xf32>
    %9 = tpu.matmul %7, %8, %cst {dimension_numbers = #tpu.dot_dimension_numbers<[1], [0], [0], [1], [0, 0, 1, 1], [], []>} : vector<128x128xbf16>, vector<128x512xbf16>, vector<128x512xf32> -> vector<128x512xf32>
    %c0_4 = arith.constant 0 : index
    %c0_5 = arith.constant 0 : index
    %10 = vector.load %arg4[%c0_4, %c0_5] : memref<1x512xf32, #tpu.memory_space<vmem>>, vector<1x512xf32>
    %11 = vector.broadcast %10 : vector<1x512xf32> to vector<128x512xf32>
    %12 = arith.addf %9, %11 : vector<128x512xf32>
    %cst_6 = arith.constant 0.000000e+00 : f32
    %13 = vector.broadcast %cst_6 : f32 to vector<128x512xf32>
    %14 = arith.cmpf ogt, %12, %13 : vector<128x512xf32>
    %15 = vector.broadcast %0 : f32 to vector<128x512xf32>
    %16 = arith.mulf %15, %12 : vector<128x512xf32>
    %17 = arith.select %14, %12, %16 : vector<128x512xi1>, vector<128x512xf32>
    %18 = arith.truncf %17 : vector<128x512xf32> to vector<128x512xbf16>
    %c0_7 = arith.constant 0 : index
    %c0_8 = arith.constant 0 : index
    %19 = vector.load %arg5[%c0_7, %c0_8] : memref<512x512xbf16, #tpu.memory_space<vmem>>, vector<512x512xbf16>
    %cst_9 = arith.constant dense<0.000000e+00> : vector<128x512xf32>
    %20 = tpu.matmul %18, %19, %cst_9 {dimension_numbers = #tpu.dot_dimension_numbers<[1], [0], [0], [1], [0, 0, 1, 1], [], []>} : vector<128x512xbf16>, vector<512x512xbf16>, vector<128x512xf32> -> vector<128x512xf32>
    %c0_10 = arith.constant 0 : index
    %c0_11 = arith.constant 0 : index
    %21 = vector.load %arg6[%c0_10, %c0_11] : memref<1x512xf32, #tpu.memory_space<vmem>>, vector<1x512xf32>
    %22 = vector.broadcast %21 : vector<1x512xf32> to vector<128x512xf32>
    %23 = arith.addf %20, %22 : vector<128x512xf32>
    %cst_12 = arith.constant 0.000000e+00 : f32
    %24 = vector.broadcast %cst_12 : f32 to vector<128x512xf32>
    %25 = arith.cmpf ogt, %23, %24 : vector<128x512xf32>
    %26 = vector.broadcast %1 : f32 to vector<128x512xf32>
    %27 = arith.mulf %26, %23 : vector<128x512xf32>
    %28 = arith.select %25, %23, %27 : vector<128x512xi1>, vector<128x512xf32>
    %29 = arith.truncf %28 : vector<128x512xf32> to vector<128x512xbf16>
    %c0_13 = arith.constant 0 : index
    %c0_14 = arith.constant 0 : index
    %30 = vector.load %arg7[%c0_13, %c0_14] : memref<512x128xbf16, #tpu.memory_space<vmem>>, vector<512x128xbf16>
    %cst_15 = arith.constant dense<0.000000e+00> : vector<128x128xf32>
    %31 = tpu.matmul %29, %30, %cst_15 {dimension_numbers = #tpu.dot_dimension_numbers<[1], [0], [0], [1], [0, 0, 1, 1], [], []>} : vector<128x512xbf16>, vector<512x128xbf16>, vector<128x128xf32> -> vector<128x128xf32>
    %c0_16 = arith.constant 0 : index
    %c0_17 = arith.constant 0 : index
    %32 = vector.load %arg8[%c0_16, %c0_17] : memref<1x128xf32, #tpu.memory_space<vmem>>, vector<1x128xf32>
    %33 = vector.broadcast %32 : vector<1x128xf32> to vector<128x128xf32>
    %34 = arith.addf %31, %33 : vector<128x128xf32>
    %35 = arith.truncf %34 : vector<128x128xf32> to vector<128x128xbf16>
    %c0_18 = arith.constant 0 : index
    %c0_19 = arith.constant 0 : index
    %36 = vector.load %arg9[%c0_18, %c0_19] : memref<128x512xbf16, #tpu.memory_space<vmem>>, vector<128x512xbf16>
    %cst_20 = arith.constant dense<0.000000e+00> : vector<128x512xf32>
    %37 = tpu.matmul %35, %36, %cst_20 {dimension_numbers = #tpu.dot_dimension_numbers<[1], [0], [0], [1], [0, 0, 1, 1], [], []>} : vector<128x128xbf16>, vector<128x512xbf16>, vector<128x512xf32> -> vector<128x512xf32>
    %c0_21 = arith.constant 0 : index
    %c0_22 = arith.constant 0 : index
    %38 = vector.load %arg10[%c0_21, %c0_22] : memref<1x512xf32, #tpu.memory_space<vmem>>, vector<1x512xf32>
    %39 = vector.broadcast %38 : vector<1x512xf32> to vector<128x512xf32>
    %40 = arith.addf %37, %39 : vector<128x512xf32>
    %cst_23 = arith.constant 0.000000e+00 : f32
    %41 = vector.broadcast %cst_23 : f32 to vector<128x512xf32>
    %42 = arith.cmpf ogt, %40, %41 : vector<128x512xf32>
    %43 = vector.broadcast %2 : f32 to vector<128x512xf32>
    %44 = arith.mulf %43, %40 : vector<128x512xf32>
    %45 = arith.select %42, %40, %44 : vector<128x512xi1>, vector<128x512xf32>
    %46 = arith.truncf %45 : vector<128x512xf32> to vector<128x512xbf16>
    %c0_24 = arith.constant 0 : index
    %c0_25 = arith.constant 0 : index
    %47 = vector.load %arg11[%c0_24, %c0_25] : memref<512x128xbf16, #tpu.memory_space<vmem>>, vector<512x128xbf16>
    %cst_26 = arith.constant dense<0.000000e+00> : vector<128x128xf32>
    %48 = tpu.matmul %46, %47, %cst_26 {dimension_numbers = #tpu.dot_dimension_numbers<[1], [0], [0], [1], [0, 0, 1, 1], [], []>} : vector<128x512xbf16>, vector<512x128xbf16>, vector<128x128xf32> -> vector<128x128xf32>
    %c0_27 = arith.constant 0 : index
    %c0_28 = arith.constant 0 : index
    %49 = vector.load %arg12[%c0_27, %c0_28] : memref<1x128xf32, #tpu.memory_space<vmem>>, vector<1x128xf32>
    %50 = vector.broadcast %49 : vector<1x128xf32> to vector<128x128xf32>
    %51 = arith.addf %48, %50 : vector<128x128xf32>
    %52 = arith.subf %34, %51 : vector<128x128xf32>
    %53 = arith.truncf %52 : vector<128x128xf32> to vector<128x128xbf16>
    %c0_29 = arith.constant 0 : index
    %c0_30 = arith.constant 0 : index
    %54 = vector.load %arg13[%c0_29, %c0_30] : memref<128x512xbf16, #tpu.memory_space<vmem>>, vector<128x512xbf16>
    %cst_31 = arith.constant dense<0.000000e+00> : vector<128x512xf32>
    %55 = tpu.matmul %53, %54, %cst_31 {dimension_numbers = #tpu.dot_dimension_numbers<[1], [0], [0], [1], [0, 0, 1, 1], [], []>} : vector<128x128xbf16>, vector<128x512xbf16>, vector<128x512xf32> -> vector<128x512xf32>
    %c0_32 = arith.constant 0 : index
    %c0_33 = arith.constant 0 : index
    %56 = vector.load %arg14[%c0_32, %c0_33] : memref<1x512xf32, #tpu.memory_space<vmem>>, vector<1x512xf32>
    %57 = vector.broadcast %56 : vector<1x512xf32> to vector<128x512xf32>
    %58 = arith.addf %55, %57 : vector<128x512xf32>
    %cst_34 = arith.constant 0.000000e+00 : f32
    %59 = vector.broadcast %cst_34 : f32 to vector<128x512xf32>
    %60 = arith.cmpf ogt, %58, %59 : vector<128x512xf32>
    %61 = vector.broadcast %3 : f32 to vector<128x512xf32>
    %62 = arith.mulf %61, %58 : vector<128x512xf32>
    %63 = arith.select %60, %58, %62 : vector<128x512xi1>, vector<128x512xf32>
    %64 = arith.truncf %63 : vector<128x512xf32> to vector<128x512xbf16>
    %c0_35 = arith.constant 0 : index
    %c0_36 = arith.constant 0 : index
    %65 = vector.load %arg15[%c0_35, %c0_36] : memref<512x128xbf16, #tpu.memory_space<vmem>>, vector<512x128xbf16>
    %cst_37 = arith.constant dense<0.000000e+00> : vector<128x128xf32>
    %66 = tpu.matmul %64, %65, %cst_37 {dimension_numbers = #tpu.dot_dimension_numbers<[1], [0], [0], [1], [0, 0, 1, 1], [], []>} : vector<128x512xbf16>, vector<512x128xbf16>, vector<128x128xf32> -> vector<128x128xf32>
    %c0_38 = arith.constant 0 : index
    %c0_39 = arith.constant 0 : index
    %67 = vector.load %arg16[%c0_38, %c0_39] : memref<1x128xf32, #tpu.memory_space<vmem>>, vector<1x128xf32>
    %68 = vector.broadcast %67 : vector<1x128xf32> to vector<128x128xf32>
    %69 = arith.addf %66, %68 : vector<128x128xf32>
    %70 = arith.subf %52, %69 : vector<128x128xf32>
    %71 = arith.truncf %70 : vector<128x128xf32> to vector<128x128xbf16>
    %c0_40 = arith.constant 0 : index
    %c0_41 = arith.constant 0 : index
    %72 = vector.load %arg17[%c0_40, %c0_41] : memref<128x512xbf16, #tpu.memory_space<vmem>>, vector<128x512xbf16>
    %cst_42 = arith.constant dense<0.000000e+00> : vector<128x512xf32>
    %73 = tpu.matmul %71, %72, %cst_42 {dimension_numbers = #tpu.dot_dimension_numbers<[1], [0], [0], [1], [0, 0, 1, 1], [], []>} : vector<128x128xbf16>, vector<128x512xbf16>, vector<128x512xf32> -> vector<128x512xf32>
    %c0_43 = arith.constant 0 : index
    %c0_44 = arith.constant 0 : index
    %74 = vector.load %arg18[%c0_43, %c0_44] : memref<1x512xf32, #tpu.memory_space<vmem>>, vector<1x512xf32>
    %75 = vector.broadcast %74 : vector<1x512xf32> to vector<128x512xf32>
    %76 = arith.addf %73, %75 : vector<128x512xf32>
    %cst_45 = arith.constant 0.000000e+00 : f32
    %77 = vector.broadcast %cst_45 : f32 to vector<128x512xf32>
    %78 = arith.cmpf ogt, %76, %77 : vector<128x512xf32>
    %79 = vector.broadcast %4 : f32 to vector<128x512xf32>
    %80 = arith.mulf %79, %76 : vector<128x512xf32>
    %81 = arith.select %78, %76, %80 : vector<128x512xi1>, vector<128x512xf32>
    %c0_46 = arith.constant 0 : index
    %c0_47 = arith.constant 0 : index
    %82 = vector.load %arg19[%c0_46, %c0_47] : memref<1x512xbf16, #tpu.memory_space<vmem>>, vector<1x512xbf16>
    %83 = arith.extf %82 : vector<1x512xbf16> to vector<1x512xf32>
    %84 = vector.broadcast %83 : vector<1x512xf32> to vector<128x512xf32>
    %85 = arith.mulf %81, %84 : vector<128x512xf32>
    %cst_48 = arith.constant dense<0.000000e+00> : vector<128xf32>
    %86 = vector.multi_reduction <add>, %85, %cst_48 [1] : vector<128x512xf32> to vector<128xf32>
    %87 = vector.shape_cast %86 : vector<128xf32> to vector<128x1xf32>
    %88 = vector.broadcast %5 : f32 to vector<128x1xf32>
    %89 = arith.addf %87, %88 : vector<128x1xf32>
    %c0_49 = arith.constant 0 : index
    %c0_50 = arith.constant 0 : index
    %90 = vector.load %arg20[%c0_49, %c0_50] : memref<128x1xf32, #tpu.memory_space<vmem>>, vector<128x1xf32>
    tpu.vector_store %arg20[%c0_49, %c0_50], %89 {strides = array<i32>} : memref<128x1xf32, #tpu.memory_space<vmem>>, vector<128x1xf32>,
    return
  }
  func.func @transform_0(%arg0: i32, %arg1: memref<6xf32, #tpu.memory_space<smem>>) -> (i32, i32) {
    %c0_i32 = arith.constant 0 : i32
    %c0_i32_0 = arith.constant 0 : i32
    return %arg0, %c0_i32 : i32, i32
  }
  func.func @transform_1(%arg0: i32, %arg1: memref<6xf32, #tpu.memory_space<smem>>) -> (i32, i32) {
    %c0_i32 = arith.constant 0 : i32
    %c0_i32_0 = arith.constant 0 : i32
    %c0_i32_1 = arith.constant 0 : i32
    return %c0_i32, %c0_i32_0 : i32, i32
  }
  func.func @transform_2(%arg0: i32, %arg1: memref<6xf32, #tpu.memory_space<smem>>) -> (i32, i32) {
    %c0_i32 = arith.constant 0 : i32
    %c0_i32_0 = arith.constant 0 : i32
    %c0_i32_1 = arith.constant 0 : i32
    return %c0_i32, %c0_i32_0 : i32, i32
  }
  func.func @transform_3(%arg0: i32, %arg1: memref<6xf32, #tpu.memory_space<smem>>) -> (i32, i32) {
    %c0_i32 = arith.constant 0 : i32
    %c0_i32_0 = arith.constant 0 : i32
    %c0_i32_1 = arith.constant 0 : i32
    return %c0_i32, %c0_i32_0 : i32, i32
  }
  func.func @transform_4(%arg0: i32, %arg1: memref<6xf32, #tpu.memory_space<smem>>) -> (i32, i32) {
    %c0_i32 = arith.constant 0 : i32
    %c0_i32_0 = arith.constant 0 : i32
    %c0_i32_1 = arith.constant 0 : i32
    return %c0_i32, %c0_i32_0 : i32, i32
  }
  func.func @transform_5(%arg0: i32, %arg1: memref<6xf32, #tpu.memory_space<smem>>) -> (i32, i32) {
    %c0_i32 = arith.constant 0 : i32
    %c0_i32_0 = arith.constant 0 : i32
    %c0_i32_1 = arith.constant 0 : i32
    return %c0_i32, %c0_i32_0 : i32, i32
  }
  func.func @transform_6(%arg0: i32, %arg1: memref<6xf32, #tpu.memory_space<smem>>) -> (i32, i32) {
    %c0_i32 = arith.constant 0 : i32
    %c0_i32_0 = arith.constant 0 : i32
    %c0_i32_1 = arith.constant 0 : i32
    return %c0_i32, %c0_i32_0 : i32, i32
  }
  func.func @transform_7(%arg0: i32, %arg1: memref<6xf32, #tpu.memory_space<smem>>) -> (i32, i32) {
    %c0_i32 = arith.constant 0 : i32
    %c0_i32_0 = arith.constant 0 : i32
    %c0_i32_1 = arith.constant 0 : i32
    return %c0_i32, %c0_i32_0 : i32, i32
  }
  func.func @transform_8(%arg0: i32, %arg1: memref<6xf32, #tpu.memory_space<smem>>) -> (i32, i32) {
    %c0_i32 = arith.constant 0 : i32
    %c0_i32_0 = arith.constant 0 : i32
    %c0_i32_1 = arith.constant 0 : i32
    return %c0_i32, %c0_i32_0 : i32, i32
  }
  func.func @transform_9(%arg0: i32, %arg1: memref<6xf32, #tpu.memory_space<smem>>) -> (i32, i32) {
    %c0_i32 = arith.constant 0 : i32
    %c0_i32_0 = arith.constant 0 : i32
    %c0_i32_1 = arith.constant 0 : i32
    return %c0_i32, %c0_i32_0 : i32, i32
  }
  func.func @transform_10(%arg0: i32, %arg1: memref<6xf32, #tpu.memory_space<smem>>) -> (i32, i32) {
    %c0_i32 = arith.constant 0 : i32
    %c0_i32_0 = arith.constant 0 : i32
    %c0_i32_1 = arith.constant 0 : i32
    return %c0_i32, %c0_i32_0 : i32, i32
  }
  func.func @transform_11(%arg0: i32, %arg1: memref<6xf32, #tpu.memory_space<smem>>) -> (i32, i32) {
    %c0_i32 = arith.constant 0 : i32
    %c0_i32_0 = arith.constant 0 : i32
    %c0_i32_1 = arith.constant 0 : i32
    return %c0_i32, %c0_i32_0 : i32, i32
  }
  func.func @transform_12(%arg0: i32, %arg1: memref<6xf32, #tpu.memory_space<smem>>) -> (i32, i32) {
    %c0_i32 = arith.constant 0 : i32
    %c0_i32_0 = arith.constant 0 : i32
    %c0_i32_1 = arith.constant 0 : i32
    return %c0_i32, %c0_i32_0 : i32, i32
  }
  func.func @transform_13(%arg0: i32, %arg1: memref<6xf32, #tpu.memory_space<smem>>) -> (i32, i32) {
    %c0_i32 = arith.constant 0 : i32
    %c0_i32_0 = arith.constant 0 : i32
    %c0_i32_1 = arith.constant 0 : i32
    return %c0_i32, %c0_i32_0 : i32, i32
  }
  func.func @transform_14(%arg0: i32, %arg1: memref<6xf32, #tpu.memory_space<smem>>) -> (i32, i32) {
    %c0_i32 = arith.constant 0 : i32
    %c0_i32_0 = arith.constant 0 : i32
    %c0_i32_1 = arith.constant 0 : i32
    return %c0_i32, %c0_i32_0 : i32, i32
  }
  func.func @transform_15(%arg0: i32, %arg1: memref<6xf32, #tpu.memory_space<smem>>) -> (i32, i32) {
    %c0_i32 = arith.constant 0 : i32
    %c0_i32_0 = arith.constant 0 : i32
    %c0_i32_1 = arith.constant 0 : i32
    return %c0_i32, %c0_i32_0 : i32, i32
  }
  func.func @transform_16(%arg0: i32, %arg1: memref<6xf32, #tpu.memory_space<smem>>) -> (i32, i32) {
    %c0_i32 = arith.constant 0 : i32
    %c0_i32_0 = arith.constant 0 : i32
    %c0_i32_1 = arith.constant 0 : i32
    return %c0_i32, %c0_i32_0 : i32, i32
  }
  func.func @transform_17(%arg0: i32, %arg1: memref<6xf32, #tpu.memory_space<smem>>) -> (i32, i32) {
    %c0_i32 = arith.constant 0 : i32
    %c0_i32_0 = arith.constant 0 : i32
    %c0_i32_1 = arith.constant 0 : i32
    return %c0_i32, %c0_i32_0 : i32, i32
  }
  func.func @transform_18(%arg0: i32, %arg1: memref<6xf32, #tpu.memory_space<smem>>) -> (i32, i32) {
    %c0_i32 = arith.constant 0 : i32
    %c0_i32_0 = arith.constant 0 : i32
    return %arg0, %c0_i32 : i32, i32
  }
}

</mosaic_0001>

<llo_original>
// kernel: tpu_custom_call.1
$region0: #{tpu_custom_call.1}
  #allocation0 [shape = 'u32[]', space=smem, size = 0x4, offset = 0x4, fixed_abs, tag = 'smem constant byte address 0x4 - core index']
  #allocation1 [shape = 'u32[72,128]{1,0:T(1,128)}', space=vmem, size = 0x9000, scoped, tag = 'internal scratch']
  #allocation2 [shape = 's32[1]{0}', space=sflag, size = 0x4, scoped, tag = 'scoped memory for tpu_custom_call.1']
  #allocation3 [shape = 'u8[512]{0}', space=smem, size = 0x200, scoped, tag = 'prefetched SMEM operand 0']
  %s0 = inlined_call_operand.hbm [shape: f32[6], index: 0, kind: input, shape index: {}]
  %s1 = inlined_call_operand.hbm [shape: f32[256,128], index: 1, kind: input, shape index: {}]
  %s2 = inlined_call_operand.hbm [shape: bf16[128,512], index: 2, kind: input, shape index: {}]
  %s3 = inlined_call_operand.hbm [shape: f32[1,512], index: 3, kind: input, shape index: {}]
  %s4 = inlined_call_operand.hbm [shape: bf16[512,512], index: 4, kind: input, shape index: {}]
  %s5 = inlined_call_operand.vmem [shape: f32[1,512], index: 5, kind: input, shape index: {}]
  %s6 = inlined_call_operand.hbm [shape: bf16[512,128], index: 6, kind: input, shape index: {}]
  %s7 = inlined_call_operand.hbm [shape: f32[1,128], index: 7, kind: input, shape index: {}]
  %s8 = inlined_call_operand.hbm [shape: bf16[128,512], index: 8, kind: input, shape index: {}]
  %s9 = inlined_call_operand.vmem [shape: f32[1,512], index: 9, kind: input, shape index: {}]
  %s10 = inlined_call_operand.hbm [shape: bf16[512,128], index: 10, kind: input, shape index: {}]
  %s11 = inlined_call_operand.hbm [shape: f32[1,128], index: 11, kind: input, shape index: {}]
  %s12 = inlined_call_operand.hbm [shape: bf16[128,512], index: 12, kind: input, shape index: {}]
  %s13 = inlined_call_operand.vmem [shape: f32[1,512], index: 13, kind: input, shape index: {}]
  %s14 = inlined_call_operand.hbm [shape: bf16[512,128], index: 14, kind: input, shape index: {}]
  %s15 = inlined_call_operand.hbm [shape: f32[1,128], index: 15, kind: input, shape index: {}]
  %s16 = inlined_call_operand.hbm [shape: bf16[128,512], index: 16, kind: input, shape index: {}]
  %s17 = inlined_call_operand.vmem [shape: f32[1,512], index: 17, kind: input, shape index: {}]
  %s18 = inlined_call_operand.hbm [shape: bf16[1,512], index: 18, kind: input, shape index: {}]
  %s19 = inlined_call_operand.vmem [shape: f32[256,1], index: 19, kind: output, shape index: {}]
  %s20 = sld [smem:[#allocation0]]
  $region161: #{tpu_custom_call.1} parent=0
    _
  %s22 = ssub.s32 1, %s20
  %s23 = scalar_select 0, %s22, %s20
  %s25 = sshll.u32 %s0, 4
  %s26 = int_to_ptr.hbm [resolvable:$true] %s25
  %28 = dma.hbm_to_smem %s26, 16, [#allocation3], [#allocation2]
  %30 = dma.done [#allocation2], 16
  %31 = sfence
  $region1: #{tpu_custom_call.1} parent=0
    #allocation4 [shape = 'u8[131072]{0}', space=vmem, size = 0x20000, scoped, tag = 'input window, operand 1']
    #allocation5 [shape = 's32[2]{0}', space=sflag, size = 0x8, scoped, tag = 'scoped memory for tpu_custom_call.1']
    #allocation6 [shape = 'u8[131072]{0}', space=vmem, size = 0x20000, scoped, tag = 'input window, operand 2, single buffered']
    #allocation7 [shape = 's32[1]{0}', space=sflag, size = 0x4, scoped, tag = 'scoped memory for tpu_custom_call.1']
    #allocation8 [shape = 'u8[2048]{0}', space=vmem, size = 0x800, scoped, tag = 'input window, operand 3, single buffered']
    #allocation9 [shape = 'u8[524288]{0}', space=vmem, size = 0x80000, scoped, tag = 'input window, operand 4, single buffered']
    #allocation10 [shape = 's32[1]{0}', space=sflag, size = 0x4, scoped, tag = 'scoped memory for tpu_custom_call.1']
    #allocation11 [shape = 'u8[131072]{0}', space=vmem, size = 0x20000, scoped, tag = 'input window, operand 6, single buffered']
    #allocation12 [shape = 'u8[512]{0}', space=vmem, size = 0x400, scoped, tag = 'input window, operand 7, single buffered']
    #allocation13 [shape = 's32[1]{0}', space=sflag, size = 0x4, scoped, tag = 'scoped memory for tpu_custom_call.1']
    #allocation14 [shape = 'u8[131072]{0}', space=vmem, size = 0x20000, scoped, tag = 'input window, operand 8, single buffered']
    #allocation15 [shape = 'u8[131072]{0}', space=vmem, size = 0x20000, scoped, tag = 'input window, operand 10, single buffered']
    #allocation16 [shape = 's32[1]{0}', space=sflag, size = 0x4, scoped, tag = 'scoped memory for tpu_custom_call.1']
    #allocation17 [shape = 'u8[512]{0}', space=vmem, size = 0x400, scoped, tag = 'input window, operand 11, single buffered']
    #allocation18 [shape = 'u8[131072]{0}', space=vmem, size = 0x20000, scoped, tag = 'input window, operand 12, single buffered']
    #allocation19 [shape = 's32[1]{0}', space=sflag, size = 0x4, scoped, tag = 'scoped memory for tpu_custom_call.1']
    #allocation20 [shape = 'u8[131072]{0}', space=vmem, size = 0x20000, scoped, tag = 'input window, operand 14, single buffered']
    #allocation21 [shape = 'u8[512]{0}', space=vmem, size = 0x400, scoped, tag = 'input window, operand 15, single buffered']
    #allocation22 [shape = 's32[1]{0}', space=sflag, size = 0x4, scoped, tag = 'scoped memory for tpu_custom_call.1']
    #allocation23 [shape = 'u8[131072]{0}', space=vmem, size = 0x20000, scoped, tag = 'input window, operand 16, single buffered']
    #allocation24 [shape = 'u8[2048]{0}', space=vmem, size = 0x800, scoped, tag = 'input window, operand 18, single buffered']
    #allocation25 [shape = 's32[1]{0}', space=sflag, size = 0x4, scoped, tag = 'scoped memory for tpu_custom_call.1']
    %32 = vsyncpa [#allocation5], 0
    %s33 = scalar_lea.sflag [#allocation5], 1
    %34 = vsyncpa %s33, 0
    %35 = vsyncpa [#allocation7], 0
    %36 = vsyncpa [#allocation10], 0
    %37 = vsyncpa [#allocation13], 0
    %38 = vsyncpa [#allocation16], 0
    %39 = vsyncpa [#allocation19], 0
    %40 = vsyncpa [#allocation22], 0
    %41 = vsyncpa [#allocation25], 0
    loop: start=0, step=1, limit=4
    $region2: #{tpu_custom_call.1} parent=1 // loop_pre_header
      _
    $region3: #{tpu_custom_call.1} parent=1 // loop_header
      %s43 = sphi 0, %s47
      %p44 = scmp.ge.s32.totalorder %s43, 4
      %s53 = sphi 0, %s55
      %s56 = sphi 0, %s53
      %s57 = sphi 0, %s56
      %s73 = sphi 0, %s57
      %s77 = sphi 0, %s77
      %s79 = sphi 0, %s77
      %s80 = sphi 0, %s79
      %s94 = sphi 0, %s80
      %s98 = sphi 0, %s98
      %s100 = sphi 0, %s98
      %s101 = sphi 0, %s100
      %s115 = sphi 0, %s101
      %s119 = sphi 0, %s119
      %s121 = sphi 0, %s119
      %s122 = sphi 0, %s121
      %s136 = sphi 0, %s122
      %s140 = sphi 0, %s140
      %s142 = sphi 0, %s140
      %s143 = sphi 0, %s142
      %s157 = sphi 0, %s143
      %s161 = sphi 0, %s161
      %s163 = sphi 0, %s161
      %s164 = sphi 0, %s163
      %s178 = sphi 0, %s164
      %s182 = sphi 0, %s182
      %s184 = sphi 0, %s182
      %s185 = sphi 0, %s184
      %s199 = sphi 0, %s185
      %s203 = sphi 0, %s203
      %s205 = sphi 0, %s203
      %s206 = sphi 0, %s205
      %s220 = sphi 0, %s206
      %s224 = sphi 0, %s224
      %s226 = sphi 0, %s224
      %s227 = sphi 0, %s226
      %s241 = sphi 0, %s227
      %s245 = sphi 0, %s245
      %s247 = sphi 0, %s245
      %s248 = sphi 0, %s247
      %s262 = sphi 0, %s248
      %s266 = sphi 0, %s266
      %s268 = sphi 0, %s266
      %s269 = sphi 0, %s268
      %s283 = sphi 0, %s269
      %s287 = sphi 0, %s287
      %s289 = sphi 0, %s287
      %s290 = sphi 0, %s289
      %s304 = sphi 0, %s290
      %s308 = sphi 0, %s308
      %s310 = sphi 0, %s308
      %s311 = sphi 0, %s310
      %s325 = sphi 0, %s311
      %s329 = sphi 0, %s329
      %s331 = sphi 0, %s329
      %s332 = sphi 0, %s331
      %s346 = sphi 0, %s332
      %s350 = sphi 0, %s350
      %s352 = sphi 0, %s350
      %s353 = sphi 0, %s352
      %s367 = sphi 0, %s353
      %s371 = sphi 0, %s371
      %s373 = sphi 0, %s371
      %s374 = sphi 0, %s373
      %s388 = sphi 0, %s374
      %s392 = sphi 0, %s392
      %s394 = sphi 0, %s392
      %s395 = sphi 0, %s394
      %s409 = sphi 0, %s395
      %s413 = sphi 0, %s413
      %s415 = sphi 0, %s413
      %s416 = sphi 0, %s415
      %s430 = sphi 0, %s416
      %s436 = sphi 0, %s438
      %s439 = sphi 0, %s436
      %s440 = sphi 0, %s439
      %s456 = sphi 0, %s440
    $region4: #{tpu_custom_call.1} parent=1 // loop_header_branch
      %46 = sbr.rel (%p44) target = $region8
    $region5: #{tpu_custom_call.1} parent=1 // loop_body
      %s48 = ssub.s32 %s43, 1
      %s49 = ssub.s32 %s43, 2
      %s50 = sadd.s32 %s43, 1
      %s51 = ssub.s32 %s43, %s50
      %p52 = scmp.eq.s32.totalorder %s51, 0
      %s54 = sadd.s32 %s53, 1
      %s55 = scalar_select %p52, %s53, %s54
      %p58 = pneg %p52
      %p59 = scmp.eq.s32.totalorder %s43, 1
      %p60 = por %p58, %p59
      %p61 = scmp.ne.s32.totalorder %s53, %s56
      %p62 = scmp.eq.s32.totalorder %s43, 0
      %p63 = por %p61, %p62
      %p64 = scmp.ne.s32.totalorder %s53, %s56
      %p65 = scmp.eq.s32.totalorder %s48, 1
      %p66 = por %p64, %p65
      %p67 = scmp.ne.s32.totalorder %s56, %s57
      %p68 = scmp.eq.s32.totalorder %s48, 0
      %p69 = por %p67, %p68
      %p70 = scmp.ne.s32.totalorder %s56, %s57
      %p71 = scmp.eq.s32.totalorder %s49, 1
      %p72 = por %p70, %p71
      %p74 = scmp.ne.s32.totalorder %s57, %s73
      %p75 = scmp.eq.s32.totalorder %s49, 0
      %p76 = por %p74, %p75
      %s78 = sadd.s32 %s77, 1
      %p81 = scmp.eq.s32.totalorder %s43, 1
      %p82 = scmp.ne.s32.totalorder %s77, %s79
      %p83 = scmp.eq.s32.totalorder %s43, 0
      %p84 = por %p82, %p83
      %p85 = scmp.ne.s32.totalorder %s77, %s79
      %p86 = scmp.eq.s32.totalorder %s48, 1
      %p87 = por %p85, %p86
      %p88 = scmp.ne.s32.totalorder %s79, %s80
      %p89 = scmp.eq.s32.totalorder %s48, 0
      %p90 = por %p88, %p89
      %p91 = scmp.ne.s32.totalorder %s79, %s80
      %p92 = scmp.eq.s32.totalorder %s49, 1
      %p93 = por %p91, %p92
      %p95 = scmp.ne.s32.totalorder %s80, %s94
      %p96 = scmp.eq.s32.totalorder %s49, 0
      %p97 = por %p95, %p96
      %s99 = sadd.s32 %s98, 1
      %p102 = scmp.eq.s32.totalorder %s43, 1
      %p103 = scmp.ne.s32.totalorder %s98, %s100
      %p104 = scmp.eq.s32.totalorder %s43, 0
      %p105 = por %p103, %p104
      %p106 = scmp.ne.s32.totalorder %s98, %s100
      %p107 = scmp.eq.s32.totalorder %s48, 1
      %p108 = por %p106, %p107
      %p109 = scmp.ne.s32.totalorder %s100, %s101
      %p110 = scmp.eq.s32.totalorder %s48, 0
      %p111 = por %p109, %p110
      %p112 = scmp.ne.s32.totalorder %s100, %s101
      %p113 = scmp.eq.s32.totalorder %s49, 1
      %p114 = por %p112, %p113
      %p116 = scmp.ne.s32.totalorder %s101, %s115
      %p117 = scmp.eq.s32.totalorder %s49, 0
      %p118 = por %p116, %p117
      %s120 = sadd.s32 %s119, 1
      %p123 = scmp.eq.s32.totalorder %s43, 1
      %p124 = scmp.ne.s32.totalorder %s119, %s121
      %p125 = scmp.eq.s32.totalorder %s43, 0
      %p126 = por %p124, %p125
      %p127 = scmp.ne.s32.totalorder %s119, %s121
      %p128 = scmp.eq.s32.totalorder %s48, 1
      %p129 = por %p127, %p128
      %p130 = scmp.ne.s32.totalorder %s121, %s122
      %p131 = scmp.eq.s32.totalorder %s48, 0
      %p132 = por %p130, %p131
      %p133 = scmp.ne.s32.totalorder %s121, %s122
      %p134 = scmp.eq.s32.totalorder %s49, 1
      %p135 = por %p133, %p134
      %p137 = scmp.ne.s32.totalorder %s122, %s136
      %p138 = scmp.eq.s32.totalorder %s49, 0
      %p139 = por %p137, %p138
      %s141 = sadd.s32 %s140, 1
      %p144 = scmp.eq.s32.totalorder %s43, 1
      %p145 = scmp.ne.s32.totalorder %s140, %s142
      %p146 = scmp.eq.s32.totalorder %s43, 0
      %p147 = por %p145, %p146
      %p148 = scmp.ne.s32.totalorder %s140, %s142
      %p149 = scmp.eq.s32.totalorder %s48, 1
      %p150 = por %p148, %p149
      %p151 = scmp.ne.s32.totalorder %s142, %s143
      %p152 = scmp.eq.s32.totalorder %s48, 0
      %p153 = por %p151, %p152
      %p154 = scmp.ne.s32.totalorder %s142, %s143
      %p155 = scmp.eq.s32.totalorder %s49, 1
      %p156 = por %p154, %p155
      %p158 = scmp.ne.s32.totalorder %s143, %s157
      %p159 = scmp.eq.s32.totalorder %s49, 0
      %p160 = por %p158, %p159
      %s162 = sadd.s32 %s161, 1
      %p165 = scmp.eq.s32.totalorder %s43, 1
      %p166 = scmp.ne.s32.totalorder %s161, %s163
      %p167 = scmp.eq.s32.totalorder %s43, 0
      %p168 = por %p166, %p167
      %p169 = scmp.ne.s32.totalorder %s161, %s163
      %p170 = scmp.eq.s32.totalorder %s48, 1
      %p171 = por %p169, %p170
      %p172 = scmp.ne.s32.totalorder %s163, %s164
      %p173 = scmp.eq.s32.totalorder %s48, 0
      %p174 = por %p172, %p173
      %p175 = scmp.ne.s32.totalorder %s163, %s164
      %p176 = scmp.eq.s32.totalorder %s49, 1
      %p177 = por %p175, %p176
      %p179 = scmp.ne.s32.totalorder %s164, %s178
      %p180 = scmp.eq.s32.totalorder %s49, 0
      %p181 = por %p179, %p180
      %s183 = sadd.s32 %s182, 1
      %p186 = scmp.eq.s32.totalorder %s43, 1
      %p187 = scmp.ne.s32.totalorder %s182, %s184
      %p188 = scmp.eq.s32.totalorder %s43, 0
      %p189 = por %p187, %p188
      %p190 = scmp.ne.s32.totalorder %s182, %s184
      %p191 = scmp.eq.s32.totalorder %s48, 1
      %p192 = por %p190, %p191
      %p193 = scmp.ne.s32.totalorder %s184, %s185
      %p194 = scmp.eq.s32.totalorder %s48, 0
      %p195 = por %p193, %p194
      %p196 = scmp.ne.s32.totalorder %s184, %s185
      %p197 = scmp.eq.s32.totalorder %s49, 1
      %p198 = por %p196, %p197
      %p200 = scmp.ne.s32.totalorder %s185, %s199
      %p201 = scmp.eq.s32.totalorder %s49, 0
      %p202 = por %p200, %p201
      %s204 = sadd.s32 %s203, 1
      %p207 = scmp.eq.s32.totalorder %s43, 1
      %p208 = scmp.ne.s32.totalorder %s203, %s205
      %p209 = scmp.eq.s32.totalorder %s43, 0
      %p210 = por %p208, %p209
      %p211 = scmp.ne.s32.totalorder %s203, %s205
      %p212 = scmp.eq.s32.totalorder %s48, 1
      %p213 = por %p211, %p212
      %p214 = scmp.ne.s32.totalorder %s205, %s206
      %p215 = scmp.eq.s32.totalorder %s48, 0
      %p216 = por %p214, %p215
      %p217 = scmp.ne.s32.totalorder %s205, %s206
      %p218 = scmp.eq.s32.totalorder %s49, 1
      %p219 = por %p217, %p218
      %p221 = scmp.ne.s32.totalorder %s206, %s220
      %p222 = scmp.eq.s32.totalorder %s49, 0
      %p223 = por %p221, %p222
      %s225 = sadd.s32 %s224, 1
      %p228 = scmp.eq.s32.totalorder %s43, 1
      %p229 = scmp.ne.s32.totalorder %s224, %s226
      %p230 = scmp.eq.s32.totalorder %s43, 0
      %p231 = por %p229, %p230
      %p232 = scmp.ne.s32.totalorder %s224, %s226
      %p233 = scmp.eq.s32.totalorder %s48, 1
      %p234 = por %p232, %p233
      %p235 = scmp.ne.s32.totalorder %s226, %s227
      %p236 = scmp.eq.s32.totalorder %s48, 0
      %p237 = por %p235, %p236
      %p238 = scmp.ne.s32.totalorder %s226, %s227
      %p239 = scmp.eq.s32.totalorder %s49, 1
      %p240 = por %p238, %p239
      %p242 = scmp.ne.s32.totalorder %s227, %s241
      %p243 = scmp.eq.s32.totalorder %s49, 0
      %p244 = por %p242, %p243
      %s246 = sadd.s32 %s245, 1
      %p249 = scmp.eq.s32.totalorder %s43, 1
      %p250 = scmp.ne.s32.totalorder %s245, %s247
      %p251 = scmp.eq.s32.totalorder %s43, 0
      %p252 = por %p250, %p251
      %p253 = scmp.ne.s32.totalorder %s245, %s247
      %p254 = scmp.eq.s32.totalorder %s48, 1
      %p255 = por %p253, %p254
      %p256 = scmp.ne.s32.totalorder %s247, %s248
      %p257 = scmp.eq.s32.totalorder %s48, 0
      %p258 = por %p256, %p257
      %p259 = scmp.ne.s32.totalorder %s247, %s248
      %p260 = scmp.eq.s32.totalorder %s49, 1
      %p261 = por %p259, %p260
      %p263 = scmp.ne.s32.totalorder %s248, %s262
      %p264 = scmp.eq.s32.totalorder %s49, 0
      %p265 = por %p263, %p264
      %s267 = sadd.s32 %s266, 1
      %p270 = scmp.eq.s32.totalorder %s43, 1
      %p271 = scmp.ne.s32.totalorder %s266, %s268
      %p272 = scmp.eq.s32.totalorder %s43, 0
      %p273 = por %p271, %p272
      %p274 = scmp.ne.s32.totalorder %s266, %s268
      %p275 = scmp.eq.s32.totalorder %s48, 1
      %p276 = por %p274, %p275
      %p277 = scmp.ne.s32.totalorder %s268, %s269
      %p278 = scmp.eq.s32.totalorder %s48, 0
      %p279 = por %p277, %p278
      %p280 = scmp.ne.s32.totalorder %s268, %s269
      %p281 = scmp.eq.s32.totalorder %s49, 1
      %p282 = por %p280, %p281
      %p284 = scmp.ne.s32.totalorder %s269, %s283
      %p285 = scmp.eq.s32.totalorder %s49, 0
      %p286 = por %p284, %p285
      %s288 = sadd.s32 %s287, 1
      %p291 = scmp.eq.s32.totalorder %s43, 1
      %p292 = scmp.ne.s32.totalorder %s287, %s289
      %p293 = scmp.eq.s32.totalorder %s43, 0
      %p294 = por %p292, %p293
      %p295 = scmp.ne.s32.totalorder %s287, %s289
      %p296 = scmp.eq.s32.totalorder %s48, 1
      %p297 = por %p295, %p296
      %p298 = scmp.ne.s32.totalorder %s289, %s290
      %p299 = scmp.eq.s32.totalorder %s48, 0
      %p300 = por %p298, %p299
      %p301 = scmp.ne.s32.totalorder %s289, %s290
      %p302 = scmp.eq.s32.totalorder %s49, 1
      %p303 = por %p301, %p302
      %p305 = scmp.ne.s32.totalorder %s290, %s304
      %p306 = scmp.eq.s32.totalorder %s49, 0
      %p307 = por %p305, %p306
      %s309 = sadd.s32 %s308, 1
      %p312 = scmp.eq.s32.totalorder %s43, 1
      %p313 = scmp.ne.s32.totalorder %s308, %s310
      %p314 = scmp.eq.s32.totalorder %s43, 0
      %p315 = por %p313, %p314
      %p316 = scmp.ne.s32.totalorder %s308, %s310
      %p317 = scmp.eq.s32.totalorder %s48, 1
      %p318 = por %p316, %p317
      %p319 = scmp.ne.s32.totalorder %s310, %s311
      %p320 = scmp.eq.s32.totalorder %s48, 0
      %p321 = por %p319, %p320
      %p322 = scmp.ne.s32.totalorder %s310, %s311
      %p323 = scmp.eq.s32.totalorder %s49, 1
      %p324 = por %p322, %p323
      %p326 = scmp.ne.s32.totalorder %s311, %s325
      %p327 = scmp.eq.s32.totalorder %s49, 0
      %p328 = por %p326, %p327
      %s330 = sadd.s32 %s329, 1
      %p333 = scmp.eq.s32.totalorder %s43, 1
      %p334 = scmp.ne.s32.totalorder %s329, %s331
      %p335 = scmp.eq.s32.totalorder %s43, 0
      %p336 = por %p334, %p335
      %p337 = scmp.ne.s32.totalorder %s329, %s331
      %p338 = scmp.eq.s32.totalorder %s48, 1
      %p339 = por %p337, %p338
      %p340 = scmp.ne.s32.totalorder %s331, %s332
      %p341 = scmp.eq.s32.totalorder %s48, 0
      %p342 = por %p340, %p341
      %p343 = scmp.ne.s32.totalorder %s331, %s332
      %p344 = scmp.eq.s32.totalorder %s49, 1
      %p345 = por %p343, %p344
      %p347 = scmp.ne.s32.totalorder %s332, %s346
      %p348 = scmp.eq.s32.totalorder %s49, 0
      %p349 = por %p347, %p348
      %s351 = sadd.s32 %s350, 1
      %p354 = scmp.eq.s32.totalorder %s43, 1
      %p355 = scmp.ne.s32.totalorder %s350, %s352
      %p356 = scmp.eq.s32.totalorder %s43, 0
      %p357 = por %p355, %p356
      %p358 = scmp.ne.s32.totalorder %s350, %s352
      %p359 = scmp.eq.s32.totalorder %s48, 1
      %p360 = por %p358, %p359
      %p361 = scmp.ne.s32.totalorder %s352, %s353
      %p362 = scmp.eq.s32.totalorder %s48, 0
      %p363 = por %p361, %p362
      %p364 = scmp.ne.s32.totalorder %s352, %s353
      %p365 = scmp.eq.s32.totalorder %s49, 1
      %p366 = por %p364, %p365
      %p368 = scmp.ne.s32.totalorder %s353, %s367
      %p369 = scmp.eq.s32.totalorder %s49, 0
      %p370 = por %p368, %p369
      %s372 = sadd.s32 %s371, 1
      %p375 = scmp.eq.s32.totalorder %s43, 1
      %p376 = scmp.ne.s32.totalorder %s371, %s373
      %p377 = scmp.eq.s32.totalorder %s43, 0
      %p378 = por %p376, %p377
      %p379 = scmp.ne.s32.totalorder %s371, %s373
      %p380 = scmp.eq.s32.totalorder %s48, 1
      %p381 = por %p379, %p380
      %p382 = scmp.ne.s32.totalorder %s373, %s374
      %p383 = scmp.eq.s32.totalorder %s48, 0
      %p384 = por %p382, %p383
      %p385 = scmp.ne.s32.totalorder %s373, %s374
      %p386 = scmp.eq.s32.totalorder %s49, 1
      %p387 = por %p385, %p386
      %p389 = scmp.ne.s32.totalorder %s374, %s388
      %p390 = scmp.eq.s32.totalorder %s49, 0
      %p391 = por %p389, %p390
      %s393 = sadd.s32 %s392, 1
      %p396 = scmp.eq.s32.totalorder %s43, 1
      %p397 = scmp.ne.s32.totalorder %s392, %s394
      %p398 = scmp.eq.s32.totalorder %s43, 0
      %p399 = por %p397, %p398
      %p400 = scmp.ne.s32.totalorder %s392, %s394
      %p401 = scmp.eq.s32.totalorder %s48, 1
      %p402 = por %p400, %p401
      %p403 = scmp.ne.s32.totalorder %s394, %s395
      %p404 = scmp.eq.s32.totalorder %s48, 0
      %p405 = por %p403, %p404
      %p406 = scmp.ne.s32.totalorder %s394, %s395
      %p407 = scmp.eq.s32.totalorder %s49, 1
      %p408 = por %p406, %p407
      %p410 = scmp.ne.s32.totalorder %s395, %s409
      %p411 = scmp.eq.s32.totalorder %s49, 0
      %p412 = por %p410, %p411
      %s414 = sadd.s32 %s413, 1
      %p417 = scmp.eq.s32.totalorder %s43, 1
      %p418 = scmp.ne.s32.totalorder %s413, %s415
      %p419 = scmp.eq.s32.totalorder %s43, 0
      %p420 = por %p418, %p419
      %p421 = scmp.ne.s32.totalorder %s413, %s415
      %p422 = scmp.eq.s32.totalorder %s48, 1
      %p423 = por %p421, %p422
      %p424 = scmp.ne.s32.totalorder %s415, %s416
      %p425 = scmp.eq.s32.totalorder %s48, 0
      %p426 = por %p424, %p425
      %p427 = scmp.ne.s32.totalorder %s415, %s416
      %p428 = scmp.eq.s32.totalorder %s49, 1
      %p429 = por %p427, %p428
      %p431 = scmp.ne.s32.totalorder %s416, %s430
      %p432 = scmp.eq.s32.totalorder %s49, 0
      %p433 = por %p431, %p432
      %s434 = ssub.s32 %s43, %s50
      %p435 = scmp.eq.s32.totalorder %s434, 0
      %s437 = sadd.s32 %s436, 1
      %s438 = scalar_select %p435, %s436, %s437
      %p441 = pneg %p435
      %p442 = scmp.eq.s32.totalorder %s43, 1
      %p443 = por %p441, %p442
      %p444 = scmp.ne.s32.totalorder %s436, %s439
      %p445 = scmp.eq.s32.totalorder %s43, 0
      %p446 = por %p444, %p445
      %p447 = scmp.ne.s32.totalorder %s436, %s439
      %p448 = scmp.eq.s32.totalorder %s48, 1
      %p449 = por %p447, %p448
      %p450 = scmp.ne.s32.totalorder %s439, %s440
      %p451 = scmp.eq.s32.totalorder %s48, 0
      %p452 = por %p450, %p451
      %p453 = scmp.ne.s32.totalorder %s439, %s440
      %p454 = scmp.eq.s32.totalorder %s49, 1
      %p455 = por %p453, %p454
      %p457 = scmp.ne.s32.totalorder %s440, %s456
      %p458 = scmp.eq.s32.totalorder %s49, 0
      %p459 = por %p457, %p458
      %p460 = scmp.le.s32.totalorder 1, %s43
      %p461 = scmp.lt.s32.totalorder %s43, 3
      %p462 = pnand %p460, %p461
      %p463 = pneg %p462
      // Predicated region
      $region9: #{tpu_custom_call.1} parent=5 // pred_check
        _
      $region10: #{tpu_custom_call.1} parent=5 // pred_check_branch
        %465 = sbr.rel (%p462) target = $region12
      $region11: #{tpu_custom_call.1} parent=5 // pred_region
        %s466 = ssub.s32 %s43, 1
        // Predicated region
        $region13: #{tpu_custom_call.1} parent=11 // pred_check
          %p467 = pneg %p90
        $region14: #{tpu_custom_call.1} parent=11 // pred_check_branch
          %469 = sbr.rel (%p467) target = $region16
        $region15: #{tpu_custom_call.1} parent=11 // pred_region
          %471 = vsyncadd [#allocation7], 0
          %s472 = sshll.u32 %s2, 4
          %s473 = int_to_ptr.hbm [resolvable:$true] %s472
          %s474 = sshll.u32 [#allocation6], 4
          %s475 = int_to_ptr.vmem [resolvable:$true] %s474
          %480 = dma.hbm_to_vmem [thread:$0]  %s473, 4096, %s475, [#allocation7], 256, 256, 16
        $region16: #{tpu_custom_call.1} parent=11 // pred_fallthru
          _
        // Predicated region
        $region17: #{tpu_custom_call.1} parent=11 // pred_check
          %p481 = pneg %p111
        $region18: #{tpu_custom_call.1} parent=11 // pred_check_branch
          %483 = sbr.rel (%p481) target = $region20
        $region19: #{tpu_custom_call.1} parent=11 // pred_region
          %485 = vsyncadd [#allocation7], 0
          %s487 = sshll.u32 %s3, 4
          %s488 = int_to_ptr.hbm [resolvable:$true] %s487
          %s489 = sshll.u32 [#allocation8], 4
          %s490 = int_to_ptr.vmem [resolvable:$true] %s489
          %492 = dma.hbm_to_vmem [thread:$0]  %s488, 64, %s490, [#allocation7]
        $region20: #{tpu_custom_call.1} parent=11 // pred_fallthru
          _
        // Predicated region
        $region21: #{tpu_custom_call.1} parent=11 // pred_check
          %p493 = pneg %p132
        $region22: #{tpu_custom_call.1} parent=11 // pred_check_branch
          %495 = sbr.rel (%p493) target = $region24
        $region23: #{tpu_custom_call.1} parent=11 // pred_region
          %497 = vsyncadd [#allocation10], 0
          %s498 = sshll.u32 %s4, 4
          %s499 = int_to_ptr.hbm [resolvable:$true] %s498
          %s500 = sshll.u32 [#allocation9], 4
          %s501 = int_to_ptr.vmem [resolvable:$true] %s500
          %506 = dma.hbm_to_vmem [thread:$0]  %s499, 16384, %s501, [#allocation10], 256, 256, 16
        $region24: #{tpu_custom_call.1} parent=11 // pred_fallthru
          _
        // Predicated region
        $region25: #{tpu_custom_call.1} parent=11 // pred_check
          %p507 = pneg %p153
        $region26: #{tpu_custom_call.1} parent=11 // pred_check_branch
          %509 = sbr.rel (%p507) target = $region28
        $region27: #{tpu_custom_call.1} parent=11 // pred_region
          _
        $region28: #{tpu_custom_call.1} parent=11 // pred_fallthru
          _
        // Predicated region
        $region29: #{tpu_custom_call.1} parent=11 // pred_check
          %p510 = pneg %p174
        $region30: #{tpu_custom_call.1} parent=11 // pred_check_branch
          %512 = sbr.rel (%p510) target = $region32
        $region31: #{tpu_custom_call.1} parent=11 // pred_region
          %514 = vsyncadd [#allocation10], 0
          %s515 = sshll.u32 %s6, 4
          %s516 = int_to_ptr.hbm [resolvable:$true] %s515
          %s517 = sshll.u32 [#allocation11], 4
          %s518 = int_to_ptr.vmem [resolvable:$true] %s517
          %523 = dma.hbm_to_vmem [thread:$0]  %s516, 4096, %s518, [#allocation10], 64, 64, 4
        $region32: #{tpu_custom_call.1} parent=11 // pred_fallthru
          _
        // Predicated region
        $region33: #{tpu_custom_call.1} parent=11 // pred_check
          %p524 = pneg %p195
        $region34: #{tpu_custom_call.1} parent=11 // pred_check_branch
          %526 = sbr.rel (%p524) target = $region36
        $region35: #{tpu_custom_call.1} parent=11 // pred_region
          %528 = vsyncadd [#allocation13], 0
          %s530 = sshll.u32 %s7, 4
          %s531 = int_to_ptr.hbm [resolvable:$true] %s530
          %s532 = sshll.u32 [#allocation12], 4
          %s533 = int_to_ptr.vmem [resolvable:$true] %s532
          %535 = dma.hbm_to_vmem [thread:$0]  %s531, 16, %s533, [#allocation13]
        $region36: #{tpu_custom_call.1} parent=11 // pred_fallthru
          _
        // Predicated region
        $region37: #{tpu_custom_call.1} parent=11 // pred_check
          %p536 = pneg %p216
        $region38: #{tpu_custom_call.1} parent=11 // pred_check_branch
          %538 = sbr.rel (%p536) target = $region40
        $region39: #{tpu_custom_call.1} parent=11 // pred_region
          %540 = vsyncadd [#allocation13], 0
          %s541 = sshll.u32 %s8, 4
          %s542 = int_to_ptr.hbm [resolvable:$true] %s541
          %s543 = sshll.u32 [#allocation14], 4
          %s544 = int_to_ptr.vmem [resolvable:$true] %s543
          %549 = dma.hbm_to_vmem [thread:$0]  %s542, 4096, %s544, [#allocation13], 256, 256, 16
        $region40: #{tpu_custom_call.1} parent=11 // pred_fallthru
          _
        // Predicated region
        $region41: #{tpu_custom_call.1} parent=11 // pred_check
          %p550 = pneg %p237
        $region42: #{tpu_custom_call.1} parent=11 // pred_check_branch
          %552 = sbr.rel (%p550) target = $region44
        $region43: #{tpu_custom_call.1} parent=11 // pred_region
          _
        $region44: #{tpu_custom_call.1} parent=11 // pred_fallthru
          _
        // Predicated region
        $region45: #{tpu_custom_call.1} parent=11 // pred_check
          %p553 = pneg %p258
        $region46: #{tpu_custom_call.1} parent=11 // pred_check_branch
          %555 = sbr.rel (%p553) target = $region48
        $region47: #{tpu_custom_call.1} parent=11 // pred_region
          %557 = vsyncadd [#allocation16], 0
          %s558 = sshll.u32 %s10, 4
          %s559 = int_to_ptr.hbm [resolvable:$true] %s558
          %s560 = sshll.u32 [#allocation15], 4
          %s561 = int_to_ptr.vmem [resolvable:$true] %s560
          %566 = dma.hbm_to_vmem [thread:$0]  %s559, 4096, %s561, [#allocation16], 64, 64, 4
        $region48: #{tpu_custom_call.1} parent=11 // pred_fallthru
          _
        // Predicated region
        $region49: #{tpu_custom_call.1} parent=11 // pred_check
          %p567 = pneg %p279
        $region50: #{tpu_custom_call.1} parent=11 // pred_check_branch
          %569 = sbr.rel (%p567) target = $region52
        $region51: #{tpu_custom_call.1} parent=11 // pred_region
          %571 = vsyncadd [#allocation16], 0
          %s573 = sshll.u32 %s11, 4
          %s574 = int_to_ptr.hbm [resolvable:$true] %s573
          %s575 = sshll.u32 [#allocation17], 4
          %s576 = int_to_ptr.vmem [resolvable:$true] %s575
          %578 = dma.hbm_to_vmem [thread:$0]  %s574, 16, %s576, [#allocation16]
        $region52: #{tpu_custom_call.1} parent=11 // pred_fallthru
          _
        // Predicated region
        $region53: #{tpu_custom_call.1} parent=11 // pred_check
          %p579 = pneg %p300
        $region54: #{tpu_custom_call.1} parent=11 // pred_check_branch
          %581 = sbr.rel (%p579) target = $region56
        $region55: #{tpu_custom_call.1} parent=11 // pred_region
          %583 = vsyncadd [#allocation19], 0
          %s584 = sshll.u32 %s12, 4
          %s585 = int_to_ptr.hbm [resolvable:$true] %s584
          %s586 = sshll.u32 [#allocation18], 4
          %s587 = int_to_ptr.vmem [resolvable:$true] %s586
          %592 = dma.hbm_to_vmem [thread:$0]  %s585, 4096, %s587, [#allocation19], 256, 256, 16
        $region56: #{tpu_custom_call.1} parent=11 // pred_fallthru
          _
        // Predicated region
        $region57: #{tpu_custom_call.1} parent=11 // pred_check
          %p593 = pneg %p321
        $region58: #{tpu_custom_call.1} parent=11 // pred_check_branch
          %595 = sbr.rel (%p593) target = $region60
        $region59: #{tpu_custom_call.1} parent=11 // pred_region
          _
        $region60: #{tpu_custom_call.1} parent=11 // pred_fallthru
          _
        // Predicated region
        $region61: #{tpu_custom_call.1} parent=11 // pred_check
          %p596 = pneg %p342
        $region62: #{tpu_custom_call.1} parent=11 // pred_check_branch
          %598 = sbr.rel (%p596) target = $region64
        $region63: #{tpu_custom_call.1} parent=11 // pred_region
          %600 = vsyncadd [#allocation19], 0
          %s601 = sshll.u32 %s14, 4
          %s602 = int_to_ptr.hbm [resolvable:$true] %s601
          %s603 = sshll.u32 [#allocation20], 4
          %s604 = int_to_ptr.vmem [resolvable:$true] %s603
          %609 = dma.hbm_to_vmem [thread:$0]  %s602, 4096, %s604, [#allocation19], 64, 64, 4
        $region64: #{tpu_custom_call.1} parent=11 // pred_fallthru
          _
        // Predicated region
        $region65: #{tpu_custom_call.1} parent=11 // pred_check
          %p610 = pneg %p363
        $region66: #{tpu_custom_call.1} parent=11 // pred_check_branch
          %612 = sbr.rel (%p610) target = $region68
        $region67: #{tpu_custom_call.1} parent=11 // pred_region
          %614 = vsyncadd [#allocation22], 0
          %s616 = sshll.u32 %s15, 4
          %s617 = int_to_ptr.hbm [resolvable:$true] %s616
          %s618 = sshll.u32 [#allocation21], 4
          %s619 = int_to_ptr.vmem [resolvable:$true] %s618
          %621 = dma.hbm_to_vmem [thread:$0]  %s617, 16, %s619, [#allocation22]
        $region68: #{tpu_custom_call.1} parent=11 // pred_fallthru
          _
        // Predicated region
        $region69: #{tpu_custom_call.1} parent=11 // pred_check
          %p622 = pneg %p384
        $region70: #{tpu_custom_call.1} parent=11 // pred_check_branch
          %624 = sbr.rel (%p622) target = $region72
        $region71: #{tpu_custom_call.1} parent=11 // pred_region
          %626 = vsyncadd [#allocation22], 0
          %s627 = sshll.u32 %s16, 4
          %s628 = int_to_ptr.hbm [resolvable:$true] %s627
          %s629 = sshll.u32 [#allocation23], 4
          %s630 = int_to_ptr.vmem [resolvable:$true] %s629
          %635 = dma.hbm_to_vmem [thread:$0]  %s628, 4096, %s630, [#allocation22], 256, 256, 16
        $region72: #{tpu_custom_call.1} parent=11 // pred_fallthru
          _
        // Predicated region
        $region73: #{tpu_custom_call.1} parent=11 // pred_check
          %p636 = pneg %p405
        $region74: #{tpu_custom_call.1} parent=11 // pred_check_branch
          %638 = sbr.rel (%p636) target = $region76
        $region75: #{tpu_custom_call.1} parent=11 // pred_region
          _
        $region76: #{tpu_custom_call.1} parent=11 // pred_fallthru
          _
        // Predicated region
        $region77: #{tpu_custom_call.1} parent=11 // pred_check
          %p639 = pneg %p426
        $region78: #{tpu_custom_call.1} parent=11 // pred_check_branch
          %641 = sbr.rel (%p639) target = $region80
        $region79: #{tpu_custom_call.1} parent=11 // pred_region
          %643 = vsyncadd [#allocation25], 0
          %s645 = sshll.u32 %s18, 4
          %s646 = int_to_ptr.hbm [resolvable:$true] %s645
          %s647 = sshll.u32 [#allocation24], 4
          %s648 = int_to_ptr.vmem [resolvable:$true] %s647
          %650 = dma.hbm_to_vmem [thread:$0]  %s646, 64, %s648, [#allocation25]
        $region80: #{tpu_custom_call.1} parent=11 // pred_fallthru
          _
      $region12: #{tpu_custom_call.1} parent=5 // pred_fallthru
        _
      %p651 = scmp.lt.s32.totalorder %s43, 2
      // Predicated region
      $region81: #{tpu_custom_call.1} parent=5 // pred_check
        %p652 = pneg %p651
      $region82: #{tpu_custom_call.1} parent=5 // pred_check_branch
        %654 = sbr.rel (%p652) target = $region84
      $region83: #{tpu_custom_call.1} parent=5 // pred_region
        // Predicated region
        $region85: #{tpu_custom_call.1} parent=83 // pred_check
          %p655 = pneg %p63
        $region86: #{tpu_custom_call.1} parent=83 // pred_check_branch
          %657 = sbr.rel (%p655) target = $region88
        $region87: #{tpu_custom_call.1} parent=83 // pred_region
          %s658 = sand.u32 %s53, 1
          %s659 = scalar_lea.sflag [#allocation5], %s658
          %s660 = sand.u32 %s53, 1
          %s661 = smul.addr %s660, 128
          %s662 = scalar_lea.vmem [#allocation4], %s661
          %s663 = smul.u32 16, %s43
          %665 = vsyncadd %s659, 0
          %s666 = smul.addr %s663, 8
          %s667 = scalar_lea.hbm %s1, %s666
          %s668 = sshll.u32 %s667, 4
          %s669 = int_to_ptr.hbm [resolvable:$true] %s668
          %s670 = sshll.u32 %s662, 4
          %s671 = int_to_ptr.vmem [resolvable:$true] %s670
          %676 = dma.hbm_to_vmem [thread:$0]  %s669, 2048, %s671, %s659, 128, 128, 8
        $region88: #{tpu_custom_call.1} parent=83 // pred_fallthru
          _
      $region84: #{tpu_custom_call.1} parent=5 // pred_fallthru
        _
      %p677 = scmp.le.s32.totalorder 1, %s43
      %p678 = scmp.lt.s32.totalorder %s43, 3
      %p679 = pnand %p677, %p678
      %p680 = pneg %p679
      // Predicated region
      $region89: #{tpu_custom_call.1} parent=5 // pred_check
        _
      $region90: #{tpu_custom_call.1} parent=5 // pred_check_branch
        %682 = sbr.rel (%p679) target = $region92
      $region91: #{tpu_custom_call.1} parent=5 // pred_region
        %s683 = ssub.s32 %s43, 1
        %s684 = sand.u32 %s56, 1
        %s685 = scalar_lea.sflag [#allocation5], %s684
        %s686 = sand.u32 %s56, 1
        %s687 = smul.addr %s686, 128
        %s688 = scalar_lea.vmem [#allocation4], %s687
        // Predicated region
        $region93: #{tpu_custom_call.1} parent=91 // pred_check
          %p689 = pneg %p69
        $region94: #{tpu_custom_call.1} parent=91 // pred_check_branch
          %691 = sbr.rel (%p689) target = $region96
        $region95: #{tpu_custom_call.1} parent=91 // pred_region
          %693 = dma.done %s685, 2048
        $region96: #{tpu_custom_call.1} parent=91 // pred_fallthru
          _
        // Predicated region
        $region97: #{tpu_custom_call.1} parent=91 // pred_check
          %p694 = pneg %p90
        $region98: #{tpu_custom_call.1} parent=91 // pred_check_branch
          %696 = sbr.rel (%p694) target = $region100
        $region99: #{tpu_custom_call.1} parent=91 // pred_region
          %698 = dma.done [#allocation7], 4096
        $region100: #{tpu_custom_call.1} parent=91 // pred_fallthru
          _
        // Predicated region
        $region101: #{tpu_custom_call.1} parent=91 // pred_check
          %p699 = pneg %p111
        $region102: #{tpu_custom_call.1} parent=91 // pred_check_branch
          %701 = sbr.rel (%p699) target = $region104
        $region103: #{tpu_custom_call.1} parent=91 // pred_region
          %703 = dma.done [#allocation7], 64
        $region104: #{tpu_custom_call.1} parent=91 // pred_fallthru
          _
        // Predicated region
        $region105: #{tpu_custom_call.1} parent=91 // pred_check
          %p704 = pneg %p132
        $region106: #{tpu_custom_call.1} parent=91 // pred_check_branch
          %706 = sbr.rel (%p704) target = $region108
        $region107: #{tpu_custom_call.1} parent=91 // pred_region
          %708 = dma.done [#allocation10], 16384
        $region108: #{tpu_custom_call.1} parent=91 // pred_fallthru
          _
        // Predicated region
        $region109: #{tpu_custom_call.1} parent=91 // pred_check
          %p709 = pneg %p174
        $region110: #{tpu_custom_call.1} parent=91 // pred_check_branch
          %711 = sbr.rel (%p709) target = $region112
        $region111: #{tpu_custom_call.1} parent=91 // pred_region
          %713 = dma.done [#allocation10], 4096
        $region112: #{tpu_custom_call.1} parent=91 // pred_fallthru
          _
        // Predicated region
        $region113: #{tpu_custom_call.1} parent=91 // pred_check
          %p714 = pneg %p195
        $region114: #{tpu_custom_call.1} parent=91 // pred_check_branch
          %716 = sbr.rel (%p714) target = $region116
        $region115: #{tpu_custom_call.1} parent=91 // pred_region
          %718 = dma.done [#allocation13], 16
        $region116: #{tpu_custom_call.1} parent=91 // pred_fallthru
          _
        // Predicated region
        $region117: #{tpu_custom_call.1} parent=91 // pred_check
          %p719 = pneg %p216
        $region118: #{tpu_custom_call.1} parent=91 // pred_check_branch
          %721 = sbr.rel (%p719) target = $region120
        $region119: #{tpu_custom_call.1} parent=91 // pred_region
          %723 = dma.done [#allocation13], 4096
        $region120: #{tpu_custom_call.1} parent=91 // pred_fallthru
          _
        // Predicated region
        $region121: #{tpu_custom_call.1} parent=91 // pred_check
          %p724 = pneg %p258
        $region122: #{tpu_custom_call.1} parent=91 // pred_check_branch
          %726 = sbr.rel (%p724) target = $region124
        $region123: #{tpu_custom_call.1} parent=91 // pred_region
          %728 = dma.done [#allocation16], 4096
        $region124: #{tpu_custom_call.1} parent=91 // pred_fallthru
          _
        // Predicated region
        $region125: #{tpu_custom_call.1} parent=91 // pred_check
          %p729 = pneg %p279
        $region126: #{tpu_custom_call.1} parent=91 // pred_check_branch
          %731 = sbr.rel (%p729) target = $region128
        $region127: #{tpu_custom_call.1} parent=91 // pred_region
          %733 = dma.done [#allocation16], 16
        $region128: #{tpu_custom_call.1} parent=91 // pred_fallthru
          _
        // Predicated region
        $region129: #{tpu_custom_call.1} parent=91 // pred_check
          %p734 = pneg %p300
        $region130: #{tpu_custom_call.1} parent=91 // pred_check_branch
          %736 = sbr.rel (%p734) target = $region132
        $region131: #{tpu_custom_call.1} parent=91 // pred_region
          %738 = dma.done [#allocation19], 4096
        $region132: #{tpu_custom_call.1} parent=91 // pred_fallthru
          _
        // Predicated region
        $region133: #{tpu_custom_call.1} parent=91 // pred_check
          %p739 = pneg %p342
        $region134: #{tpu_custom_call.1} parent=91 // pred_check_branch
          %741 = sbr.rel (%p739) target = $region136
        $region135: #{tpu_custom_call.1} parent=91 // pred_region
          %743 = dma.done [#allocation19], 4096
        $region136: #{tpu_custom_call.1} parent=91 // pred_fallthru
          _
        // Predicated region
        $region137: #{tpu_custom_call.1} parent=91 // pred_check
          %p744 = pneg %p363
        $region138: #{tpu_custom_call.1} parent=91 // pred_check_branch
          %746 = sbr.rel (%p744) target = $region140
        $region139: #{tpu_custom_call.1} parent=91 // pred_region
          %748 = dma.done [#allocation22], 16
        $region140: #{tpu_custom_call.1} parent=91 // pred_fallthru
          _
        // Predicated region
        $region141: #{tpu_custom_call.1} parent=91 // pred_check
          %p749 = pneg %p384
        $region142: #{tpu_custom_call.1} parent=91 // pred_check_branch
          %751 = sbr.rel (%p749) target = $region144
        $region143: #{tpu_custom_call.1} parent=91 // pred_region
          %753 = dma.done [#allocation22], 4096
        $region144: #{tpu_custom_call.1} parent=91 // pred_fallthru
          _
        // Predicated region
        $region145: #{tpu_custom_call.1} parent=91 // pred_check
          %p754 = pneg %p426
        $region146: #{tpu_custom_call.1} parent=91 // pred_check_branch
          %756 = sbr.rel (%p754) target = $region148
        $region147: #{tpu_custom_call.1} parent=91 // pred_region
          %758 = dma.done [#allocation25], 64
        $region148: #{tpu_custom_call.1} parent=91 // pred_fallthru
          _
        %s759 = sand.u32 %s56, 1
        %s760 = scalar_lea.sflag [#allocation5], %s759
        %s761 = sand.u32 %s56, 1
        %s762 = smul.addr %s761, 128
        %s763 = scalar_lea.vmem [#allocation4], %s762
        %p764 = pneg %p69
        %p765 = pneg %p66
        %p766 = pneg %p90
        %p767 = pneg %p87
        %p768 = pneg %p111
        %p769 = pneg %p108
        %p770 = pneg %p132
        %p771 = pneg %p129
        %p772 = pneg %p153
        %p773 = pneg %p150
        %p774 = pneg %p174
        %p775 = pneg %p171
        %p776 = pneg %p195
        %p777 = pneg %p192
        %p778 = pneg %p216
        %p779 = pneg %p213
        %p780 = pneg %p237
        %p781 = pneg %p234
        %p782 = pneg %p258
        %p783 = pneg %p255
        %p784 = pneg %p279
        %p785 = pneg %p276
        %p786 = pneg %p300
        %p787 = pneg %p297
        %p788 = pneg %p321
        %p789 = pneg %p318
        %p790 = pneg %p342
        %p791 = pneg %p339
        %p792 = pneg %p363
        %p793 = pneg %p360
        %p794 = pneg %p384
        %p795 = pneg %p381
        %p796 = pneg %p405
        %p797 = pneg %p402
        %p798 = pneg %p426
        %p799 = pneg %p423
        %p800 = pneg %p452
        %p801 = pneg %p449
        %s802 = smul.u32 16, %s48
        %p803 = scmp.lt.s32.totalorder %s802, 31
        %s804 = scalar_select %p803, %s802, 31
        %s805 = smul.addr %s804, 8
        %s806 = scalar_lea.vmem %s19, %s805
        %s807 = smul.u32 16, %s48
        %s808 = smul.u32 16, %s48
        %p809 = scmp.lt.s32.totalorder %s808, 31
        %s810 = scalar_select %p809, %s808, 31
        %s811 = smul.addr %s810, 8
        %s812 = scalar_lea.vmem %s19, %s811
        %s813 = smul.u32 16, %s48
        %s814 = sld [smem:[#allocation3]]
        %s815 = sld [smem:[#allocation3 + $0x1]]
        %s816 = sld [smem:[#allocation3 + $0x2]]
        %s817 = sld [smem:[#allocation3 + $0x3]]
        %s818 = sld [smem:[#allocation3 + $0x4]]
        %s819 = sld [smem:[#allocation3 + $0x5]]
        %v820 = vld [vmem:[%s688] sm:$0xff]
        %v821 = vld [vmem:[%s688 + $0x8] sm:$0xff]
        %v822 = vld [vmem:[%s688 + $0x10] sm:$0xff]
        %v823 = vld [vmem:[%s688 + $0x18] sm:$0xff]
        %v824 = vld [vmem:[%s688 + $0x20] sm:$0xff]
        %v825 = vld [vmem:[%s688 + $0x28] sm:$0xff]
        %v826 = vld [vmem:[%s688 + $0x30] sm:$0xff]
        %v827 = vld [vmem:[%s688 + $0x38] sm:$0xff]
        %v828 = vld [vmem:[%s688 + $0x40] sm:$0xff]
        %v829 = vld [vmem:[%s688 + $0x48] sm:$0xff]
        %v830 = vld [vmem:[%s688 + $0x50] sm:$0xff]
        %v831 = vld [vmem:[%s688 + $0x58] sm:$0xff]
        %v832 = vld [vmem:[%s688 + $0x60] sm:$0xff]
        %v833 = vld [vmem:[%s688 + $0x68] sm:$0xff]
        %v834 = vld [vmem:[%s688 + $0x70] sm:$0xff]
        %v835 = vld [vmem:[%s688 + $0x78] sm:$0xff]
        %v836 = vpack.c.bf16 %v821, %v820
        %v837 = vpack.c.bf16 %v823, %v822
        %v838 = vpack.c.bf16 %v825, %v824
        %v839 = vpack.c.bf16 %v827, %v826
        %v840 = vpack.c.bf16 %v829, %v828
        %v841 = vpack.c.bf16 %v831, %v830
        %v842 = vpack.c.bf16 %v833, %v832
        %v843 = vpack.c.bf16 %v835, %v834
        %v844 = vld [vmem:[#allocation6] sm:$0xff]
        %v845 = vld [vmem:[#allocation6 + $0x8] sm:$0xff]
        %v846 = vld [vmem:[#allocation6 + $0x10] sm:$0xff]
        %v847 = vld [vmem:[#allocation6 + $0x18] sm:$0xff]
        %v848 = vld [vmem:[#allocation6 + $0x20] sm:$0xff]
        %v849 = vld [vmem:[#allocation6 + $0x28] sm:$0xff]
        %v850 = vld [vmem:[#allocation6 + $0x30] sm:$0xff]
        %v851 = vld [vmem:[#allocation6 + $0x38] sm:$0xff]
        %v852 = vld [vmem:[#allocation6 + $0x40] sm:$0xff]
        %v853 = vld [vmem:[#allocation6 + $0x48] sm:$0xff]
        %v854 = vld [vmem:[#allocation6 + $0x50] sm:$0xff]
        %v855 = vld [vmem:[#allocation6 + $0x58] sm:$0xff]
        %v856 = vld [vmem:[#allocation6 + $0x60] sm:$0xff]
        %v857 = vld [vmem:[#allocation6 + $0x68] sm:$0xff]
        %v858 = vld [vmem:[#allocation6 + $0x70] sm:$0xff]
        %v859 = vld [vmem:[#allocation6 + $0x78] sm:$0xff]
        %v860 = vld [vmem:[#allocation6 + $0x80] sm:$0xff]
        %v861 = vld [vmem:[#allocation6 + $0x88] sm:$0xff]
        %v862 = vld [vmem:[#allocation6 + $0x90] sm:$0xff]
        %v863 = vld [vmem:[#allocation6 + $0x98] sm:$0xff]
        %v864 = vld [vmem:[#allocation6 + $0xa0] sm:$0xff]
        %v865 = vld [vmem:[#allocation6 + $0xa8] sm:$0xff]
        %v866 = vld [vmem:[#allocation6 + $0xb0] sm:$0xff]
        %v867 = vld [vmem:[#allocation6 + $0xb8] sm:$0xff]
        %v868 = vld [vmem:[#allocation6 + $0xc0] sm:$0xff]
        %v869 = vld [vmem:[#allocation6 + $0xc8] sm:$0xff]
        %v870 = vld [vmem:[#allocation6 + $0xd0] sm:$0xff]
        %v871 = vld [vmem:[#allocation6 + $0xd8] sm:$0xff]
        %v872 = vld [vmem:[#allocation6 + $0xe0] sm:$0xff]
        %v873 = vld [vmem:[#allocation6 + $0xe8] sm:$0xff]
        %v874 = vld [vmem:[#allocation6 + $0xf0] sm:$0xff]
        %v875 = vld [vmem:[#allocation6 + $0xf8] sm:$0xff]
        %v876 = vld [vmem:[#allocation8] sm:$0xf]
        %v878 = vperm.slane %v876, 0
        %v879 = vperm.slane %v876, 1
        %v880 = vperm.slane %v876, 2
        %v881 = vperm.slane %v876, 3
        %v918 = vunpack.c.l.b16 %v844
        %v919 = vunpack.c.h.b16 %v844
        %v920 = vunpack.c.l.b16 %v845
        %v921 = vunpack.c.h.b16 %v845
        %v922 = vunpack.c.l.b16 %v846
        %v923 = vunpack.c.h.b16 %v846
        %v924 = vunpack.c.l.b16 %v847
        %v925 = vunpack.c.h.b16 %v847
        %v926 = vunpack.c.l.b16 %v848
        %v927 = vunpack.c.h.b16 %v848
        %v928 = vunpack.c.l.b16 %v849
        %v929 = vunpack.c.h.b16 %v849
        %v930 = vunpack.c.l.b16 %v850
        %v931 = vunpack.c.h.b16 %v850
        %v932 = vunpack.c.l.b16 %v851
        %v933 = vunpack.c.h.b16 %v851
        %v934 = vunpack.c.l.b16 %v852
        %v935 = vunpack.c.h.b16 %v852
        %v936 = vunpack.c.l.b16 %v853
        %v937 = vunpack.c.h.b16 %v853
        %v938 = vunpack.c.l.b16 %v854
        %v939 = vunpack.c.h.b16 %v854
        %v940 = vunpack.c.l.b16 %v855
        %v941 = vunpack.c.h.b16 %v855
        %v942 = vunpack.c.l.b16 %v856
        %v943 = vunpack.c.h.b16 %v856
        %v944 = vunpack.c.l.b16 %v857
        %v945 = vunpack.c.h.b16 %v857
        %v946 = vunpack.c.l.b16 %v858
        %v947 = vunpack.c.h.b16 %v858
        %v948 = vunpack.c.l.b16 %v859
        %v949 = vunpack.c.h.b16 %v859
        %v950 = vunpack.c.l.b16 %v860
        %v951 = vunpack.c.h.b16 %v860
        %v952 = vunpack.c.l.b16 %v861
        %v953 = vunpack.c.h.b16 %v861
        %v954 = vunpack.c.l.b16 %v862
        %v955 = vunpack.c.h.b16 %v862
        %v956 = vunpack.c.l.b16 %v863
        %v957 = vunpack.c.h.b16 %v863
        %v958 = vunpack.c.l.b16 %v864
        %v959 = vunpack.c.h.b16 %v864
        %v960 = vunpack.c.l.b16 %v865
        %v961 = vunpack.c.h.b16 %v865
        %v962 = vunpack.c.l.b16 %v866
        %v963 = vunpack.c.h.b16 %v866
        %v964 = vunpack.c.l.b16 %v867
        %v965 = vunpack.c.h.b16 %v867
        %v966 = vunpack.c.l.b16 %v868
        %v967 = vunpack.c.h.b16 %v868
        %v968 = vunpack.c.l.b16 %v869
        %v969 = vunpack.c.h.b16 %v869
        %v970 = vunpack.c.l.b16 %v870
        %v971 = vunpack.c.h.b16 %v870
        %v972 = vunpack.c.l.b16 %v871
        %v973 = vunpack.c.h.b16 %v871
        %v974 = vunpack.c.l.b16 %v872
        %v975 = vunpack.c.h.b16 %v872
        %v976 = vunpack.c.l.b16 %v873
        %v977 = vunpack.c.h.b16 %v873
        %v978 = vunpack.c.l.b16 %v874
        %v979 = vunpack.c.h.b16 %v874
        %v980 = vunpack.c.l.b16 %v875
        %v981 = vunpack.c.h.b16 %v875
        %v982 = vpack.c.b16 %v922, %v918
        %v983 = vpack.c.b16 %v923, %v919
        %v984 = vpack.c.b16 %v924, %v920
        %v985 = vpack.c.b16 %v925, %v921
        %v986 = vpack.c.b16 %v930, %v926
        %v987 = vpack.c.b16 %v931, %v927
        %v988 = vpack.c.b16 %v932, %v928
        %v989 = vpack.c.b16 %v933, %v929
        %v990 = vpack.c.b16 %v938, %v934
        %v991 = vpack.c.b16 %v939, %v935
        %v992 = vpack.c.b16 %v940, %v936
        %v993 = vpack.c.b16 %v941, %v937
        %v994 = vpack.c.b16 %v946, %v942
        %v995 = vpack.c.b16 %v947, %v943
        %v996 = vpack.c.b16 %v948, %v944
        %v997 = vpack.c.b16 %v949, %v945
        %v998 = vpack.c.b16 %v954, %v950
        %v999 = vpack.c.b16 %v955, %v951
        %v1000 = vpack.c.b16 %v956, %v952
        %v1001 = vpack.c.b16 %v957, %v953
        %v1002 = vpack.c.b16 %v962, %v958
        %v1003 = vpack.c.b16 %v963, %v959
        %v1004 = vpack.c.b16 %v964, %v960
        %v1005 = vpack.c.b16 %v965, %v961
        %v1006 = vpack.c.b16 %v970, %v966
        %v1007 = vpack.c.b16 %v971, %v967
        %v1008 = vpack.c.b16 %v972, %v968
        %v1009 = vpack.c.b16 %v973, %v969
        %v1010 = vpack.c.b16 %v978, %v974
        %v1011 = vpack.c.b16 %v979, %v975
        %v1012 = vpack.c.b16 %v980, %v976
        %v1013 = vpack.c.b16 %v981, %v977
        %1046 = vmatpush.bf16.msra.mxu0 %v1010
        %1047 = vmatpush.bf16.msra.mxu0 %v1006
        %1048 = vmatpush.bf16.msra.mxu0 %v1002
        %1049 = vmatpush.bf16.msra.mxu0 %v998
        %1050 = vmatpush.bf16.msra.mxu0 %v994
        %1051 = vmatpush.bf16.msra.mxu0 %v990
        %1052 = vmatpush.bf16.msra.mxu0 %v986
        %1053 = vmatpush.bf16.msra.mxu0 %v982
        %1054 = vmatmul.bf16.gmra.mxu0 %v836
        %v1055 = vpop.f32.mrf.mxu0
        %v1056 = vadd.f32 %v878, %v1055
        %v1057 = vpop.f32.mrf.mxu0
        %v1058 = vadd.f32 %v878, %v1057
        %1059 = vmatmul.bf16.gmra.mxu0 %v837
        %v1060 = vpop.f32.mrf.mxu0
        %v1061 = vadd.f32 %v878, %v1060
        %v1062 = vpop.f32.mrf.mxu0
        %v1063 = vadd.f32 %v878, %v1062
        %1064 = vmatmul.bf16.gmra.mxu0 %v838
        %v1065 = vpop.f32.mrf.mxu0
        %v1066 = vadd.f32 %v878, %v1065
        %v1067 = vpop.f32.mrf.mxu0
        %v1068 = vadd.f32 %v878, %v1067
        %1069 = vmatmul.bf16.gmra.mxu0 %v839
        %v1070 = vpop.f32.mrf.mxu0
        %v1071 = vadd.f32 %v878, %v1070
        %v1072 = vpop.f32.mrf.mxu0
        %v1073 = vadd.f32 %v878, %v1072
        %1074 = vmatmul.bf16.gmra.mxu0 %v840
        %v1075 = vpop.f32.mrf.mxu0
        %v1076 = vadd.f32 %v878, %v1075
        %v1077 = vpop.f32.mrf.mxu0
        %v1078 = vadd.f32 %v878, %v1077
        %1079 = vmatmul.bf16.gmra.mxu0 %v841
        %v1080 = vpop.f32.mrf.mxu0
        %v1081 = vadd.f32 %v878, %v1080
        %v1082 = vpop.f32.mrf.mxu0
        %v1083 = vadd.f32 %v878, %v1082
        %1084 = vmatmul.bf16.gmra.mxu0 %v842
        %v1085 = vpop.f32.mrf.mxu0
        %v1086 = vadd.f32 %v878, %v1085
        %v1087 = vpop.f32.mrf.mxu0
        %v1088 = vadd.f32 %v878, %v1087
        %1089 = vmatmul.bf16.gmra.mxu0 %v843
        %v1090 = vpop.f32.mrf.mxu0
        %v1091 = vadd.f32 %v878, %v1090
        %v1092 = vpop.f32.mrf.mxu0
        %v1093 = vadd.f32 %v878, %v1092
        %1094 = vdwg.mxu0
        %1095 = vmatpush.bf16.msra.mxu0 %v1011
        %1096 = vmatpush.bf16.msra.mxu0 %v1007
        %1097 = vmatpush.bf16.msra.mxu0 %v1003
        %1098 = vmatpush.bf16.msra.mxu0 %v999
        %1099 = vmatpush.bf16.msra.mxu0 %v995
        %1100 = vmatpush.bf16.msra.mxu0 %v991
        %1101 = vmatpush.bf16.msra.mxu0 %v987
        %1102 = vmatpush.bf16.msra.mxu0 %v983
        %1103 = vmatmul.bf16.gmra.mxu0 %v836
        %v1104 = vpop.f32.mrf.mxu0
        %v1105 = vadd.f32 %v879, %v1104
        %v1106 = vpop.f32.mrf.mxu0
        %v1107 = vadd.f32 %v879, %v1106
        %1108 = vmatmul.bf16.gmra.mxu0 %v837
        %v1109 = vpop.f32.mrf.mxu0
        %v1110 = vadd.f32 %v879, %v1109
        %v1111 = vpop.f32.mrf.mxu0
        %v1112 = vadd.f32 %v879, %v1111
        %1113 = vmatmul.bf16.gmra.mxu0 %v838
        %v1114 = vpop.f32.mrf.mxu0
        %v1115 = vadd.f32 %v879, %v1114
        %v1116 = vpop.f32.mrf.mxu0
        %v1117 = vadd.f32 %v879, %v1116
        %1118 = vmatmul.bf16.gmra.mxu0 %v839
        %v1119 = vpop.f32.mrf.mxu0
        %v1120 = vadd.f32 %v879, %v1119
        %v1121 = vpop.f32.mrf.mxu0
        %v1122 = vadd.f32 %v879, %v1121
        %1123 = vmatmul.bf16.gmra.mxu0 %v840
        %v1124 = vpop.f32.mrf.mxu0
        %v1125 = vadd.f32 %v879, %v1124
        %v1126 = vpop.f32.mrf.mxu0
        %v1127 = vadd.f32 %v879, %v1126
        %1128 = vmatmul.bf16.gmra.mxu0 %v841
        %v1129 = vpop.f32.mrf.mxu0
        %v1130 = vadd.f32 %v879, %v1129
        %v1131 = vpop.f32.mrf.mxu0
        %v1132 = vadd.f32 %v879, %v1131
        %1133 = vmatmul.bf16.gmra.mxu0 %v842
        %v1134 = vpop.f32.mrf.mxu0
        %v1135 = vadd.f32 %v879, %v1134
        %v1136 = vpop.f32.mrf.mxu0
        %v1137 = vadd.f32 %v879, %v1136
        %1138 = vmatmul.bf16.gmra.mxu0 %v843
        %v1139 = vpop.f32.mrf.mxu0
        %v1140 = vadd.f32 %v879, %v1139
        %v1141 = vpop.f32.mrf.mxu0
        %v1142 = vadd.f32 %v879, %v1141
        %1143 = vdwg.mxu0
        %1144 = vmatpush.bf16.msra.mxu0 %v1012
        %1145 = vmatpush.bf16.msra.mxu0 %v1008
        %1146 = vmatpush.bf16.msra.mxu0 %v1004
        %1147 = vmatpush.bf16.msra.mxu0 %v1000
        %1148 = vmatpush.bf16.msra.mxu0 %v996
        %1149 = vmatpush.bf16.msra.mxu0 %v992
        %1150 = vmatpush.bf16.msra.mxu0 %v988
        %1151 = vmatpush.bf16.msra.mxu0 %v984
        %1152 = vmatmul.bf16.gmra.mxu0 %v836
        %v1153 = vpop.f32.mrf.mxu0
        %v1154 = vadd.f32 %v880, %v1153
        %v1155 = vpop.f32.mrf.mxu0
        %v1156 = vadd.f32 %v880, %v1155
        %1157 = vmatmul.bf16.gmra.mxu0 %v837
        %v1158 = vpop.f32.mrf.mxu0
        %v1159 = vadd.f32 %v880, %v1158
        %v1160 = vpop.f32.mrf.mxu0
        %v1161 = vadd.f32 %v880, %v1160
        %1162 = vmatmul.bf16.gmra.mxu0 %v838
        %v1163 = vpop.f32.mrf.mxu0
        %v1164 = vadd.f32 %v880, %v1163
        %v1165 = vpop.f32.mrf.mxu0
        %v1166 = vadd.f32 %v880, %v1165
        %1167 = vmatmul.bf16.gmra.mxu0 %v839
        %v1168 = vpop.f32.mrf.mxu0
        %v1169 = vadd.f32 %v880, %v1168
        %v1170 = vpop.f32.mrf.mxu0
        %v1171 = vadd.f32 %v880, %v1170
        %1172 = vmatmul.bf16.gmra.mxu0 %v840
        %v1173 = vpop.f32.mrf.mxu0
        %v1174 = vadd.f32 %v880, %v1173
        %v1175 = vpop.f32.mrf.mxu0
        %v1176 = vadd.f32 %v880, %v1175
        %1177 = vmatmul.bf16.gmra.mxu0 %v841
        %v1178 = vpop.f32.mrf.mxu0
        %v1179 = vadd.f32 %v880, %v1178
        %v1180 = vpop.f32.mrf.mxu0
        %v1181 = vadd.f32 %v880, %v1180
        %1182 = vmatmul.bf16.gmra.mxu0 %v842
        %v1183 = vpop.f32.mrf.mxu0
        %v1184 = vadd.f32 %v880, %v1183
        %v1185 = vpop.f32.mrf.mxu0
        %v1186 = vadd.f32 %v880, %v1185
        %1187 = vmatmul.bf16.gmra.mxu0 %v843
        %v1188 = vpop.f32.mrf.mxu0
        %v1189 = vadd.f32 %v880, %v1188
        %v1190 = vpop.f32.mrf.mxu0
        %v1191 = vadd.f32 %v880, %v1190
        %1192 = vdwg.mxu0
        %1193 = vmatpush.bf16.msra.mxu0 %v1013
        %1194 = vmatpush.bf16.msra.mxu0 %v1009
        %1195 = vmatpush.bf16.msra.mxu0 %v1005
        %1196 = vmatpush.bf16.msra.mxu0 %v1001
        %1197 = vmatpush.bf16.msra.mxu0 %v997
        %1198 = vmatpush.bf16.msra.mxu0 %v993
        %1199 = vmatpush.bf16.msra.mxu0 %v989
        %1200 = vmatpush.bf16.msra.mxu0 %v985
        %1201 = vmatmul.bf16.gmra.mxu0 %v836
        %v1202 = vpop.f32.mrf.mxu0
        %v1203 = vadd.f32 %v881, %v1202
        %v1204 = vpop.f32.mrf.mxu0
        %v1205 = vadd.f32 %v881, %v1204
        %1206 = vmatmul.bf16.gmra.mxu0 %v837
        %v1207 = vpop.f32.mrf.mxu0
        %v1208 = vadd.f32 %v881, %v1207
        %v1209 = vpop.f32.mrf.mxu0
        %v1210 = vadd.f32 %v881, %v1209
        %1211 = vmatmul.bf16.gmra.mxu0 %v838
        %v1212 = vpop.f32.mrf.mxu0
        %v1213 = vadd.f32 %v881, %v1212
        %v1214 = vpop.f32.mrf.mxu0
        %v1215 = vadd.f32 %v881, %v1214
        %1216 = vmatmul.bf16.gmra.mxu0 %v839
        %v1217 = vpop.f32.mrf.mxu0
        %v1218 = vadd.f32 %v881, %v1217
        %v1219 = vpop.f32.mrf.mxu0
        %v1220 = vadd.f32 %v881, %v1219
        %1221 = vmatmul.bf16.gmra.mxu0 %v840
        %v1222 = vpop.f32.mrf.mxu0
        %v1223 = vadd.f32 %v881, %v1222
        %v1224 = vpop.f32.mrf.mxu0
        %v1225 = vadd.f32 %v881, %v1224
        %1226 = vmatmul.bf16.gmra.mxu0 %v841
        %v1227 = vpop.f32.mrf.mxu0
        %v1228 = vadd.f32 %v881, %v1227
        %v1229 = vpop.f32.mrf.mxu0
        %v1230 = vadd.f32 %v881, %v1229
        %1231 = vmatmul.bf16.gmra.mxu0 %v842
        %v1232 = vpop.f32.mrf.mxu0
        %v1233 = vadd.f32 %v881, %v1232
        %v1234 = vpop.f32.mrf.mxu0
        %v1235 = vadd.f32 %v881, %v1234
        %1236 = vmatmul.bf16.gmra.mxu0 %v843
        %v1237 = vpop.f32.mrf.mxu0
        %v1238 = vadd.f32 %v881, %v1237
        %v1239 = vpop.f32.mrf.mxu0
        %v1240 = vadd.f32 %v881, %v1239
        %1241 = vdwg.mxu0
        %vm1242 = vcmp.gt.f32.partialorder %v1056, 0.0
        %vm1243 = vcmp.gt.f32.partialorder %v1105, 0.0
        %vm1244 = vcmp.gt.f32.partialorder %v1154, 0.0
        %vm1245 = vcmp.gt.f32.partialorder %v1203, 0.0
        %vm1246 = vcmp.gt.f32.partialorder %v1058, 0.0
        %vm1247 = vcmp.gt.f32.partialorder %v1107, 0.0
        %vm1248 = vcmp.gt.f32.partialorder %v1156, 0.0
        %vm1249 = vcmp.gt.f32.partialorder %v1205, 0.0
        %vm1250 = vcmp.gt.f32.partialorder %v1061, 0.0
        %vm1251 = vcmp.gt.f32.partialorder %v1110, 0.0
        %vm1252 = vcmp.gt.f32.partialorder %v1159, 0.0
        %vm1253 = vcmp.gt.f32.partialorder %v1208, 0.0
        %vm1254 = vcmp.gt.f32.partialorder %v1063, 0.0
        %vm1255 = vcmp.gt.f32.partialorder %v1112, 0.0
        %vm1256 = vcmp.gt.f32.partialorder %v1161, 0.0
        %vm1257 = vcmp.gt.f32.partialorder %v1210, 0.0
        %vm1258 = vcmp.gt.f32.partialorder %v1066, 0.0
        %vm1259 = vcmp.gt.f32.partialorder %v1115, 0.0
        %vm1260 = vcmp.gt.f32.partialorder %v1164, 0.0
        %vm1261 = vcmp.gt.f32.partialorder %v1213, 0.0
        %vm1262 = vcmp.gt.f32.partialorder %v1068, 0.0
        %vm1263 = vcmp.gt.f32.partialorder %v1117, 0.0
        %vm1264 = vcmp.gt.f32.partialorder %v1166, 0.0
        %vm1265 = vcmp.gt.f32.partialorder %v1215, 0.0
        %vm1266 = vcmp.gt.f32.partialorder %v1071, 0.0
        %vm1267 = vcmp.gt.f32.partialorder %v1120, 0.0
        %vm1268 = vcmp.gt.f32.partialorder %v1169, 0.0
        %vm1269 = vcmp.gt.f32.partialorder %v1218, 0.0
        %vm1270 = vcmp.gt.f32.partialorder %v1073, 0.0
        %vm1271 = vcmp.gt.f32.partialorder %v1122, 0.0
        %vm1272 = vcmp.gt.f32.partialorder %v1171, 0.0
        %vm1273 = vcmp.gt.f32.partialorder %v1220, 0.0
        %vm1274 = vcmp.gt.f32.partialorder %v1076, 0.0
        %vm1275 = vcmp.gt.f32.partialorder %v1125, 0.0
        %vm1276 = vcmp.gt.f32.partialorder %v1174, 0.0
        %vm1277 = vcmp.gt.f32.partialorder %v1223, 0.0
        %vm1278 = vcmp.gt.f32.partialorder %v1078, 0.0
        %vm1279 = vcmp.gt.f32.partialorder %v1127, 0.0
        %vm1280 = vcmp.gt.f32.partialorder %v1176, 0.0
        %vm1281 = vcmp.gt.f32.partialorder %v1225, 0.0
        %vm1282 = vcmp.gt.f32.partialorder %v1081, 0.0
        %vm1283 = vcmp.gt.f32.partialorder %v1130, 0.0
        %vm1284 = vcmp.gt.f32.partialorder %v1179, 0.0
        %vm1285 = vcmp.gt.f32.partialorder %v1228, 0.0
        %vm1286 = vcmp.gt.f32.partialorder %v1083, 0.0
        %vm1287 = vcmp.gt.f32.partialorder %v1132, 0.0
        %vm1288 = vcmp.gt.f32.partialorder %v1181, 0.0
        %vm1289 = vcmp.gt.f32.partialorder %v1230, 0.0
        %vm1290 = vcmp.gt.f32.partialorder %v1086, 0.0
        %vm1291 = vcmp.gt.f32.partialorder %v1135, 0.0
        %vm1292 = vcmp.gt.f32.partialorder %v1184, 0.0
        %vm1293 = vcmp.gt.f32.partialorder %v1233, 0.0
        %vm1294 = vcmp.gt.f32.partialorder %v1088, 0.0
        %vm1295 = vcmp.gt.f32.partialorder %v1137, 0.0
        %vm1296 = vcmp.gt.f32.partialorder %v1186, 0.0
        %vm1297 = vcmp.gt.f32.partialorder %v1235, 0.0
        %vm1298 = vcmp.gt.f32.partialorder %v1091, 0.0
        %vm1299 = vcmp.gt.f32.partialorder %v1140, 0.0
        %vm1300 = vcmp.gt.f32.partialorder %v1189, 0.0
        %vm1301 = vcmp.gt.f32.partialorder %v1238, 0.0
        %vm1302 = vcmp.gt.f32.partialorder %v1093, 0.0
        %vm1303 = vcmp.gt.f32.partialorder %v1142, 0.0
        %vm1304 = vcmp.gt.f32.partialorder %v1191, 0.0
        %vm1305 = vcmp.gt.f32.partialorder %v1240, 0.0
        %v1306 = vstv %s814
        %v1307 = vmul.f32 %v1306, %v1056
        %v1308 = vmul.f32 %v1306, %v1105
        %v1309 = vmul.f32 %v1306, %v1154
        %v1310 = vmul.f32 %v1306, %v1203
        %v1311 = vmul.f32 %v1306, %v1058
        %v1312 = vmul.f32 %v1306, %v1107
        %v1313 = vmul.f32 %v1306, %v1156
        %v1314 = vmul.f32 %v1306, %v1205
        %v1315 = vmul.f32 %v1306, %v1061
        %v1316 = vmul.f32 %v1306, %v1110
        %v1317 = vmul.f32 %v1306, %v1159
        %v1318 = vmul.f32 %v1306, %v1208
        %v1319 = vmul.f32 %v1306, %v1063
        %v1320 = vmul.f32 %v1306, %v1112
        %v1321 = vmul.f32 %v1306, %v1161
        %v1322 = vmul.f32 %v1306, %v1210
        %v1323 = vmul.f32 %v1306, %v1066
        %v1324 = vmul.f32 %v1306, %v1115
        %v1325 = vmul.f32 %v1306, %v1164
        %v1326 = vmul.f32 %v1306, %v1213
        %v1327 = vmul.f32 %v1306, %v1068
        %v1328 = vmul.f32 %v1306, %v1117
        %v1329 = vmul.f32 %v1306, %v1166
        %v1330 = vmul.f32 %v1306, %v1215
        %v1331 = vmul.f32 %v1306, %v1071
        %v1332 = vmul.f32 %v1306, %v1120
        %v1333 = vmul.f32 %v1306, %v1169
        %v1334 = vmul.f32 %v1306, %v1218
        %v1335 = vmul.f32 %v1306, %v1073
        %v1336 = vmul.f32 %v1306, %v1122
        %v1337 = vmul.f32 %v1306, %v1171
        %v1338 = vmul.f32 %v1306, %v1220
        %v1339 = vmul.f32 %v1306, %v1076
        %v1340 = vmul.f32 %v1306, %v1125
        %v1341 = vmul.f32 %v1306, %v1174
        %v1342 = vmul.f32 %v1306, %v1223
        %v1343 = vmul.f32 %v1306, %v1078
        %v1344 = vmul.f32 %v1306, %v1127
        %v1345 = vmul.f32 %v1306, %v1176
        %v1346 = vmul.f32 %v1306, %v1225
        %v1347 = vmul.f32 %v1306, %v1081
        %v1348 = vmul.f32 %v1306, %v1130
        %v1349 = vmul.f32 %v1306, %v1179
        %v1350 = vmul.f32 %v1306, %v1228
        %v1351 = vmul.f32 %v1306, %v1083
        %v1352 = vmul.f32 %v1306, %v1132
        %v1353 = vmul.f32 %v1306, %v1181
        %v1354 = vmul.f32 %v1306, %v1230
        %v1355 = vmul.f32 %v1306, %v1086
        %v1356 = vmul.f32 %v1306, %v1135
        %v1357 = vmul.f32 %v1306, %v1184
        %v1358 = vmul.f32 %v1306, %v1233
        %v1359 = vmul.f32 %v1306, %v1088
        %v1360 = vmul.f32 %v1306, %v1137
        %v1361 = vmul.f32 %v1306, %v1186
        %v1362 = vmul.f32 %v1306, %v1235
        %v1363 = vmul.f32 %v1306, %v1091
        %v1364 = vmul.f32 %v1306, %v1140
        %v1365 = vmul.f32 %v1306, %v1189
        %v1366 = vmul.f32 %v1306, %v1238
        %v1367 = vmul.f32 %v1306, %v1093
        %v1368 = vmul.f32 %v1306, %v1142
        %v1369 = vmul.f32 %v1306, %v1191
        %v1370 = vmul.f32 %v1306, %v1240
        %v1371 = vsel %vm1242, %v1056, %v1307
        %v1372 = vsel %vm1243, %v1105, %v1308
        %v1373 = vsel %vm1244, %v1154, %v1309
        %v1374 = vsel %vm1245, %v1203, %v1310
        %v1375 = vsel %vm1246, %v1058, %v1311
        %v1376 = vsel %vm1247, %v1107, %v1312
        %v1377 = vsel %vm1248, %v1156, %v1313
        %v1378 = vsel %vm1249, %v1205, %v1314
        %v1379 = vsel %vm1250, %v1061, %v1315
        %v1380 = vsel %vm1251, %v1110, %v1316
        %v1381 = vsel %vm1252, %v1159, %v1317
        %v1382 = vsel %vm1253, %v1208, %v1318
        %v1383 = vsel %vm1254, %v1063, %v1319
        %v1384 = vsel %vm1255, %v1112, %v1320
        %v1385 = vsel %vm1256, %v1161, %v1321
        %v1386 = vsel %vm1257, %v1210, %v1322
        %v1387 = vsel %vm1258, %v1066, %v1323
        %v1388 = vsel %vm1259, %v1115, %v1324
        %v1389 = vsel %vm1260, %v1164, %v1325
        %v1390 = vsel %vm1261, %v1213, %v1326
        %v1391 = vsel %vm1262, %v1068, %v1327
        %v1392 = vsel %vm1263, %v1117, %v1328
        %v1393 = vsel %vm1264, %v1166, %v1329
        %v1394 = vsel %vm1265, %v1215, %v1330
        %v1395 = vsel %vm1266, %v1071, %v1331
        %v1396 = vsel %vm1267, %v1120, %v1332
        %v1397 = vsel %vm1268, %v1169, %v1333
        %v1398 = vsel %vm1269, %v1218, %v1334
        %v1399 = vsel %vm1270, %v1073, %v1335
        %v1400 = vsel %vm1271, %v1122, %v1336
        %v1401 = vsel %vm1272, %v1171, %v1337
        %v1402 = vsel %vm1273, %v1220, %v1338
        %v1403 = vsel %vm1274, %v1076, %v1339
        %v1404 = vsel %vm1275, %v1125, %v1340
        %v1405 = vsel %vm1276, %v1174, %v1341
        %v1406 = vsel %vm1277, %v1223, %v1342
        %v1407 = vsel %vm1278, %v1078, %v1343
        %v1408 = vsel %vm1279, %v1127, %v1344
        %v1409 = vsel %vm1280, %v1176, %v1345
        %v1410 = vsel %vm1281, %v1225, %v1346
        %v1411 = vsel %vm1282, %v1081, %v1347
        %v1412 = vsel %vm1283, %v1130, %v1348
        %v1413 = vsel %vm1284, %v1179, %v1349
        %v1414 = vsel %vm1285, %v1228, %v1350
        %v1415 = vsel %vm1286, %v1083, %v1351
        %v1416 = vsel %vm1287, %v1132, %v1352
        %v1417 = vsel %vm1288, %v1181, %v1353
        %v1418 = vsel %vm1289, %v1230, %v1354
        %v1419 = vsel %vm1290, %v1086, %v1355
        %v1420 = vsel %vm1291, %v1135, %v1356
        %v1421 = vsel %vm1292, %v1184, %v1357
        %v1422 = vsel %vm1293, %v1233, %v1358
        %v1423 = vsel %vm1294, %v1088, %v1359
        %v1424 = vsel %vm1295, %v1137, %v1360
        %v1425 = vsel %vm1296, %v1186, %v1361
        %v1426 = vsel %vm1297, %v1235, %v1362
        %v1427 = vsel %vm1298, %v1091, %v1363
        %v1428 = vsel %vm1299, %v1140, %v1364
        %v1429 = vsel %vm1300, %v1189, %v1365
        %v1430 = vsel %vm1301, %v1238, %v1366
        %v1431 = vsel %vm1302, %v1093, %v1367
        %v1432 = vsel %vm1303, %v1142, %v1368
        %v1433 = vsel %vm1304, %v1191, %v1369
        %v1434 = vsel %vm1305, %v1240, %v1370
        %v1435 = vpack.c.bf16 %v1375, %v1371
        %v1436 = vpack.c.bf16 %v1376, %v1372
        %v1437 = vpack.c.bf16 %v1377, %v1373
        %v1438 = vpack.c.bf16 %v1378, %v1374
        %v1439 = vpack.c.bf16 %v1383, %v1379
        %v1440 = vpack.c.bf16 %v1384, %v1380
        %v1441 = vpack.c.bf16 %v1385, %v1381
        %v1442 = vpack.c.bf16 %v1386, %v1382
        %v1443 = vpack.c.bf16 %v1391, %v1387
        %v1444 = vpack.c.bf16 %v1392, %v1388
        %v1445 = vpack.c.bf16 %v1393, %v1389
        %v1446 = vpack.c.bf16 %v1394, %v1390
        %v1447 = vpack.c.bf16 %v1399, %v1395
        %v1448 = vpack.c.bf16 %v1400, %v1396
        %v1449 = vpack.c.bf16 %v1401, %v1397
        %v1450 = vpack.c.bf16 %v1402, %v1398
        %v1451 = vpack.c.bf16 %v1407, %v1403
        %v1452 = vpack.c.bf16 %v1408, %v1404
        %v1453 = vpack.c.bf16 %v1409, %v1405
        %v1454 = vpack.c.bf16 %v1410, %v1406
        %v1455 = vpack.c.bf16 %v1415, %v1411
        %v1456 = vpack.c.bf16 %v1416, %v1412
        %v1457 = vpack.c.bf16 %v1417, %v1413
        %v1458 = vpack.c.bf16 %v1418, %v1414
        %v1459 = vpack.c.bf16 %v1423, %v1419
        %v1460 = vpack.c.bf16 %v1424, %v1420
        %v1461 = vpack.c.bf16 %v1425, %v1421
        %v1462 = vpack.c.bf16 %v1426, %v1422
        %v1463 = vpack.c.bf16 %v1431, %v1427
        %v1464 = vpack.c.bf16 %v1432, %v1428
        %v1465 = vpack.c.bf16 %v1433, %v1429
        %v1466 = vpack.c.bf16 %v1434, %v1430
        %v1467 = vld [vmem:[#allocation9] sm:$0xff]
        %v1468 = vld [vmem:[#allocation9 + $0x8] sm:$0xff]
        %v1469 = vld [vmem:[#allocation9 + $0x10] sm:$0xff]
        %v1470 = vld [vmem:[#allocation9 + $0x18] sm:$0xff]
        %v1471 = vld [vmem:[#allocation9 + $0x20] sm:$0xff]
        %v1472 = vld [vmem:[#allocation9 + $0x28] sm:$0xff]
        %v1473 = vld [vmem:[#allocation9 + $0x30] sm:$0xff]
        %v1474 = vld [vmem:[#allocation9 + $0x38] sm:$0xff]
        %v1475 = vld [vmem:[#allocation9 + $0x40] sm:$0xff]
        %v1476 = vld [vmem:[#allocation9 + $0x48] sm:$0xff]
        %v1477 = vld [vmem:[#allocation9 + $0x50] sm:$0xff]
        %v1478 = vld [vmem:[#allocation9 + $0x58] sm:$0xff]
        %v1479 = vld [vmem:[#allocation9 + $0x60] sm:$0xff]
        %v1480 = vld [vmem:[#allocation9 + $0x68] sm:$0xff]
        %v1481 = vld [vmem:[#allocation9 + $0x70] sm:$0xff]
        %v1482 = vld [vmem:[#allocation9 + $0x78] sm:$0xff]
        %v1483 = vld [vmem:[#allocation9 + $0x80] sm:$0xff]
        %v1484 = vld [vmem:[#allocation9 + $0x88] sm:$0xff]
        %v1485 = vld [vmem:[#allocation9 + $0x90] sm:$0xff]
        %v1486 = vld [vmem:[#allocation9 + $0x98] sm:$0xff]
        %v1487 = vld [vmem:[#allocation9 + $0xa0] sm:$0xff]
        %v1488 = vld [vmem:[#allocation9 + $0xa8] sm:$0xff]
        %v1489 = vld [vmem:[#allocation9 + $0xb0] sm:$0xff]
        %v1490 = vld [vmem:[#allocation9 + $0xb8] sm:$0xff]
        %v1491 = vld [vmem:[#allocation9 + $0xc0] sm:$0xff]
        %v1492 = vld [vmem:[#allocation9 + $0xc8] sm:$0xff]
        %v1493 = vld [vmem:[#allocation9 + $0xd0] sm:$0xff]
        %v1494 = vld [vmem:[#allocation9 + $0xd8] sm:$0xff]
        %v1495 = vld [vmem:[#allocation9 + $0xe0] sm:$0xff]
        %v1496 = vld [vmem:[#allocation9 + $0xe8] sm:$0xff]
        %v1497 = vld [vmem:[#allocation9 + $0xf0] sm:$0xff]
        %v1498 = vld [vmem:[#allocation9 + $0xf8] sm:$0xff]
        %v1499 = vld [vmem:[#allocation9 + $0x100] sm:$0xff]
        %v1500 = vld [vmem:[#allocation9 + $0x108] sm:$0xff]
        %v1501 = vld [vmem:[#allocation9 + $0x110] sm:$0xff]
        %v1502 = vld [vmem:[#allocation9 + $0x118] sm:$0xff]
        %v1503 = vld [vmem:[#allocation9 + $0x120] sm:$0xff]
        %v1504 = vld [vmem:[#allocation9 + $0x128] sm:$0xff]
        %v1505 = vld [vmem:[#allocation9 + $0x130] sm:$0xff]
        %v1506 = vld [vmem:[#allocation9 + $0x138] sm:$0xff]
        %v1507 = vld [vmem:[#allocation9 + $0x140] sm:$0xff]
        %v1508 = vld [vmem:[#allocation9 + $0x148] sm:$0xff]
        %v1509 = vld [vmem:[#allocation9 + $0x150] sm:$0xff]
        %v1510 = vld [vmem:[#allocation9 + $0x158] sm:$0xff]
        %v1511 = vld [vmem:[#allocation9 + $0x160] sm:$0xff]
        %v1512 = vld [vmem:[#allocation9 + $0x168] sm:$0xff]
        %v1513 = vld [vmem:[#allocation9 + $0x170] sm:$0xff]
        %v1514 = vld [vmem:[#allocation9 + $0x178] sm:$0xff]
        %v1515 = vld [vmem:[#allocation9 + $0x180] sm:$0xff]
        %v1516 = vld [vmem:[#allocation9 + $0x188] sm:$0xff]
        %v1517 = vld [vmem:[#allocation9 + $0x190] sm:$0xff]
        %v1518 = vld [vmem:[#allocation9 + $0x198] sm:$0xff]
        %v1519 = vld [vmem:[#allocation9 + $0x1a0] sm:$0xff]
        %v1520 = vld [vmem:[#allocation9 + $0x1a8] sm:$0xff]
        %v1521 = vld [vmem:[#allocation9 + $0x1b0] sm:$0xff]
        %v1522 = vld [vmem:[#allocation9 + $0x1b8] sm:$0xff]
        %v1523 = vld [vmem:[#allocation9 + $0x1c0] sm:$0xff]
        %v1524 = vld [vmem:[#allocation9 + $0x1c8] sm:$0xff]
        %v1525 = vld [vmem:[#allocation9 + $0x1d0] sm:$0xff]
        %v1526 = vld [vmem:[#allocation9 + $0x1d8] sm:$0xff]
        %v1527 = vld [vmem:[#allocation9 + $0x1e0] sm:$0xff]
        %v1528 = vld [vmem:[#allocation9 + $0x1e8] sm:$0xff]
        %v1529 = vld [vmem:[#allocation9 + $0x1f0] sm:$0xff]
        %v1530 = vld [vmem:[#allocation9 + $0x1f8] sm:$0xff]
        %v1531 = vld [vmem:[#allocation9 + $0x200] sm:$0xff]
        %v1532 = vld [vmem:[#allocation9 + $0x208] sm:$0xff]
        %v1533 = vld [vmem:[#allocation9 + $0x210] sm:$0xff]
        %v1534 = vld [vmem:[#allocation9 + $0x218] sm:$0xff]
        %v1535 = vld [vmem:[#allocation9 + $0x220] sm:$0xff]
        %v1536 = vld [vmem:[#allocation9 + $0x228] sm:$0xff]
        %v1537 = vld [vmem:[#allocation9 + $0x230] sm:$0xff]
        %v1538 = vld [vmem:[#allocation9 + $0x238] sm:$0xff]
        %v1539 = vld [vmem:[#allocation9 + $0x240] sm:$0xff]
        %v1540 = vld [vmem:[#allocation9 + $0x248] sm:$0xff]
        %v1541 = vld [vmem:[#allocation9 + $0x250] sm:$0xff]
        %v1542 = vld [vmem:[#allocation9 + $0x258] sm:$0xff]
        %v1543 = vld [vmem:[#allocation9 + $0x260] sm:$0xff]
        %v1544 = vld [vmem:[#allocation9 + $0x268] sm:$0xff]
        %v1545 = vld [vmem:[#allocation9 + $0x270] sm:$0xff]
        %v1546 = vld [vmem:[#allocation9 + $0x278] sm:$0xff]
        %v1547 = vld [vmem:[#allocation9 + $0x280] sm:$0xff]
        %v1548 = vld [vmem:[#allocation9 + $0x288] sm:$0xff]
        %v1549 = vld [vmem:[#allocation9 + $0x290] sm:$0xff]
        %v1550 = vld [vmem:[#allocation9 + $0x298] sm:$0xff]
        %v1551 = vld [vmem:[#allocation9 + $0x2a0] sm:$0xff]
        %v1552 = vld [vmem:[#allocation9 + $0x2a8] sm:$0xff]
        %v1553 = vld [vmem:[#allocation9 + $0x2b0] sm:$0xff]
        %v1554 = vld [vmem:[#allocation9 + $0x2b8] sm:$0xff]
        %v1555 = vld [vmem:[#allocation9 + $0x2c0] sm:$0xff]
        %v1556 = vld [vmem:[#allocation9 + $0x2c8] sm:$0xff]
        %v1557 = vld [vmem:[#allocation9 + $0x2d0] sm:$0xff]
        %v1558 = vld [vmem:[#allocation9 + $0x2d8] sm:$0xff]
        %v1559 = vld [vmem:[#allocation9 + $0x2e0] sm:$0xff]
        %v1560 = vld [vmem:[#allocation9 + $0x2e8] sm:$0xff]
        %v1561 = vld [vmem:[#allocation9 + $0x2f0] sm:$0xff]
        %v1562 = vld [vmem:[#allocation9 + $0x2f8] sm:$0xff]
        %v1563 = vld [vmem:[#allocation9 + $0x300] sm:$0xff]
        %v1564 = vld [vmem:[#allocation9 + $0x308] sm:$0xff]
        %v1565 = vld [vmem:[#allocation9 + $0x310] sm:$0xff]
        %v1566 = vld [vmem:[#allocation9 + $0x318] sm:$0xff]
        %v1567 = vld [vmem:[#allocation9 + $0x320] sm:$0xff]
        %v1568 = vld [vmem:[#allocation9 + $0x328] sm:$0xff]
        %v1569 = vld [vmem:[#allocation9 + $0x330] sm:$0xff]
        %v1570 = vld [vmem:[#allocation9 + $0x338] sm:$0xff]
        %v1571 = vld [vmem:[#allocation9 + $0x340] sm:$0xff]
        %v1572 = vld [vmem:[#allocation9 + $0x348] sm:$0xff]
        %v1573 = vld [vmem:[#allocation9 + $0x350] sm:$0xff]
        %v1574 = vld [vmem:[#allocation9 + $0x358] sm:$0xff]
        %v1575 = vld [vmem:[#allocation9 + $0x360] sm:$0xff]
        %v1576 = vld [vmem:[#allocation9 + $0x368] sm:$0xff]
        %v1577 = vld [vmem:[#allocation9 + $0x370] sm:$0xff]
        %v1578 = vld [vmem:[#allocation9 + $0x378] sm:$0xff]
        %v1579 = vld [vmem:[#allocation9 + $0x380] sm:$0xff]
        %v1580 = vld [vmem:[#allocation9 + $0x388] sm:$0xff]
        %v1581 = vld [vmem:[#allocation9 + $0x390] sm:$0xff]
        %v1582 = vld [vmem:[#allocation9 + $0x398] sm:$0xff]
        %v1583 = vld [vmem:[#allocation9 + $0x3a0] sm:$0xff]
        %v1584 = vld [vmem:[#allocation9 + $0x3a8] sm:$0xff]
        %v1585 = vld [vmem:[#allocation9 + $0x3b0] sm:$0xff]
        %v1586 = vld [vmem:[#allocation9 + $0x3b8] sm:$0xff]
        %v1587 = vld [vmem:[#allocation9 + $0x3c0] sm:$0xff]
        %v1588 = vld [vmem:[#allocation9 + $0x3c8] sm:$0xff]
        %v1589 = vld [vmem:[#allocation9 + $0x3d0] sm:$0xff]
        %v1590 = vld [vmem:[#allocation9 + $0x3d8] sm:$0xff]
        %v1591 = vld [vmem:[#allocation9 + $0x3e0] sm:$0xff]
        %v1592 = vld [vmem:[#allocation9 + $0x3e8] sm:$0xff]
        %v1593 = vld [vmem:[#allocation9 + $0x3f0] sm:$0xff]
        %v1594 = vld [vmem:[#allocation9 + $0x3f8] sm:$0xff]
        %v1595 = vld [vmem:[%s5] sm:$0xf]
        %v1597 = vperm.slane %v1595, 0
        %v1598 = vperm.slane %v1595, 1
        %v1599 = vperm.slane %v1595, 2
        %v1600 = vperm.slane %v1595, 3
        %v1733 = vunpack.c.l.b16 %v1467
        %v1734 = vunpack.c.h.b16 %v1467
        %v1735 = vunpack.c.l.b16 %v1468
        %v1736 = vunpack.c.h.b16 %v1468
        %v1737 = vunpack.c.l.b16 %v1469
        %v1738 = vunpack.c.h.b16 %v1469
        %v1739 = vunpack.c.l.b16 %v1470
        %v1740 = vunpack.c.h.b16 %v1470
        %v1741 = vunpack.c.l.b16 %v1471
        %v1742 = vunpack.c.h.b16 %v1471
        %v1743 = vunpack.c.l.b16 %v1472
        %v1744 = vunpack.c.h.b16 %v1472
        %v1745 = vunpack.c.l.b16 %v1473
        %v1746 = vunpack.c.h.b16 %v1473
        %v1747 = vunpack.c.l.b16 %v1474
        %v1748 = vunpack.c.h.b16 %v1474
        %v1749 = vunpack.c.l.b16 %v1475
        %v1750 = vunpack.c.h.b16 %v1475
        %v1751 = vunpack.c.l.b16 %v1476
        %v1752 = vunpack.c.h.b16 %v1476
        %v1753 = vunpack.c.l.b16 %v1477
        %v1754 = vunpack.c.h.b16 %v1477
        %v1755 = vunpack.c.l.b16 %v1478
        %v1756 = vunpack.c.h.b16 %v1478
        %v1757 = vunpack.c.l.b16 %v1479
        %v1758 = vunpack.c.h.b16 %v1479
        %v1759 = vunpack.c.l.b16 %v1480
        %v1760 = vunpack.c.h.b16 %v1480
        %v1761 = vunpack.c.l.b16 %v1481
        %v1762 = vunpack.c.h.b16 %v1481
        %v1763 = vunpack.c.l.b16 %v1482
        %v1764 = vunpack.c.h.b16 %v1482
        %v1765 = vunpack.c.l.b16 %v1483
        %v1766 = vunpack.c.h.b16 %v1483
        %v1767 = vunpack.c.l.b16 %v1484
        %v1768 = vunpack.c.h.b16 %v1484
        %v1769 = vunpack.c.l.b16 %v1485
        %v1770 = vunpack.c.h.b16 %v1485
        %v1771 = vunpack.c.l.b16 %v1486
        %v1772 = vunpack.c.h.b16 %v1486
        %v1773 = vunpack.c.l.b16 %v1487
        %v1774 = vunpack.c.h.b16 %v1487
        %v1775 = vunpack.c.l.b16 %v1488
        %v1776 = vunpack.c.h.b16 %v1488
        %v1777 = vunpack.c.l.b16 %v1489
        %v1778 = vunpack.c.h.b16 %v1489
        %v1779 = vunpack.c.l.b16 %v1490
        %v1780 = vunpack.c.h.b16 %v1490
        %v1781 = vunpack.c.l.b16 %v1491
        %v1782 = vunpack.c.h.b16 %v1491
        %v1783 = vunpack.c.l.b16 %v1492
        %v1784 = vunpack.c.h.b16 %v1492
        %v1785 = vunpack.c.l.b16 %v1493
        %v1786 = vunpack.c.h.b16 %v1493
        %v1787 = vunpack.c.l.b16 %v1494
        %v1788 = vunpack.c.h.b16 %v1494
        %v1789 = vunpack.c.l.b16 %v1495
        %v1790 = vunpack.c.h.b16 %v1495
        %v1791 = vunpack.c.l.b16 %v1496
        %v1792 = vunpack.c.h.b16 %v1496
        %v1793 = vunpack.c.l.b16 %v1497
        %v1794 = vunpack.c.h.b16 %v1497
        %v1795 = vunpack.c.l.b16 %v1498
        %v1796 = vunpack.c.h.b16 %v1498
        %v1797 = vunpack.c.l.b16 %v1499
        %v1798 = vunpack.c.h.b16 %v1499
        %v1799 = vunpack.c.l.b16 %v1500
        %v1800 = vunpack.c.h.b16 %v1500
        %v1801 = vunpack.c.l.b16 %v1501
        %v1802 = vunpack.c.h.b16 %v1501
        %v1803 = vunpack.c.l.b16 %v1502
        %v1804 = vunpack.c.h.b16 %v1502
        %v1805 = vunpack.c.l.b16 %v1503
        %v1806 = vunpack.c.h.b16 %v1503
        %v1807 = vunpack.c.l.b16 %v1504
        %v1808 = vunpack.c.h.b16 %v1504
        %v1809 = vunpack.c.l.b16 %v1505
        %v1810 = vunpack.c.h.b16 %v1505
        %v1811 = vunpack.c.l.b16 %v1506
        %v1812 = vunpack.c.h.b16 %v1506
        %v1813 = vunpack.c.l.b16 %v1507
        %v1814 = vunpack.c.h.b16 %v1507
        %v1815 = vunpack.c.l.b16 %v1508
        %v1816 = vunpack.c.h.b16 %v1508
        %v1817 = vunpack.c.l.b16 %v1509
        %v1818 = vunpack.c.h.b16 %v1509
        %v1819 = vunpack.c.l.b16 %v1510
        %v1820 = vunpack.c.h.b16 %v1510
        %v1821 = vunpack.c.l.b16 %v1511
        %v1822 = vunpack.c.h.b16 %v1511
        %v1823 = vunpack.c.l.b16 %v1512
        %v1824 = vunpack.c.h.b16 %v1512
        %v1825 = vunpack.c.l.b16 %v1513
        %v1826 = vunpack.c.h.b16 %v1513
        %v1827 = vunpack.c.l.b16 %v1514
        %v1828 = vunpack.c.h.b16 %v1514
        %v1829 = vunpack.c.l.b16 %v1515
        %v1830 = vunpack.c.h.b16 %v1515
        %v1831 = vunpack.c.l.b16 %v1516
        %v1832 = vunpack.c.h.b16 %v1516
        %v1833 = vunpack.c.l.b16 %v1517
        %v1834 = vunpack.c.h.b16 %v1517
        %v1835 = vunpack.c.l.b16 %v1518
        %v1836 = vunpack.c.h.b16 %v1518
        %v1837 = vunpack.c.l.b16 %v1519
        %v1838 = vunpack.c.h.b16 %v1519
        %v1839 = vunpack.c.l.b16 %v1520
        %v1840 = vunpack.c.h.b16 %v1520
        %v1841 = vunpack.c.l.b16 %v1521
        %v1842 = vunpack.c.h.b16 %v1521
        %v1843 = vunpack.c.l.b16 %v1522
        %v1844 = vunpack.c.h.b16 %v1522
        %v1845 = vunpack.c.l.b16 %v1523
        %v1846 = vunpack.c.h.b16 %v1523
        %v1847 = vunpack.c.l.b16 %v1524
        %v1848 = vunpack.c.h.b16 %v1524
        %v1849 = vunpack.c.l.b16 %v1525
        %v1850 = vunpack.c.h.b16 %v1525
        %v1851 = vunpack.c.l.b16 %v1526
        %v1852 = vunpack.c.h.b16 %v1526
        %v1853 = vunpack.c.l.b16 %v1527
        %v1854 = vunpack.c.h.b16 %v1527
        %v1855 = vunpack.c.l.b16 %v1528
        %v1856 = vunpack.c.h.b16 %v1528
        %v1857 = vunpack.c.l.b16 %v1529
        %v1858 = vunpack.c.h.b16 %v1529
        %v1859 = vunpack.c.l.b16 %v1530
        %v1860 = vunpack.c.h.b16 %v1530
        %v1861 = vunpack.c.l.b16 %v1531
        %v1862 = vunpack.c.h.b16 %v1531
        %v1863 = vunpack.c.l.b16 %v1532
        %v1864 = vunpack.c.h.b16 %v1532
        %v1865 = vunpack.c.l.b16 %v1533
        %v1866 = vunpack.c.h.b16 %v1533
        %v1867 = vunpack.c.l.b16 %v1534
        %v1868 = vunpack.c.h.b16 %v1534
        %v1869 = vunpack.c.l.b16 %v1535
        %v1870 = vunpack.c.h.b16 %v1535
        %v1871 = vunpack.c.l.b16 %v1536
        %v1872 = vunpack.c.h.b16 %v1536
        %v1873 = vunpack.c.l.b16 %v1537
        %v1874 = vunpack.c.h.b16 %v1537
        %v1875 = vunpack.c.l.b16 %v1538
        %v1876 = vunpack.c.h.b16 %v1538
        %v1877 = vunpack.c.l.b16 %v1539
        %v1878 = vunpack.c.h.b16 %v1539
        %v1879 = vunpack.c.l.b16 %v1540
        %v1880 = vunpack.c.h.b16 %v1540
        %v1881 = vunpack.c.l.b16 %v1541
        %v1882 = vunpack.c.h.b16 %v1541
        %v1883 = vunpack.c.l.b16 %v1542
        %v1884 = vunpack.c.h.b16 %v1542
        %v1885 = vunpack.c.l.b16 %v1543
        %v1886 = vunpack.c.h.b16 %v1543
        %v1887 = vunpack.c.l.b16 %v1544
        %v1888 = vunpack.c.h.b16 %v1544
        %v1889 = vunpack.c.l.b16 %v1545
        %v1890 = vunpack.c.h.b16 %v1545
        %v1891 = vunpack.c.l.b16 %v1546
        %v1892 = vunpack.c.h.b16 %v1546
        %v1893 = vunpack.c.l.b16 %v1547
        %v1894 = vunpack.c.h.b16 %v1547
        %v1895 = vunpack.c.l.b16 %v1548
        %v1896 = vunpack.c.h.b16 %v1548
        %v1897 = vunpack.c.l.b16 %v1549
        %v1898 = vunpack.c.h.b16 %v1549
        %v1899 = vunpack.c.l.b16 %v1550
        %v1900 = vunpack.c.h.b16 %v1550
        %v1901 = vunpack.c.l.b16 %v1551
        %v1902 = vunpack.c.h.b16 %v1551
        %v1903 = vunpack.c.l.b16 %v1552
        %v1904 = vunpack.c.h.b16 %v1552
        %v1905 = vunpack.c.l.b16 %v1553
        %v1906 = vunpack.c.h.b16 %v1553
        %v1907 = vunpack.c.l.b16 %v1554
        %v1908 = vunpack.c.h.b16 %v1554
        %v1909 = vunpack.c.l.b16 %v1555
        %v1910 = vunpack.c.h.b16 %v1555
        %v1911 = vunpack.c.l.b16 %v1556
        %v1912 = vunpack.c.h.b16 %v1556
        %v1913 = vunpack.c.l.b16 %v1557
        %v1914 = vunpack.c.h.b16 %v1557
        %v1915 = vunpack.c.l.b16 %v1558
        %v1916 = vunpack.c.h.b16 %v1558
        %v1917 = vunpack.c.l.b16 %v1559
        %v1918 = vunpack.c.h.b16 %v1559
        %v1919 = vunpack.c.l.b16 %v1560
        %v1920 = vunpack.c.h.b16 %v1560
        %v1921 = vunpack.c.l.b16 %v1561
        %v1922 = vunpack.c.h.b16 %v1561
        %v1923 = vunpack.c.l.b16 %v1562
        %v1924 = vunpack.c.h.b16 %v1562
        %v1925 = vunpack.c.l.b16 %v1563
        %v1926 = vunpack.c.h.b16 %v1563
        %v1927 = vunpack.c.l.b16 %v1564
        %v1928 = vunpack.c.h.b16 %v1564
        %v1929 = vunpack.c.l.b16 %v1565
        %v1930 = vunpack.c.h.b16 %v1565
        %v1931 = vunpack.c.l.b16 %v1566
        %v1932 = vunpack.c.h.b16 %v1566
        %v1933 = vunpack.c.l.b16 %v1567
        %v1934 = vunpack.c.h.b16 %v1567
        %v1935 = vunpack.c.l.b16 %v1568
        %v1936 = vunpack.c.h.b16 %v1568
        %v1937 = vunpack.c.l.b16 %v1569
        %v1938 = vunpack.c.h.b16 %v1569
        %v1939 = vunpack.c.l.b16 %v1570
        %v1940 = vunpack.c.h.b16 %v1570
        %v1941 = vunpack.c.l.b16 %v1571
        %v1942 = vunpack.c.h.b16 %v1571
        %v1943 = vunpack.c.l.b16 %v1572
        %v1944 = vunpack.c.h.b16 %v1572
        %v1945 = vunpack.c.l.b16 %v1573
        %v1946 = vunpack.c.h.b16 %v1573
        %v1947 = vunpack.c.l.b16 %v1574
        %v1948 = vunpack.c.h.b16 %v1574
        %v1949 = vunpack.c.l.b16 %v1575
        %v1950 = vunpack.c.h.b16 %v1575
        %v1951 = vunpack.c.l.b16 %v1576
        %v1952 = vunpack.c.h.b16 %v1576
        %v1953 = vunpack.c.l.b16 %v1577
        %v1954 = vunpack.c.h.b16 %v1577
        %v1955 = vunpack.c.l.b16 %v1578
        %v1956 = vunpack.c.h.b16 %v1578
        %v1957 = vunpack.c.l.b16 %v1579
        %v1958 = vunpack.c.h.b16 %v1579
        %v1959 = vunpack.c.l.b16 %v1580
        %v1960 = vunpack.c.h.b16 %v1580
        %v1961 = vunpack.c.l.b16 %v1581
        %v1962 = vunpack.c.h.b16 %v1581
        %v1963 = vunpack.c.l.b16 %v1582
        %v1964 = vunpack.c.h.b16 %v1582
        %v1965 = vunpack.c.l.b16 %v1583
        %v1966 = vunpack.c.h.b16 %v1583
        %v1967 = vunpack.c.l.b16 %v1584
        %v1968 = vunpack.c.h.b16 %v1584
        %v1969 = vunpack.c.l.b16 %v1585
        %v1970 = vunpack.c.h.b16 %v1585
        %v1971 = vunpack.c.l.b16 %v1586
        %v1972 = vunpack.c.h.b16 %v1586
        %v1973 = vunpack.c.l.b16 %v1587
        %v1974 = vunpack.c.h.b16 %v1587
        %v1975 = vunpack.c.l.b16 %v1588
        %v1976 = vunpack.c.h.b16 %v1588
        %v1977 = vunpack.c.l.b16 %v1589
        %v1978 = vunpack.c.h.b16 %v1589
        %v1979 = vunpack.c.l.b16 %v1590
        %v1980 = vunpack.c.h.b16 %v1590
        %v1981 = vunpack.c.l.b16 %v1591
        %v1982 = vunpack.c.h.b16 %v1591
        %v1983 = vunpack.c.l.b16 %v1592
        %v1984 = vunpack.c.h.b16 %v1592
        %v1985 = vunpack.c.l.b16 %v1593
        %v1986 = vunpack.c.h.b16 %v1593
        %v1987 = vunpack.c.l.b16 %v1594
        %v1988 = vunpack.c.h.b16 %v1594
        %v1989 = vpack.c.b16 %v1737, %v1733
        %v1990 = vpack.c.b16 %v1738, %v1734
        %v1991 = vpack.c.b16 %v1739, %v1735
        %v1992 = vpack.c.b16 %v1740, %v1736
        %v1993 = vpack.c.b16 %v1745, %v1741
        %v1994 = vpack.c.b16 %v1746, %v1742
        %v1995 = vpack.c.b16 %v1747, %v1743
        %v1996 = vpack.c.b16 %v1748, %v1744
        %v1997 = vpack.c.b16 %v1753, %v1749
        %v1998 = vpack.c.b16 %v1754, %v1750
        %v1999 = vpack.c.b16 %v1755, %v1751
        %v2000 = vpack.c.b16 %v1756, %v1752
        %v2001 = vpack.c.b16 %v1761, %v1757
        %v2002 = vpack.c.b16 %v1762, %v1758
        %v2003 = vpack.c.b16 %v1763, %v1759
        %v2004 = vpack.c.b16 %v1764, %v1760
        %v2005 = vpack.c.b16 %v1769, %v1765
        %v2006 = vpack.c.b16 %v1770, %v1766
        %v2007 = vpack.c.b16 %v1771, %v1767
        %v2008 = vpack.c.b16 %v1772, %v1768
        %v2009 = vpack.c.b16 %v1777, %v1773
        %v2010 = vpack.c.b16 %v1778, %v1774
        %v2011 = vpack.c.b16 %v1779, %v1775
        %v2012 = vpack.c.b16 %v1780, %v1776
        %v2013 = vpack.c.b16 %v1785, %v1781
        %v2014 = vpack.c.b16 %v1786, %v1782
        %v2015 = vpack.c.b16 %v1787, %v1783
        %v2016 = vpack.c.b16 %v1788, %v1784
        %v2017 = vpack.c.b16 %v1793, %v1789
        %v2018 = vpack.c.b16 %v1794, %v1790
        %v2019 = vpack.c.b16 %v1795, %v1791
        %v2020 = vpack.c.b16 %v1796, %v1792
        %v2021 = vpack.c.b16 %v1801, %v1797
        %v2022 = vpack.c.b16 %v1802, %v1798
        %v2023 = vpack.c.b16 %v1803, %v1799
        %v2024 = vpack.c.b16 %v1804, %v1800
        %v2025 = vpack.c.b16 %v1809, %v1805
        %v2026 = vpack.c.b16 %v1810, %v1806
        %v2027 = vpack.c.b16 %v1811, %v1807
        %v2028 = vpack.c.b16 %v1812, %v1808
        %v2029 = vpack.c.b16 %v1817, %v1813
        %v2030 = vpack.c.b16 %v1818, %v1814
        %v2031 = vpack.c.b16 %v1819, %v1815
        %v2032 = vpack.c.b16 %v1820, %v1816
        %v2033 = vpack.c.b16 %v1825, %v1821
        %v2034 = vpack.c.b16 %v1826, %v1822
        %v2035 = vpack.c.b16 %v1827, %v1823
        %v2036 = vpack.c.b16 %v1828, %v1824
        %v2037 = vpack.c.b16 %v1833, %v1829
        %v2038 = vpack.c.b16 %v1834, %v1830
        %v2039 = vpack.c.b16 %v1835, %v1831
        %v2040 = vpack.c.b16 %v1836, %v1832
        %v2041 = vpack.c.b16 %v1841, %v1837
        %v2042 = vpack.c.b16 %v1842, %v1838
        %v2043 = vpack.c.b16 %v1843, %v1839
        %v2044 = vpack.c.b16 %v1844, %v1840
        %v2045 = vpack.c.b16 %v1849, %v1845
        %v2046 = vpack.c.b16 %v1850, %v1846
        %v2047 = vpack.c.b16 %v1851, %v1847
        %v2048 = vpack.c.b16 %v1852, %v1848
        %v2049 = vpack.c.b16 %v1857, %v1853
        %v2050 = vpack.c.b16 %v1858, %v1854
        %v2051 = vpack.c.b16 %v1859, %v1855
        %v2052 = vpack.c.b16 %v1860, %v1856
        %v2053 = vpack.c.b16 %v1865, %v1861
        %v2054 = vpack.c.b16 %v1866, %v1862
        %v2055 = vpack.c.b16 %v1867, %v1863
        %v2056 = vpack.c.b16 %v1868, %v1864
        %v2057 = vpack.c.b16 %v1873, %v1869
        %v2058 = vpack.c.b16 %v1874, %v1870
        %v2059 = vpack.c.b16 %v1875, %v1871
        %v2060 = vpack.c.b16 %v1876, %v1872
        %v2061 = vpack.c.b16 %v1881, %v1877
        %v2062 = vpack.c.b16 %v1882, %v1878
        %v2063 = vpack.c.b16 %v1883, %v1879
        %v2064 = vpack.c.b16 %v1884, %v1880
        %v2065 = vpack.c.b16 %v1889, %v1885
        %v2066 = vpack.c.b16 %v1890, %v1886
        %v2067 = vpack.c.b16 %v1891, %v1887
        %v2068 = vpack.c.b16 %v1892, %v1888
        %v2069 = vpack.c.b16 %v1897, %v1893
        %v2070 = vpack.c.b16 %v1898, %v1894
        %v2071 = vpack.c.b16 %v1899, %v1895
        %v2072 = vpack.c.b16 %v1900, %v1896
        %v2073 = vpack.c.b16 %v1905, %v1901
        %v2074 = vpack.c.b16 %v1906, %v1902
        %v2075 = vpack.c.b16 %v1907, %v1903
        %v2076 = vpack.c.b16 %v1908, %v1904
        %v2077 = vpack.c.b16 %v1913, %v1909
        %v2078 = vpack.c.b16 %v1914, %v1910
        %v2079 = vpack.c.b16 %v1915, %v1911
        %v2080 = vpack.c.b16 %v1916, %v1912
        %v2081 = vpack.c.b16 %v1921, %v1917
        %v2082 = vpack.c.b16 %v1922, %v1918
        %v2083 = vpack.c.b16 %v1923, %v1919
        %v2084 = vpack.c.b16 %v1924, %v1920
        %v2085 = vpack.c.b16 %v1929, %v1925
        %v2086 = vpack.c.b16 %v1930, %v1926
        %v2087 = vpack.c.b16 %v1931, %v1927
        %v2088 = vpack.c.b16 %v1932, %v1928
        %v2089 = vpack.c.b16 %v1937, %v1933
        %v2090 = vpack.c.b16 %v1938, %v1934
        %v2091 = vpack.c.b16 %v1939, %v1935
        %v2092 = vpack.c.b16 %v1940, %v1936
        %v2093 = vpack.c.b16 %v1945, %v1941
        %v2094 = vpack.c.b16 %v1946, %v1942
        %v2095 = vpack.c.b16 %v1947, %v1943
        %v2096 = vpack.c.b16 %v1948, %v1944
        %v2097 = vpack.c.b16 %v1953, %v1949
        %v2098 = vpack.c.b16 %v1954, %v1950
        %v2099 = vpack.c.b16 %v1955, %v1951
        %v2100 = vpack.c.b16 %v1956, %v1952
        %v2101 = vpack.c.b16 %v1961, %v1957
        %v2102 = vpack.c.b16 %v1962, %v1958
        %v2103 = vpack.c.b16 %v1963, %v1959
        %v2104 = vpack.c.b16 %v1964, %v1960
        %v2105 = vpack.c.b16 %v1969, %v1965
        %v2106 = vpack.c.b16 %v1970, %v1966
        %v2107 = vpack.c.b16 %v1971, %v1967
        %v2108 = vpack.c.b16 %v1972, %v1968
        %v2109 = vpack.c.b16 %v1977, %v1973
        %v2110 = vpack.c.b16 %v1978, %v1974
        %v2111 = vpack.c.b16 %v1979, %v1975
        %v2112 = vpack.c.b16 %v1980, %v1976
        %v2113 = vpack.c.b16 %v1985, %v1981
        %v2114 = vpack.c.b16 %v1986, %v1982
        %v2115 = vpack.c.b16 %v1987, %v1983
        %v2116 = vpack.c.b16 %v1988, %v1984
        %2245 = vmatpush.bf16.msra.mxu0 %v2017
        %2246 = vmatpush.bf16.msra.mxu0 %v2013
        %2247 = vmatpush.bf16.msra.mxu0 %v2009
        %2248 = vmatpush.bf16.msra.mxu0 %v2005
        %2249 = vmatpush.bf16.msra.mxu0 %v2001
        %2250 = vmatpush.bf16.msra.mxu0 %v1997
        %2251 = vmatpush.bf16.msra.mxu0 %v1993
        %2252 = vmatpush.bf16.msra.mxu0 %v1989
        %2253 = vmatmul.bf16.gmra.mxu0 %v1435
        %v2254 = vpop.f32.mrf.mxu0
        %v2255 = vadd.f32 %v1597, %v2254
        %v2256 = vpop.f32.mrf.mxu0
        %v2257 = vadd.f32 %v1597, %v2256
        %2258 = vmatmul.bf16.gmra.mxu0 %v1439
        %v2259 = vpop.f32.mrf.mxu0
        %v2260 = vadd.f32 %v1597, %v2259
        %v2261 = vpop.f32.mrf.mxu0
        %v2262 = vadd.f32 %v1597, %v2261
        %2263 = vmatmul.bf16.gmra.mxu0 %v1443
        %v2264 = vpop.f32.mrf.mxu0
        %v2265 = vadd.f32 %v1597, %v2264
        %v2266 = vpop.f32.mrf.mxu0
        %v2267 = vadd.f32 %v1597, %v2266
        %2268 = vmatmul.bf16.gmra.mxu0 %v1447
        %v2269 = vpop.f32.mrf.mxu0
        %v2270 = vadd.f32 %v1597, %v2269
        %v2271 = vpop.f32.mrf.mxu0
        %v2272 = vadd.f32 %v1597, %v2271
        %2273 = vmatmul.bf16.gmra.mxu0 %v1451
        %v2274 = vpop.f32.mrf.mxu0
        %v2275 = vadd.f32 %v1597, %v2274
        %v2276 = vpop.f32.mrf.mxu0
        %v2277 = vadd.f32 %v1597, %v2276
        %2278 = vmatmul.bf16.gmra.mxu0 %v1455
        %v2279 = vpop.f32.mrf.mxu0
        %v2280 = vadd.f32 %v1597, %v2279
        %v2281 = vpop.f32.mrf.mxu0
        %v2282 = vadd.f32 %v1597, %v2281
        %2283 = vmatmul.bf16.gmra.mxu0 %v1459
        %v2284 = vpop.f32.mrf.mxu0
        %v2285 = vadd.f32 %v1597, %v2284
        %v2286 = vpop.f32.mrf.mxu0
        %v2287 = vadd.f32 %v1597, %v2286
        %2288 = vmatmul.bf16.gmra.mxu0 %v1463
        %v2289 = vpop.f32.mrf.mxu0
        %v2290 = vadd.f32 %v1597, %v2289
        %v2291 = vpop.f32.mrf.mxu0
        %v2292 = vadd.f32 %v1597, %v2291
        %2293 = vdwg.mxu0
        %2294 = vmatpush.bf16.msra.mxu0 %v2049
        %2295 = vmatpush.bf16.msra.mxu0 %v2045
        %2296 = vmatpush.bf16.msra.mxu0 %v2041
        %2297 = vmatpush.bf16.msra.mxu0 %v2037
        %2298 = vmatpush.bf16.msra.mxu0 %v2033
        %2299 = vmatpush.bf16.msra.mxu0 %v2029
        %2300 = vmatpush.bf16.msra.mxu0 %v2025
        %2301 = vmatpush.bf16.msra.mxu0 %v2021
        %2302 = vmatmul.bf16.gmra.mxu0 %v1436
        %v2303 = vpop.f32.mrf.mxu0
        %v2304 = vadd.f32 %v2255, %v2303
        %v2305 = vpop.f32.mrf.mxu0
        %v2306 = vadd.f32 %v2257, %v2305
        %2307 = vmatmul.bf16.gmra.mxu0 %v1440
        %v2308 = vpop.f32.mrf.mxu0
        %v2309 = vadd.f32 %v2260, %v2308
        %v2310 = vpop.f32.mrf.mxu0
        %v2311 = vadd.f32 %v2262, %v2310
        %2312 = vmatmul.bf16.gmra.mxu0 %v1444
        %v2313 = vpop.f32.mrf.mxu0
        %v2314 = vadd.f32 %v2265, %v2313
        %v2315 = vpop.f32.mrf.mxu0
        %v2316 = vadd.f32 %v2267, %v2315
        %2317 = vmatmul.bf16.gmra.mxu0 %v1448
        %v2318 = vpop.f32.mrf.mxu0
        %v2319 = vadd.f32 %v2270, %v2318
        %v2320 = vpop.f32.mrf.mxu0
        %v2321 = vadd.f32 %v2272, %v2320
        %2322 = vmatmul.bf16.gmra.mxu0 %v1452
        %v2323 = vpop.f32.mrf.mxu0
        %v2324 = vadd.f32 %v2275, %v2323
        %v2325 = vpop.f32.mrf.mxu0
        %v2326 = vadd.f32 %v2277, %v2325
        %2327 = vmatmul.bf16.gmra.mxu0 %v1456
        %v2328 = vpop.f32.mrf.mxu0
        %v2329 = vadd.f32 %v2280, %v2328
        %v2330 = vpop.f32.mrf.mxu0
        %v2331 = vadd.f32 %v2282, %v2330
        %2332 = vmatmul.bf16.gmra.mxu0 %v1460
        %v2333 = vpop.f32.mrf.mxu0
        %v2334 = vadd.f32 %v2285, %v2333
        %v2335 = vpop.f32.mrf.mxu0
        %v2336 = vadd.f32 %v2287, %v2335
        %2337 = vmatmul.bf16.gmra.mxu0 %v1464
        %v2338 = vpop.f32.mrf.mxu0
        %v2339 = vadd.f32 %v2290, %v2338
        %v2340 = vpop.f32.mrf.mxu0
        %v2341 = vadd.f32 %v2292, %v2340
        %2342 = vdwg.mxu0
        %2343 = vmatpush.bf16.msra.mxu0 %v2081
        %2344 = vmatpush.bf16.msra.mxu0 %v2077
        %2345 = vmatpush.bf16.msra.mxu0 %v2073
        %2346 = vmatpush.bf16.msra.mxu0 %v2069
        %2347 = vmatpush.bf16.msra.mxu0 %v2065
        %2348 = vmatpush.bf16.msra.mxu0 %v2061
        %2349 = vmatpush.bf16.msra.mxu0 %v2057
        %2350 = vmatpush.bf16.msra.mxu0 %v2053
        %2351 = vmatmul.bf16.gmra.mxu0 %v1437
        %v2352 = vpop.f32.mrf.mxu0
        %v2353 = vadd.f32 %v2304, %v2352
        %v2354 = vpop.f32.mrf.mxu0
        %v2355 = vadd.f32 %v2306, %v2354
        %2356 = vmatmul.bf16.gmra.mxu0 %v1441
        %v2357 = vpop.f32.mrf.mxu0
        %v2358 = vadd.f32 %v2309, %v2357
        %v2359 = vpop.f32.mrf.mxu0
        %v2360 = vadd.f32 %v2311, %v2359
        %2361 = vmatmul.bf16.gmra.mxu0 %v1445
        %v2362 = vpop.f32.mrf.mxu0
        %v2363 = vadd.f32 %v2314, %v2362
        %v2364 = vpop.f32.mrf.mxu0
        %v2365 = vadd.f32 %v2316, %v2364
        %2366 = vmatmul.bf16.gmra.mxu0 %v1449
        %v2367 = vpop.f32.mrf.mxu0
        %v2368 = vadd.f32 %v2319, %v2367
        %v2369 = vpop.f32.mrf.mxu0
        %v2370 = vadd.f32 %v2321, %v2369
        %2371 = vmatmul.bf16.gmra.mxu0 %v1453
        %v2372 = vpop.f32.mrf.mxu0
        %v2373 = vadd.f32 %v2324, %v2372
        %v2374 = vpop.f32.mrf.mxu0
        %v2375 = vadd.f32 %v2326, %v2374
        %2376 = vmatmul.bf16.gmra.mxu0 %v1457
        %v2377 = vpop.f32.mrf.mxu0
        %v2378 = vadd.f32 %v2329, %v2377
        %v2379 = vpop.f32.mrf.mxu0
        %v2380 = vadd.f32 %v2331, %v2379
        %2381 = vmatmul.bf16.gmra.mxu0 %v1461
        %v2382 = vpop.f32.mrf.mxu0
        %v2383 = vadd.f32 %v2334, %v2382
        %v2384 = vpop.f32.mrf.mxu0
        %v2385 = vadd.f32 %v2336, %v2384
        %2386 = vmatmul.bf16.gmra.mxu0 %v1465
        %v2387 = vpop.f32.mrf.mxu0
        %v2388 = vadd.f32 %v2339, %v2387
        %v2389 = vpop.f32.mrf.mxu0
        %v2390 = vadd.f32 %v2341, %v2389
        %2391 = vdwg.mxu0
        %2392 = vmatpush.bf16.msra.mxu0 %v2113
        %2393 = vmatpush.bf16.msra.mxu0 %v2109
        %2394 = vmatpush.bf16.msra.mxu0 %v2105
        %2395 = vmatpush.bf16.msra.mxu0 %v2101
        %2396 = vmatpush.bf16.msra.mxu0 %v2097
        %2397 = vmatpush.bf16.msra.mxu0 %v2093
        %2398 = vmatpush.bf16.msra.mxu0 %v2089
        %2399 = vmatpush.bf16.msra.mxu0 %v2085
        %2400 = vmatmul.bf16.gmra.mxu0 %v1438
        %v2401 = vpop.f32.mrf.mxu0
        %v2402 = vadd.f32 %v2353, %v2401
        %v2403 = vpop.f32.mrf.mxu0
        %v2404 = vadd.f32 %v2355, %v2403
        %2405 = vmatmul.bf16.gmra.mxu0 %v1442
        %v2406 = vpop.f32.mrf.mxu0
        %v2407 = vadd.f32 %v2358, %v2406
        %v2408 = vpop.f32.mrf.mxu0
        %v2409 = vadd.f32 %v2360, %v2408
        %2410 = vmatmul.bf16.gmra.mxu0 %v1446
        %v2411 = vpop.f32.mrf.mxu0
        %v2412 = vadd.f32 %v2363, %v2411
        %v2413 = vpop.f32.mrf.mxu0
        %v2414 = vadd.f32 %v2365, %v2413
        %2415 = vmatmul.bf16.gmra.mxu0 %v1450
        %v2416 = vpop.f32.mrf.mxu0
        %v2417 = vadd.f32 %v2368, %v2416
        %v2418 = vpop.f32.mrf.mxu0
        %v2419 = vadd.f32 %v2370, %v2418
        %2420 = vmatmul.bf16.gmra.mxu0 %v1454
        %v2421 = vpop.f32.mrf.mxu0
        %v2422 = vadd.f32 %v2373, %v2421
        %v2423 = vpop.f32.mrf.mxu0
        %v2424 = vadd.f32 %v2375, %v2423
        %2425 = vmatmul.bf16.gmra.mxu0 %v1458
        %v2426 = vpop.f32.mrf.mxu0
        %v2427 = vadd.f32 %v2378, %v2426
        %v2428 = vpop.f32.mrf.mxu0
        %v2429 = vadd.f32 %v2380, %v2428
        %2430 = vmatmul.bf16.gmra.mxu0 %v1462
        %v2431 = vpop.f32.mrf.mxu0
        %v2432 = vadd.f32 %v2383, %v2431
        %v2433 = vpop.f32.mrf.mxu0
        %v2434 = vadd.f32 %v2385, %v2433
        %2435 = vmatmul.bf16.gmra.mxu0 %v1466
        %v2436 = vpop.f32.mrf.mxu0
        %v2437 = vadd.f32 %v2388, %v2436
        %v2438 = vpop.f32.mrf.mxu0
        %v2439 = vadd.f32 %v2390, %v2438
        %2440 = vdwg.mxu0
        %2441 = vmatpush.bf16.msra.mxu0 %v2018
        %2442 = vmatpush.bf16.msra.mxu0 %v2014
        %2443 = vmatpush.bf16.msra.mxu0 %v2010
        %2444 = vmatpush.bf16.msra.mxu0 %v2006
        %2445 = vmatpush.bf16.msra.mxu0 %v2002
        %2446 = vmatpush.bf16.msra.mxu0 %v1998
        %2447 = vmatpush.bf16.msra.mxu0 %v1994
        %2448 = vmatpush.bf16.msra.mxu0 %v1990
        %2449 = vmatmul.bf16.gmra.mxu0 %v1435
        %v2450 = vpop.f32.mrf.mxu0
        %v2451 = vadd.f32 %v1598, %v2450
        %v2452 = vpop.f32.mrf.mxu0
        %v2453 = vadd.f32 %v1598, %v2452
        %2454 = vmatmul.bf16.gmra.mxu0 %v1439
        %v2455 = vpop.f32.mrf.mxu0
        %v2456 = vadd.f32 %v1598, %v2455
        %v2457 = vpop.f32.mrf.mxu0
        %v2458 = vadd.f32 %v1598, %v2457
        %2459 = vmatmul.bf16.gmra.mxu0 %v1443
        %v2460 = vpop.f32.mrf.mxu0
        %v2461 = vadd.f32 %v1598, %v2460
        %v2462 = vpop.f32.mrf.mxu0
        %v2463 = vadd.f32 %v1598, %v2462
        %2464 = vmatmul.bf16.gmra.mxu0 %v1447
        %v2465 = vpop.f32.mrf.mxu0
        %v2466 = vadd.f32 %v1598, %v2465
        %v2467 = vpop.f32.mrf.mxu0
        %v2468 = vadd.f32 %v1598, %v2467
        %2469 = vmatmul.bf16.gmra.mxu0 %v1451
        %v2470 = vpop.f32.mrf.mxu0
        %v2471 = vadd.f32 %v1598, %v2470
        %v2472 = vpop.f32.mrf.mxu0
        %v2473 = vadd.f32 %v1598, %v2472
        %2474 = vmatmul.bf16.gmra.mxu0 %v1455
        %v2475 = vpop.f32.mrf.mxu0
        %v2476 = vadd.f32 %v1598, %v2475
        %v2477 = vpop.f32.mrf.mxu0
        %v2478 = vadd.f32 %v1598, %v2477
        %2479 = vmatmul.bf16.gmra.mxu0 %v1459
        %v2480 = vpop.f32.mrf.mxu0
        %v2481 = vadd.f32 %v1598, %v2480
        %v2482 = vpop.f32.mrf.mxu0
        %v2483 = vadd.f32 %v1598, %v2482
        %2484 = vmatmul.bf16.gmra.mxu0 %v1463
        %v2485 = vpop.f32.mrf.mxu0
        %v2486 = vadd.f32 %v1598, %v2485
        %v2487 = vpop.f32.mrf.mxu0
        %v2488 = vadd.f32 %v1598, %v2487
        %2489 = vdwg.mxu0
        %2490 = vmatpush.bf16.msra.mxu0 %v2050
        %2491 = vmatpush.bf16.msra.mxu0 %v2046
        %2492 = vmatpush.bf16.msra.mxu0 %v2042
        %2493 = vmatpush.bf16.msra.mxu0 %v2038
        %2494 = vmatpush.bf16.msra.mxu0 %v2034
        %2495 = vmatpush.bf16.msra.mxu0 %v2030
        %2496 = vmatpush.bf16.msra.mxu0 %v2026
        %2497 = vmatpush.bf16.msra.mxu0 %v2022
        %2498 = vmatmul.bf16.gmra.mxu0 %v1436
        %v2499 = vpop.f32.mrf.mxu0
        %v2500 = vadd.f32 %v2451, %v2499
        %v2501 = vpop.f32.mrf.mxu0
        %v2502 = vadd.f32 %v2453, %v2501
        %2503 = vmatmul.bf16.gmra.mxu0 %v1440
        %v2504 = vpop.f32.mrf.mxu0
        %v2505 = vadd.f32 %v2456, %v2504
        %v2506 = vpop.f32.mrf.mxu0
        %v2507 = vadd.f32 %v2458, %v2506
        %2508 = vmatmul.bf16.gmra.mxu0 %v1444
        %v2509 = vpop.f32.mrf.mxu0
        %v2510 = vadd.f32 %v2461, %v2509
        %v2511 = vpop.f32.mrf.mxu0
        %v2512 = vadd.f32 %v2463, %v2511
        %2513 = vmatmul.bf16.gmra.mxu0 %v1448
        %v2514 = vpop.f32.mrf.mxu0
        %v2515 = vadd.f32 %v2466, %v2514
        %v2516 = vpop.f32.mrf.mxu0
        %v2517 = vadd.f32 %v2468, %v2516
        %2518 = vmatmul.bf16.gmra.mxu0 %v1452
        %v2519 = vpop.f32.mrf.mxu0
        %v2520 = vadd.f32 %v2471, %v2519
        %v2521 = vpop.f32.mrf.mxu0
        %v2522 = vadd.f32 %v2473, %v2521
        %2523 = vmatmul.bf16.gmra.mxu0 %v1456
        %v2524 = vpop.f32.mrf.mxu0
        %v2525 = vadd.f32 %v2476, %v2524
        %v2526 = vpop.f32.mrf.mxu0
        %v2527 = vadd.f32 %v2478, %v2526
        %2528 = vmatmul.bf16.gmra.mxu0 %v1460
        %v2529 = vpop.f32.mrf.mxu0
        %v2530 = vadd.f32 %v2481, %v2529
        %v2531 = vpop.f32.mrf.mxu0
        %v2532 = vadd.f32 %v2483, %v2531
        %2533 = vmatmul.bf16.gmra.mxu0 %v1464
        %v2534 = vpop.f32.mrf.mxu0
        %v2535 = vadd.f32 %v2486, %v2534
        %v2536 = vpop.f32.mrf.mxu0
        %v2537 = vadd.f32 %v2488, %v2536
        %2538 = vdwg.mxu0
        %2539 = vmatpush.bf16.msra.mxu0 %v2082
        %2540 = vmatpush.bf16.msra.mxu0 %v2078
        %2541 = vmatpush.bf16.msra.mxu0 %v2074
        %2542 = vmatpush.bf16.msra.mxu0 %v2070
        %2543 = vmatpush.bf16.msra.mxu0 %v2066
        %2544 = vmatpush.bf16.msra.mxu0 %v2062
        %2545 = vmatpush.bf16.msra.mxu0 %v2058
        %2546 = vmatpush.bf16.msra.mxu0 %v2054
        %2547 = vmatmul.bf16.gmra.mxu0 %v1437
        %v2548 = vpop.f32.mrf.mxu0
        %v2549 = vadd.f32 %v2500, %v2548
        %v2550 = vpop.f32.mrf.mxu0
        %v2551 = vadd.f32 %v2502, %v2550
        %2552 = vmatmul.bf16.gmra.mxu0 %v1441
        %v2553 = vpop.f32.mrf.mxu0
        %v2554 = vadd.f32 %v2505, %v2553
        %v2555 = vpop.f32.mrf.mxu0
        %v2556 = vadd.f32 %v2507, %v2555
        %2557 = vmatmul.bf16.gmra.mxu0 %v1445
        %v2558 = vpop.f32.mrf.mxu0
        %v2559 = vadd.f32 %v2510, %v2558
        %v2560 = vpop.f32.mrf.mxu0
        %v2561 = vadd.f32 %v2512, %v2560
        %2562 = vmatmul.bf16.gmra.mxu0 %v1449
        %v2563 = vpop.f32.mrf.mxu0
        %v2564 = vadd.f32 %v2515, %v2563
        %v2565 = vpop.f32.mrf.mxu0
        %v2566 = vadd.f32 %v2517, %v2565
        %2567 = vmatmul.bf16.gmra.mxu0 %v1453
        %v2568 = vpop.f32.mrf.mxu0
        %v2569 = vadd.f32 %v2520, %v2568
        %v2570 = vpop.f32.mrf.mxu0
        %v2571 = vadd.f32 %v2522, %v2570
        %2572 = vmatmul.bf16.gmra.mxu0 %v1457
        %v2573 = vpop.f32.mrf.mxu0
        %v2574 = vadd.f32 %v2525, %v2573
        %v2575 = vpop.f32.mrf.mxu0
        %v2576 = vadd.f32 %v2527, %v2575
        %2577 = vmatmul.bf16.gmra.mxu0 %v1461
        %v2578 = vpop.f32.mrf.mxu0
        %v2579 = vadd.f32 %v2530, %v2578
        %v2580 = vpop.f32.mrf.mxu0
        %v2581 = vadd.f32 %v2532, %v2580
        %2582 = vmatmul.bf16.gmra.mxu0 %v1465
        %v2583 = vpop.f32.mrf.mxu0
        %v2584 = vadd.f32 %v2535, %v2583
        %v2585 = vpop.f32.mrf.mxu0
        %v2586 = vadd.f32 %v2537, %v2585
        %2587 = vdwg.mxu0
        %2588 = vmatpush.bf16.msra.mxu0 %v2114
        %2589 = vmatpush.bf16.msra.mxu0 %v2110
        %2590 = vmatpush.bf16.msra.mxu0 %v2106
        %2591 = vmatpush.bf16.msra.mxu0 %v2102
        %2592 = vmatpush.bf16.msra.mxu0 %v2098
        %2593 = vmatpush.bf16.msra.mxu0 %v2094
        %2594 = vmatpush.bf16.msra.mxu0 %v2090
        %2595 = vmatpush.bf16.msra.mxu0 %v2086
        %2596 = vmatmul.bf16.gmra.mxu0 %v1438
        %v2597 = vpop.f32.mrf.mxu0
        %v2598 = vadd.f32 %v2549, %v2597
        %v2599 = vpop.f32.mrf.mxu0
        %v2600 = vadd.f32 %v2551, %v2599
        %2601 = vmatmul.bf16.gmra.mxu0 %v1442
        %v2602 = vpop.f32.mrf.mxu0
        %v2603 = vadd.f32 %v2554, %v2602
        %v2604 = vpop.f32.mrf.mxu0
        %v2605 = vadd.f32 %v2556, %v2604
        %2606 = vmatmul.bf16.gmra.mxu0 %v1446
        %v2607 = vpop.f32.mrf.mxu0
        %v2608 = vadd.f32 %v2559, %v2607
        %v2609 = vpop.f32.mrf.mxu0
        %v2610 = vadd.f32 %v2561, %v2609
        %2611 = vmatmul.bf16.gmra.mxu0 %v1450
        %v2612 = vpop.f32.mrf.mxu0
        %v2613 = vadd.f32 %v2564, %v2612
        %v2614 = vpop.f32.mrf.mxu0
        %v2615 = vadd.f32 %v2566, %v2614
        %2616 = vmatmul.bf16.gmra.mxu0 %v1454
        %v2617 = vpop.f32.mrf.mxu0
        %v2618 = vadd.f32 %v2569, %v2617
        %v2619 = vpop.f32.mrf.mxu0
        %v2620 = vadd.f32 %v2571, %v2619
        %2621 = vmatmul.bf16.gmra.mxu0 %v1458
        %v2622 = vpop.f32.mrf.mxu0
        %v2623 = vadd.f32 %v2574, %v2622
        %v2624 = vpop.f32.mrf.mxu0
        %v2625 = vadd.f32 %v2576, %v2624
        %2626 = vmatmul.bf16.gmra.mxu0 %v1462
        %v2627 = vpop.f32.mrf.mxu0
        %v2628 = vadd.f32 %v2579, %v2627
        %v2629 = vpop.f32.mrf.mxu0
        %v2630 = vadd.f32 %v2581, %v2629
        %2631 = vmatmul.bf16.gmra.mxu0 %v1466
        %v2632 = vpop.f32.mrf.mxu0
        %v2633 = vadd.f32 %v2584, %v2632
        %v2634 = vpop.f32.mrf.mxu0
        %v2635 = vadd.f32 %v2586, %v2634
        %2636 = vdwg.mxu0
        %2637 = vmatpush.bf16.msra.mxu0 %v2019
        %2638 = vmatpush.bf16.msra.mxu0 %v2015
        %2639 = vmatpush.bf16.msra.mxu0 %v2011
        %2640 = vmatpush.bf16.msra.mxu0 %v2007
        %2641 = vmatpush.bf16.msra.mxu0 %v2003
        %2642 = vmatpush.bf16.msra.mxu0 %v1999
        %2643 = vmatpush.bf16.msra.mxu0 %v1995
        %2644 = vmatpush.bf16.msra.mxu0 %v1991
        %2645 = vmatmul.bf16.gmra.mxu0 %v1435
        %v2646 = vpop.f32.mrf.mxu0
        %v2647 = vadd.f32 %v1599, %v2646
        %v2648 = vpop.f32.mrf.mxu0
        %v2649 = vadd.f32 %v1599, %v2648
        %2650 = vmatmul.bf16.gmra.mxu0 %v1439
        %v2651 = vpop.f32.mrf.mxu0
        %v2652 = vadd.f32 %v1599, %v2651
        %v2653 = vpop.f32.mrf.mxu0
        %v2654 = vadd.f32 %v1599, %v2653
        %2655 = vmatmul.bf16.gmra.mxu0 %v1443
        %v2656 = vpop.f32.mrf.mxu0
        %v2657 = vadd.f32 %v1599, %v2656
        %v2658 = vpop.f32.mrf.mxu0
        %v2659 = vadd.f32 %v1599, %v2658
        %2660 = vmatmul.bf16.gmra.mxu0 %v1447
        %v2661 = vpop.f32.mrf.mxu0
        %v2662 = vadd.f32 %v1599, %v2661
        %v2663 = vpop.f32.mrf.mxu0
        %v2664 = vadd.f32 %v1599, %v2663
        %2665 = vmatmul.bf16.gmra.mxu0 %v1451
        %v2666 = vpop.f32.mrf.mxu0
        %v2667 = vadd.f32 %v1599, %v2666
        %v2668 = vpop.f32.mrf.mxu0
        %v2669 = vadd.f32 %v1599, %v2668
        %2670 = vmatmul.bf16.gmra.mxu0 %v1455
        %v2671 = vpop.f32.mrf.mxu0
        %v2672 = vadd.f32 %v1599, %v2671
        %v2673 = vpop.f32.mrf.mxu0
        %v2674 = vadd.f32 %v1599, %v2673
        %2675 = vmatmul.bf16.gmra.mxu0 %v1459
        %v2676 = vpop.f32.mrf.mxu0
        %v2677 = vadd.f32 %v1599, %v2676
        %v2678 = vpop.f32.mrf.mxu0
        %v2679 = vadd.f32 %v1599, %v2678
        %2680 = vmatmul.bf16.gmra.mxu0 %v1463
        %v2681 = vpop.f32.mrf.mxu0
        %v2682 = vadd.f32 %v1599, %v2681
        %v2683 = vpop.f32.mrf.mxu0
        %v2684 = vadd.f32 %v1599, %v2683
        %2685 = vdwg.mxu0
        %2686 = vmatpush.bf16.msra.mxu0 %v2051
        %2687 = vmatpush.bf16.msra.mxu0 %v2047
        %2688 = vmatpush.bf16.msra.mxu0 %v2043
        %2689 = vmatpush.bf16.msra.mxu0 %v2039
        %2690 = vmatpush.bf16.msra.mxu0 %v2035
        %2691 = vmatpush.bf16.msra.mxu0 %v2031
        %2692 = vmatpush.bf16.msra.mxu0 %v2027
        %2693 = vmatpush.bf16.msra.mxu0 %v2023
        %2694 = vmatmul.bf16.gmra.mxu0 %v1436
        %v2695 = vpop.f32.mrf.mxu0
        %v2696 = vadd.f32 %v2647, %v2695
        %v2697 = vpop.f32.mrf.mxu0
        %v2698 = vadd.f32 %v2649, %v2697
        %2699 = vmatmul.bf16.gmra.mxu0 %v1440
        %v2700 = vpop.f32.mrf.mxu0
        %v2701 = vadd.f32 %v2652, %v2700
        %v2702 = vpop.f32.mrf.mxu0
        %v2703 = vadd.f32 %v2654, %v2702
        %2704 = vmatmul.bf16.gmra.mxu0 %v1444
        %v2705 = vpop.f32.mrf.mxu0
        %v2706 = vadd.f32 %v2657, %v2705
        %v2707 = vpop.f32.mrf.mxu0
        %v2708 = vadd.f32 %v2659, %v2707
        %2709 = vmatmul.bf16.gmra.mxu0 %v1448
        %v2710 = vpop.f32.mrf.mxu0
        %v2711 = vadd.f32 %v2662, %v2710
        %v2712 = vpop.f32.mrf.mxu0
        %v2713 = vadd.f32 %v2664, %v2712
        %2714 = vmatmul.bf16.gmra.mxu0 %v1452
        %v2715 = vpop.f32.mrf.mxu0
        %v2716 = vadd.f32 %v2667, %v2715
        %v2717 = vpop.f32.mrf.mxu0
        %v2718 = vadd.f32 %v2669, %v2717
        %2719 = vmatmul.bf16.gmra.mxu0 %v1456
        %v2720 = vpop.f32.mrf.mxu0
        %v2721 = vadd.f32 %v2672, %v2720
        %v2722 = vpop.f32.mrf.mxu0
        %v2723 = vadd.f32 %v2674, %v2722
        %2724 = vmatmul.bf16.gmra.mxu0 %v1460
        %v2725 = vpop.f32.mrf.mxu0
        %v2726 = vadd.f32 %v2677, %v2725
        %v2727 = vpop.f32.mrf.mxu0
        %v2728 = vadd.f32 %v2679, %v2727
        %2729 = vmatmul.bf16.gmra.mxu0 %v1464
        %v2730 = vpop.f32.mrf.mxu0
        %v2731 = vadd.f32 %v2682, %v2730
        %v2732 = vpop.f32.mrf.mxu0
        %v2733 = vadd.f32 %v2684, %v2732
        %2734 = vdwg.mxu0
        %2735 = vmatpush.bf16.msra.mxu0 %v2083
        %2736 = vmatpush.bf16.msra.mxu0 %v2079
        %2737 = vmatpush.bf16.msra.mxu0 %v2075
        %2738 = vmatpush.bf16.msra.mxu0 %v2071
        %2739 = vmatpush.bf16.msra.mxu0 %v2067
        %2740 = vmatpush.bf16.msra.mxu0 %v2063
        %2741 = vmatpush.bf16.msra.mxu0 %v2059
        %2742 = vmatpush.bf16.msra.mxu0 %v2055
        %2743 = vmatmul.bf16.gmra.mxu0 %v1437
        %v2744 = vpop.f32.mrf.mxu0
        %v2745 = vadd.f32 %v2696, %v2744
        %v2746 = vpop.f32.mrf.mxu0
        %v2747 = vadd.f32 %v2698, %v2746
        %2748 = vmatmul.bf16.gmra.mxu0 %v1441
        %v2749 = vpop.f32.mrf.mxu0
        %v2750 = vadd.f32 %v2701, %v2749
        %v2751 = vpop.f32.mrf.mxu0
        %v2752 = vadd.f32 %v2703, %v2751
        %2753 = vmatmul.bf16.gmra.mxu0 %v1445
        %v2754 = vpop.f32.mrf.mxu0
        %v2755 = vadd.f32 %v2706, %v2754
        %v2756 = vpop.f32.mrf.mxu0
        %v2757 = vadd.f32 %v2708, %v2756
        %2758 = vmatmul.bf16.gmra.mxu0 %v1449
        %v2759 = vpop.f32.mrf.mxu0
        %v2760 = vadd.f32 %v2711, %v2759
        %v2761 = vpop.f32.mrf.mxu0
        %v2762 = vadd.f32 %v2713, %v2761
        %2763 = vmatmul.bf16.gmra.mxu0 %v1453
        %v2764 = vpop.f32.mrf.mxu0
        %v2765 = vadd.f32 %v2716, %v2764
        %v2766 = vpop.f32.mrf.mxu0
        %v2767 = vadd.f32 %v2718, %v2766
        %2768 = vmatmul.bf16.gmra.mxu0 %v1457
        %v2769 = vpop.f32.mrf.mxu0
        %v2770 = vadd.f32 %v2721, %v2769
        %v2771 = vpop.f32.mrf.mxu0
        %v2772 = vadd.f32 %v2723, %v2771
        %2773 = vmatmul.bf16.gmra.mxu0 %v1461
        %v2774 = vpop.f32.mrf.mxu0
        %v2775 = vadd.f32 %v2726, %v2774
        %v2776 = vpop.f32.mrf.mxu0
        %v2777 = vadd.f32 %v2728, %v2776
        %2778 = vmatmul.bf16.gmra.mxu0 %v1465
        %v2779 = vpop.f32.mrf.mxu0
        %v2780 = vadd.f32 %v2731, %v2779
        %v2781 = vpop.f32.mrf.mxu0
        %v2782 = vadd.f32 %v2733, %v2781
        %2783 = vdwg.mxu0
        %2784 = vmatpush.bf16.msra.mxu0 %v2115
        %2785 = vmatpush.bf16.msra.mxu0 %v2111
        %2786 = vmatpush.bf16.msra.mxu0 %v2107
        %2787 = vmatpush.bf16.msra.mxu0 %v2103
        %2788 = vmatpush.bf16.msra.mxu0 %v2099
        %2789 = vmatpush.bf16.msra.mxu0 %v2095
        %2790 = vmatpush.bf16.msra.mxu0 %v2091
        %2791 = vmatpush.bf16.msra.mxu0 %v2087
        %2792 = vmatmul.bf16.gmra.mxu0 %v1438
        %v2793 = vpop.f32.mrf.mxu0
        %v2794 = vadd.f32 %v2745, %v2793
        %v2795 = vpop.f32.mrf.mxu0
        %v2796 = vadd.f32 %v2747, %v2795
        %2797 = vmatmul.bf16.gmra.mxu0 %v1442
        %v2798 = vpop.f32.mrf.mxu0
        %v2799 = vadd.f32 %v2750, %v2798
        %v2800 = vpop.f32.mrf.mxu0
        %v2801 = vadd.f32 %v2752, %v2800
        %2802 = vmatmul.bf16.gmra.mxu0 %v1446
        %v2803 = vpop.f32.mrf.mxu0
        %v2804 = vadd.f32 %v2755, %v2803
        %v2805 = vpop.f32.mrf.mxu0
        %v2806 = vadd.f32 %v2757, %v2805
        %2807 = vmatmul.bf16.gmra.mxu0 %v1450
        %v2808 = vpop.f32.mrf.mxu0
        %v2809 = vadd.f32 %v2760, %v2808
        %v2810 = vpop.f32.mrf.mxu0
        %v2811 = vadd.f32 %v2762, %v2810
        %2812 = vmatmul.bf16.gmra.mxu0 %v1454
        %v2813 = vpop.f32.mrf.mxu0
        %v2814 = vadd.f32 %v2765, %v2813
        %v2815 = vpop.f32.mrf.mxu0
        %v2816 = vadd.f32 %v2767, %v2815
        %2817 = vmatmul.bf16.gmra.mxu0 %v1458
        %v2818 = vpop.f32.mrf.mxu0
        %v2819 = vadd.f32 %v2770, %v2818
        %v2820 = vpop.f32.mrf.mxu0
        %v2821 = vadd.f32 %v2772, %v2820
        %2822 = vmatmul.bf16.gmra.mxu0 %v1462
        %v2823 = vpop.f32.mrf.mxu0
        %v2824 = vadd.f32 %v2775, %v2823
        %v2825 = vpop.f32.mrf.mxu0
        %v2826 = vadd.f32 %v2777, %v2825
        %2827 = vmatmul.bf16.gmra.mxu0 %v1466
        %v2828 = vpop.f32.mrf.mxu0
        %v2829 = vadd.f32 %v2780, %v2828
        %v2830 = vpop.f32.mrf.mxu0
        %v2831 = vadd.f32 %v2782, %v2830
        %2832 = vdwg.mxu0
        %2833 = vmatpush.bf16.msra.mxu0 %v2020
        %2834 = vmatpush.bf16.msra.mxu0 %v2016
        %2835 = vmatpush.bf16.msra.mxu0 %v2012
        %2836 = vmatpush.bf16.msra.mxu0 %v2008
        %2837 = vmatpush.bf16.msra.mxu0 %v2004
        %2838 = vmatpush.bf16.msra.mxu0 %v2000
        %2839 = vmatpush.bf16.msra.mxu0 %v1996
        %2840 = vmatpush.bf16.msra.mxu0 %v1992
        %2841 = vmatmul.bf16.gmra.mxu0 %v1435
        %v2842 = vpop.f32.mrf.mxu0
        %v2843 = vadd.f32 %v1600, %v2842
        %v2844 = vpop.f32.mrf.mxu0
        %v2845 = vadd.f32 %v1600, %v2844
        %2846 = vmatmul.bf16.gmra.mxu0 %v1439
        %v2847 = vpop.f32.mrf.mxu0
        %v2848 = vadd.f32 %v1600, %v2847
        %v2849 = vpop.f32.mrf.mxu0
        %v2850 = vadd.f32 %v1600, %v2849
        %2851 = vmatmul.bf16.gmra.mxu0 %v1443
        %v2852 = vpop.f32.mrf.mxu0
        %v2853 = vadd.f32 %v1600, %v2852
        %v2854 = vpop.f32.mrf.mxu0
        %v2855 = vadd.f32 %v1600, %v2854
        %2856 = vmatmul.bf16.gmra.mxu0 %v1447
        %v2857 = vpop.f32.mrf.mxu0
        %v2858 = vadd.f32 %v1600, %v2857
        %v2859 = vpop.f32.mrf.mxu0
        %v2860 = vadd.f32 %v1600, %v2859
        %2861 = vmatmul.bf16.gmra.mxu0 %v1451
        %v2862 = vpop.f32.mrf.mxu0
        %v2863 = vadd.f32 %v1600, %v2862
        %v2864 = vpop.f32.mrf.mxu0
        %v2865 = vadd.f32 %v1600, %v2864
        %2866 = vmatmul.bf16.gmra.mxu0 %v1455
        %v2867 = vpop.f32.mrf.mxu0
        %v2868 = vadd.f32 %v1600, %v2867
        %v2869 = vpop.f32.mrf.mxu0
        %v2870 = vadd.f32 %v1600, %v2869
        %2871 = vmatmul.bf16.gmra.mxu0 %v1459
        %v2872 = vpop.f32.mrf.mxu0
        %v2873 = vadd.f32 %v1600, %v2872
        %v2874 = vpop.f32.mrf.mxu0
        %v2875 = vadd.f32 %v1600, %v2874
        %2876 = vmatmul.bf16.gmra.mxu0 %v1463
        %v2877 = vpop.f32.mrf.mxu0
        %v2878 = vadd.f32 %v1600, %v2877
        %v2879 = vpop.f32.mrf.mxu0
        %v2880 = vadd.f32 %v1600, %v2879
        %2881 = vdwg.mxu0
        %2882 = vmatpush.bf16.msra.mxu0 %v2052
        %2883 = vmatpush.bf16.msra.mxu0 %v2048
        %2884 = vmatpush.bf16.msra.mxu0 %v2044
        %2885 = vmatpush.bf16.msra.mxu0 %v2040
        %2886 = vmatpush.bf16.msra.mxu0 %v2036
        %2887 = vmatpush.bf16.msra.mxu0 %v2032
        %2888 = vmatpush.bf16.msra.mxu0 %v2028
        %2889 = vmatpush.bf16.msra.mxu0 %v2024
        %2890 = vmatmul.bf16.gmra.mxu0 %v1436
        %v2891 = vpop.f32.mrf.mxu0
        %v2892 = vadd.f32 %v2843, %v2891
        %v2893 = vpop.f32.mrf.mxu0
        %v2894 = vadd.f32 %v2845, %v2893
        %2895 = vmatmul.bf16.gmra.mxu0 %v1440
        %v2896 = vpop.f32.mrf.mxu0
        %v2897 = vadd.f32 %v2848, %v2896
        %v2898 = vpop.f32.mrf.mxu0
        %v2899 = vadd.f32 %v2850, %v2898
        %2900 = vmatmul.bf16.gmra.mxu0 %v1444
        %v2901 = vpop.f32.mrf.mxu0
        %v2902 = vadd.f32 %v2853, %v2901
        %v2903 = vpop.f32.mrf.mxu0
        %v2904 = vadd.f32 %v2855, %v2903
        %2905 = vmatmul.bf16.gmra.mxu0 %v1448
        %v2906 = vpop.f32.mrf.mxu0
        %v2907 = vadd.f32 %v2858, %v2906
        %v2908 = vpop.f32.mrf.mxu0
        %v2909 = vadd.f32 %v2860, %v2908
        %2910 = vmatmul.bf16.gmra.mxu0 %v1452
        %v2911 = vpop.f32.mrf.mxu0
        %v2912 = vadd.f32 %v2863, %v2911
        %v2913 = vpop.f32.mrf.mxu0
        %v2914 = vadd.f32 %v2865, %v2913
        %2915 = vmatmul.bf16.gmra.mxu0 %v1456
        %v2916 = vpop.f32.mrf.mxu0
        %v2917 = vadd.f32 %v2868, %v2916
        %v2918 = vpop.f32.mrf.mxu0
        %v2919 = vadd.f32 %v2870, %v2918
        %2920 = vmatmul.bf16.gmra.mxu0 %v1460
        %v2921 = vpop.f32.mrf.mxu0
        %v2922 = vadd.f32 %v2873, %v2921
        %v2923 = vpop.f32.mrf.mxu0
        %v2924 = vadd.f32 %v2875, %v2923
        %2925 = vmatmul.bf16.gmra.mxu0 %v1464
        %v2926 = vpop.f32.mrf.mxu0
        %v2927 = vadd.f32 %v2878, %v2926
        %v2928 = vpop.f32.mrf.mxu0
        %v2929 = vadd.f32 %v2880, %v2928
        %2930 = vdwg.mxu0
        %2931 = vmatpush.bf16.msra.mxu0 %v2084
        %2932 = vmatpush.bf16.msra.mxu0 %v2080
        %2933 = vmatpush.bf16.msra.mxu0 %v2076
        %2934 = vmatpush.bf16.msra.mxu0 %v2072
        %2935 = vmatpush.bf16.msra.mxu0 %v2068
        %2936 = vmatpush.bf16.msra.mxu0 %v2064
        %2937 = vmatpush.bf16.msra.mxu0 %v2060
        %2938 = vmatpush.bf16.msra.mxu0 %v2056
        %2939 = vmatmul.bf16.gmra.mxu0 %v1437
        %v2940 = vpop.f32.mrf.mxu0
        %v2941 = vadd.f32 %v2892, %v2940
        %v2942 = vpop.f32.mrf.mxu0
        %v2943 = vadd.f32 %v2894, %v2942
        %2944 = vmatmul.bf16.gmra.mxu0 %v1441
        %v2945 = vpop.f32.mrf.mxu0
        %v2946 = vadd.f32 %v2897, %v2945
        %v2947 = vpop.f32.mrf.mxu0
        %v2948 = vadd.f32 %v2899, %v2947
        %2949 = vmatmul.bf16.gmra.mxu0 %v1445
        %v2950 = vpop.f32.mrf.mxu0
        %v2951 = vadd.f32 %v2902, %v2950
        %v2952 = vpop.f32.mrf.mxu0
        %v2953 = vadd.f32 %v2904, %v2952
        %2954 = vmatmul.bf16.gmra.mxu0 %v1449
        %v2955 = vpop.f32.mrf.mxu0
        %v2956 = vadd.f32 %v2907, %v2955
        %v2957 = vpop.f32.mrf.mxu0
        %v2958 = vadd.f32 %v2909, %v2957
        %2959 = vmatmul.bf16.gmra.mxu0 %v1453
        %v2960 = vpop.f32.mrf.mxu0
        %v2961 = vadd.f32 %v2912, %v2960
        %v2962 = vpop.f32.mrf.mxu0
        %v2963 = vadd.f32 %v2914, %v2962
        %2964 = vmatmul.bf16.gmra.mxu0 %v1457
        %v2965 = vpop.f32.mrf.mxu0
        %v2966 = vadd.f32 %v2917, %v2965
        %v2967 = vpop.f32.mrf.mxu0
        %v2968 = vadd.f32 %v2919, %v2967
        %2969 = vmatmul.bf16.gmra.mxu0 %v1461
        %v2970 = vpop.f32.mrf.mxu0
        %v2971 = vadd.f32 %v2922, %v2970
        %v2972 = vpop.f32.mrf.mxu0
        %v2973 = vadd.f32 %v2924, %v2972
        %2974 = vmatmul.bf16.gmra.mxu0 %v1465
        %v2975 = vpop.f32.mrf.mxu0
        %v2976 = vadd.f32 %v2927, %v2975
        %v2977 = vpop.f32.mrf.mxu0
        %v2978 = vadd.f32 %v2929, %v2977
        %2979 = vdwg.mxu0
        %2980 = vmatpush.bf16.msra.mxu0 %v2116
        %2981 = vmatpush.bf16.msra.mxu0 %v2112
        %2982 = vmatpush.bf16.msra.mxu0 %v2108
        %2983 = vmatpush.bf16.msra.mxu0 %v2104
        %2984 = vmatpush.bf16.msra.mxu0 %v2100
        %2985 = vmatpush.bf16.msra.mxu0 %v2096
        %2986 = vmatpush.bf16.msra.mxu0 %v2092
        %2987 = vmatpush.bf16.msra.mxu0 %v2088
        %2988 = vmatmul.bf16.gmra.mxu0 %v1438
        %v2989 = vpop.f32.mrf.mxu0
        %v2990 = vadd.f32 %v2941, %v2989
        %v2991 = vpop.f32.mrf.mxu0
        %v2992 = vadd.f32 %v2943, %v2991
        %2993 = vmatmul.bf16.gmra.mxu0 %v1442
        %v2994 = vpop.f32.mrf.mxu0
        %v2995 = vadd.f32 %v2946, %v2994
        %v2996 = vpop.f32.mrf.mxu0
        %v2997 = vadd.f32 %v2948, %v2996
        %2998 = vmatmul.bf16.gmra.mxu0 %v1446
        %v2999 = vpop.f32.mrf.mxu0
        %v3000 = vadd.f32 %v2951, %v2999
        %v3001 = vpop.f32.mrf.mxu0
        %v3002 = vadd.f32 %v2953, %v3001
        %3003 = vmatmul.bf16.gmra.mxu0 %v1450
        %v3004 = vpop.f32.mrf.mxu0
        %v3005 = vadd.f32 %v2956, %v3004
        %v3006 = vpop.f32.mrf.mxu0
        %v3007 = vadd.f32 %v2958, %v3006
        %3008 = vmatmul.bf16.gmra.mxu0 %v1454
        %v3009 = vpop.f32.mrf.mxu0
        %v3010 = vadd.f32 %v2961, %v3009
        %v3011 = vpop.f32.mrf.mxu0
        %v3012 = vadd.f32 %v2963, %v3011
        %3013 = vmatmul.bf16.gmra.mxu0 %v1458
        %v3014 = vpop.f32.mrf.mxu0
        %v3015 = vadd.f32 %v2966, %v3014
        %v3016 = vpop.f32.mrf.mxu0
        %v3017 = vadd.f32 %v2968, %v3016
        %3018 = vmatmul.bf16.gmra.mxu0 %v1462
        %v3019 = vpop.f32.mrf.mxu0
        %v3020 = vadd.f32 %v2971, %v3019
        %v3021 = vpop.f32.mrf.mxu0
        %v3022 = vadd.f32 %v2973, %v3021
        %3023 = vmatmul.bf16.gmra.mxu0 %v1466
        %v3024 = vpop.f32.mrf.mxu0
        %v3025 = vadd.f32 %v2976, %v3024
        %v3026 = vpop.f32.mrf.mxu0
        %v3027 = vadd.f32 %v2978, %v3026
        %3028 = vdwg.mxu0
        %vm3029 = vcmp.gt.f32.partialorder %v2402, 0.0
        %vm3030 = vcmp.gt.f32.partialorder %v2598, 0.0
        %vm3031 = vcmp.gt.f32.partialorder %v2794, 0.0
        %vm3032 = vcmp.gt.f32.partialorder %v2990, 0.0
        %vm3033 = vcmp.gt.f32.partialorder %v2404, 0.0
        %vm3034 = vcmp.gt.f32.partialorder %v2600, 0.0
        %vm3035 = vcmp.gt.f32.partialorder %v2796, 0.0
        %vm3036 = vcmp.gt.f32.partialorder %v2992, 0.0
        %vm3037 = vcmp.gt.f32.partialorder %v2407, 0.0
        %vm3038 = vcmp.gt.f32.partialorder %v2603, 0.0
        %vm3039 = vcmp.gt.f32.partialorder %v2799, 0.0
        %vm3040 = vcmp.gt.f32.partialorder %v2995, 0.0
        %vm3041 = vcmp.gt.f32.partialorder %v2409, 0.0
        %vm3042 = vcmp.gt.f32.partialorder %v2605, 0.0
        %vm3043 = vcmp.gt.f32.partialorder %v2801, 0.0
        %vm3044 = vcmp.gt.f32.partialorder %v2997, 0.0
        %vm3045 = vcmp.gt.f32.partialorder %v2412, 0.0
        %vm3046 = vcmp.gt.f32.partialorder %v2608, 0.0
        %vm3047 = vcmp.gt.f32.partialorder %v2804, 0.0
        %vm3048 = vcmp.gt.f32.partialorder %v3000, 0.0
        %vm3049 = vcmp.gt.f32.partialorder %v2414, 0.0
        %vm3050 = vcmp.gt.f32.partialorder %v2610, 0.0
        %vm3051 = vcmp.gt.f32.partialorder %v2806, 0.0
        %vm3052 = vcmp.gt.f32.partialorder %v3002, 0.0
        %vm3053 = vcmp.gt.f32.partialorder %v2417, 0.0
        %vm3054 = vcmp.gt.f32.partialorder %v2613, 0.0
        %vm3055 = vcmp.gt.f32.partialorder %v2809, 0.0
        %vm3056 = vcmp.gt.f32.partialorder %v3005, 0.0
        %vm3057 = vcmp.gt.f32.partialorder %v2419, 0.0
        %vm3058 = vcmp.gt.f32.partialorder %v2615, 0.0
        %vm3059 = vcmp.gt.f32.partialorder %v2811, 0.0
        %vm3060 = vcmp.gt.f32.partialorder %v3007, 0.0
        %vm3061 = vcmp.gt.f32.partialorder %v2422, 0.0
        %vm3062 = vcmp.gt.f32.partialorder %v2618, 0.0
        %vm3063 = vcmp.gt.f32.partialorder %v2814, 0.0
        %vm3064 = vcmp.gt.f32.partialorder %v3010, 0.0
        %vm3065 = vcmp.gt.f32.partialorder %v2424, 0.0
        %vm3066 = vcmp.gt.f32.partialorder %v2620, 0.0
        %vm3067 = vcmp.gt.f32.partialorder %v2816, 0.0
        %vm3068 = vcmp.gt.f32.partialorder %v3012, 0.0
        %vm3069 = vcmp.gt.f32.partialorder %v2427, 0.0
        %vm3070 = vcmp.gt.f32.partialorder %v2623, 0.0
        %vm3071 = vcmp.gt.f32.partialorder %v2819, 0.0
        %vm3072 = vcmp.gt.f32.partialorder %v3015, 0.0
        %vm3073 = vcmp.gt.f32.partialorder %v2429, 0.0
        %vm3074 = vcmp.gt.f32.partialorder %v2625, 0.0
        %vm3075 = vcmp.gt.f32.partialorder %v2821, 0.0
        %vm3076 = vcmp.gt.f32.partialorder %v3017, 0.0
        %vm3077 = vcmp.gt.f32.partialorder %v2432, 0.0
        %vm3078 = vcmp.gt.f32.partialorder %v2628, 0.0
        %vm3079 = vcmp.gt.f32.partialorder %v2824, 0.0
        %vm3080 = vcmp.gt.f32.partialorder %v3020, 0.0
        %vm3081 = vcmp.gt.f32.partialorder %v2434, 0.0
        %vm3082 = vcmp.gt.f32.partialorder %v2630, 0.0
        %vm3083 = vcmp.gt.f32.partialorder %v2826, 0.0
        %vm3084 = vcmp.gt.f32.partialorder %v3022, 0.0
        %vm3085 = vcmp.gt.f32.partialorder %v2437, 0.0
        %vm3086 = vcmp.gt.f32.partialorder %v2633, 0.0
        %vm3087 = vcmp.gt.f32.partialorder %v2829, 0.0
        %vm3088 = vcmp.gt.f32.partialorder %v3025, 0.0
        %vm3089 = vcmp.gt.f32.partialorder %v2439, 0.0
        %vm3090 = vcmp.gt.f32.partialorder %v2635, 0.0
        %vm3091 = vcmp.gt.f32.partialorder %v2831, 0.0
        %vm3092 = vcmp.gt.f32.partialorder %v3027, 0.0
        %v3093 = vstv %s815
        %v3094 = vmul.f32 %v3093, %v2402
        %v3095 = vmul.f32 %v3093, %v2598
        %v3096 = vmul.f32 %v3093, %v2794
        %v3097 = vmul.f32 %v3093, %v2990
        %v3098 = vmul.f32 %v3093, %v2404
        %v3099 = vmul.f32 %v3093, %v2600
        %v3100 = vmul.f32 %v3093, %v2796
        %v3101 = vmul.f32 %v3093, %v2992
        %v3102 = vmul.f32 %v3093, %v2407
        %v3103 = vmul.f32 %v3093, %v2603
        %v3104 = vmul.f32 %v3093, %v2799
        %v3105 = vmul.f32 %v3093, %v2995
        %v3106 = vmul.f32 %v3093, %v2409
        %v3107 = vmul.f32 %v3093, %v2605
        %v3108 = vmul.f32 %v3093, %v2801
        %v3109 = vmul.f32 %v3093, %v2997
        %v3110 = vmul.f32 %v3093, %v2412
        %v3111 = vmul.f32 %v3093, %v2608
        %v3112 = vmul.f32 %v3093, %v2804
        %v3113 = vmul.f32 %v3093, %v3000
        %v3114 = vmul.f32 %v3093, %v2414
        %v3115 = vmul.f32 %v3093, %v2610
        %v3116 = vmul.f32 %v3093, %v2806
        %v3117 = vmul.f32 %v3093, %v3002
        %v3118 = vmul.f32 %v3093, %v2417
        %v3119 = vmul.f32 %v3093, %v2613
        %v3120 = vmul.f32 %v3093, %v2809
        %v3121 = vmul.f32 %v3093, %v3005
        %v3122 = vmul.f32 %v3093, %v2419
        %v3123 = vmul.f32 %v3093, %v2615
        %v3124 = vmul.f32 %v3093, %v2811
        %v3125 = vmul.f32 %v3093, %v3007
        %v3126 = vmul.f32 %v3093, %v2422
        %v3127 = vmul.f32 %v3093, %v2618
        %v3128 = vmul.f32 %v3093, %v2814
        %v3129 = vmul.f32 %v3093, %v3010
        %v3130 = vmul.f32 %v3093, %v2424
        %v3131 = vmul.f32 %v3093, %v2620
        %v3132 = vmul.f32 %v3093, %v2816
        %v3133 = vmul.f32 %v3093, %v3012
        %v3134 = vmul.f32 %v3093, %v2427
        %v3135 = vmul.f32 %v3093, %v2623
        %v3136 = vmul.f32 %v3093, %v2819
        %v3137 = vmul.f32 %v3093, %v3015
        %v3138 = vmul.f32 %v3093, %v2429
        %v3139 = vmul.f32 %v3093, %v2625
        %v3140 = vmul.f32 %v3093, %v2821
        %v3141 = vmul.f32 %v3093, %v3017
        %v3142 = vmul.f32 %v3093, %v2432
        %v3143 = vmul.f32 %v3093, %v2628
        %v3144 = vmul.f32 %v3093, %v2824
        %v3145 = vmul.f32 %v3093, %v3020
        %v3146 = vmul.f32 %v3093, %v2434
        %v3147 = vmul.f32 %v3093, %v2630
        %v3148 = vmul.f32 %v3093, %v2826
        %v3149 = vmul.f32 %v3093, %v3022
        %v3150 = vmul.f32 %v3093, %v2437
        %v3151 = vmul.f32 %v3093, %v2633
        %v3152 = vmul.f32 %v3093, %v2829
        %v3153 = vmul.f32 %v3093, %v3025
        %v3154 = vmul.f32 %v3093, %v2439
        %v3155 = vmul.f32 %v3093, %v2635
        %v3156 = vmul.f32 %v3093, %v2831
        %v3157 = vmul.f32 %v3093, %v3027
        %v3158 = vsel %vm3029, %v2402, %v3094
        %v3159 = vsel %vm3030, %v2598, %v3095
        %v3160 = vsel %vm3031, %v2794, %v3096
        %v3161 = vsel %vm3032, %v2990, %v3097
        %v3162 = vsel %vm3033, %v2404, %v3098
        %v3163 = vsel %vm3034, %v2600, %v3099
        %v3164 = vsel %vm3035, %v2796, %v3100
        %v3165 = vsel %vm3036, %v2992, %v3101
        %v3166 = vsel %vm3037, %v2407, %v3102
        %v3167 = vsel %vm3038, %v2603, %v3103
        %v3168 = vsel %vm3039, %v2799, %v3104
        %v3169 = vsel %vm3040, %v2995, %v3105
        %v3170 = vsel %vm3041, %v2409, %v3106
        %v3171 = vsel %vm3042, %v2605, %v3107
        %v3172 = vsel %vm3043, %v2801, %v3108
        %v3173 = vsel %vm3044, %v2997, %v3109
        %v3174 = vsel %vm3045, %v2412, %v3110
        %v3175 = vsel %vm3046, %v2608, %v3111
        %v3176 = vsel %vm3047, %v2804, %v3112
        %v3177 = vsel %vm3048, %v3000, %v3113
        %v3178 = vsel %vm3049, %v2414, %v3114
        %v3179 = vsel %vm3050, %v2610, %v3115
        %v3180 = vsel %vm3051, %v2806, %v3116
        %v3181 = vsel %vm3052, %v3002, %v3117
        %v3182 = vsel %vm3053, %v2417, %v3118
        %v3183 = vsel %vm3054, %v2613, %v3119
        %v3184 = vsel %vm3055, %v2809, %v3120
        %v3185 = vsel %vm3056, %v3005, %v3121
        %v3186 = vsel %vm3057, %v2419, %v3122
        %v3187 = vsel %vm3058, %v2615, %v3123
        %v3188 = vsel %vm3059, %v2811, %v3124
        %v3189 = vsel %vm3060, %v3007, %v3125
        %v3190 = vsel %vm3061, %v2422, %v3126
        %v3191 = vsel %vm3062, %v2618, %v3127
        %v3192 = vsel %vm3063, %v2814, %v3128
        %v3193 = vsel %vm3064, %v3010, %v3129
        %v3194 = vsel %vm3065, %v2424, %v3130
        %v3195 = vsel %vm3066, %v2620, %v3131
        %v3196 = vsel %vm3067, %v2816, %v3132
        %v3197 = vsel %vm3068, %v3012, %v3133
        %v3198 = vsel %vm3069, %v2427, %v3134
        %v3199 = vsel %vm3070, %v2623, %v3135
        %v3200 = vsel %vm3071, %v2819, %v3136
        %v3201 = vsel %vm3072, %v3015, %v3137
        %v3202 = vsel %vm3073, %v2429, %v3138
        %v3203 = vsel %vm3074, %v2625, %v3139
        %v3204 = vsel %vm3075, %v2821, %v3140
        %v3205 = vsel %vm3076, %v3017, %v3141
        %v3206 = vsel %vm3077, %v2432, %v3142
        %v3207 = vsel %vm3078, %v2628, %v3143
        %v3208 = vsel %vm3079, %v2824, %v3144
        %v3209 = vsel %vm3080, %v3020, %v3145
        %v3210 = vsel %vm3081, %v2434, %v3146
        %v3211 = vsel %vm3082, %v2630, %v3147
        %v3212 = vsel %vm3083, %v2826, %v3148
        %v3213 = vsel %vm3084, %v3022, %v3149
        %v3214 = vsel %vm3085, %v2437, %v3150
        %v3215 = vsel %vm3086, %v2633, %v3151
        %v3216 = vsel %vm3087, %v2829, %v3152
        %v3217 = vsel %vm3088, %v3025, %v3153
        %v3218 = vsel %vm3089, %v2439, %v3154
        %v3219 = vsel %vm3090, %v2635, %v3155
        %v3220 = vsel %vm3091, %v2831, %v3156
        %v3221 = vsel %vm3092, %v3027, %v3157
        %v3222 = vpack.c.bf16 %v3162, %v3158
        %v3223 = vpack.c.bf16 %v3163, %v3159
        %v3224 = vpack.c.bf16 %v3164, %v3160
        %v3225 = vpack.c.bf16 %v3165, %v3161
        %v3226 = vpack.c.bf16 %v3170, %v3166
        %v3227 = vpack.c.bf16 %v3171, %v3167
        %v3228 = vpack.c.bf16 %v3172, %v3168
        %v3229 = vpack.c.bf16 %v3173, %v3169
        %v3230 = vpack.c.bf16 %v3178, %v3174
        %v3231 = vpack.c.bf16 %v3179, %v3175
        %v3232 = vpack.c.bf16 %v3180, %v3176
        %v3233 = vpack.c.bf16 %v3181, %v3177
        %v3234 = vpack.c.bf16 %v3186, %v3182
        %v3235 = vpack.c.bf16 %v3187, %v3183
        %v3236 = vpack.c.bf16 %v3188, %v3184
        %v3237 = vpack.c.bf16 %v3189, %v3185
        %v3238 = vpack.c.bf16 %v3194, %v3190
        %v3239 = vpack.c.bf16 %v3195, %v3191
        %v3240 = vpack.c.bf16 %v3196, %v3192
        %v3241 = vpack.c.bf16 %v3197, %v3193
        %v3242 = vpack.c.bf16 %v3202, %v3198
        %v3243 = vpack.c.bf16 %v3203, %v3199
        %v3244 = vpack.c.bf16 %v3204, %v3200
        %v3245 = vpack.c.bf16 %v3205, %v3201
        %v3246 = vpack.c.bf16 %v3210, %v3206
        %v3247 = vpack.c.bf16 %v3211, %v3207
        %v3248 = vpack.c.bf16 %v3212, %v3208
        %v3249 = vpack.c.bf16 %v3213, %v3209
        %v3250 = vpack.c.bf16 %v3218, %v3214
        %v3251 = vpack.c.bf16 %v3219, %v3215
        %v3252 = vpack.c.bf16 %v3220, %v3216
        %v3253 = vpack.c.bf16 %v3221, %v3217
        %v3254 = vld [vmem:[#allocation11] sm:$0xf]
        %v3255 = vld [vmem:[#allocation11 + $0x4] sm:$0xf]
        %v3256 = vld [vmem:[#allocation11 + $0x8] sm:$0xf]
        %v3257 = vld [vmem:[#allocation11 + $0xc] sm:$0xf]
        %v3258 = vld [vmem:[#allocation11 + $0x10] sm:$0xf]
        %v3259 = vld [vmem:[#allocation11 + $0x14] sm:$0xf]
        %v3260 = vld [vmem:[#allocation11 + $0x18] sm:$0xf]
        %v3261 = vld [vmem:[#allocation11 + $0x1c] sm:$0xf]
        %v3262 = vld [vmem:[#allocation11 + $0x20] sm:$0xf]
        %v3263 = vld [vmem:[#allocation11 + $0x24] sm:$0xf]
        %v3264 = vld [vmem:[#allocation11 + $0x28] sm:$0xf]
        %v3265 = vld [vmem:[#allocation11 + $0x2c] sm:$0xf]
        %v3266 = vld [vmem:[#allocation11 + $0x30] sm:$0xf]
        %v3267 = vld [vmem:[#allocation11 + $0x34] sm:$0xf]
        %v3268 = vld [vmem:[#allocation11 + $0x38] sm:$0xf]
        %v3269 = vld [vmem:[#allocation11 + $0x3c] sm:$0xf]
        %v3270 = vld [vmem:[#allocation11 + $0x40] sm:$0xf]
        %v3271 = vld [vmem:[#allocation11 + $0x44] sm:$0xf]
        %v3272 = vld [vmem:[#allocation11 + $0x48] sm:$0xf]
        %v3273 = vld [vmem:[#allocation11 + $0x4c] sm:$0xf]
        %v3274 = vld [vmem:[#allocation11 + $0x50] sm:$0xf]
        %v3275 = vld [vmem:[#allocation11 + $0x54] sm:$0xf]
        %v3276 = vld [vmem:[#allocation11 + $0x58] sm:$0xf]
        %v3277 = vld [vmem:[#allocation11 + $0x5c] sm:$0xf]
        %v3278 = vld [vmem:[#allocation11 + $0x60] sm:$0xf]
        %v3279 = vld [vmem:[#allocation11 + $0x64] sm:$0xf]
        %v3280 = vld [vmem:[#allocation11 + $0x68] sm:$0xf]
        %v3281 = vld [vmem:[#allocation11 + $0x6c] sm:$0xf]
        %v3282 = vld [vmem:[#allocation11 + $0x70] sm:$0xf]
        %v3283 = vld [vmem:[#allocation11 + $0x74] sm:$0xf]
        %v3284 = vld [vmem:[#allocation11 + $0x78] sm:$0xf]
        %v3285 = vld [vmem:[#allocation11 + $0x7c] sm:$0xf]
        %v3286 = vld [vmem:[#allocation11 + $0x80] sm:$0xf]
        %v3287 = vld [vmem:[#allocation11 + $0x84] sm:$0xf]
        %v3288 = vld [vmem:[#allocation11 + $0x88] sm:$0xf]
        %v3289 = vld [vmem:[#allocation11 + $0x8c] sm:$0xf]
        %v3290 = vld [vmem:[#allocation11 + $0x90] sm:$0xf]
        %v3291 = vld [vmem:[#allocation11 + $0x94] sm:$0xf]
        %v3292 = vld [vmem:[#allocation11 + $0x98] sm:$0xf]
        %v3293 = vld [vmem:[#allocation11 + $0x9c] sm:$0xf]
        %v3294 = vld [vmem:[#allocation11 + $0xa0] sm:$0xf]
        %v3295 = vld [vmem:[#allocation11 + $0xa4] sm:$0xf]
        %v3296 = vld [vmem:[#allocation11 + $0xa8] sm:$0xf]
        %v3297 = vld [vmem:[#allocation11 + $0xac] sm:$0xf]
        %v3298 = vld [vmem:[#allocation11 + $0xb0] sm:$0xf]
        %v3299 = vld [vmem:[#allocation11 + $0xb4] sm:$0xf]
        %v3300 = vld [vmem:[#allocation11 + $0xb8] sm:$0xf]
        %v3301 = vld [vmem:[#allocation11 + $0xbc] sm:$0xf]
        %v3302 = vld [vmem:[#allocation11 + $0xc0] sm:$0xf]
        %v3303 = vld [vmem:[#allocation11 + $0xc4] sm:$0xf]
        %v3304 = vld [vmem:[#allocation11 + $0xc8] sm:$0xf]
        %v3305 = vld [vmem:[#allocation11 + $0xcc] sm:$0xf]
        %v3306 = vld [vmem:[#allocation11 + $0xd0] sm:$0xf]
        %v3307 = vld [vmem:[#allocation11 + $0xd4] sm:$0xf]
        %v3308 = vld [vmem:[#allocation11 + $0xd8] sm:$0xf]
        %v3309 = vld [vmem:[#allocation11 + $0xdc] sm:$0xf]
        %v3310 = vld [vmem:[#allocation11 + $0xe0] sm:$0xf]
        %v3311 = vld [vmem:[#allocation11 + $0xe4] sm:$0xf]
        %v3312 = vld [vmem:[#allocation11 + $0xe8] sm:$0xf]
        %v3313 = vld [vmem:[#allocation11 + $0xec] sm:$0xf]
        %v3314 = vld [vmem:[#allocation11 + $0xf0] sm:$0xf]
        %v3315 = vld [vmem:[#allocation11 + $0xf4] sm:$0xf]
        %v3316 = vld [vmem:[#allocation11 + $0xf8] sm:$0xf]
        %v3317 = vld [vmem:[#allocation11 + $0xfc] sm:$0xf]
        %v3318 = vld [vmem:[#allocation12] sm:$0x1]
        %v3320 = vperm.slane %v3318, 0
        %v3386 = vunpack.c.l.b16 %v3254
        %v3387 = vunpack.c.l.b16 %v3255
        %v3388 = vunpack.c.l.b16 %v3256
        %v3389 = vunpack.c.l.b16 %v3257
        %v3390 = vunpack.c.l.b16 %v3258
        %v3391 = vunpack.c.l.b16 %v3259
        %v3392 = vunpack.c.l.b16 %v3260
        %v3393 = vunpack.c.l.b16 %v3261
        %v3394 = vunpack.c.l.b16 %v3262
        %v3395 = vunpack.c.l.b16 %v3263
        %v3396 = vunpack.c.l.b16 %v3264
        %v3397 = vunpack.c.l.b16 %v3265
        %v3398 = vunpack.c.l.b16 %v3266
        %v3399 = vunpack.c.l.b16 %v3267
        %v3400 = vunpack.c.l.b16 %v3268
        %v3401 = vunpack.c.l.b16 %v3269
        %v3402 = vunpack.c.l.b16 %v3270
        %v3403 = vunpack.c.l.b16 %v3271
        %v3404 = vunpack.c.l.b16 %v3272
        %v3405 = vunpack.c.l.b16 %v3273
        %v3406 = vunpack.c.l.b16 %v3274
        %v3407 = vunpack.c.l.b16 %v3275
        %v3408 = vunpack.c.l.b16 %v3276
        %v3409 = vunpack.c.l.b16 %v3277
        %v3410 = vunpack.c.l.b16 %v3278
        %v3411 = vunpack.c.l.b16 %v3279
        %v3412 = vunpack.c.l.b16 %v3280
        %v3413 = vunpack.c.l.b16 %v3281
        %v3414 = vunpack.c.l.b16 %v3282
        %v3415 = vunpack.c.l.b16 %v3283
        %v3416 = vunpack.c.l.b16 %v3284
        %v3417 = vunpack.c.l.b16 %v3285
        %v3418 = vunpack.c.l.b16 %v3286
        %v3419 = vunpack.c.l.b16 %v3287
        %v3420 = vunpack.c.l.b16 %v3288
        %v3421 = vunpack.c.l.b16 %v3289
        %v3422 = vunpack.c.l.b16 %v3290
        %v3423 = vunpack.c.l.b16 %v3291
        %v3424 = vunpack.c.l.b16 %v3292
        %v3425 = vunpack.c.l.b16 %v3293
        %v3426 = vunpack.c.l.b16 %v3294
        %v3427 = vunpack.c.l.b16 %v3295
        %v3428 = vunpack.c.l.b16 %v3296
        %v3429 = vunpack.c.l.b16 %v3297
        %v3430 = vunpack.c.l.b16 %v3298
        %v3431 = vunpack.c.l.b16 %v3299
        %v3432 = vunpack.c.l.b16 %v3300
        %v3433 = vunpack.c.l.b16 %v3301
        %v3434 = vunpack.c.l.b16 %v3302
        %v3435 = vunpack.c.l.b16 %v3303
        %v3436 = vunpack.c.l.b16 %v3304
        %v3437 = vunpack.c.l.b16 %v3305
        %v3438 = vunpack.c.l.b16 %v3306
        %v3439 = vunpack.c.l.b16 %v3307
        %v3440 = vunpack.c.l.b16 %v3308
        %v3441 = vunpack.c.l.b16 %v3309
        %v3442 = vunpack.c.l.b16 %v3310
        %v3443 = vunpack.c.l.b16 %v3311
        %v3444 = vunpack.c.l.b16 %v3312
        %v3445 = vunpack.c.l.b16 %v3313
        %v3446 = vunpack.c.l.b16 %v3314
        %v3447 = vunpack.c.l.b16 %v3315
        %v3448 = vunpack.c.l.b16 %v3316
        %v3449 = vunpack.c.l.b16 %v3317
        %v3450 = vpack.c.b16 %v3387, %v3386
        %v3451 = vpack.c.b16 %v3389, %v3388
        %v3452 = vpack.c.b16 %v3391, %v3390
        %v3453 = vpack.c.b16 %v3393, %v3392
        %v3454 = vpack.c.b16 %v3395, %v3394
        %v3455 = vpack.c.b16 %v3397, %v3396
        %v3456 = vpack.c.b16 %v3399, %v3398
        %v3457 = vpack.c.b16 %v3401, %v3400
        %v3458 = vpack.c.b16 %v3403, %v3402
        %v3459 = vpack.c.b16 %v3405, %v3404
        %v3460 = vpack.c.b16 %v3407, %v3406
        %v3461 = vpack.c.b16 %v3409, %v3408
        %v3462 = vpack.c.b16 %v3411, %v3410
        %v3463 = vpack.c.b16 %v3413, %v3412
        %v3464 = vpack.c.b16 %v3415, %v3414
        %v3465 = vpack.c.b16 %v3417, %v3416
        %v3466 = vpack.c.b16 %v3419, %v3418
        %v3467 = vpack.c.b16 %v3421, %v3420
        %v3468 = vpack.c.b16 %v3423, %v3422
        %v3469 = vpack.c.b16 %v3425, %v3424
        %v3470 = vpack.c.b16 %v3427, %v3426
        %v3471 = vpack.c.b16 %v3429, %v3428
        %v3472 = vpack.c.b16 %v3431, %v3430
        %v3473 = vpack.c.b16 %v3433, %v3432
        %v3474 = vpack.c.b16 %v3435, %v3434
        %v3475 = vpack.c.b16 %v3437, %v3436
        %v3476 = vpack.c.b16 %v3439, %v3438
        %v3477 = vpack.c.b16 %v3441, %v3440
        %v3478 = vpack.c.b16 %v3443, %v3442
        %v3479 = vpack.c.b16 %v3445, %v3444
        %v3480 = vpack.c.b16 %v3447, %v3446
        %v3481 = vpack.c.b16 %v3449, %v3448
        %3514 = vmatpush.bf16.msra.mxu0 %v3457
        %3515 = vmatpush.bf16.msra.mxu0 %v3456
        %3516 = vmatpush.bf16.msra.mxu0 %v3455
        %3517 = vmatpush.bf16.msra.mxu0 %v3454
        %3518 = vmatpush.bf16.msra.mxu0 %v3453
        %3519 = vmatpush.bf16.msra.mxu0 %v3452
        %3520 = vmatpush.bf16.msra.mxu0 %v3451
        %3521 = vmatpush.bf16.msra.mxu0 %v3450
        %3522 = vmatmul.bf16.gmra.mxu0 %v3222
        %v3523 = vpop.f32.mrf.mxu0
        %v3524 = vadd.f32 %v3320, %v3523
        %v3525 = vpop.f32.mrf.mxu0
        %v3526 = vadd.f32 %v3320, %v3525
        %3527 = vmatmul.bf16.gmra.mxu0 %v3226
        %v3528 = vpop.f32.mrf.mxu0
        %v3529 = vadd.f32 %v3320, %v3528
        %v3530 = vpop.f32.mrf.mxu0
        %v3531 = vadd.f32 %v3320, %v3530
        %3532 = vmatmul.bf16.gmra.mxu0 %v3230
        %v3533 = vpop.f32.mrf.mxu0
        %v3534 = vadd.f32 %v3320, %v3533
        %v3535 = vpop.f32.mrf.mxu0
        %v3536 = vadd.f32 %v3320, %v3535
        %3537 = vmatmul.bf16.gmra.mxu0 %v3234
        %v3538 = vpop.f32.mrf.mxu0
        %v3539 = vadd.f32 %v3320, %v3538
        %v3540 = vpop.f32.mrf.mxu0
        %v3541 = vadd.f32 %v3320, %v3540
        %3542 = vmatmul.bf16.gmra.mxu0 %v3238
        %v3543 = vpop.f32.mrf.mxu0
        %v3544 = vadd.f32 %v3320, %v3543
        %v3545 = vpop.f32.mrf.mxu0
        %v3546 = vadd.f32 %v3320, %v3545
        %3547 = vmatmul.bf16.gmra.mxu0 %v3242
        %v3548 = vpop.f32.mrf.mxu0
        %v3549 = vadd.f32 %v3320, %v3548
        %v3550 = vpop.f32.mrf.mxu0
        %v3551 = vadd.f32 %v3320, %v3550
        %3552 = vmatmul.bf16.gmra.mxu0 %v3246
        %v3553 = vpop.f32.mrf.mxu0
        %v3554 = vadd.f32 %v3320, %v3553
        %v3555 = vpop.f32.mrf.mxu0
        %v3556 = vadd.f32 %v3320, %v3555
        %3557 = vmatmul.bf16.gmra.mxu0 %v3250
        %v3558 = vpop.f32.mrf.mxu0
        %v3559 = vadd.f32 %v3320, %v3558
        %v3560 = vpop.f32.mrf.mxu0
        %v3561 = vadd.f32 %v3320, %v3560
        %3562 = vdwg.mxu0
        %3563 = vmatpush.bf16.msra.mxu0 %v3465
        %3564 = vmatpush.bf16.msra.mxu0 %v3464
        %3565 = vmatpush.bf16.msra.mxu0 %v3463
        %3566 = vmatpush.bf16.msra.mxu0 %v3462
        %3567 = vmatpush.bf16.msra.mxu0 %v3461
        %3568 = vmatpush.bf16.msra.mxu0 %v3460
        %3569 = vmatpush.bf16.msra.mxu0 %v3459
        %3570 = vmatpush.bf16.msra.mxu0 %v3458
        %3571 = vmatmul.bf16.gmra.mxu0 %v3223
        %v3572 = vpop.f32.mrf.mxu0
        %v3573 = vadd.f32 %v3524, %v3572
        %v3574 = vpop.f32.mrf.mxu0
        %v3575 = vadd.f32 %v3526, %v3574
        %3576 = vmatmul.bf16.gmra.mxu0 %v3227
        %v3577 = vpop.f32.mrf.mxu0
        %v3578 = vadd.f32 %v3529, %v3577
        %v3579 = vpop.f32.mrf.mxu0
        %v3580 = vadd.f32 %v3531, %v3579
        %3581 = vmatmul.bf16.gmra.mxu0 %v3231
        %v3582 = vpop.f32.mrf.mxu0
        %v3583 = vadd.f32 %v3534, %v3582
        %v3584 = vpop.f32.mrf.mxu0
        %v3585 = vadd.f32 %v3536, %v3584
        %3586 = vmatmul.bf16.gmra.mxu0 %v3235
        %v3587 = vpop.f32.mrf.mxu0
        %v3588 = vadd.f32 %v3539, %v3587
        %v3589 = vpop.f32.mrf.mxu0
        %v3590 = vadd.f32 %v3541, %v3589
        %3591 = vmatmul.bf16.gmra.mxu0 %v3239
        %v3592 = vpop.f32.mrf.mxu0
        %v3593 = vadd.f32 %v3544, %v3592
        %v3594 = vpop.f32.mrf.mxu0
        %v3595 = vadd.f32 %v3546, %v3594
        %3596 = vmatmul.bf16.gmra.mxu0 %v3243
        %v3597 = vpop.f32.mrf.mxu0
        %v3598 = vadd.f32 %v3549, %v3597
        %v3599 = vpop.f32.mrf.mxu0
        %v3600 = vadd.f32 %v3551, %v3599
        %3601 = vmatmul.bf16.gmra.mxu0 %v3247
        %v3602 = vpop.f32.mrf.mxu0
        %v3603 = vadd.f32 %v3554, %v3602
        %v3604 = vpop.f32.mrf.mxu0
        %v3605 = vadd.f32 %v3556, %v3604
        %3606 = vmatmul.bf16.gmra.mxu0 %v3251
        %v3607 = vpop.f32.mrf.mxu0
        %v3608 = vadd.f32 %v3559, %v3607
        %v3609 = vpop.f32.mrf.mxu0
        %v3610 = vadd.f32 %v3561, %v3609
        %3611 = vdwg.mxu0
        %3612 = vmatpush.bf16.msra.mxu0 %v3473
        %3613 = vmatpush.bf16.msra.mxu0 %v3472
        %3614 = vmatpush.bf16.msra.mxu0 %v3471
        %3615 = vmatpush.bf16.msra.mxu0 %v3470
        %3616 = vmatpush.bf16.msra.mxu0 %v3469
        %3617 = vmatpush.bf16.msra.mxu0 %v3468
        %3618 = vmatpush.bf16.msra.mxu0 %v3467
        %3619 = vmatpush.bf16.msra.mxu0 %v3466
        %3620 = vmatmul.bf16.gmra.mxu0 %v3224
        %v3621 = vpop.f32.mrf.mxu0
        %v3622 = vadd.f32 %v3573, %v3621
        %v3623 = vpop.f32.mrf.mxu0
        %v3624 = vadd.f32 %v3575, %v3623
        %3625 = vmatmul.bf16.gmra.mxu0 %v3228
        %v3626 = vpop.f32.mrf.mxu0
        %v3627 = vadd.f32 %v3578, %v3626
        %v3628 = vpop.f32.mrf.mxu0
        %v3629 = vadd.f32 %v3580, %v3628
        %3630 = vmatmul.bf16.gmra.mxu0 %v3232
        %v3631 = vpop.f32.mrf.mxu0
        %v3632 = vadd.f32 %v3583, %v3631
        %v3633 = vpop.f32.mrf.mxu0
        %v3634 = vadd.f32 %v3585, %v3633
        %3635 = vmatmul.bf16.gmra.mxu0 %v3236
        %v3636 = vpop.f32.mrf.mxu0
        %v3637 = vadd.f32 %v3588, %v3636
        %v3638 = vpop.f32.mrf.mxu0
        %v3639 = vadd.f32 %v3590, %v3638
        %3640 = vmatmul.bf16.gmra.mxu0 %v3240
        %v3641 = vpop.f32.mrf.mxu0
        %v3642 = vadd.f32 %v3593, %v3641
        %v3643 = vpop.f32.mrf.mxu0
        %v3644 = vadd.f32 %v3595, %v3643
        %3645 = vmatmul.bf16.gmra.mxu0 %v3244
        %v3646 = vpop.f32.mrf.mxu0
        %v3647 = vadd.f32 %v3598, %v3646
        %v3648 = vpop.f32.mrf.mxu0
        %v3649 = vadd.f32 %v3600, %v3648
        %3650 = vmatmul.bf16.gmra.mxu0 %v3248
        %v3651 = vpop.f32.mrf.mxu0
        %v3652 = vadd.f32 %v3603, %v3651
        %v3653 = vpop.f32.mrf.mxu0
        %v3654 = vadd.f32 %v3605, %v3653
        %3655 = vmatmul.bf16.gmra.mxu0 %v3252
        %v3656 = vpop.f32.mrf.mxu0
        %v3657 = vadd.f32 %v3608, %v3656
        %v3658 = vpop.f32.mrf.mxu0
        %v3659 = vadd.f32 %v3610, %v3658
        %3660 = vdwg.mxu0
        %3661 = vmatpush.bf16.msra.mxu0 %v3481
        %3662 = vmatpush.bf16.msra.mxu0 %v3480
        %3663 = vmatpush.bf16.msra.mxu0 %v3479
        %3664 = vmatpush.bf16.msra.mxu0 %v3478
        %3665 = vmatpush.bf16.msra.mxu0 %v3477
        %3666 = vmatpush.bf16.msra.mxu0 %v3476
        %3667 = vmatpush.bf16.msra.mxu0 %v3475
        %3668 = vmatpush.bf16.msra.mxu0 %v3474
        %3669 = vmatmul.bf16.gmra.mxu0 %v3225
        %v3670 = vpop.f32.mrf.mxu0
        %v3671 = vadd.f32 %v3622, %v3670
        %v3672 = vpop.f32.mrf.mxu0
        %v3673 = vadd.f32 %v3624, %v3672
        %3674 = vmatmul.bf16.gmra.mxu0 %v3229
        %v3675 = vpop.f32.mrf.mxu0
        %v3676 = vadd.f32 %v3627, %v3675
        %v3677 = vpop.f32.mrf.mxu0
        %v3678 = vadd.f32 %v3629, %v3677
        %3679 = vmatmul.bf16.gmra.mxu0 %v3233
        %v3680 = vpop.f32.mrf.mxu0
        %v3681 = vadd.f32 %v3632, %v3680
        %v3682 = vpop.f32.mrf.mxu0
        %v3683 = vadd.f32 %v3634, %v3682
        %3684 = vmatmul.bf16.gmra.mxu0 %v3237
        %v3685 = vpop.f32.mrf.mxu0
        %v3686 = vadd.f32 %v3637, %v3685
        %v3687 = vpop.f32.mrf.mxu0
        %v3688 = vadd.f32 %v3639, %v3687
        %3689 = vmatmul.bf16.gmra.mxu0 %v3241
        %v3690 = vpop.f32.mrf.mxu0
        %v3691 = vadd.f32 %v3642, %v3690
        %v3692 = vpop.f32.mrf.mxu0
        %v3693 = vadd.f32 %v3644, %v3692
        %3694 = vmatmul.bf16.gmra.mxu0 %v3245
        %v3695 = vpop.f32.mrf.mxu0
        %v3696 = vadd.f32 %v3647, %v3695
        %v3697 = vpop.f32.mrf.mxu0
        %v3698 = vadd.f32 %v3649, %v3697
        %3699 = vmatmul.bf16.gmra.mxu0 %v3249
        %v3700 = vpop.f32.mrf.mxu0
        %v3701 = vadd.f32 %v3652, %v3700
        %v3702 = vpop.f32.mrf.mxu0
        %v3703 = vadd.f32 %v3654, %v3702
        %3704 = vmatmul.bf16.gmra.mxu0 %v3253
        %v3705 = vpop.f32.mrf.mxu0
        %v3706 = vadd.f32 %v3657, %v3705
        %v3707 = vpop.f32.mrf.mxu0
        %v3708 = vadd.f32 %v3659, %v3707
        %3709 = vdwg.mxu0
        %v3710 = vpack.c.bf16 %v3673, %v3671
        %v3711 = vpack.c.bf16 %v3678, %v3676
        %v3712 = vpack.c.bf16 %v3683, %v3681
        %v3713 = vpack.c.bf16 %v3688, %v3686
        %v3714 = vpack.c.bf16 %v3693, %v3691
        %v3715 = vpack.c.bf16 %v3698, %v3696
        %v3716 = vpack.c.bf16 %v3703, %v3701
        %v3717 = vpack.c.bf16 %v3708, %v3706
        %v3718 = vld [vmem:[#allocation14] sm:$0xff]
        %v3719 = vld [vmem:[#allocation14 + $0x8] sm:$0xff]
        %v3720 = vld [vmem:[#allocation14 + $0x10] sm:$0xff]
        %v3721 = vld [vmem:[#allocation14 + $0x18] sm:$0xff]
        %v3722 = vld [vmem:[#allocation14 + $0x20] sm:$0xff]
        %v3723 = vld [vmem:[#allocation14 + $0x28] sm:$0xff]
        %v3724 = vld [vmem:[#allocation14 + $0x30] sm:$0xff]
        %v3725 = vld [vmem:[#allocation14 + $0x38] sm:$0xff]
        %v3726 = vld [vmem:[#allocation14 + $0x40] sm:$0xff]
        %v3727 = vld [vmem:[#allocation14 + $0x48] sm:$0xff]
        %v3728 = vld [vmem:[#allocation14 + $0x50] sm:$0xff]
        %v3729 = vld [vmem:[#allocation14 + $0x58] sm:$0xff]
        %v3730 = vld [vmem:[#allocation14 + $0x60] sm:$0xff]
        %v3731 = vld [vmem:[#allocation14 + $0x68] sm:$0xff]
        %v3732 = vld [vmem:[#allocation14 + $0x70] sm:$0xff]
        %v3733 = vld [vmem:[#allocation14 + $0x78] sm:$0xff]
        %v3734 = vld [vmem:[#allocation14 + $0x80] sm:$0xff]
        %v3735 = vld [vmem:[#allocation14 + $0x88] sm:$0xff]
        %v3736 = vld [vmem:[#allocation14 + $0x90] sm:$0xff]
        %v3737 = vld [vmem:[#allocation14 + $0x98] sm:$0xff]
        %v3738 = vld [vmem:[#allocation14 + $0xa0] sm:$0xff]
        %v3739 = vld [vmem:[#allocation14 + $0xa8] sm:$0xff]
        %v3740 = vld [vmem:[#allocation14 + $0xb0] sm:$0xff]
        %v3741 = vld [vmem:[#allocation14 + $0xb8] sm:$0xff]
        %v3742 = vld [vmem:[#allocation14 + $0xc0] sm:$0xff]
        %v3743 = vld [vmem:[#allocation14 + $0xc8] sm:$0xff]
        %v3744 = vld [vmem:[#allocation14 + $0xd0] sm:$0xff]
        %v3745 = vld [vmem:[#allocation14 + $0xd8] sm:$0xff]
        %v3746 = vld [vmem:[#allocation14 + $0xe0] sm:$0xff]
        %v3747 = vld [vmem:[#allocation14 + $0xe8] sm:$0xff]
        %v3748 = vld [vmem:[#allocation14 + $0xf0] sm:$0xff]
        %v3749 = vld [vmem:[#allocation14 + $0xf8] sm:$0xff]
        %v3750 = vld [vmem:[%s9] sm:$0xf]
        %v3752 = vperm.slane %v3750, 0
        %v3753 = vperm.slane %v3750, 1
        %v3754 = vperm.slane %v3750, 2
        %v3755 = vperm.slane %v3750, 3
        %v3792 = vunpack.c.l.b16 %v3718
        %v3793 = vunpack.c.h.b16 %v3718
        %v3794 = vunpack.c.l.b16 %v3719
        %v3795 = vunpack.c.h.b16 %v3719
        %v3796 = vunpack.c.l.b16 %v3720
        %v3797 = vunpack.c.h.b16 %v3720
        %v3798 = vunpack.c.l.b16 %v3721
        %v3799 = vunpack.c.h.b16 %v3721
        %v3800 = vunpack.c.l.b16 %v3722
        %v3801 = vunpack.c.h.b16 %v3722
        %v3802 = vunpack.c.l.b16 %v3723
        %v3803 = vunpack.c.h.b16 %v3723
        %v3804 = vunpack.c.l.b16 %v3724
        %v3805 = vunpack.c.h.b16 %v3724
        %v3806 = vunpack.c.l.b16 %v3725
        %v3807 = vunpack.c.h.b16 %v3725
        %v3808 = vunpack.c.l.b16 %v3726
        %v3809 = vunpack.c.h.b16 %v3726
        %v3810 = vunpack.c.l.b16 %v3727
        %v3811 = vunpack.c.h.b16 %v3727
        %v3812 = vunpack.c.l.b16 %v3728
        %v3813 = vunpack.c.h.b16 %v3728
        %v3814 = vunpack.c.l.b16 %v3729
        %v3815 = vunpack.c.h.b16 %v3729
        %v3816 = vunpack.c.l.b16 %v3730
        %v3817 = vunpack.c.h.b16 %v3730
        %v3818 = vunpack.c.l.b16 %v3731
        %v3819 = vunpack.c.h.b16 %v3731
        %v3820 = vunpack.c.l.b16 %v3732
        %v3821 = vunpack.c.h.b16 %v3732
        %v3822 = vunpack.c.l.b16 %v3733
        %v3823 = vunpack.c.h.b16 %v3733
        %v3824 = vunpack.c.l.b16 %v3734
        %v3825 = vunpack.c.h.b16 %v3734
        %v3826 = vunpack.c.l.b16 %v3735
        %v3827 = vunpack.c.h.b16 %v3735
        %v3828 = vunpack.c.l.b16 %v3736
        %v3829 = vunpack.c.h.b16 %v3736
        %v3830 = vunpack.c.l.b16 %v3737
        %v3831 = vunpack.c.h.b16 %v3737
        %v3832 = vunpack.c.l.b16 %v3738
        %v3833 = vunpack.c.h.b16 %v3738
        %v3834 = vunpack.c.l.b16 %v3739
        %v3835 = vunpack.c.h.b16 %v3739
        %v3836 = vunpack.c.l.b16 %v3740
        %v3837 = vunpack.c.h.b16 %v3740
        %v3838 = vunpack.c.l.b16 %v3741
        %v3839 = vunpack.c.h.b16 %v3741
        %v3840 = vunpack.c.l.b16 %v3742
        %v3841 = vunpack.c.h.b16 %v3742
        %v3842 = vunpack.c.l.b16 %v3743
        %v3843 = vunpack.c.h.b16 %v3743
        %v3844 = vunpack.c.l.b16 %v3744
        %v3845 = vunpack.c.h.b16 %v3744
        %v3846 = vunpack.c.l.b16 %v3745
        %v3847 = vunpack.c.h.b16 %v3745
        %v3848 = vunpack.c.l.b16 %v3746
        %v3849 = vunpack.c.h.b16 %v3746
        %v3850 = vunpack.c.l.b16 %v3747
        %v3851 = vunpack.c.h.b16 %v3747
        %v3852 = vunpack.c.l.b16 %v3748
        %v3853 = vunpack.c.h.b16 %v3748
        %v3854 = vunpack.c.l.b16 %v3749
        %v3855 = vunpack.c.h.b16 %v3749
        %v3856 = vpack.c.b16 %v3796, %v3792
        %v3857 = vpack.c.b16 %v3797, %v3793
        %v3858 = vpack.c.b16 %v3798, %v3794
        %v3859 = vpack.c.b16 %v3799, %v3795
        %v3860 = vpack.c.b16 %v3804, %v3800
        %v3861 = vpack.c.b16 %v3805, %v3801
        %v3862 = vpack.c.b16 %v3806, %v3802
        %v3863 = vpack.c.b16 %v3807, %v3803
        %v3864 = vpack.c.b16 %v3812, %v3808
        %v3865 = vpack.c.b16 %v3813, %v3809
        %v3866 = vpack.c.b16 %v3814, %v3810
        %v3867 = vpack.c.b16 %v3815, %v3811
        %v3868 = vpack.c.b16 %v3820, %v3816
        %v3869 = vpack.c.b16 %v3821, %v3817
        %v3870 = vpack.c.b16 %v3822, %v3818
        %v3871 = vpack.c.b16 %v3823, %v3819
        %v3872 = vpack.c.b16 %v3828, %v3824
        %v3873 = vpack.c.b16 %v3829, %v3825
        %v3874 = vpack.c.b16 %v3830, %v3826
        %v3875 = vpack.c.b16 %v3831, %v3827
        %v3876 = vpack.c.b16 %v3836, %v3832
        %v3877 = vpack.c.b16 %v3837, %v3833
        %v3878 = vpack.c.b16 %v3838, %v3834
        %v3879 = vpack.c.b16 %v3839, %v3835
        %v3880 = vpack.c.b16 %v3844, %v3840
        %v3881 = vpack.c.b16 %v3845, %v3841
        %v3882 = vpack.c.b16 %v3846, %v3842
        %v3883 = vpack.c.b16 %v3847, %v3843
        %v3884 = vpack.c.b16 %v3852, %v3848
        %v3885 = vpack.c.b16 %v3853, %v3849
        %v3886 = vpack.c.b16 %v3854, %v3850
        %v3887 = vpack.c.b16 %v3855, %v3851
        %3920 = vmatpush.bf16.msra.mxu0 %v3884
        %3921 = vmatpush.bf16.msra.mxu0 %v3880
        %3922 = vmatpush.bf16.msra.mxu0 %v3876
        %3923 = vmatpush.bf16.msra.mxu0 %v3872
        %3924 = vmatpush.bf16.msra.mxu0 %v3868
        %3925 = vmatpush.bf16.msra.mxu0 %v3864
        %3926 = vmatpush.bf16.msra.mxu0 %v3860
        %3927 = vmatpush.bf16.msra.mxu0 %v3856
        %3928 = vmatmul.bf16.gmra.mxu0 %v3710
        %v3929 = vpop.f32.mrf.mxu0
        %v3930 = vadd.f32 %v3752, %v3929
        %v3931 = vpop.f32.mrf.mxu0
        %v3932 = vadd.f32 %v3752, %v3931
        %3933 = vmatmul.bf16.gmra.mxu0 %v3711
        %v3934 = vpop.f32.mrf.mxu0
        %v3935 = vadd.f32 %v3752, %v3934
        %v3936 = vpop.f32.mrf.mxu0
        %v3937 = vadd.f32 %v3752, %v3936
        %3938 = vmatmul.bf16.gmra.mxu0 %v3712
        %v3939 = vpop.f32.mrf.mxu0
        %v3940 = vadd.f32 %v3752, %v3939
        %v3941 = vpop.f32.mrf.mxu0
        %v3942 = vadd.f32 %v3752, %v3941
        %3943 = vmatmul.bf16.gmra.mxu0 %v3713
        %v3944 = vpop.f32.mrf.mxu0
        %v3945 = vadd.f32 %v3752, %v3944
        %v3946 = vpop.f32.mrf.mxu0
        %v3947 = vadd.f32 %v3752, %v3946
        %3948 = vmatmul.bf16.gmra.mxu0 %v3714
        %v3949 = vpop.f32.mrf.mxu0
        %v3950 = vadd.f32 %v3752, %v3949
        %v3951 = vpop.f32.mrf.mxu0
        %v3952 = vadd.f32 %v3752, %v3951
        %3953 = vmatmul.bf16.gmra.mxu0 %v3715
        %v3954 = vpop.f32.mrf.mxu0
        %v3955 = vadd.f32 %v3752, %v3954
        %v3956 = vpop.f32.mrf.mxu0
        %v3957 = vadd.f32 %v3752, %v3956
        %3958 = vmatmul.bf16.gmra.mxu0 %v3716
        %v3959 = vpop.f32.mrf.mxu0
        %v3960 = vadd.f32 %v3752, %v3959
        %v3961 = vpop.f32.mrf.mxu0
        %v3962 = vadd.f32 %v3752, %v3961
        %3963 = vmatmul.bf16.gmra.mxu0 %v3717
        %v3964 = vpop.f32.mrf.mxu0
        %v3965 = vadd.f32 %v3752, %v3964
        %v3966 = vpop.f32.mrf.mxu0
        %v3967 = vadd.f32 %v3752, %v3966
        %3968 = vdwg.mxu0
        %3969 = vmatpush.bf16.msra.mxu0 %v3885
        %3970 = vmatpush.bf16.msra.mxu0 %v3881
        %3971 = vmatpush.bf16.msra.mxu0 %v3877
        %3972 = vmatpush.bf16.msra.mxu0 %v3873
        %3973 = vmatpush.bf16.msra.mxu0 %v3869
        %3974 = vmatpush.bf16.msra.mxu0 %v3865
        %3975 = vmatpush.bf16.msra.mxu0 %v3861
        %3976 = vmatpush.bf16.msra.mxu0 %v3857
        %3977 = vmatmul.bf16.gmra.mxu0 %v3710
        %v3978 = vpop.f32.mrf.mxu0
        %v3979 = vadd.f32 %v3753, %v3978
        %v3980 = vpop.f32.mrf.mxu0
        %v3981 = vadd.f32 %v3753, %v3980
        %3982 = vmatmul.bf16.gmra.mxu0 %v3711
        %v3983 = vpop.f32.mrf.mxu0
        %v3984 = vadd.f32 %v3753, %v3983
        %v3985 = vpop.f32.mrf.mxu0
        %v3986 = vadd.f32 %v3753, %v3985
        %3987 = vmatmul.bf16.gmra.mxu0 %v3712
        %v3988 = vpop.f32.mrf.mxu0
        %v3989 = vadd.f32 %v3753, %v3988
        %v3990 = vpop.f32.mrf.mxu0
        %v3991 = vadd.f32 %v3753, %v3990
        %3992 = vmatmul.bf16.gmra.mxu0 %v3713
        %v3993 = vpop.f32.mrf.mxu0
        %v3994 = vadd.f32 %v3753, %v3993
        %v3995 = vpop.f32.mrf.mxu0
        %v3996 = vadd.f32 %v3753, %v3995
        %3997 = vmatmul.bf16.gmra.mxu0 %v3714
        %v3998 = vpop.f32.mrf.mxu0
        %v3999 = vadd.f32 %v3753, %v3998
        %v4000 = vpop.f32.mrf.mxu0
        %v4001 = vadd.f32 %v3753, %v4000
        %4002 = vmatmul.bf16.gmra.mxu0 %v3715
        %v4003 = vpop.f32.mrf.mxu0
        %v4004 = vadd.f32 %v3753, %v4003
        %v4005 = vpop.f32.mrf.mxu0
        %v4006 = vadd.f32 %v3753, %v4005
        %4007 = vmatmul.bf16.gmra.mxu0 %v3716
        %v4008 = vpop.f32.mrf.mxu0
        %v4009 = vadd.f32 %v3753, %v4008
        %v4010 = vpop.f32.mrf.mxu0
        %v4011 = vadd.f32 %v3753, %v4010
        %4012 = vmatmul.bf16.gmra.mxu0 %v3717
        %v4013 = vpop.f32.mrf.mxu0
        %v4014 = vadd.f32 %v3753, %v4013
        %v4015 = vpop.f32.mrf.mxu0
        %v4016 = vadd.f32 %v3753, %v4015
        %4017 = vdwg.mxu0
        %4018 = vmatpush.bf16.msra.mxu0 %v3886
        %4019 = vmatpush.bf16.msra.mxu0 %v3882
        %4020 = vmatpush.bf16.msra.mxu0 %v3878
        %4021 = vmatpush.bf16.msra.mxu0 %v3874
        %4022 = vmatpush.bf16.msra.mxu0 %v3870
        %4023 = vmatpush.bf16.msra.mxu0 %v3866
        %4024 = vmatpush.bf16.msra.mxu0 %v3862
        %4025 = vmatpush.bf16.msra.mxu0 %v3858
        %4026 = vmatmul.bf16.gmra.mxu0 %v3710
        %v4027 = vpop.f32.mrf.mxu0
        %v4028 = vadd.f32 %v3754, %v4027
        %v4029 = vpop.f32.mrf.mxu0
        %v4030 = vadd.f32 %v3754, %v4029
        %4031 = vmatmul.bf16.gmra.mxu0 %v3711
        %v4032 = vpop.f32.mrf.mxu0
        %v4033 = vadd.f32 %v3754, %v4032
        %v4034 = vpop.f32.mrf.mxu0
        %v4035 = vadd.f32 %v3754, %v4034
        %4036 = vmatmul.bf16.gmra.mxu0 %v3712
        %v4037 = vpop.f32.mrf.mxu0
        %v4038 = vadd.f32 %v3754, %v4037
        %v4039 = vpop.f32.mrf.mxu0
        %v4040 = vadd.f32 %v3754, %v4039
        %4041 = vmatmul.bf16.gmra.mxu0 %v3713
        %v4042 = vpop.f32.mrf.mxu0
        %v4043 = vadd.f32 %v3754, %v4042
        %v4044 = vpop.f32.mrf.mxu0
        %v4045 = vadd.f32 %v3754, %v4044
        %4046 = vmatmul.bf16.gmra.mxu0 %v3714
        %v4047 = vpop.f32.mrf.mxu0
        %v4048 = vadd.f32 %v3754, %v4047
        %v4049 = vpop.f32.mrf.mxu0
        %v4050 = vadd.f32 %v3754, %v4049
        %4051 = vmatmul.bf16.gmra.mxu0 %v3715
        %v4052 = vpop.f32.mrf.mxu0
        %v4053 = vadd.f32 %v3754, %v4052
        %v4054 = vpop.f32.mrf.mxu0
        %v4055 = vadd.f32 %v3754, %v4054
        %4056 = vmatmul.bf16.gmra.mxu0 %v3716
        %v4057 = vpop.f32.mrf.mxu0
        %v4058 = vadd.f32 %v3754, %v4057
        %v4059 = vpop.f32.mrf.mxu0
        %v4060 = vadd.f32 %v3754, %v4059
        %4061 = vmatmul.bf16.gmra.mxu0 %v3717
        %v4062 = vpop.f32.mrf.mxu0
        %v4063 = vadd.f32 %v3754, %v4062
        %v4064 = vpop.f32.mrf.mxu0
        %v4065 = vadd.f32 %v3754, %v4064
        %4066 = vdwg.mxu0
        %4067 = vmatpush.bf16.msra.mxu0 %v3887
        %4068 = vmatpush.bf16.msra.mxu0 %v3883
        %4069 = vmatpush.bf16.msra.mxu0 %v3879
        %4070 = vmatpush.bf16.msra.mxu0 %v3875
        %4071 = vmatpush.bf16.msra.mxu0 %v3871
        %4072 = vmatpush.bf16.msra.mxu0 %v3867
        %4073 = vmatpush.bf16.msra.mxu0 %v3863
        %4074 = vmatpush.bf16.msra.mxu0 %v3859
        %4075 = vmatmul.bf16.gmra.mxu0 %v3710
        %v4076 = vpop.f32.mrf.mxu0
        %v4077 = vadd.f32 %v3755, %v4076
        %v4078 = vpop.f32.mrf.mxu0
        %v4079 = vadd.f32 %v3755, %v4078
        %4080 = vmatmul.bf16.gmra.mxu0 %v3711
        %v4081 = vpop.f32.mrf.mxu0
        %v4082 = vadd.f32 %v3755, %v4081
        %v4083 = vpop.f32.mrf.mxu0
        %v4084 = vadd.f32 %v3755, %v4083
        %4085 = vmatmul.bf16.gmra.mxu0 %v3712
        %v4086 = vpop.f32.mrf.mxu0
        %v4087 = vadd.f32 %v3755, %v4086
        %v4088 = vpop.f32.mrf.mxu0
        %v4089 = vadd.f32 %v3755, %v4088
        %4090 = vmatmul.bf16.gmra.mxu0 %v3713
        %v4091 = vpop.f32.mrf.mxu0
        %v4092 = vadd.f32 %v3755, %v4091
        %v4093 = vpop.f32.mrf.mxu0
        %v4094 = vadd.f32 %v3755, %v4093
        %4095 = vmatmul.bf16.gmra.mxu0 %v3714
        %v4096 = vpop.f32.mrf.mxu0
        %v4097 = vadd.f32 %v3755, %v4096
        %v4098 = vpop.f32.mrf.mxu0
        %v4099 = vadd.f32 %v3755, %v4098
        %4100 = vmatmul.bf16.gmra.mxu0 %v3715
        %v4101 = vpop.f32.mrf.mxu0
        %v4102 = vadd.f32 %v3755, %v4101
        %v4103 = vpop.f32.mrf.mxu0
        %v4104 = vadd.f32 %v3755, %v4103
        %4105 = vmatmul.bf16.gmra.mxu0 %v3716
        %v4106 = vpop.f32.mrf.mxu0
        %v4107 = vadd.f32 %v3755, %v4106
        %v4108 = vpop.f32.mrf.mxu0
        %v4109 = vadd.f32 %v3755, %v4108
        %4110 = vmatmul.bf16.gmra.mxu0 %v3717
        %v4111 = vpop.f32.mrf.mxu0
        %v4112 = vadd.f32 %v3755, %v4111
        %v4113 = vpop.f32.mrf.mxu0
        %v4114 = vadd.f32 %v3755, %v4113
        %4115 = vdwg.mxu0
        %vm4116 = vcmp.gt.f32.partialorder %v3930, 0.0
        %vm4117 = vcmp.gt.f32.partialorder %v3979, 0.0
        %vm4118 = vcmp.gt.f32.partialorder %v4028, 0.0
        %vm4119 = vcmp.gt.f32.partialorder %v4077, 0.0
        %vm4120 = vcmp.gt.f32.partialorder %v3932, 0.0
        %vm4121 = vcmp.gt.f32.partialorder %v3981, 0.0
        %vm4122 = vcmp.gt.f32.partialorder %v4030, 0.0
        %vm4123 = vcmp.gt.f32.partialorder %v4079, 0.0
        %vm4124 = vcmp.gt.f32.partialorder %v3935, 0.0
        %vm4125 = vcmp.gt.f32.partialorder %v3984, 0.0
        %vm4126 = vcmp.gt.f32.partialorder %v4033, 0.0
        %vm4127 = vcmp.gt.f32.partialorder %v4082, 0.0
        %vm4128 = vcmp.gt.f32.partialorder %v3937, 0.0
        %vm4129 = vcmp.gt.f32.partialorder %v3986, 0.0
        %vm4130 = vcmp.gt.f32.partialorder %v4035, 0.0
        %vm4131 = vcmp.gt.f32.partialorder %v4084, 0.0
        %vm4132 = vcmp.gt.f32.partialorder %v3940, 0.0
        %vm4133 = vcmp.gt.f32.partialorder %v3989, 0.0
        %vm4134 = vcmp.gt.f32.partialorder %v4038, 0.0
        %vm4135 = vcmp.gt.f32.partialorder %v4087, 0.0
        %vm4136 = vcmp.gt.f32.partialorder %v3942, 0.0
        %vm4137 = vcmp.gt.f32.partialorder %v3991, 0.0
        %vm4138 = vcmp.gt.f32.partialorder %v4040, 0.0
        %vm4139 = vcmp.gt.f32.partialorder %v4089, 0.0
        %vm4140 = vcmp.gt.f32.partialorder %v3945, 0.0
        %vm4141 = vcmp.gt.f32.partialorder %v3994, 0.0
        %vm4142 = vcmp.gt.f32.partialorder %v4043, 0.0
        %vm4143 = vcmp.gt.f32.partialorder %v4092, 0.0
        %vm4144 = vcmp.gt.f32.partialorder %v3947, 0.0
        %vm4145 = vcmp.gt.f32.partialorder %v3996, 0.0
        %vm4146 = vcmp.gt.f32.partialorder %v4045, 0.0
        %vm4147 = vcmp.gt.f32.partialorder %v4094, 0.0
        %vm4148 = vcmp.gt.f32.partialorder %v3950, 0.0
        %vm4149 = vcmp.gt.f32.partialorder %v3999, 0.0
        %vm4150 = vcmp.gt.f32.partialorder %v4048, 0.0
        %vm4151 = vcmp.gt.f32.partialorder %v4097, 0.0
        %vm4152 = vcmp.gt.f32.partialorder %v3952, 0.0
        %vm4153 = vcmp.gt.f32.partialorder %v4001, 0.0
        %vm4154 = vcmp.gt.f32.partialorder %v4050, 0.0
        %vm4155 = vcmp.gt.f32.partialorder %v4099, 0.0
        %vm4156 = vcmp.gt.f32.partialorder %v3955, 0.0
        %vm4157 = vcmp.gt.f32.partialorder %v4004, 0.0
        %vm4158 = vcmp.gt.f32.partialorder %v4053, 0.0
        %vm4159 = vcmp.gt.f32.partialorder %v4102, 0.0
        %vm4160 = vcmp.gt.f32.partialorder %v3957, 0.0
        %vm4161 = vcmp.gt.f32.partialorder %v4006, 0.0
        %vm4162 = vcmp.gt.f32.partialorder %v4055, 0.0
        %vm4163 = vcmp.gt.f32.partialorder %v4104, 0.0
        %vm4164 = vcmp.gt.f32.partialorder %v3960, 0.0
        %vm4165 = vcmp.gt.f32.partialorder %v4009, 0.0
        %vm4166 = vcmp.gt.f32.partialorder %v4058, 0.0
        %vm4167 = vcmp.gt.f32.partialorder %v4107, 0.0
        %vm4168 = vcmp.gt.f32.partialorder %v3962, 0.0
        %vm4169 = vcmp.gt.f32.partialorder %v4011, 0.0
        %vm4170 = vcmp.gt.f32.partialorder %v4060, 0.0
        %vm4171 = vcmp.gt.f32.partialorder %v4109, 0.0
        %vm4172 = vcmp.gt.f32.partialorder %v3965, 0.0
        %vm4173 = vcmp.gt.f32.partialorder %v4014, 0.0
        %vm4174 = vcmp.gt.f32.partialorder %v4063, 0.0
        %vm4175 = vcmp.gt.f32.partialorder %v4112, 0.0
        %vm4176 = vcmp.gt.f32.partialorder %v3967, 0.0
        %vm4177 = vcmp.gt.f32.partialorder %v4016, 0.0
        %vm4178 = vcmp.gt.f32.partialorder %v4065, 0.0
        %vm4179 = vcmp.gt.f32.partialorder %v4114, 0.0
        %v4180 = vstv %s816
        %v4181 = vmul.f32 %v4180, %v3930
        %v4182 = vmul.f32 %v4180, %v3979
        %v4183 = vmul.f32 %v4180, %v4028
        %v4184 = vmul.f32 %v4180, %v4077
        %v4185 = vmul.f32 %v4180, %v3932
        %v4186 = vmul.f32 %v4180, %v3981
        %v4187 = vmul.f32 %v4180, %v4030
        %v4188 = vmul.f32 %v4180, %v4079
        %v4189 = vmul.f32 %v4180, %v3935
        %v4190 = vmul.f32 %v4180, %v3984
        %v4191 = vmul.f32 %v4180, %v4033
        %v4192 = vmul.f32 %v4180, %v4082
        %v4193 = vmul.f32 %v4180, %v3937
        %v4194 = vmul.f32 %v4180, %v3986
        %v4195 = vmul.f32 %v4180, %v4035
        %v4196 = vmul.f32 %v4180, %v4084
        %v4197 = vmul.f32 %v4180, %v3940
        %v4198 = vmul.f32 %v4180, %v3989
        %v4199 = vmul.f32 %v4180, %v4038
        %v4200 = vmul.f32 %v4180, %v4087
        %v4201 = vmul.f32 %v4180, %v3942
        %v4202 = vmul.f32 %v4180, %v3991
        %v4203 = vmul.f32 %v4180, %v4040
        %v4204 = vmul.f32 %v4180, %v4089
        %v4205 = vmul.f32 %v4180, %v3945
        %v4206 = vmul.f32 %v4180, %v3994
        %v4207 = vmul.f32 %v4180, %v4043
        %v4208 = vmul.f32 %v4180, %v4092
        %v4209 = vmul.f32 %v4180, %v3947
        %v4210 = vmul.f32 %v4180, %v3996
        %v4211 = vmul.f32 %v4180, %v4045
        %v4212 = vmul.f32 %v4180, %v4094
        %v4213 = vmul.f32 %v4180, %v3950
        %v4214 = vmul.f32 %v4180, %v3999
        %v4215 = vmul.f32 %v4180, %v4048
        %v4216 = vmul.f32 %v4180, %v4097
        %v4217 = vmul.f32 %v4180, %v3952
        %v4218 = vmul.f32 %v4180, %v4001
        %v4219 = vmul.f32 %v4180, %v4050
        %v4220 = vmul.f32 %v4180, %v4099
        %v4221 = vmul.f32 %v4180, %v3955
        %v4222 = vmul.f32 %v4180, %v4004
        %v4223 = vmul.f32 %v4180, %v4053
        %v4224 = vmul.f32 %v4180, %v4102
        %v4225 = vmul.f32 %v4180, %v3957
        %v4226 = vmul.f32 %v4180, %v4006
        %v4227 = vmul.f32 %v4180, %v4055
        %v4228 = vmul.f32 %v4180, %v4104
        %v4229 = vmul.f32 %v4180, %v3960
        %v4230 = vmul.f32 %v4180, %v4009
        %v4231 = vmul.f32 %v4180, %v4058
        %v4232 = vmul.f32 %v4180, %v4107
        %v4233 = vmul.f32 %v4180, %v3962
        %v4234 = vmul.f32 %v4180, %v4011
        %v4235 = vmul.f32 %v4180, %v4060
        %v4236 = vmul.f32 %v4180, %v4109
        %v4237 = vmul.f32 %v4180, %v3965
        %v4238 = vmul.f32 %v4180, %v4014
        %v4239 = vmul.f32 %v4180, %v4063
        %v4240 = vmul.f32 %v4180, %v4112
        %v4241 = vmul.f32 %v4180, %v3967
        %v4242 = vmul.f32 %v4180, %v4016
        %v4243 = vmul.f32 %v4180, %v4065
        %v4244 = vmul.f32 %v4180, %v4114
        %v4245 = vsel %vm4116, %v3930, %v4181
        %v4246 = vsel %vm4117, %v3979, %v4182
        %v4247 = vsel %vm4118, %v4028, %v4183
        %v4248 = vsel %vm4119, %v4077, %v4184
        %v4249 = vsel %vm4120, %v3932, %v4185
        %v4250 = vsel %vm4121, %v3981, %v4186
        %v4251 = vsel %vm4122, %v4030, %v4187
        %v4252 = vsel %vm4123, %v4079, %v4188
        %v4253 = vsel %vm4124, %v3935, %v4189
        %v4254 = vsel %vm4125, %v3984, %v4190
        %v4255 = vsel %vm4126, %v4033, %v4191
        %v4256 = vsel %vm4127, %v4082, %v4192
        %v4257 = vsel %vm4128, %v3937, %v4193
        %v4258 = vsel %vm4129, %v3986, %v4194
        %v4259 = vsel %vm4130, %v4035, %v4195
        %v4260 = vsel %vm4131, %v4084, %v4196
        %v4261 = vsel %vm4132, %v3940, %v4197
        %v4262 = vsel %vm4133, %v3989, %v4198
        %v4263 = vsel %vm4134, %v4038, %v4199
        %v4264 = vsel %vm4135, %v4087, %v4200
        %v4265 = vsel %vm4136, %v3942, %v4201
        %v4266 = vsel %vm4137, %v3991, %v4202
        %v4267 = vsel %vm4138, %v4040, %v4203
        %v4268 = vsel %vm4139, %v4089, %v4204
        %v4269 = vsel %vm4140, %v3945, %v4205
        %v4270 = vsel %vm4141, %v3994, %v4206
        %v4271 = vsel %vm4142, %v4043, %v4207
        %v4272 = vsel %vm4143, %v4092, %v4208
        %v4273 = vsel %vm4144, %v3947, %v4209
        %v4274 = vsel %vm4145, %v3996, %v4210
        %v4275 = vsel %vm4146, %v4045, %v4211
        %v4276 = vsel %vm4147, %v4094, %v4212
        %v4277 = vsel %vm4148, %v3950, %v4213
        %v4278 = vsel %vm4149, %v3999, %v4214
        %v4279 = vsel %vm4150, %v4048, %v4215
        %v4280 = vsel %vm4151, %v4097, %v4216
        %v4281 = vsel %vm4152, %v3952, %v4217
        %v4282 = vsel %vm4153, %v4001, %v4218
        %v4283 = vsel %vm4154, %v4050, %v4219
        %v4284 = vsel %vm4155, %v4099, %v4220
        %v4285 = vsel %vm4156, %v3955, %v4221
        %v4286 = vsel %vm4157, %v4004, %v4222
        %v4287 = vsel %vm4158, %v4053, %v4223
        %v4288 = vsel %vm4159, %v4102, %v4224
        %v4289 = vsel %vm4160, %v3957, %v4225
        %v4290 = vsel %vm4161, %v4006, %v4226
        %v4291 = vsel %vm4162, %v4055, %v4227
        %v4292 = vsel %vm4163, %v4104, %v4228
        %v4293 = vsel %vm4164, %v3960, %v4229
        %v4294 = vsel %vm4165, %v4009, %v4230
        %v4295 = vsel %vm4166, %v4058, %v4231
        %v4296 = vsel %vm4167, %v4107, %v4232
        %v4297 = vsel %vm4168, %v3962, %v4233
        %v4298 = vsel %vm4169, %v4011, %v4234
        %v4299 = vsel %vm4170, %v4060, %v4235
        %v4300 = vsel %vm4171, %v4109, %v4236
        %v4301 = vsel %vm4172, %v3965, %v4237
        %v4302 = vsel %vm4173, %v4014, %v4238
        %v4303 = vsel %vm4174, %v4063, %v4239
        %v4304 = vsel %vm4175, %v4112, %v4240
        %v4305 = vsel %vm4176, %v3967, %v4241
        %v4306 = vsel %vm4177, %v4016, %v4242
        %v4307 = vsel %vm4178, %v4065, %v4243
        %v4308 = vsel %vm4179, %v4114, %v4244
        %v4309 = vpack.c.bf16 %v4249, %v4245
        %v4310 = vpack.c.bf16 %v4250, %v4246
        %v4311 = vpack.c.bf16 %v4251, %v4247
        %v4312 = vpack.c.bf16 %v4252, %v4248
        %v4313 = vpack.c.bf16 %v4257, %v4253
        %v4314 = vpack.c.bf16 %v4258, %v4254
        %v4315 = vpack.c.bf16 %v4259, %v4255
        %v4316 = vpack.c.bf16 %v4260, %v4256
        %v4317 = vpack.c.bf16 %v4265, %v4261
        %v4318 = vpack.c.bf16 %v4266, %v4262
        %v4319 = vpack.c.bf16 %v4267, %v4263
        %v4320 = vpack.c.bf16 %v4268, %v4264
        %v4321 = vpack.c.bf16 %v4273, %v4269
        %v4322 = vpack.c.bf16 %v4274, %v4270
        %v4323 = vpack.c.bf16 %v4275, %v4271
        %v4324 = vpack.c.bf16 %v4276, %v4272
        %v4325 = vpack.c.bf16 %v4281, %v4277
        %v4326 = vpack.c.bf16 %v4282, %v4278
        %v4327 = vpack.c.bf16 %v4283, %v4279
        %v4328 = vpack.c.bf16 %v4284, %v4280
        %v4329 = vpack.c.bf16 %v4289, %v4285
        %v4330 = vpack.c.bf16 %v4290, %v4286
        %v4331 = vpack.c.bf16 %v4291, %v4287
        %v4332 = vpack.c.bf16 %v4292, %v4288
        %v4333 = vpack.c.bf16 %v4297, %v4293
        %v4334 = vpack.c.bf16 %v4298, %v4294
        %v4335 = vpack.c.bf16 %v4299, %v4295
        %v4336 = vpack.c.bf16 %v4300, %v4296
        %v4337 = vpack.c.bf16 %v4305, %v4301
        %v4338 = vpack.c.bf16 %v4306, %v4302
        %v4339 = vpack.c.bf16 %v4307, %v4303
        %v4340 = vpack.c.bf16 %v4308, %v4304
        %v4341 = vld [vmem:[#allocation15] sm:$0xf]
        %v4342 = vld [vmem:[#allocation15 + $0x4] sm:$0xf]
        %v4343 = vld [vmem:[#allocation15 + $0x8] sm:$0xf]
        %v4344 = vld [vmem:[#allocation15 + $0xc] sm:$0xf]
        %v4345 = vld [vmem:[#allocation15 + $0x10] sm:$0xf]
        %v4346 = vld [vmem:[#allocation15 + $0x14] sm:$0xf]
        %v4347 = vld [vmem:[#allocation15 + $0x18] sm:$0xf]
        %v4348 = vld [vmem:[#allocation15 + $0x1c] sm:$0xf]
        %v4349 = vld [vmem:[#allocation15 + $0x20] sm:$0xf]
        %v4350 = vld [vmem:[#allocation15 + $0x24] sm:$0xf]
        %v4351 = vld [vmem:[#allocation15 + $0x28] sm:$0xf]
        %v4352 = vld [vmem:[#allocation15 + $0x2c] sm:$0xf]
        %v4353 = vld [vmem:[#allocation15 + $0x30] sm:$0xf]
        %v4354 = vld [vmem:[#allocation15 + $0x34] sm:$0xf]
        %v4355 = vld [vmem:[#allocation15 + $0x38] sm:$0xf]
        %v4356 = vld [vmem:[#allocation15 + $0x3c] sm:$0xf]
        %v4357 = vld [vmem:[#allocation15 + $0x40] sm:$0xf]
        %v4358 = vld [vmem:[#allocation15 + $0x44] sm:$0xf]
        %v4359 = vld [vmem:[#allocation15 + $0x48] sm:$0xf]
        %v4360 = vld [vmem:[#allocation15 + $0x4c] sm:$0xf]
        %v4361 = vld [vmem:[#allocation15 + $0x50] sm:$0xf]
        %v4362 = vld [vmem:[#allocation15 + $0x54] sm:$0xf]
        %v4363 = vld [vmem:[#allocation15 + $0x58] sm:$0xf]
        %v4364 = vld [vmem:[#allocation15 + $0x5c] sm:$0xf]
        %v4365 = vld [vmem:[#allocation15 + $0x60] sm:$0xf]
        %v4366 = vld [vmem:[#allocation15 + $0x64] sm:$0xf]
        %v4367 = vld [vmem:[#allocation15 + $0x68] sm:$0xf]
        %v4368 = vld [vmem:[#allocation15 + $0x6c] sm:$0xf]
        %v4369 = vld [vmem:[#allocation15 + $0x70] sm:$0xf]
        %v4370 = vld [vmem:[#allocation15 + $0x74] sm:$0xf]
        %v4371 = vld [vmem:[#allocation15 + $0x78] sm:$0xf]
        %v4372 = vld [vmem:[#allocation15 + $0x7c] sm:$0xf]
        %v4373 = vld [vmem:[#allocation15 + $0x80] sm:$0xf]
        %v4374 = vld [vmem:[#allocation15 + $0x84] sm:$0xf]
        %v4375 = vld [vmem:[#allocation15 + $0x88] sm:$0xf]
        %v4376 = vld [vmem:[#allocation15 + $0x8c] sm:$0xf]
        %v4377 = vld [vmem:[#allocation15 + $0x90] sm:$0xf]
        %v4378 = vld [vmem:[#allocation15 + $0x94] sm:$0xf]
        %v4379 = vld [vmem:[#allocation15 + $0x98] sm:$0xf]
        %v4380 = vld [vmem:[#allocation15 + $0x9c] sm:$0xf]
        %v4381 = vld [vmem:[#allocation15 + $0xa0] sm:$0xf]
        %v4382 = vld [vmem:[#allocation15 + $0xa4] sm:$0xf]
        %v4383 = vld [vmem:[#allocation15 + $0xa8] sm:$0xf]
        %v4384 = vld [vmem:[#allocation15 + $0xac] sm:$0xf]
        %v4385 = vld [vmem:[#allocation15 + $0xb0] sm:$0xf]
        %v4386 = vld [vmem:[#allocation15 + $0xb4] sm:$0xf]
        %v4387 = vld [vmem:[#allocation15 + $0xb8] sm:$0xf]
        %v4388 = vld [vmem:[#allocation15 + $0xbc] sm:$0xf]
        %v4389 = vld [vmem:[#allocation15 + $0xc0] sm:$0xf]
        %v4390 = vld [vmem:[#allocation15 + $0xc4] sm:$0xf]
        %v4391 = vld [vmem:[#allocation15 + $0xc8] sm:$0xf]
        %v4392 = vld [vmem:[#allocation15 + $0xcc] sm:$0xf]
        %v4393 = vld [vmem:[#allocation15 + $0xd0] sm:$0xf]
        %v4394 = vld [vmem:[#allocation15 + $0xd4] sm:$0xf]
        %v4395 = vld [vmem:[#allocation15 + $0xd8] sm:$0xf]
        %v4396 = vld [vmem:[#allocation15 + $0xdc] sm:$0xf]
        %v4397 = vld [vmem:[#allocation15 + $0xe0] sm:$0xf]
        %v4398 = vld [vmem:[#allocation15 + $0xe4] sm:$0xf]
        %v4399 = vld [vmem:[#allocation15 + $0xe8] sm:$0xf]
        %v4400 = vld [vmem:[#allocation15 + $0xec] sm:$0xf]
        %v4401 = vld [vmem:[#allocation15 + $0xf0] sm:$0xf]
        %v4402 = vld [vmem:[#allocation15 + $0xf4] sm:$0xf]
        %v4403 = vld [vmem:[#allocation15 + $0xf8] sm:$0xf]
        %v4404 = vld [vmem:[#allocation15 + $0xfc] sm:$0xf]
        %v4405 = vld [vmem:[#allocation17] sm:$0x1]
        %v4407 = vperm.slane %v4405, 0
        %v4473 = vunpack.c.l.b16 %v4341
        %v4474 = vunpack.c.l.b16 %v4342
        %v4475 = vunpack.c.l.b16 %v4343
        %v4476 = vunpack.c.l.b16 %v4344
        %v4477 = vunpack.c.l.b16 %v4345
        %v4478 = vunpack.c.l.b16 %v4346
        %v4479 = vunpack.c.l.b16 %v4347
        %v4480 = vunpack.c.l.b16 %v4348
        %v4481 = vunpack.c.l.b16 %v4349
        %v4482 = vunpack.c.l.b16 %v4350
        %v4483 = vunpack.c.l.b16 %v4351
        %v4484 = vunpack.c.l.b16 %v4352
        %v4485 = vunpack.c.l.b16 %v4353
        %v4486 = vunpack.c.l.b16 %v4354
        %v4487 = vunpack.c.l.b16 %v4355
        %v4488 = vunpack.c.l.b16 %v4356
        %v4489 = vunpack.c.l.b16 %v4357
        %v4490 = vunpack.c.l.b16 %v4358
        %v4491 = vunpack.c.l.b16 %v4359
        %v4492 = vunpack.c.l.b16 %v4360
        %v4493 = vunpack.c.l.b16 %v4361
        %v4494 = vunpack.c.l.b16 %v4362
        %v4495 = vunpack.c.l.b16 %v4363
        %v4496 = vunpack.c.l.b16 %v4364
        %v4497 = vunpack.c.l.b16 %v4365
        %v4498 = vunpack.c.l.b16 %v4366
        %v4499 = vunpack.c.l.b16 %v4367
        %v4500 = vunpack.c.l.b16 %v4368
        %v4501 = vunpack.c.l.b16 %v4369
        %v4502 = vunpack.c.l.b16 %v4370
        %v4503 = vunpack.c.l.b16 %v4371
        %v4504 = vunpack.c.l.b16 %v4372
        %v4505 = vunpack.c.l.b16 %v4373
        %v4506 = vunpack.c.l.b16 %v4374
        %v4507 = vunpack.c.l.b16 %v4375
        %v4508 = vunpack.c.l.b16 %v4376
        %v4509 = vunpack.c.l.b16 %v4377
        %v4510 = vunpack.c.l.b16 %v4378
        %v4511 = vunpack.c.l.b16 %v4379
        %v4512 = vunpack.c.l.b16 %v4380
        %v4513 = vunpack.c.l.b16 %v4381
        %v4514 = vunpack.c.l.b16 %v4382
        %v4515 = vunpack.c.l.b16 %v4383
        %v4516 = vunpack.c.l.b16 %v4384
        %v4517 = vunpack.c.l.b16 %v4385
        %v4518 = vunpack.c.l.b16 %v4386
        %v4519 = vunpack.c.l.b16 %v4387
        %v4520 = vunpack.c.l.b16 %v4388
        %v4521 = vunpack.c.l.b16 %v4389
        %v4522 = vunpack.c.l.b16 %v4390
        %v4523 = vunpack.c.l.b16 %v4391
        %v4524 = vunpack.c.l.b16 %v4392
        %v4525 = vunpack.c.l.b16 %v4393
        %v4526 = vunpack.c.l.b16 %v4394
        %v4527 = vunpack.c.l.b16 %v4395
        %v4528 = vunpack.c.l.b16 %v4396
        %v4529 = vunpack.c.l.b16 %v4397
        %v4530 = vunpack.c.l.b16 %v4398
        %v4531 = vunpack.c.l.b16 %v4399
        %v4532 = vunpack.c.l.b16 %v4400
        %v4533 = vunpack.c.l.b16 %v4401
        %v4534 = vunpack.c.l.b16 %v4402
        %v4535 = vunpack.c.l.b16 %v4403
        %v4536 = vunpack.c.l.b16 %v4404
        %v4537 = vpack.c.b16 %v4474, %v4473
        %v4538 = vpack.c.b16 %v4476, %v4475
        %v4539 = vpack.c.b16 %v4478, %v4477
        %v4540 = vpack.c.b16 %v4480, %v4479
        %v4541 = vpack.c.b16 %v4482, %v4481
        %v4542 = vpack.c.b16 %v4484, %v4483
        %v4543 = vpack.c.b16 %v4486, %v4485
        %v4544 = vpack.c.b16 %v4488, %v4487
        %v4545 = vpack.c.b16 %v4490, %v4489
        %v4546 = vpack.c.b16 %v4492, %v4491
        %v4547 = vpack.c.b16 %v4494, %v4493
        %v4548 = vpack.c.b16 %v4496, %v4495
        %v4549 = vpack.c.b16 %v4498, %v4497
        %v4550 = vpack.c.b16 %v4500, %v4499
        %v4551 = vpack.c.b16 %v4502, %v4501
        %v4552 = vpack.c.b16 %v4504, %v4503
        %v4553 = vpack.c.b16 %v4506, %v4505
        %v4554 = vpack.c.b16 %v4508, %v4507
        %v4555 = vpack.c.b16 %v4510, %v4509
        %v4556 = vpack.c.b16 %v4512, %v4511
        %v4557 = vpack.c.b16 %v4514, %v4513
        %v4558 = vpack.c.b16 %v4516, %v4515
        %v4559 = vpack.c.b16 %v4518, %v4517
        %v4560 = vpack.c.b16 %v4520, %v4519
        %v4561 = vpack.c.b16 %v4522, %v4521
        %v4562 = vpack.c.b16 %v4524, %v4523
        %v4563 = vpack.c.b16 %v4526, %v4525
        %v4564 = vpack.c.b16 %v4528, %v4527
        %v4565 = vpack.c.b16 %v4530, %v4529
        %v4566 = vpack.c.b16 %v4532, %v4531
        %v4567 = vpack.c.b16 %v4534, %v4533
        %v4568 = vpack.c.b16 %v4536, %v4535
        %4601 = vmatpush.bf16.msra.mxu0 %v4544
        %4602 = vmatpush.bf16.msra.mxu0 %v4543
        %4603 = vmatpush.bf16.msra.mxu0 %v4542
        %4604 = vmatpush.bf16.msra.mxu0 %v4541
        %4605 = vmatpush.bf16.msra.mxu0 %v4540
        %4606 = vmatpush.bf16.msra.mxu0 %v4539
        %4607 = vmatpush.bf16.msra.mxu0 %v4538
        %4608 = vmatpush.bf16.msra.mxu0 %v4537
        %4609 = vmatmul.bf16.gmra.mxu0 %v4309
        %v4610 = vpop.f32.mrf.mxu0
        %v4611 = vadd.f32 %v4407, %v4610
        %v4612 = vpop.f32.mrf.mxu0
        %v4613 = vadd.f32 %v4407, %v4612
        %4614 = vmatmul.bf16.gmra.mxu0 %v4313
        %v4615 = vpop.f32.mrf.mxu0
        %v4616 = vadd.f32 %v4407, %v4615
        %v4617 = vpop.f32.mrf.mxu0
        %v4618 = vadd.f32 %v4407, %v4617
        %4619 = vmatmul.bf16.gmra.mxu0 %v4317
        %v4620 = vpop.f32.mrf.mxu0
        %v4621 = vadd.f32 %v4407, %v4620
        %v4622 = vpop.f32.mrf.mxu0
        %v4623 = vadd.f32 %v4407, %v4622
        %4624 = vmatmul.bf16.gmra.mxu0 %v4321
        %v4625 = vpop.f32.mrf.mxu0
        %v4626 = vadd.f32 %v4407, %v4625
        %v4627 = vpop.f32.mrf.mxu0
        %v4628 = vadd.f32 %v4407, %v4627
        %4629 = vmatmul.bf16.gmra.mxu0 %v4325
        %v4630 = vpop.f32.mrf.mxu0
        %v4631 = vadd.f32 %v4407, %v4630
        %v4632 = vpop.f32.mrf.mxu0
        %v4633 = vadd.f32 %v4407, %v4632
        %4634 = vmatmul.bf16.gmra.mxu0 %v4329
        %v4635 = vpop.f32.mrf.mxu0
        %v4636 = vadd.f32 %v4407, %v4635
        %v4637 = vpop.f32.mrf.mxu0
        %v4638 = vadd.f32 %v4407, %v4637
        %4639 = vmatmul.bf16.gmra.mxu0 %v4333
        %v4640 = vpop.f32.mrf.mxu0
        %v4641 = vadd.f32 %v4407, %v4640
        %v4642 = vpop.f32.mrf.mxu0
        %v4643 = vadd.f32 %v4407, %v4642
        %4644 = vmatmul.bf16.gmra.mxu0 %v4337
        %v4645 = vpop.f32.mrf.mxu0
        %v4646 = vadd.f32 %v4407, %v4645
        %v4647 = vpop.f32.mrf.mxu0
        %v4648 = vadd.f32 %v4407, %v4647
        %4649 = vdwg.mxu0
        %4650 = vmatpush.bf16.msra.mxu0 %v4552
        %4651 = vmatpush.bf16.msra.mxu0 %v4551
        %4652 = vmatpush.bf16.msra.mxu0 %v4550
        %4653 = vmatpush.bf16.msra.mxu0 %v4549
        %4654 = vmatpush.bf16.msra.mxu0 %v4548
        %4655 = vmatpush.bf16.msra.mxu0 %v4547
        %4656 = vmatpush.bf16.msra.mxu0 %v4546
        %4657 = vmatpush.bf16.msra.mxu0 %v4545
        %4658 = vmatmul.bf16.gmra.mxu0 %v4310
        %v4659 = vpop.f32.mrf.mxu0
        %v4660 = vadd.f32 %v4611, %v4659
        %v4661 = vpop.f32.mrf.mxu0
        %v4662 = vadd.f32 %v4613, %v4661
        %4663 = vmatmul.bf16.gmra.mxu0 %v4314
        %v4664 = vpop.f32.mrf.mxu0
        %v4665 = vadd.f32 %v4616, %v4664
        %v4666 = vpop.f32.mrf.mxu0
        %v4667 = vadd.f32 %v4618, %v4666
        %4668 = vmatmul.bf16.gmra.mxu0 %v4318
        %v4669 = vpop.f32.mrf.mxu0
        %v4670 = vadd.f32 %v4621, %v4669
        %v4671 = vpop.f32.mrf.mxu0
        %v4672 = vadd.f32 %v4623, %v4671
        %4673 = vmatmul.bf16.gmra.mxu0 %v4322
        %v4674 = vpop.f32.mrf.mxu0
        %v4675 = vadd.f32 %v4626, %v4674
        %v4676 = vpop.f32.mrf.mxu0
        %v4677 = vadd.f32 %v4628, %v4676
        %4678 = vmatmul.bf16.gmra.mxu0 %v4326
        %v4679 = vpop.f32.mrf.mxu0
        %v4680 = vadd.f32 %v4631, %v4679
        %v4681 = vpop.f32.mrf.mxu0
        %v4682 = vadd.f32 %v4633, %v4681
        %4683 = vmatmul.bf16.gmra.mxu0 %v4330
        %v4684 = vpop.f32.mrf.mxu0
        %v4685 = vadd.f32 %v4636, %v4684
        %v4686 = vpop.f32.mrf.mxu0
        %v4687 = vadd.f32 %v4638, %v4686
        %4688 = vmatmul.bf16.gmra.mxu0 %v4334
        %v4689 = vpop.f32.mrf.mxu0
        %v4690 = vadd.f32 %v4641, %v4689
        %v4691 = vpop.f32.mrf.mxu0
        %v4692 = vadd.f32 %v4643, %v4691
        %4693 = vmatmul.bf16.gmra.mxu0 %v4338
        %v4694 = vpop.f32.mrf.mxu0
        %v4695 = vadd.f32 %v4646, %v4694
        %v4696 = vpop.f32.mrf.mxu0
        %v4697 = vadd.f32 %v4648, %v4696
        %4698 = vdwg.mxu0
        %4699 = vmatpush.bf16.msra.mxu0 %v4560
        %4700 = vmatpush.bf16.msra.mxu0 %v4559
        %4701 = vmatpush.bf16.msra.mxu0 %v4558
        %4702 = vmatpush.bf16.msra.mxu0 %v4557
        %4703 = vmatpush.bf16.msra.mxu0 %v4556
        %4704 = vmatpush.bf16.msra.mxu0 %v4555
        %4705 = vmatpush.bf16.msra.mxu0 %v4554
        %4706 = vmatpush.bf16.msra.mxu0 %v4553
        %4707 = vmatmul.bf16.gmra.mxu0 %v4311
        %v4708 = vpop.f32.mrf.mxu0
        %v4709 = vadd.f32 %v4660, %v4708
        %v4710 = vpop.f32.mrf.mxu0
        %v4711 = vadd.f32 %v4662, %v4710
        %4712 = vmatmul.bf16.gmra.mxu0 %v4315
        %v4713 = vpop.f32.mrf.mxu0
        %v4714 = vadd.f32 %v4665, %v4713
        %v4715 = vpop.f32.mrf.mxu0
        %v4716 = vadd.f32 %v4667, %v4715
        %4717 = vmatmul.bf16.gmra.mxu0 %v4319
        %v4718 = vpop.f32.mrf.mxu0
        %v4719 = vadd.f32 %v4670, %v4718
        %v4720 = vpop.f32.mrf.mxu0
        %v4721 = vadd.f32 %v4672, %v4720
        %4722 = vmatmul.bf16.gmra.mxu0 %v4323
        %v4723 = vpop.f32.mrf.mxu0
        %v4724 = vadd.f32 %v4675, %v4723
        %v4725 = vpop.f32.mrf.mxu0
        %v4726 = vadd.f32 %v4677, %v4725
        %4727 = vmatmul.bf16.gmra.mxu0 %v4327
        %v4728 = vpop.f32.mrf.mxu0
        %v4729 = vadd.f32 %v4680, %v4728
        %v4730 = vpop.f32.mrf.mxu0
        %v4731 = vadd.f32 %v4682, %v4730
        %4732 = vmatmul.bf16.gmra.mxu0 %v4331
        %v4733 = vpop.f32.mrf.mxu0
        %v4734 = vadd.f32 %v4685, %v4733
        %v4735 = vpop.f32.mrf.mxu0
        %v4736 = vadd.f32 %v4687, %v4735
        %4737 = vmatmul.bf16.gmra.mxu0 %v4335
        %v4738 = vpop.f32.mrf.mxu0
        %v4739 = vadd.f32 %v4690, %v4738
        %v4740 = vpop.f32.mrf.mxu0
        %v4741 = vadd.f32 %v4692, %v4740
        %4742 = vmatmul.bf16.gmra.mxu0 %v4339
        %v4743 = vpop.f32.mrf.mxu0
        %v4744 = vadd.f32 %v4695, %v4743
        %v4745 = vpop.f32.mrf.mxu0
        %v4746 = vadd.f32 %v4697, %v4745
        %4747 = vdwg.mxu0
        %4748 = vmatpush.bf16.msra.mxu0 %v4568
        %4749 = vmatpush.bf16.msra.mxu0 %v4567
        %4750 = vmatpush.bf16.msra.mxu0 %v4566
        %4751 = vmatpush.bf16.msra.mxu0 %v4565
        %4752 = vmatpush.bf16.msra.mxu0 %v4564
        %4753 = vmatpush.bf16.msra.mxu0 %v4563
        %4754 = vmatpush.bf16.msra.mxu0 %v4562
        %4755 = vmatpush.bf16.msra.mxu0 %v4561
        %4756 = vmatmul.bf16.gmra.mxu0 %v4312
        %v4757 = vpop.f32.mrf.mxu0
        %v4758 = vadd.f32 %v4709, %v4757
        %v4759 = vpop.f32.mrf.mxu0
        %v4760 = vadd.f32 %v4711, %v4759
        %4761 = vmatmul.bf16.gmra.mxu0 %v4316
        %v4762 = vpop.f32.mrf.mxu0
        %v4763 = vadd.f32 %v4714, %v4762
        %v4764 = vpop.f32.mrf.mxu0
        %v4765 = vadd.f32 %v4716, %v4764
        %4766 = vmatmul.bf16.gmra.mxu0 %v4320
        %v4767 = vpop.f32.mrf.mxu0
        %v4768 = vadd.f32 %v4719, %v4767
        %v4769 = vpop.f32.mrf.mxu0
        %v4770 = vadd.f32 %v4721, %v4769
        %4771 = vmatmul.bf16.gmra.mxu0 %v4324
        %v4772 = vpop.f32.mrf.mxu0
        %v4773 = vadd.f32 %v4724, %v4772
        %v4774 = vpop.f32.mrf.mxu0
        %v4775 = vadd.f32 %v4726, %v4774
        %4776 = vmatmul.bf16.gmra.mxu0 %v4328
        %v4777 = vpop.f32.mrf.mxu0
        %v4778 = vadd.f32 %v4729, %v4777
        %v4779 = vpop.f32.mrf.mxu0
        %v4780 = vadd.f32 %v4731, %v4779
        %4781 = vmatmul.bf16.gmra.mxu0 %v4332
        %v4782 = vpop.f32.mrf.mxu0
        %v4783 = vadd.f32 %v4734, %v4782
        %v4784 = vpop.f32.mrf.mxu0
        %v4785 = vadd.f32 %v4736, %v4784
        %4786 = vmatmul.bf16.gmra.mxu0 %v4336
        %v4787 = vpop.f32.mrf.mxu0
        %v4788 = vadd.f32 %v4739, %v4787
        %v4789 = vpop.f32.mrf.mxu0
        %v4790 = vadd.f32 %v4741, %v4789
        %4791 = vmatmul.bf16.gmra.mxu0 %v4340
        %v4792 = vpop.f32.mrf.mxu0
        %v4793 = vadd.f32 %v4744, %v4792
        %v4794 = vpop.f32.mrf.mxu0
        %v4795 = vadd.f32 %v4746, %v4794
        %4796 = vdwg.mxu0
        %v4797 = vsub.f32 %v3671, %v4758
        %v4798 = vsub.f32 %v3673, %v4760
        %v4799 = vsub.f32 %v3676, %v4763
        %v4800 = vsub.f32 %v3678, %v4765
        %v4801 = vsub.f32 %v3681, %v4768
        %v4802 = vsub.f32 %v3683, %v4770
        %v4803 = vsub.f32 %v3686, %v4773
        %v4804 = vsub.f32 %v3688, %v4775
        %v4805 = vsub.f32 %v3691, %v4778
        %v4806 = vsub.f32 %v3693, %v4780
        %v4807 = vsub.f32 %v3696, %v4783
        %v4808 = vsub.f32 %v3698, %v4785
        %v4809 = vsub.f32 %v3701, %v4788
        %v4810 = vsub.f32 %v3703, %v4790
        %v4811 = vsub.f32 %v3706, %v4793
        %v4812 = vsub.f32 %v3708, %v4795
        %v4813 = vpack.c.bf16 %v4798, %v4797
        %v4814 = vpack.c.bf16 %v4800, %v4799
        %v4815 = vpack.c.bf16 %v4802, %v4801
        %v4816 = vpack.c.bf16 %v4804, %v4803
        %v4817 = vpack.c.bf16 %v4806, %v4805
        %v4818 = vpack.c.bf16 %v4808, %v4807
        %v4819 = vpack.c.bf16 %v4810, %v4809
        %v4820 = vpack.c.bf16 %v4812, %v4811
        %v4821 = vld [vmem:[#allocation18] sm:$0xff]
        %v4822 = vld [vmem:[#allocation18 + $0x8] sm:$0xff]
        %v4823 = vld [vmem:[#allocation18 + $0x10] sm:$0xff]
        %v4824 = vld [vmem:[#allocation18 + $0x18] sm:$0xff]
        %v4825 = vld [vmem:[#allocation18 + $0x20] sm:$0xff]
        %v4826 = vld [vmem:[#allocation18 + $0x28] sm:$0xff]
        %v4827 = vld [vmem:[#allocation18 + $0x30] sm:$0xff]
        %v4828 = vld [vmem:[#allocation18 + $0x38] sm:$0xff]
        %v4829 = vld [vmem:[#allocation18 + $0x40] sm:$0xff]
        %v4830 = vld [vmem:[#allocation18 + $0x48] sm:$0xff]
        %v4831 = vld [vmem:[#allocation18 + $0x50] sm:$0xff]
        %v4832 = vld [vmem:[#allocation18 + $0x58] sm:$0xff]
        %v4833 = vld [vmem:[#allocation18 + $0x60] sm:$0xff]
        %v4834 = vld [vmem:[#allocation18 + $0x68] sm:$0xff]
        %v4835 = vld [vmem:[#allocation18 + $0x70] sm:$0xff]
        %v4836 = vld [vmem:[#allocation18 + $0x78] sm:$0xff]
        %v4837 = vld [vmem:[#allocation18 + $0x80] sm:$0xff]
        %v4838 = vld [vmem:[#allocation18 + $0x88] sm:$0xff]
        %v4839 = vld [vmem:[#allocation18 + $0x90] sm:$0xff]
        %v4840 = vld [vmem:[#allocation18 + $0x98] sm:$0xff]
        %v4841 = vld [vmem:[#allocation18 + $0xa0] sm:$0xff]
        %v4842 = vld [vmem:[#allocation18 + $0xa8] sm:$0xff]
        %v4843 = vld [vmem:[#allocation18 + $0xb0] sm:$0xff]
        %v4844 = vld [vmem:[#allocation18 + $0xb8] sm:$0xff]
        %v4845 = vld [vmem:[#allocation18 + $0xc0] sm:$0xff]
        %v4846 = vld [vmem:[#allocation18 + $0xc8] sm:$0xff]
        %v4847 = vld [vmem:[#allocation18 + $0xd0] sm:$0xff]
        %v4848 = vld [vmem:[#allocation18 + $0xd8] sm:$0xff]
        %v4849 = vld [vmem:[#allocation18 + $0xe0] sm:$0xff]
        %v4850 = vld [vmem:[#allocation18 + $0xe8] sm:$0xff]
        %v4851 = vld [vmem:[#allocation18 + $0xf0] sm:$0xff]
        %v4852 = vld [vmem:[#allocation18 + $0xf8] sm:$0xff]
        %v4853 = vld [vmem:[%s13] sm:$0xf]
        %v4855 = vperm.slane %v4853, 0
        %v4856 = vperm.slane %v4853, 1
        %v4857 = vperm.slane %v4853, 2
        %v4858 = vperm.slane %v4853, 3
        %v4895 = vunpack.c.l.b16 %v4821
        %v4896 = vunpack.c.h.b16 %v4821
        %v4897 = vunpack.c.l.b16 %v4822
        %v4898 = vunpack.c.h.b16 %v4822
        %v4899 = vunpack.c.l.b16 %v4823
        %v4900 = vunpack.c.h.b16 %v4823
        %v4901 = vunpack.c.l.b16 %v4824
        %v4902 = vunpack.c.h.b16 %v4824
        %v4903 = vunpack.c.l.b16 %v4825
        %v4904 = vunpack.c.h.b16 %v4825
        %v4905 = vunpack.c.l.b16 %v4826
        %v4906 = vunpack.c.h.b16 %v4826
        %v4907 = vunpack.c.l.b16 %v4827
        %v4908 = vunpack.c.h.b16 %v4827
        %v4909 = vunpack.c.l.b16 %v4828
        %v4910 = vunpack.c.h.b16 %v4828
        %v4911 = vunpack.c.l.b16 %v4829
        %v4912 = vunpack.c.h.b16 %v4829
        %v4913 = vunpack.c.l.b16 %v4830
        %v4914 = vunpack.c.h.b16 %v4830
        %v4915 = vunpack.c.l.b16 %v4831
        %v4916 = vunpack.c.h.b16 %v4831
        %v4917 = vunpack.c.l.b16 %v4832
        %v4918 = vunpack.c.h.b16 %v4832
        %v4919 = vunpack.c.l.b16 %v4833
        %v4920 = vunpack.c.h.b16 %v4833
        %v4921 = vunpack.c.l.b16 %v4834
        %v4922 = vunpack.c.h.b16 %v4834
        %v4923 = vunpack.c.l.b16 %v4835
        %v4924 = vunpack.c.h.b16 %v4835
        %v4925 = vunpack.c.l.b16 %v4836
        %v4926 = vunpack.c.h.b16 %v4836
        %v4927 = vunpack.c.l.b16 %v4837
        %v4928 = vunpack.c.h.b16 %v4837
        %v4929 = vunpack.c.l.b16 %v4838
        %v4930 = vunpack.c.h.b16 %v4838
        %v4931 = vunpack.c.l.b16 %v4839
        %v4932 = vunpack.c.h.b16 %v4839
        %v4933 = vunpack.c.l.b16 %v4840
        %v4934 = vunpack.c.h.b16 %v4840
        %v4935 = vunpack.c.l.b16 %v4841
        %v4936 = vunpack.c.h.b16 %v4841
        %v4937 = vunpack.c.l.b16 %v4842
        %v4938 = vunpack.c.h.b16 %v4842
        %v4939 = vunpack.c.l.b16 %v4843
        %v4940 = vunpack.c.h.b16 %v4843
        %v4941 = vunpack.c.l.b16 %v4844
        %v4942 = vunpack.c.h.b16 %v4844
        %v4943 = vunpack.c.l.b16 %v4845
        %v4944 = vunpack.c.h.b16 %v4845
        %v4945 = vunpack.c.l.b16 %v4846
        %v4946 = vunpack.c.h.b16 %v4846
        %v4947 = vunpack.c.l.b16 %v4847
        %v4948 = vunpack.c.h.b16 %v4847
        %v4949 = vunpack.c.l.b16 %v4848
        %v4950 = vunpack.c.h.b16 %v4848
        %v4951 = vunpack.c.l.b16 %v4849
        %v4952 = vunpack.c.h.b16 %v4849
        %v4953 = vunpack.c.l.b16 %v4850
        %v4954 = vunpack.c.h.b16 %v4850
        %v4955 = vunpack.c.l.b16 %v4851
        %v4956 = vunpack.c.h.b16 %v4851
        %v4957 = vunpack.c.l.b16 %v4852
        %v4958 = vunpack.c.h.b16 %v4852
        %v4959 = vpack.c.b16 %v4899, %v4895
        %v4960 = vpack.c.b16 %v4900, %v4896
        %v4961 = vpack.c.b16 %v4901, %v4897
        %v4962 = vpack.c.b16 %v4902, %v4898
        %v4963 = vpack.c.b16 %v4907, %v4903
        %v4964 = vpack.c.b16 %v4908, %v4904
        %v4965 = vpack.c.b16 %v4909, %v4905
        %v4966 = vpack.c.b16 %v4910, %v4906
        %v4967 = vpack.c.b16 %v4915, %v4911
        %v4968 = vpack.c.b16 %v4916, %v4912
        %v4969 = vpack.c.b16 %v4917, %v4913
        %v4970 = vpack.c.b16 %v4918, %v4914
        %v4971 = vpack.c.b16 %v4923, %v4919
        %v4972 = vpack.c.b16 %v4924, %v4920
        %v4973 = vpack.c.b16 %v4925, %v4921
        %v4974 = vpack.c.b16 %v4926, %v4922
        %v4975 = vpack.c.b16 %v4931, %v4927
        %v4976 = vpack.c.b16 %v4932, %v4928
        %v4977 = vpack.c.b16 %v4933, %v4929
        %v4978 = vpack.c.b16 %v4934, %v4930
        %v4979 = vpack.c.b16 %v4939, %v4935
        %v4980 = vpack.c.b16 %v4940, %v4936
        %v4981 = vpack.c.b16 %v4941, %v4937
        %v4982 = vpack.c.b16 %v4942, %v4938
        %v4983 = vpack.c.b16 %v4947, %v4943
        %v4984 = vpack.c.b16 %v4948, %v4944
        %v4985 = vpack.c.b16 %v4949, %v4945
        %v4986 = vpack.c.b16 %v4950, %v4946
        %v4987 = vpack.c.b16 %v4955, %v4951
        %v4988 = vpack.c.b16 %v4956, %v4952
        %v4989 = vpack.c.b16 %v4957, %v4953
        %v4990 = vpack.c.b16 %v4958, %v4954
        %5023 = vmatpush.bf16.msra.mxu0 %v4987
        %5024 = vmatpush.bf16.msra.mxu0 %v4983
        %5025 = vmatpush.bf16.msra.mxu0 %v4979
        %5026 = vmatpush.bf16.msra.mxu0 %v4975
        %5027 = vmatpush.bf16.msra.mxu0 %v4971
        %5028 = vmatpush.bf16.msra.mxu0 %v4967
        %5029 = vmatpush.bf16.msra.mxu0 %v4963
        %5030 = vmatpush.bf16.msra.mxu0 %v4959
        %5031 = vmatmul.bf16.gmra.mxu0 %v4813
        %v5032 = vpop.f32.mrf.mxu0
        %v5033 = vadd.f32 %v4855, %v5032
        %v5034 = vpop.f32.mrf.mxu0
        %v5035 = vadd.f32 %v4855, %v5034
        %5036 = vmatmul.bf16.gmra.mxu0 %v4814
        %v5037 = vpop.f32.mrf.mxu0
        %v5038 = vadd.f32 %v4855, %v5037
        %v5039 = vpop.f32.mrf.mxu0
        %v5040 = vadd.f32 %v4855, %v5039
        %5041 = vmatmul.bf16.gmra.mxu0 %v4815
        %v5042 = vpop.f32.mrf.mxu0
        %v5043 = vadd.f32 %v4855, %v5042
        %v5044 = vpop.f32.mrf.mxu0
        %v5045 = vadd.f32 %v4855, %v5044
        %5046 = vmatmul.bf16.gmra.mxu0 %v4816
        %v5047 = vpop.f32.mrf.mxu0
        %v5048 = vadd.f32 %v4855, %v5047
        %v5049 = vpop.f32.mrf.mxu0
        %v5050 = vadd.f32 %v4855, %v5049
        %5051 = vmatmul.bf16.gmra.mxu0 %v4817
        %v5052 = vpop.f32.mrf.mxu0
        %v5053 = vadd.f32 %v4855, %v5052
        %v5054 = vpop.f32.mrf.mxu0
        %v5055 = vadd.f32 %v4855, %v5054
        %5056 = vmatmul.bf16.gmra.mxu0 %v4818
        %v5057 = vpop.f32.mrf.mxu0
        %v5058 = vadd.f32 %v4855, %v5057
        %v5059 = vpop.f32.mrf.mxu0
        %v5060 = vadd.f32 %v4855, %v5059
        %5061 = vmatmul.bf16.gmra.mxu0 %v4819
        %v5062 = vpop.f32.mrf.mxu0
        %v5063 = vadd.f32 %v4855, %v5062
        %v5064 = vpop.f32.mrf.mxu0
        %v5065 = vadd.f32 %v4855, %v5064
        %5066 = vmatmul.bf16.gmra.mxu0 %v4820
        %v5067 = vpop.f32.mrf.mxu0
        %v5068 = vadd.f32 %v4855, %v5067
        %v5069 = vpop.f32.mrf.mxu0
        %v5070 = vadd.f32 %v4855, %v5069
        %5071 = vdwg.mxu0
        %5072 = vmatpush.bf16.msra.mxu0 %v4988
        %5073 = vmatpush.bf16.msra.mxu0 %v4984
        %5074 = vmatpush.bf16.msra.mxu0 %v4980
        %5075 = vmatpush.bf16.msra.mxu0 %v4976
        %5076 = vmatpush.bf16.msra.mxu0 %v4972
        %5077 = vmatpush.bf16.msra.mxu0 %v4968
        %5078 = vmatpush.bf16.msra.mxu0 %v4964
        %5079 = vmatpush.bf16.msra.mxu0 %v4960
        %5080 = vmatmul.bf16.gmra.mxu0 %v4813
        %v5081 = vpop.f32.mrf.mxu0
        %v5082 = vadd.f32 %v4856, %v5081
        %v5083 = vpop.f32.mrf.mxu0
        %v5084 = vadd.f32 %v4856, %v5083
        %5085 = vmatmul.bf16.gmra.mxu0 %v4814
        %v5086 = vpop.f32.mrf.mxu0
        %v5087 = vadd.f32 %v4856, %v5086
        %v5088 = vpop.f32.mrf.mxu0
        %v5089 = vadd.f32 %v4856, %v5088
        %5090 = vmatmul.bf16.gmra.mxu0 %v4815
        %v5091 = vpop.f32.mrf.mxu0
        %v5092 = vadd.f32 %v4856, %v5091
        %v5093 = vpop.f32.mrf.mxu0
        %v5094 = vadd.f32 %v4856, %v5093
        %5095 = vmatmul.bf16.gmra.mxu0 %v4816
        %v5096 = vpop.f32.mrf.mxu0
        %v5097 = vadd.f32 %v4856, %v5096
        %v5098 = vpop.f32.mrf.mxu0
        %v5099 = vadd.f32 %v4856, %v5098
        %5100 = vmatmul.bf16.gmra.mxu0 %v4817
        %v5101 = vpop.f32.mrf.mxu0
        %v5102 = vadd.f32 %v4856, %v5101
        %v5103 = vpop.f32.mrf.mxu0
        %v5104 = vadd.f32 %v4856, %v5103
        %5105 = vmatmul.bf16.gmra.mxu0 %v4818
        %v5106 = vpop.f32.mrf.mxu0
        %v5107 = vadd.f32 %v4856, %v5106
        %v5108 = vpop.f32.mrf.mxu0
        %v5109 = vadd.f32 %v4856, %v5108
        %5110 = vmatmul.bf16.gmra.mxu0 %v4819
        %v5111 = vpop.f32.mrf.mxu0
        %v5112 = vadd.f32 %v4856, %v5111
        %v5113 = vpop.f32.mrf.mxu0
        %v5114 = vadd.f32 %v4856, %v5113
        %5115 = vmatmul.bf16.gmra.mxu0 %v4820
        %v5116 = vpop.f32.mrf.mxu0
        %v5117 = vadd.f32 %v4856, %v5116
        %v5118 = vpop.f32.mrf.mxu0
        %v5119 = vadd.f32 %v4856, %v5118
        %5120 = vdwg.mxu0
        %5121 = vmatpush.bf16.msra.mxu0 %v4989
        %5122 = vmatpush.bf16.msra.mxu0 %v4985
        %5123 = vmatpush.bf16.msra.mxu0 %v4981
        %5124 = vmatpush.bf16.msra.mxu0 %v4977
        %5125 = vmatpush.bf16.msra.mxu0 %v4973
        %5126 = vmatpush.bf16.msra.mxu0 %v4969
        %5127 = vmatpush.bf16.msra.mxu0 %v4965
        %5128 = vmatpush.bf16.msra.mxu0 %v4961
        %5129 = vmatmul.bf16.gmra.mxu0 %v4813
        %v5130 = vpop.f32.mrf.mxu0
        %v5131 = vadd.f32 %v4857, %v5130
        %v5132 = vpop.f32.mrf.mxu0
        %v5133 = vadd.f32 %v4857, %v5132
        %5134 = vmatmul.bf16.gmra.mxu0 %v4814
        %v5135 = vpop.f32.mrf.mxu0
        %v5136 = vadd.f32 %v4857, %v5135
        %v5137 = vpop.f32.mrf.mxu0
        %v5138 = vadd.f32 %v4857, %v5137
        %5139 = vmatmul.bf16.gmra.mxu0 %v4815
        %v5140 = vpop.f32.mrf.mxu0
        %v5141 = vadd.f32 %v4857, %v5140
        %v5142 = vpop.f32.mrf.mxu0
        %v5143 = vadd.f32 %v4857, %v5142
        %5144 = vmatmul.bf16.gmra.mxu0 %v4816
        %v5145 = vpop.f32.mrf.mxu0
        %v5146 = vadd.f32 %v4857, %v5145
        %v5147 = vpop.f32.mrf.mxu0
        %v5148 = vadd.f32 %v4857, %v5147
        %5149 = vmatmul.bf16.gmra.mxu0 %v4817
        %v5150 = vpop.f32.mrf.mxu0
        %v5151 = vadd.f32 %v4857, %v5150
        %v5152 = vpop.f32.mrf.mxu0
        %v5153 = vadd.f32 %v4857, %v5152
        %5154 = vmatmul.bf16.gmra.mxu0 %v4818
        %v5155 = vpop.f32.mrf.mxu0
        %v5156 = vadd.f32 %v4857, %v5155
        %v5157 = vpop.f32.mrf.mxu0
        %v5158 = vadd.f32 %v4857, %v5157
        %5159 = vmatmul.bf16.gmra.mxu0 %v4819
        %v5160 = vpop.f32.mrf.mxu0
        %v5161 = vadd.f32 %v4857, %v5160
        %v5162 = vpop.f32.mrf.mxu0
        %v5163 = vadd.f32 %v4857, %v5162
        %5164 = vmatmul.bf16.gmra.mxu0 %v4820
        %v5165 = vpop.f32.mrf.mxu0
        %v5166 = vadd.f32 %v4857, %v5165
        %v5167 = vpop.f32.mrf.mxu0
        %v5168 = vadd.f32 %v4857, %v5167
        %5169 = vdwg.mxu0
        %5170 = vmatpush.bf16.msra.mxu0 %v4990
        %5171 = vmatpush.bf16.msra.mxu0 %v4986
        %5172 = vmatpush.bf16.msra.mxu0 %v4982
        %5173 = vmatpush.bf16.msra.mxu0 %v4978
        %5174 = vmatpush.bf16.msra.mxu0 %v4974
        %5175 = vmatpush.bf16.msra.mxu0 %v4970
        %5176 = vmatpush.bf16.msra.mxu0 %v4966
        %5177 = vmatpush.bf16.msra.mxu0 %v4962
        %5178 = vmatmul.bf16.gmra.mxu0 %v4813
        %v5179 = vpop.f32.mrf.mxu0
        %v5180 = vadd.f32 %v4858, %v5179
        %v5181 = vpop.f32.mrf.mxu0
        %v5182 = vadd.f32 %v4858, %v5181
        %5183 = vmatmul.bf16.gmra.mxu0 %v4814
        %v5184 = vpop.f32.mrf.mxu0
        %v5185 = vadd.f32 %v4858, %v5184
        %v5186 = vpop.f32.mrf.mxu0
        %v5187 = vadd.f32 %v4858, %v5186
        %5188 = vmatmul.bf16.gmra.mxu0 %v4815
        %v5189 = vpop.f32.mrf.mxu0
        %v5190 = vadd.f32 %v4858, %v5189
        %v5191 = vpop.f32.mrf.mxu0
        %v5192 = vadd.f32 %v4858, %v5191
        %5193 = vmatmul.bf16.gmra.mxu0 %v4816
        %v5194 = vpop.f32.mrf.mxu0
        %v5195 = vadd.f32 %v4858, %v5194
        %v5196 = vpop.f32.mrf.mxu0
        %v5197 = vadd.f32 %v4858, %v5196
        %5198 = vmatmul.bf16.gmra.mxu0 %v4817
        %v5199 = vpop.f32.mrf.mxu0
        %v5200 = vadd.f32 %v4858, %v5199
        %v5201 = vpop.f32.mrf.mxu0
        %v5202 = vadd.f32 %v4858, %v5201
        %5203 = vmatmul.bf16.gmra.mxu0 %v4818
        %v5204 = vpop.f32.mrf.mxu0
        %v5205 = vadd.f32 %v4858, %v5204
        %v5206 = vpop.f32.mrf.mxu0
        %v5207 = vadd.f32 %v4858, %v5206
        %5208 = vmatmul.bf16.gmra.mxu0 %v4819
        %v5209 = vpop.f32.mrf.mxu0
        %v5210 = vadd.f32 %v4858, %v5209
        %v5211 = vpop.f32.mrf.mxu0
        %v5212 = vadd.f32 %v4858, %v5211
        %5213 = vmatmul.bf16.gmra.mxu0 %v4820
        %v5214 = vpop.f32.mrf.mxu0
        %v5215 = vadd.f32 %v4858, %v5214
        %v5216 = vpop.f32.mrf.mxu0
        %v5217 = vadd.f32 %v4858, %v5216
        %5218 = vdwg.mxu0
        %vm5219 = vcmp.gt.f32.partialorder %v5033, 0.0
        %vm5220 = vcmp.gt.f32.partialorder %v5082, 0.0
        %vm5221 = vcmp.gt.f32.partialorder %v5131, 0.0
        %vm5222 = vcmp.gt.f32.partialorder %v5180, 0.0
        %vm5223 = vcmp.gt.f32.partialorder %v5035, 0.0
        %vm5224 = vcmp.gt.f32.partialorder %v5084, 0.0
        %vm5225 = vcmp.gt.f32.partialorder %v5133, 0.0
        %vm5226 = vcmp.gt.f32.partialorder %v5182, 0.0
        %vm5227 = vcmp.gt.f32.partialorder %v5038, 0.0
        %vm5228 = vcmp.gt.f32.partialorder %v5087, 0.0
        %vm5229 = vcmp.gt.f32.partialorder %v5136, 0.0
        %vm5230 = vcmp.gt.f32.partialorder %v5185, 0.0
        %vm5231 = vcmp.gt.f32.partialorder %v5040, 0.0
        %vm5232 = vcmp.gt.f32.partialorder %v5089, 0.0
        %vm5233 = vcmp.gt.f32.partialorder %v5138, 0.0
        %vm5234 = vcmp.gt.f32.partialorder %v5187, 0.0
        %vm5235 = vcmp.gt.f32.partialorder %v5043, 0.0
        %vm5236 = vcmp.gt.f32.partialorder %v5092, 0.0
        %vm5237 = vcmp.gt.f32.partialorder %v5141, 0.0
        %vm5238 = vcmp.gt.f32.partialorder %v5190, 0.0
        %vm5239 = vcmp.gt.f32.partialorder %v5045, 0.0
        %vm5240 = vcmp.gt.f32.partialorder %v5094, 0.0
        %vm5241 = vcmp.gt.f32.partialorder %v5143, 0.0
        %vm5242 = vcmp.gt.f32.partialorder %v5192, 0.0
        %vm5243 = vcmp.gt.f32.partialorder %v5048, 0.0
        %vm5244 = vcmp.gt.f32.partialorder %v5097, 0.0
        %vm5245 = vcmp.gt.f32.partialorder %v5146, 0.0
        %vm5246 = vcmp.gt.f32.partialorder %v5195, 0.0
        %vm5247 = vcmp.gt.f32.partialorder %v5050, 0.0
        %vm5248 = vcmp.gt.f32.partialorder %v5099, 0.0
        %vm5249 = vcmp.gt.f32.partialorder %v5148, 0.0
        %vm5250 = vcmp.gt.f32.partialorder %v5197, 0.0
        %vm5251 = vcmp.gt.f32.partialorder %v5053, 0.0
        %vm5252 = vcmp.gt.f32.partialorder %v5102, 0.0
        %vm5253 = vcmp.gt.f32.partialorder %v5151, 0.0
        %vm5254 = vcmp.gt.f32.partialorder %v5200, 0.0
        %vm5255 = vcmp.gt.f32.partialorder %v5055, 0.0
        %vm5256 = vcmp.gt.f32.partialorder %v5104, 0.0
        %vm5257 = vcmp.gt.f32.partialorder %v5153, 0.0
        %vm5258 = vcmp.gt.f32.partialorder %v5202, 0.0
        %vm5259 = vcmp.gt.f32.partialorder %v5058, 0.0
        %vm5260 = vcmp.gt.f32.partialorder %v5107, 0.0
        %vm5261 = vcmp.gt.f32.partialorder %v5156, 0.0
        %vm5262 = vcmp.gt.f32.partialorder %v5205, 0.0
        %vm5263 = vcmp.gt.f32.partialorder %v5060, 0.0
        %vm5264 = vcmp.gt.f32.partialorder %v5109, 0.0
        %vm5265 = vcmp.gt.f32.partialorder %v5158, 0.0
        %vm5266 = vcmp.gt.f32.partialorder %v5207, 0.0
        %vm5267 = vcmp.gt.f32.partialorder %v5063, 0.0
        %vm5268 = vcmp.gt.f32.partialorder %v5112, 0.0
        %vm5269 = vcmp.gt.f32.partialorder %v5161, 0.0
        %vm5270 = vcmp.gt.f32.partialorder %v5210, 0.0
        %vm5271 = vcmp.gt.f32.partialorder %v5065, 0.0
        %vm5272 = vcmp.gt.f32.partialorder %v5114, 0.0
        %vm5273 = vcmp.gt.f32.partialorder %v5163, 0.0
        %vm5274 = vcmp.gt.f32.partialorder %v5212, 0.0
        %vm5275 = vcmp.gt.f32.partialorder %v5068, 0.0
        %vm5276 = vcmp.gt.f32.partialorder %v5117, 0.0
        %vm5277 = vcmp.gt.f32.partialorder %v5166, 0.0
        %vm5278 = vcmp.gt.f32.partialorder %v5215, 0.0
        %vm5279 = vcmp.gt.f32.partialorder %v5070, 0.0
        %vm5280 = vcmp.gt.f32.partialorder %v5119, 0.0
        %vm5281 = vcmp.gt.f32.partialorder %v5168, 0.0
        %vm5282 = vcmp.gt.f32.partialorder %v5217, 0.0
        %v5283 = vstv %s817
        %v5284 = vmul.f32 %v5283, %v5033
        %v5285 = vmul.f32 %v5283, %v5082
        %v5286 = vmul.f32 %v5283, %v5131
        %v5287 = vmul.f32 %v5283, %v5180
        %v5288 = vmul.f32 %v5283, %v5035
        %v5289 = vmul.f32 %v5283, %v5084
        %v5290 = vmul.f32 %v5283, %v5133
        %v5291 = vmul.f32 %v5283, %v5182
        %v5292 = vmul.f32 %v5283, %v5038
        %v5293 = vmul.f32 %v5283, %v5087
        %v5294 = vmul.f32 %v5283, %v5136
        %v5295 = vmul.f32 %v5283, %v5185
        %v5296 = vmul.f32 %v5283, %v5040
        %v5297 = vmul.f32 %v5283, %v5089
        %v5298 = vmul.f32 %v5283, %v5138
        %v5299 = vmul.f32 %v5283, %v5187
        %v5300 = vmul.f32 %v5283, %v5043
        %v5301 = vmul.f32 %v5283, %v5092
        %v5302 = vmul.f32 %v5283, %v5141
        %v5303 = vmul.f32 %v5283, %v5190
        %v5304 = vmul.f32 %v5283, %v5045
        %v5305 = vmul.f32 %v5283, %v5094
        %v5306 = vmul.f32 %v5283, %v5143
        %v5307 = vmul.f32 %v5283, %v5192
        %v5308 = vmul.f32 %v5283, %v5048
        %v5309 = vmul.f32 %v5283, %v5097
        %v5310 = vmul.f32 %v5283, %v5146
        %v5311 = vmul.f32 %v5283, %v5195
        %v5312 = vmul.f32 %v5283, %v5050
        %v5313 = vmul.f32 %v5283, %v5099
        %v5314 = vmul.f32 %v5283, %v5148
        %v5315 = vmul.f32 %v5283, %v5197
        %v5316 = vmul.f32 %v5283, %v5053
        %v5317 = vmul.f32 %v5283, %v5102
        %v5318 = vmul.f32 %v5283, %v5151
        %v5319 = vmul.f32 %v5283, %v5200
        %v5320 = vmul.f32 %v5283, %v5055
        %v5321 = vmul.f32 %v5283, %v5104
        %v5322 = vmul.f32 %v5283, %v5153
        %v5323 = vmul.f32 %v5283, %v5202
        %v5324 = vmul.f32 %v5283, %v5058
        %v5325 = vmul.f32 %v5283, %v5107
        %v5326 = vmul.f32 %v5283, %v5156
        %v5327 = vmul.f32 %v5283, %v5205
        %v5328 = vmul.f32 %v5283, %v5060
        %v5329 = vmul.f32 %v5283, %v5109
        %v5330 = vmul.f32 %v5283, %v5158
        %v5331 = vmul.f32 %v5283, %v5207
        %v5332 = vmul.f32 %v5283, %v5063
        %v5333 = vmul.f32 %v5283, %v5112
        %v5334 = vmul.f32 %v5283, %v5161
        %v5335 = vmul.f32 %v5283, %v5210
        %v5336 = vmul.f32 %v5283, %v5065
        %v5337 = vmul.f32 %v5283, %v5114
        %v5338 = vmul.f32 %v5283, %v5163
        %v5339 = vmul.f32 %v5283, %v5212
        %v5340 = vmul.f32 %v5283, %v5068
        %v5341 = vmul.f32 %v5283, %v5117
        %v5342 = vmul.f32 %v5283, %v5166
        %v5343 = vmul.f32 %v5283, %v5215
        %v5344 = vmul.f32 %v5283, %v5070
        %v5345 = vmul.f32 %v5283, %v5119
        %v5346 = vmul.f32 %v5283, %v5168
        %v5347 = vmul.f32 %v5283, %v5217
        %v5348 = vsel %vm5219, %v5033, %v5284
        %v5349 = vsel %vm5220, %v5082, %v5285
        %v5350 = vsel %vm5221, %v5131, %v5286
        %v5351 = vsel %vm5222, %v5180, %v5287
        %v5352 = vsel %vm5223, %v5035, %v5288
        %v5353 = vsel %vm5224, %v5084, %v5289
        %v5354 = vsel %vm5225, %v5133, %v5290
        %v5355 = vsel %vm5226, %v5182, %v5291
        %v5356 = vsel %vm5227, %v5038, %v5292
        %v5357 = vsel %vm5228, %v5087, %v5293
        %v5358 = vsel %vm5229, %v5136, %v5294
        %v5359 = vsel %vm5230, %v5185, %v5295
        %v5360 = vsel %vm5231, %v5040, %v5296
        %v5361 = vsel %vm5232, %v5089, %v5297
        %v5362 = vsel %vm5233, %v5138, %v5298
        %v5363 = vsel %vm5234, %v5187, %v5299
        %v5364 = vsel %vm5235, %v5043, %v5300
        %v5365 = vsel %vm5236, %v5092, %v5301
        %v5366 = vsel %vm5237, %v5141, %v5302
        %v5367 = vsel %vm5238, %v5190, %v5303
        %v5368 = vsel %vm5239, %v5045, %v5304
        %v5369 = vsel %vm5240, %v5094, %v5305
        %v5370 = vsel %vm5241, %v5143, %v5306
        %v5371 = vsel %vm5242, %v5192, %v5307
        %v5372 = vsel %vm5243, %v5048, %v5308
        %v5373 = vsel %vm5244, %v5097, %v5309
        %v5374 = vsel %vm5245, %v5146, %v5310
        %v5375 = vsel %vm5246, %v5195, %v5311
        %v5376 = vsel %vm5247, %v5050, %v5312
        %v5377 = vsel %vm5248, %v5099, %v5313
        %v5378 = vsel %vm5249, %v5148, %v5314
        %v5379 = vsel %vm5250, %v5197, %v5315
        %v5380 = vsel %vm5251, %v5053, %v5316
        %v5381 = vsel %vm5252, %v5102, %v5317
        %v5382 = vsel %vm5253, %v5151, %v5318
        %v5383 = vsel %vm5254, %v5200, %v5319
        %v5384 = vsel %vm5255, %v5055, %v5320
        %v5385 = vsel %vm5256, %v5104, %v5321
        %v5386 = vsel %vm5257, %v5153, %v5322
        %v5387 = vsel %vm5258, %v5202, %v5323
        %v5388 = vsel %vm5259, %v5058, %v5324
        %v5389 = vsel %vm5260, %v5107, %v5325
        %v5390 = vsel %vm5261, %v5156, %v5326
        %v5391 = vsel %vm5262, %v5205, %v5327
        %v5392 = vsel %vm5263, %v5060, %v5328
        %v5393 = vsel %vm5264, %v5109, %v5329
        %v5394 = vsel %vm5265, %v5158, %v5330
        %v5395 = vsel %vm5266, %v5207, %v5331
        %v5396 = vsel %vm5267, %v5063, %v5332
        %v5397 = vsel %vm5268, %v5112, %v5333
        %v5398 = vsel %vm5269, %v5161, %v5334
        %v5399 = vsel %vm5270, %v5210, %v5335
        %v5400 = vsel %vm5271, %v5065, %v5336
        %v5401 = vsel %vm5272, %v5114, %v5337
        %v5402 = vsel %vm5273, %v5163, %v5338
        %v5403 = vsel %vm5274, %v5212, %v5339
        %v5404 = vsel %vm5275, %v5068, %v5340
        %v5405 = vsel %vm5276, %v5117, %v5341
        %v5406 = vsel %vm5277, %v5166, %v5342
        %v5407 = vsel %vm5278, %v5215, %v5343
        %v5408 = vsel %vm5279, %v5070, %v5344
        %v5409 = vsel %vm5280, %v5119, %v5345
        %v5410 = vsel %vm5281, %v5168, %v5346
        %v5411 = vsel %vm5282, %v5217, %v5347
        %v5412 = vpack.c.bf16 %v5352, %v5348
        %v5413 = vpack.c.bf16 %v5353, %v5349
        %v5414 = vpack.c.bf16 %v5354, %v5350
        %v5415 = vpack.c.bf16 %v5355, %v5351
        %v5416 = vpack.c.bf16 %v5360, %v5356
        %v5417 = vpack.c.bf16 %v5361, %v5357
        %v5418 = vpack.c.bf16 %v5362, %v5358
        %v5419 = vpack.c.bf16 %v5363, %v5359
        %v5420 = vpack.c.bf16 %v5368, %v5364
        %v5421 = vpack.c.bf16 %v5369, %v5365
        %v5422 = vpack.c.bf16 %v5370, %v5366
        %v5423 = vpack.c.bf16 %v5371, %v5367
        %v5424 = vpack.c.bf16 %v5376, %v5372
        %v5425 = vpack.c.bf16 %v5377, %v5373
        %v5426 = vpack.c.bf16 %v5378, %v5374
        %v5427 = vpack.c.bf16 %v5379, %v5375
        %v5428 = vpack.c.bf16 %v5384, %v5380
        %v5429 = vpack.c.bf16 %v5385, %v5381
        %v5430 = vpack.c.bf16 %v5386, %v5382
        %v5431 = vpack.c.bf16 %v5387, %v5383
        %v5432 = vpack.c.bf16 %v5392, %v5388
        %v5433 = vpack.c.bf16 %v5393, %v5389
        %v5434 = vpack.c.bf16 %v5394, %v5390
        %v5435 = vpack.c.bf16 %v5395, %v5391
        %v5436 = vpack.c.bf16 %v5400, %v5396
        %v5437 = vpack.c.bf16 %v5401, %v5397
        %v5438 = vpack.c.bf16 %v5402, %v5398
        %v5439 = vpack.c.bf16 %v5403, %v5399
        %v5440 = vpack.c.bf16 %v5408, %v5404
        %v5441 = vpack.c.bf16 %v5409, %v5405
        %v5442 = vpack.c.bf16 %v5410, %v5406
        %v5443 = vpack.c.bf16 %v5411, %v5407
        %v5444 = vld [vmem:[#allocation20] sm:$0xf]
        %v5445 = vld [vmem:[#allocation20 + $0x4] sm:$0xf]
        %v5446 = vld [vmem:[#allocation20 + $0x8] sm:$0xf]
        %v5447 = vld [vmem:[#allocation20 + $0xc] sm:$0xf]
        %v5448 = vld [vmem:[#allocation20 + $0x10] sm:$0xf]
        %v5449 = vld [vmem:[#allocation20 + $0x14] sm:$0xf]
        %v5450 = vld [vmem:[#allocation20 + $0x18] sm:$0xf]
        %v5451 = vld [vmem:[#allocation20 + $0x1c] sm:$0xf]
        %v5452 = vld [vmem:[#allocation20 + $0x20] sm:$0xf]
        %v5453 = vld [vmem:[#allocation20 + $0x24] sm:$0xf]
        %v5454 = vld [vmem:[#allocation20 + $0x28] sm:$0xf]
        %v5455 = vld [vmem:[#allocation20 + $0x2c] sm:$0xf]
        %v5456 = vld [vmem:[#allocation20 + $0x30] sm:$0xf]
        %v5457 = vld [vmem:[#allocation20 + $0x34] sm:$0xf]
        %v5458 = vld [vmem:[#allocation20 + $0x38] sm:$0xf]
        %v5459 = vld [vmem:[#allocation20 + $0x3c] sm:$0xf]
        %v5460 = vld [vmem:[#allocation20 + $0x40] sm:$0xf]
        %v5461 = vld [vmem:[#allocation20 + $0x44] sm:$0xf]
        %v5462 = vld [vmem:[#allocation20 + $0x48] sm:$0xf]
        %v5463 = vld [vmem:[#allocation20 + $0x4c] sm:$0xf]
        %v5464 = vld [vmem:[#allocation20 + $0x50] sm:$0xf]
        %v5465 = vld [vmem:[#allocation20 + $0x54] sm:$0xf]
        %v5466 = vld [vmem:[#allocation20 + $0x58] sm:$0xf]
        %v5467 = vld [vmem:[#allocation20 + $0x5c] sm:$0xf]
        %v5468 = vld [vmem:[#allocation20 + $0x60] sm:$0xf]
        %v5469 = vld [vmem:[#allocation20 + $0x64] sm:$0xf]
        %v5470 = vld [vmem:[#allocation20 + $0x68] sm:$0xf]
        %v5471 = vld [vmem:[#allocation20 + $0x6c] sm:$0xf]
        %v5472 = vld [vmem:[#allocation20 + $0x70] sm:$0xf]
        %v5473 = vld [vmem:[#allocation20 + $0x74] sm:$0xf]
        %v5474 = vld [vmem:[#allocation20 + $0x78] sm:$0xf]
        %v5475 = vld [vmem:[#allocation20 + $0x7c] sm:$0xf]
        %v5476 = vld [vmem:[#allocation20 + $0x80] sm:$0xf]
        %v5477 = vld [vmem:[#allocation20 + $0x84] sm:$0xf]
        %v5478 = vld [vmem:[#allocation20 + $0x88] sm:$0xf]
        %v5479 = vld [vmem:[#allocation20 + $0x8c] sm:$0xf]
        %v5480 = vld [vmem:[#allocation20 + $0x90] sm:$0xf]
        %v5481 = vld [vmem:[#allocation20 + $0x94] sm:$0xf]
        %v5482 = vld [vmem:[#allocation20 + $0x98] sm:$0xf]
        %v5483 = vld [vmem:[#allocation20 + $0x9c] sm:$0xf]
        %v5484 = vld [vmem:[#allocation20 + $0xa0] sm:$0xf]
        %v5485 = vld [vmem:[#allocation20 + $0xa4] sm:$0xf]
        %v5486 = vld [vmem:[#allocation20 + $0xa8] sm:$0xf]
        %v5487 = vld [vmem:[#allocation20 + $0xac] sm:$0xf]
        %v5488 = vld [vmem:[#allocation20 + $0xb0] sm:$0xf]
        %v5489 = vld [vmem:[#allocation20 + $0xb4] sm:$0xf]
        %v5490 = vld [vmem:[#allocation20 + $0xb8] sm:$0xf]
        %v5491 = vld [vmem:[#allocation20 + $0xbc] sm:$0xf]
        %v5492 = vld [vmem:[#allocation20 + $0xc0] sm:$0xf]
        %v5493 = vld [vmem:[#allocation20 + $0xc4] sm:$0xf]
        %v5494 = vld [vmem:[#allocation20 + $0xc8] sm:$0xf]
        %v5495 = vld [vmem:[#allocation20 + $0xcc] sm:$0xf]
        %v5496 = vld [vmem:[#allocation20 + $0xd0] sm:$0xf]
        %v5497 = vld [vmem:[#allocation20 + $0xd4] sm:$0xf]
        %v5498 = vld [vmem:[#allocation20 + $0xd8] sm:$0xf]
        %v5499 = vld [vmem:[#allocation20 + $0xdc] sm:$0xf]
        %v5500 = vld [vmem:[#allocation20 + $0xe0] sm:$0xf]
        %v5501 = vld [vmem:[#allocation20 + $0xe4] sm:$0xf]
        %v5502 = vld [vmem:[#allocation20 + $0xe8] sm:$0xf]
        %v5503 = vld [vmem:[#allocation20 + $0xec] sm:$0xf]
        %v5504 = vld [vmem:[#allocation20 + $0xf0] sm:$0xf]
        %v5505 = vld [vmem:[#allocation20 + $0xf4] sm:$0xf]
        %v5506 = vld [vmem:[#allocation20 + $0xf8] sm:$0xf]
        %v5507 = vld [vmem:[#allocation20 + $0xfc] sm:$0xf]
        %v5508 = vld [vmem:[#allocation21] sm:$0x1]
        %v5510 = vperm.slane %v5508, 0
        %v5576 = vunpack.c.l.b16 %v5444
        %v5577 = vunpack.c.l.b16 %v5445
        %v5578 = vunpack.c.l.b16 %v5446
        %v5579 = vunpack.c.l.b16 %v5447
        %v5580 = vunpack.c.l.b16 %v5448
        %v5581 = vunpack.c.l.b16 %v5449
        %v5582 = vunpack.c.l.b16 %v5450
        %v5583 = vunpack.c.l.b16 %v5451
        %v5584 = vunpack.c.l.b16 %v5452
        %v5585 = vunpack.c.l.b16 %v5453
        %v5586 = vunpack.c.l.b16 %v5454
        %v5587 = vunpack.c.l.b16 %v5455
        %v5588 = vunpack.c.l.b16 %v5456
        %v5589 = vunpack.c.l.b16 %v5457
        %v5590 = vunpack.c.l.b16 %v5458
        %v5591 = vunpack.c.l.b16 %v5459
        %v5592 = vunpack.c.l.b16 %v5460
        %v5593 = vunpack.c.l.b16 %v5461
        %v5594 = vunpack.c.l.b16 %v5462
        %v5595 = vunpack.c.l.b16 %v5463
        %v5596 = vunpack.c.l.b16 %v5464
        %v5597 = vunpack.c.l.b16 %v5465
        %v5598 = vunpack.c.l.b16 %v5466
        %v5599 = vunpack.c.l.b16 %v5467
        %v5600 = vunpack.c.l.b16 %v5468
        %v5601 = vunpack.c.l.b16 %v5469
        %v5602 = vunpack.c.l.b16 %v5470
        %v5603 = vunpack.c.l.b16 %v5471
        %v5604 = vunpack.c.l.b16 %v5472
        %v5605 = vunpack.c.l.b16 %v5473
        %v5606 = vunpack.c.l.b16 %v5474
        %v5607 = vunpack.c.l.b16 %v5475
        %v5608 = vunpack.c.l.b16 %v5476
        %v5609 = vunpack.c.l.b16 %v5477
        %v5610 = vunpack.c.l.b16 %v5478
        %v5611 = vunpack.c.l.b16 %v5479
        %v5612 = vunpack.c.l.b16 %v5480
        %v5613 = vunpack.c.l.b16 %v5481
        %v5614 = vunpack.c.l.b16 %v5482
        %v5615 = vunpack.c.l.b16 %v5483
        %v5616 = vunpack.c.l.b16 %v5484
        %v5617 = vunpack.c.l.b16 %v5485
        %v5618 = vunpack.c.l.b16 %v5486
        %v5619 = vunpack.c.l.b16 %v5487
        %v5620 = vunpack.c.l.b16 %v5488
        %v5621 = vunpack.c.l.b16 %v5489
        %v5622 = vunpack.c.l.b16 %v5490
        %v5623 = vunpack.c.l.b16 %v5491
        %v5624 = vunpack.c.l.b16 %v5492
        %v5625 = vunpack.c.l.b16 %v5493
        %v5626 = vunpack.c.l.b16 %v5494
        %v5627 = vunpack.c.l.b16 %v5495
        %v5628 = vunpack.c.l.b16 %v5496
        %v5629 = vunpack.c.l.b16 %v5497
        %v5630 = vunpack.c.l.b16 %v5498
        %v5631 = vunpack.c.l.b16 %v5499
        %v5632 = vunpack.c.l.b16 %v5500
        %v5633 = vunpack.c.l.b16 %v5501
        %v5634 = vunpack.c.l.b16 %v5502
        %v5635 = vunpack.c.l.b16 %v5503
        %v5636 = vunpack.c.l.b16 %v5504
        %v5637 = vunpack.c.l.b16 %v5505
        %v5638 = vunpack.c.l.b16 %v5506
        %v5639 = vunpack.c.l.b16 %v5507
        %v5640 = vpack.c.b16 %v5577, %v5576
        %v5641 = vpack.c.b16 %v5579, %v5578
        %v5642 = vpack.c.b16 %v5581, %v5580
        %v5643 = vpack.c.b16 %v5583, %v5582
        %v5644 = vpack.c.b16 %v5585, %v5584
        %v5645 = vpack.c.b16 %v5587, %v5586
        %v5646 = vpack.c.b16 %v5589, %v5588
        %v5647 = vpack.c.b16 %v5591, %v5590
        %v5648 = vpack.c.b16 %v5593, %v5592
        %v5649 = vpack.c.b16 %v5595, %v5594
        %v5650 = vpack.c.b16 %v5597, %v5596
        %v5651 = vpack.c.b16 %v5599, %v5598
        %v5652 = vpack.c.b16 %v5601, %v5600
        %v5653 = vpack.c.b16 %v5603, %v5602
        %v5654 = vpack.c.b16 %v5605, %v5604
        %v5655 = vpack.c.b16 %v5607, %v5606
        %v5656 = vpack.c.b16 %v5609, %v5608
        %v5657 = vpack.c.b16 %v5611, %v5610
        %v5658 = vpack.c.b16 %v5613, %v5612
        %v5659 = vpack.c.b16 %v5615, %v5614
        %v5660 = vpack.c.b16 %v5617, %v5616
        %v5661 = vpack.c.b16 %v5619, %v5618
        %v5662 = vpack.c.b16 %v5621, %v5620
        %v5663 = vpack.c.b16 %v5623, %v5622
        %v5664 = vpack.c.b16 %v5625, %v5624
        %v5665 = vpack.c.b16 %v5627, %v5626
        %v5666 = vpack.c.b16 %v5629, %v5628
        %v5667 = vpack.c.b16 %v5631, %v5630
        %v5668 = vpack.c.b16 %v5633, %v5632
        %v5669 = vpack.c.b16 %v5635, %v5634
        %v5670 = vpack.c.b16 %v5637, %v5636
        %v5671 = vpack.c.b16 %v5639, %v5638
        %5704 = vmatpush.bf16.msra.mxu0 %v5647
        %5705 = vmatpush.bf16.msra.mxu0 %v5646
        %5706 = vmatpush.bf16.msra.mxu0 %v5645
        %5707 = vmatpush.bf16.msra.mxu0 %v5644
        %5708 = vmatpush.bf16.msra.mxu0 %v5643
        %5709 = vmatpush.bf16.msra.mxu0 %v5642
        %5710 = vmatpush.bf16.msra.mxu0 %v5641
        %5711 = vmatpush.bf16.msra.mxu0 %v5640
        %5712 = vmatmul.bf16.gmra.mxu0 %v5412
        %v5713 = vpop.f32.mrf.mxu0
        %v5714 = vadd.f32 %v5510, %v5713
        %v5715 = vpop.f32.mrf.mxu0
        %v5716 = vadd.f32 %v5510, %v5715
        %5717 = vmatmul.bf16.gmra.mxu0 %v5416
        %v5718 = vpop.f32.mrf.mxu0
        %v5719 = vadd.f32 %v5510, %v5718
        %v5720 = vpop.f32.mrf.mxu0
        %v5721 = vadd.f32 %v5510, %v5720
        %5722 = vmatmul.bf16.gmra.mxu0 %v5420
        %v5723 = vpop.f32.mrf.mxu0
        %v5724 = vadd.f32 %v5510, %v5723
        %v5725 = vpop.f32.mrf.mxu0
        %v5726 = vadd.f32 %v5510, %v5725
        %5727 = vmatmul.bf16.gmra.mxu0 %v5424
        %v5728 = vpop.f32.mrf.mxu0
        %v5729 = vadd.f32 %v5510, %v5728
        %v5730 = vpop.f32.mrf.mxu0
        %v5731 = vadd.f32 %v5510, %v5730
        %5732 = vmatmul.bf16.gmra.mxu0 %v5428
        %v5733 = vpop.f32.mrf.mxu0
        %v5734 = vadd.f32 %v5510, %v5733
        %v5735 = vpop.f32.mrf.mxu0
        %v5736 = vadd.f32 %v5510, %v5735
        %5737 = vmatmul.bf16.gmra.mxu0 %v5432
        %v5738 = vpop.f32.mrf.mxu0
        %v5739 = vadd.f32 %v5510, %v5738
        %v5740 = vpop.f32.mrf.mxu0
        %v5741 = vadd.f32 %v5510, %v5740
        %5742 = vmatmul.bf16.gmra.mxu0 %v5436
        %v5743 = vpop.f32.mrf.mxu0
        %v5744 = vadd.f32 %v5510, %v5743
        %v5745 = vpop.f32.mrf.mxu0
        %v5746 = vadd.f32 %v5510, %v5745
        %5747 = vmatmul.bf16.gmra.mxu0 %v5440
        %v5748 = vpop.f32.mrf.mxu0
        %v5749 = vadd.f32 %v5510, %v5748
        %v5750 = vpop.f32.mrf.mxu0
        %v5751 = vadd.f32 %v5510, %v5750
        %5752 = vdwg.mxu0
        %5753 = vmatpush.bf16.msra.mxu0 %v5655
        %5754 = vmatpush.bf16.msra.mxu0 %v5654
        %5755 = vmatpush.bf16.msra.mxu0 %v5653
        %5756 = vmatpush.bf16.msra.mxu0 %v5652
        %5757 = vmatpush.bf16.msra.mxu0 %v5651
        %5758 = vmatpush.bf16.msra.mxu0 %v5650
        %5759 = vmatpush.bf16.msra.mxu0 %v5649
        %5760 = vmatpush.bf16.msra.mxu0 %v5648
        %5761 = vmatmul.bf16.gmra.mxu0 %v5413
        %v5762 = vpop.f32.mrf.mxu0
        %v5763 = vadd.f32 %v5714, %v5762
        %v5764 = vpop.f32.mrf.mxu0
        %v5765 = vadd.f32 %v5716, %v5764
        %5766 = vmatmul.bf16.gmra.mxu0 %v5417
        %v5767 = vpop.f32.mrf.mxu0
        %v5768 = vadd.f32 %v5719, %v5767
        %v5769 = vpop.f32.mrf.mxu0
        %v5770 = vadd.f32 %v5721, %v5769
        %5771 = vmatmul.bf16.gmra.mxu0 %v5421
        %v5772 = vpop.f32.mrf.mxu0
        %v5773 = vadd.f32 %v5724, %v5772
        %v5774 = vpop.f32.mrf.mxu0
        %v5775 = vadd.f32 %v5726, %v5774
        %5776 = vmatmul.bf16.gmra.mxu0 %v5425
        %v5777 = vpop.f32.mrf.mxu0
        %v5778 = vadd.f32 %v5729, %v5777
        %v5779 = vpop.f32.mrf.mxu0
        %v5780 = vadd.f32 %v5731, %v5779
        %5781 = vmatmul.bf16.gmra.mxu0 %v5429
        %v5782 = vpop.f32.mrf.mxu0
        %v5783 = vadd.f32 %v5734, %v5782
        %v5784 = vpop.f32.mrf.mxu0
        %v5785 = vadd.f32 %v5736, %v5784
        %5786 = vmatmul.bf16.gmra.mxu0 %v5433
        %v5787 = vpop.f32.mrf.mxu0
        %v5788 = vadd.f32 %v5739, %v5787
        %v5789 = vpop.f32.mrf.mxu0
        %v5790 = vadd.f32 %v5741, %v5789
        %5791 = vmatmul.bf16.gmra.mxu0 %v5437
        %v5792 = vpop.f32.mrf.mxu0
        %v5793 = vadd.f32 %v5744, %v5792
        %v5794 = vpop.f32.mrf.mxu0
        %v5795 = vadd.f32 %v5746, %v5794
        %5796 = vmatmul.bf16.gmra.mxu0 %v5441
        %v5797 = vpop.f32.mrf.mxu0
        %v5798 = vadd.f32 %v5749, %v5797
        %v5799 = vpop.f32.mrf.mxu0
        %v5800 = vadd.f32 %v5751, %v5799
        %5801 = vdwg.mxu0
        %5802 = vmatpush.bf16.msra.mxu0 %v5663
        %5803 = vmatpush.bf16.msra.mxu0 %v5662
        %5804 = vmatpush.bf16.msra.mxu0 %v5661
        %5805 = vmatpush.bf16.msra.mxu0 %v5660
        %5806 = vmatpush.bf16.msra.mxu0 %v5659
        %5807 = vmatpush.bf16.msra.mxu0 %v5658
        %5808 = vmatpush.bf16.msra.mxu0 %v5657
        %5809 = vmatpush.bf16.msra.mxu0 %v5656
        %5810 = vmatmul.bf16.gmra.mxu0 %v5414
        %v5811 = vpop.f32.mrf.mxu0
        %v5812 = vadd.f32 %v5763, %v5811
        %v5813 = vpop.f32.mrf.mxu0
        %v5814 = vadd.f32 %v5765, %v5813
        %5815 = vmatmul.bf16.gmra.mxu0 %v5418
        %v5816 = vpop.f32.mrf.mxu0
        %v5817 = vadd.f32 %v5768, %v5816
        %v5818 = vpop.f32.mrf.mxu0
        %v5819 = vadd.f32 %v5770, %v5818
        %5820 = vmatmul.bf16.gmra.mxu0 %v5422
        %v5821 = vpop.f32.mrf.mxu0
        %v5822 = vadd.f32 %v5773, %v5821
        %v5823 = vpop.f32.mrf.mxu0
        %v5824 = vadd.f32 %v5775, %v5823
        %5825 = vmatmul.bf16.gmra.mxu0 %v5426
        %v5826 = vpop.f32.mrf.mxu0
        %v5827 = vadd.f32 %v5778, %v5826
        %v5828 = vpop.f32.mrf.mxu0
        %v5829 = vadd.f32 %v5780, %v5828
        %5830 = vmatmul.bf16.gmra.mxu0 %v5430
        %v5831 = vpop.f32.mrf.mxu0
        %v5832 = vadd.f32 %v5783, %v5831
        %v5833 = vpop.f32.mrf.mxu0
        %v5834 = vadd.f32 %v5785, %v5833
        %5835 = vmatmul.bf16.gmra.mxu0 %v5434
        %v5836 = vpop.f32.mrf.mxu0
        %v5837 = vadd.f32 %v5788, %v5836
        %v5838 = vpop.f32.mrf.mxu0
        %v5839 = vadd.f32 %v5790, %v5838
        %5840 = vmatmul.bf16.gmra.mxu0 %v5438
        %v5841 = vpop.f32.mrf.mxu0
        %v5842 = vadd.f32 %v5793, %v5841
        %v5843 = vpop.f32.mrf.mxu0
        %v5844 = vadd.f32 %v5795, %v5843
        %5845 = vmatmul.bf16.gmra.mxu0 %v5442
        %v5846 = vpop.f32.mrf.mxu0
        %v5847 = vadd.f32 %v5798, %v5846
        %v5848 = vpop.f32.mrf.mxu0
        %v5849 = vadd.f32 %v5800, %v5848
        %5850 = vdwg.mxu0
        %5851 = vmatpush.bf16.msra.mxu0 %v5671
        %5852 = vmatpush.bf16.msra.mxu0 %v5670
        %5853 = vmatpush.bf16.msra.mxu0 %v5669
        %5854 = vmatpush.bf16.msra.mxu0 %v5668
        %5855 = vmatpush.bf16.msra.mxu0 %v5667
        %5856 = vmatpush.bf16.msra.mxu0 %v5666
        %5857 = vmatpush.bf16.msra.mxu0 %v5665
        %5858 = vmatpush.bf16.msra.mxu0 %v5664
        %5859 = vmatmul.bf16.gmra.mxu0 %v5415
        %v5860 = vpop.f32.mrf.mxu0
        %v5861 = vadd.f32 %v5812, %v5860
        %v5862 = vpop.f32.mrf.mxu0
        %v5863 = vadd.f32 %v5814, %v5862
        %5864 = vmatmul.bf16.gmra.mxu0 %v5419
        %v5865 = vpop.f32.mrf.mxu0
        %v5866 = vadd.f32 %v5817, %v5865
        %v5867 = vpop.f32.mrf.mxu0
        %v5868 = vadd.f32 %v5819, %v5867
        %5869 = vmatmul.bf16.gmra.mxu0 %v5423
        %v5870 = vpop.f32.mrf.mxu0
        %v5871 = vadd.f32 %v5822, %v5870
        %v5872 = vpop.f32.mrf.mxu0
        %v5873 = vadd.f32 %v5824, %v5872
        %5874 = vmatmul.bf16.gmra.mxu0 %v5427
        %v5875 = vpop.f32.mrf.mxu0
        %v5876 = vadd.f32 %v5827, %v5875
        %v5877 = vpop.f32.mrf.mxu0
        %v5878 = vadd.f32 %v5829, %v5877
        %5879 = vmatmul.bf16.gmra.mxu0 %v5431
        %v5880 = vpop.f32.mrf.mxu0
        %v5881 = vadd.f32 %v5832, %v5880
        %v5882 = vpop.f32.mrf.mxu0
        %v5883 = vadd.f32 %v5834, %v5882
        %5884 = vmatmul.bf16.gmra.mxu0 %v5435
        %v5885 = vpop.f32.mrf.mxu0
        %v5886 = vadd.f32 %v5837, %v5885
        %v5887 = vpop.f32.mrf.mxu0
        %v5888 = vadd.f32 %v5839, %v5887
        %5889 = vmatmul.bf16.gmra.mxu0 %v5439
        %v5890 = vpop.f32.mrf.mxu0
        %v5891 = vadd.f32 %v5842, %v5890
        %v5892 = vpop.f32.mrf.mxu0
        %v5893 = vadd.f32 %v5844, %v5892
        %5894 = vmatmul.bf16.gmra.mxu0 %v5443
        %v5895 = vpop.f32.mrf.mxu0
        %v5896 = vadd.f32 %v5847, %v5895
        %v5897 = vpop.f32.mrf.mxu0
        %v5898 = vadd.f32 %v5849, %v5897
        %5899 = vdwg.mxu0
        %v5900 = vsub.f32 %v4797, %v5861
        %v5901 = vsub.f32 %v4798, %v5863
        %v5902 = vsub.f32 %v4799, %v5866
        %v5903 = vsub.f32 %v4800, %v5868
        %v5904 = vsub.f32 %v4801, %v5871
        %v5905 = vsub.f32 %v4802, %v5873
        %v5906 = vsub.f32 %v4803, %v5876
        %v5907 = vsub.f32 %v4804, %v5878
        %v5908 = vsub.f32 %v4805, %v5881
        %v5909 = vsub.f32 %v4806, %v5883
        %v5910 = vsub.f32 %v4807, %v5886
        %v5911 = vsub.f32 %v4808, %v5888
        %v5912 = vsub.f32 %v4809, %v5891
        %v5913 = vsub.f32 %v4810, %v5893
        %v5914 = vsub.f32 %v4811, %v5896
        %v5915 = vsub.f32 %v4812, %v5898
        %v5916 = vpack.c.bf16 %v5901, %v5900
        %v5917 = vpack.c.bf16 %v5903, %v5902
        %v5918 = vpack.c.bf16 %v5905, %v5904
        %v5919 = vpack.c.bf16 %v5907, %v5906
        %v5920 = vpack.c.bf16 %v5909, %v5908
        %v5921 = vpack.c.bf16 %v5911, %v5910
        %v5922 = vpack.c.bf16 %v5913, %v5912
        %v5923 = vpack.c.bf16 %v5915, %v5914
        %v5924 = vld [vmem:[#allocation23] sm:$0xff]
        %v5925 = vld [vmem:[#allocation23 + $0x8] sm:$0xff]
        %v5926 = vld [vmem:[#allocation23 + $0x10] sm:$0xff]
        %v5927 = vld [vmem:[#allocation23 + $0x18] sm:$0xff]
        %v5928 = vld [vmem:[#allocation23 + $0x20] sm:$0xff]
        %v5929 = vld [vmem:[#allocation23 + $0x28] sm:$0xff]
        %v5930 = vld [vmem:[#allocation23 + $0x30] sm:$0xff]
        %v5931 = vld [vmem:[#allocation23 + $0x38] sm:$0xff]
        %v5932 = vld [vmem:[#allocation23 + $0x40] sm:$0xff]
        %v5933 = vld [vmem:[#allocation23 + $0x48] sm:$0xff]
        %v5934 = vld [vmem:[#allocation23 + $0x50] sm:$0xff]
        %v5935 = vld [vmem:[#allocation23 + $0x58] sm:$0xff]
        %v5936 = vld [vmem:[#allocation23 + $0x60] sm:$0xff]
        %v5937 = vld [vmem:[#allocation23 + $0x68] sm:$0xff]
        %v5938 = vld [vmem:[#allocation23 + $0x70] sm:$0xff]
        %v5939 = vld [vmem:[#allocation23 + $0x78] sm:$0xff]
        %v5940 = vld [vmem:[#allocation23 + $0x80] sm:$0xff]
        %v5941 = vld [vmem:[#allocation23 + $0x88] sm:$0xff]
        %v5942 = vld [vmem:[#allocation23 + $0x90] sm:$0xff]
        %v5943 = vld [vmem:[#allocation23 + $0x98] sm:$0xff]
        %v5944 = vld [vmem:[#allocation23 + $0xa0] sm:$0xff]
        %v5945 = vld [vmem:[#allocation23 + $0xa8] sm:$0xff]
        %v5946 = vld [vmem:[#allocation23 + $0xb0] sm:$0xff]
        %v5947 = vld [vmem:[#allocation23 + $0xb8] sm:$0xff]
        %v5948 = vld [vmem:[#allocation23 + $0xc0] sm:$0xff]
        %v5949 = vld [vmem:[#allocation23 + $0xc8] sm:$0xff]
        %v5950 = vld [vmem:[#allocation23 + $0xd0] sm:$0xff]
        %v5951 = vld [vmem:[#allocation23 + $0xd8] sm:$0xff]
        %v5952 = vld [vmem:[#allocation23 + $0xe0] sm:$0xff]
        %v5953 = vld [vmem:[#allocation23 + $0xe8] sm:$0xff]
        %v5954 = vld [vmem:[#allocation23 + $0xf0] sm:$0xff]
        %v5955 = vld [vmem:[#allocation23 + $0xf8] sm:$0xff]
        %v5956 = vld [vmem:[%s17] sm:$0xf]
        %v5958 = vperm.slane %v5956, 0
        %v5959 = vperm.slane %v5956, 1
        %v5960 = vperm.slane %v5956, 2
        %v5961 = vperm.slane %v5956, 3
        %v5998 = vunpack.c.l.b16 %v5924
        %v5999 = vunpack.c.h.b16 %v5924
        %v6000 = vunpack.c.l.b16 %v5925
        %v6001 = vunpack.c.h.b16 %v5925
        %v6002 = vunpack.c.l.b16 %v5926
        %v6003 = vunpack.c.h.b16 %v5926
        %v6004 = vunpack.c.l.b16 %v5927
        %v6005 = vunpack.c.h.b16 %v5927
        %v6006 = vunpack.c.l.b16 %v5928
        %v6007 = vunpack.c.h.b16 %v5928
        %v6008 = vunpack.c.l.b16 %v5929
        %v6009 = vunpack.c.h.b16 %v5929
        %v6010 = vunpack.c.l.b16 %v5930
        %v6011 = vunpack.c.h.b16 %v5930
        %v6012 = vunpack.c.l.b16 %v5931
        %v6013 = vunpack.c.h.b16 %v5931
        %v6014 = vunpack.c.l.b16 %v5932
        %v6015 = vunpack.c.h.b16 %v5932
        %v6016 = vunpack.c.l.b16 %v5933
        %v6017 = vunpack.c.h.b16 %v5933
        %v6018 = vunpack.c.l.b16 %v5934
        %v6019 = vunpack.c.h.b16 %v5934
        %v6020 = vunpack.c.l.b16 %v5935
        %v6021 = vunpack.c.h.b16 %v5935
        %v6022 = vunpack.c.l.b16 %v5936
        %v6023 = vunpack.c.h.b16 %v5936
        %v6024 = vunpack.c.l.b16 %v5937
        %v6025 = vunpack.c.h.b16 %v5937
        %v6026 = vunpack.c.l.b16 %v5938
        %v6027 = vunpack.c.h.b16 %v5938
        %v6028 = vunpack.c.l.b16 %v5939
        %v6029 = vunpack.c.h.b16 %v5939
        %v6030 = vunpack.c.l.b16 %v5940
        %v6031 = vunpack.c.h.b16 %v5940
        %v6032 = vunpack.c.l.b16 %v5941
        %v6033 = vunpack.c.h.b16 %v5941
        %v6034 = vunpack.c.l.b16 %v5942
        %v6035 = vunpack.c.h.b16 %v5942
        %v6036 = vunpack.c.l.b16 %v5943
        %v6037 = vunpack.c.h.b16 %v5943
        %v6038 = vunpack.c.l.b16 %v5944
        %v6039 = vunpack.c.h.b16 %v5944
        %v6040 = vunpack.c.l.b16 %v5945
        %v6041 = vunpack.c.h.b16 %v5945
        %v6042 = vunpack.c.l.b16 %v5946
        %v6043 = vunpack.c.h.b16 %v5946
        %v6044 = vunpack.c.l.b16 %v5947
        %v6045 = vunpack.c.h.b16 %v5947
        %v6046 = vunpack.c.l.b16 %v5948
        %v6047 = vunpack.c.h.b16 %v5948
        %v6048 = vunpack.c.l.b16 %v5949
        %v6049 = vunpack.c.h.b16 %v5949
        %v6050 = vunpack.c.l.b16 %v5950
        %v6051 = vunpack.c.h.b16 %v5950
        %v6052 = vunpack.c.l.b16 %v5951
        %v6053 = vunpack.c.h.b16 %v5951
        %v6054 = vunpack.c.l.b16 %v5952
        %v6055 = vunpack.c.h.b16 %v5952
        %v6056 = vunpack.c.l.b16 %v5953
        %v6057 = vunpack.c.h.b16 %v5953
        %v6058 = vunpack.c.l.b16 %v5954
        %v6059 = vunpack.c.h.b16 %v5954
        %v6060 = vunpack.c.l.b16 %v5955
        %v6061 = vunpack.c.h.b16 %v5955
        %v6062 = vpack.c.b16 %v6002, %v5998
        %v6063 = vpack.c.b16 %v6003, %v5999
        %v6064 = vpack.c.b16 %v6004, %v6000
        %v6065 = vpack.c.b16 %v6005, %v6001
        %v6066 = vpack.c.b16 %v6010, %v6006
        %v6067 = vpack.c.b16 %v6011, %v6007
        %v6068 = vpack.c.b16 %v6012, %v6008
        %v6069 = vpack.c.b16 %v6013, %v6009
        %v6070 = vpack.c.b16 %v6018, %v6014
        %v6071 = vpack.c.b16 %v6019, %v6015
        %v6072 = vpack.c.b16 %v6020, %v6016
        %v6073 = vpack.c.b16 %v6021, %v6017
        %v6074 = vpack.c.b16 %v6026, %v6022
        %v6075 = vpack.c.b16 %v6027, %v6023
        %v6076 = vpack.c.b16 %v6028, %v6024
        %v6077 = vpack.c.b16 %v6029, %v6025
        %v6078 = vpack.c.b16 %v6034, %v6030
        %v6079 = vpack.c.b16 %v6035, %v6031
        %v6080 = vpack.c.b16 %v6036, %v6032
        %v6081 = vpack.c.b16 %v6037, %v6033
        %v6082 = vpack.c.b16 %v6042, %v6038
        %v6083 = vpack.c.b16 %v6043, %v6039
        %v6084 = vpack.c.b16 %v6044, %v6040
        %v6085 = vpack.c.b16 %v6045, %v6041
        %v6086 = vpack.c.b16 %v6050, %v6046
        %v6087 = vpack.c.b16 %v6051, %v6047
        %v6088 = vpack.c.b16 %v6052, %v6048
        %v6089 = vpack.c.b16 %v6053, %v6049
        %v6090 = vpack.c.b16 %v6058, %v6054
        %v6091 = vpack.c.b16 %v6059, %v6055
        %v6092 = vpack.c.b16 %v6060, %v6056
        %v6093 = vpack.c.b16 %v6061, %v6057
        %6126 = vmatpush.bf16.msra.mxu0 %v6090
        %6127 = vmatpush.bf16.msra.mxu0 %v6086
        %6128 = vmatpush.bf16.msra.mxu0 %v6082
        %6129 = vmatpush.bf16.msra.mxu0 %v6078
        %6130 = vmatpush.bf16.msra.mxu0 %v6074
        %6131 = vmatpush.bf16.msra.mxu0 %v6070
        %6132 = vmatpush.bf16.msra.mxu0 %v6066
        %6133 = vmatpush.bf16.msra.mxu0 %v6062
        %6134 = vmatmul.bf16.gmra.mxu0 %v5916
        %v6135 = vpop.f32.mrf.mxu0
        %v6136 = vadd.f32 %v5958, %v6135
        %v6137 = vpop.f32.mrf.mxu0
        %v6138 = vadd.f32 %v5958, %v6137
        %6139 = vmatmul.bf16.gmra.mxu0 %v5917
        %v6140 = vpop.f32.mrf.mxu0
        %v6141 = vadd.f32 %v5958, %v6140
        %v6142 = vpop.f32.mrf.mxu0
        %v6143 = vadd.f32 %v5958, %v6142
        %6144 = vmatmul.bf16.gmra.mxu0 %v5918
        %v6145 = vpop.f32.mrf.mxu0
        %v6146 = vadd.f32 %v5958, %v6145
        %v6147 = vpop.f32.mrf.mxu0
        %v6148 = vadd.f32 %v5958, %v6147
        %6149 = vmatmul.bf16.gmra.mxu0 %v5919
        %v6150 = vpop.f32.mrf.mxu0
        %v6151 = vadd.f32 %v5958, %v6150
        %v6152 = vpop.f32.mrf.mxu0
        %v6153 = vadd.f32 %v5958, %v6152
        %6154 = vmatmul.bf16.gmra.mxu0 %v5920
        %v6155 = vpop.f32.mrf.mxu0
        %v6156 = vadd.f32 %v5958, %v6155
        %v6157 = vpop.f32.mrf.mxu0
        %v6158 = vadd.f32 %v5958, %v6157
        %6159 = vmatmul.bf16.gmra.mxu0 %v5921
        %v6160 = vpop.f32.mrf.mxu0
        %v6161 = vadd.f32 %v5958, %v6160
        %v6162 = vpop.f32.mrf.mxu0
        %v6163 = vadd.f32 %v5958, %v6162
        %6164 = vmatmul.bf16.gmra.mxu0 %v5922
        %v6165 = vpop.f32.mrf.mxu0
        %v6166 = vadd.f32 %v5958, %v6165
        %v6167 = vpop.f32.mrf.mxu0
        %v6168 = vadd.f32 %v5958, %v6167
        %6169 = vmatmul.bf16.gmra.mxu0 %v5923
        %v6170 = vpop.f32.mrf.mxu0
        %v6171 = vadd.f32 %v5958, %v6170
        %v6172 = vpop.f32.mrf.mxu0
        %v6173 = vadd.f32 %v5958, %v6172
        %6174 = vdwg.mxu0
        %6175 = vmatpush.bf16.msra.mxu0 %v6091
        %6176 = vmatpush.bf16.msra.mxu0 %v6087
        %6177 = vmatpush.bf16.msra.mxu0 %v6083
        %6178 = vmatpush.bf16.msra.mxu0 %v6079
        %6179 = vmatpush.bf16.msra.mxu0 %v6075
        %6180 = vmatpush.bf16.msra.mxu0 %v6071
        %6181 = vmatpush.bf16.msra.mxu0 %v6067
        %6182 = vmatpush.bf16.msra.mxu0 %v6063
        %6183 = vmatmul.bf16.gmra.mxu0 %v5916
        %v6184 = vpop.f32.mrf.mxu0
        %v6185 = vadd.f32 %v5959, %v6184
        %v6186 = vpop.f32.mrf.mxu0
        %v6187 = vadd.f32 %v5959, %v6186
        %6188 = vmatmul.bf16.gmra.mxu0 %v5917
        %v6189 = vpop.f32.mrf.mxu0
        %v6190 = vadd.f32 %v5959, %v6189
        %v6191 = vpop.f32.mrf.mxu0
        %v6192 = vadd.f32 %v5959, %v6191
        %6193 = vmatmul.bf16.gmra.mxu0 %v5918
        %v6194 = vpop.f32.mrf.mxu0
        %v6195 = vadd.f32 %v5959, %v6194
        %v6196 = vpop.f32.mrf.mxu0
        %v6197 = vadd.f32 %v5959, %v6196
        %6198 = vmatmul.bf16.gmra.mxu0 %v5919
        %v6199 = vpop.f32.mrf.mxu0
        %v6200 = vadd.f32 %v5959, %v6199
        %v6201 = vpop.f32.mrf.mxu0
        %v6202 = vadd.f32 %v5959, %v6201
        %6203 = vmatmul.bf16.gmra.mxu0 %v5920
        %v6204 = vpop.f32.mrf.mxu0
        %v6205 = vadd.f32 %v5959, %v6204
        %v6206 = vpop.f32.mrf.mxu0
        %v6207 = vadd.f32 %v5959, %v6206
        %6208 = vmatmul.bf16.gmra.mxu0 %v5921
        %v6209 = vpop.f32.mrf.mxu0
        %v6210 = vadd.f32 %v5959, %v6209
        %v6211 = vpop.f32.mrf.mxu0
        %v6212 = vadd.f32 %v5959, %v6211
        %6213 = vmatmul.bf16.gmra.mxu0 %v5922
        %v6214 = vpop.f32.mrf.mxu0
        %v6215 = vadd.f32 %v5959, %v6214
        %v6216 = vpop.f32.mrf.mxu0
        %v6217 = vadd.f32 %v5959, %v6216
        %6218 = vmatmul.bf16.gmra.mxu0 %v5923
        %v6219 = vpop.f32.mrf.mxu0
        %v6220 = vadd.f32 %v5959, %v6219
        %v6221 = vpop.f32.mrf.mxu0
        %v6222 = vadd.f32 %v5959, %v6221
        %6223 = vdwg.mxu0
        %6224 = vmatpush.bf16.msra.mxu0 %v6092
        %6225 = vmatpush.bf16.msra.mxu0 %v6088
        %6226 = vmatpush.bf16.msra.mxu0 %v6084
        %6227 = vmatpush.bf16.msra.mxu0 %v6080
        %6228 = vmatpush.bf16.msra.mxu0 %v6076
        %6229 = vmatpush.bf16.msra.mxu0 %v6072
        %6230 = vmatpush.bf16.msra.mxu0 %v6068
        %6231 = vmatpush.bf16.msra.mxu0 %v6064
        %6232 = vmatmul.bf16.gmra.mxu0 %v5916
        %v6233 = vpop.f32.mrf.mxu0
        %v6234 = vadd.f32 %v5960, %v6233
        %v6235 = vpop.f32.mrf.mxu0
        %v6236 = vadd.f32 %v5960, %v6235
        %6237 = vmatmul.bf16.gmra.mxu0 %v5917
        %v6238 = vpop.f32.mrf.mxu0
        %v6239 = vadd.f32 %v5960, %v6238
        %v6240 = vpop.f32.mrf.mxu0
        %v6241 = vadd.f32 %v5960, %v6240
        %6242 = vmatmul.bf16.gmra.mxu0 %v5918
        %v6243 = vpop.f32.mrf.mxu0
        %v6244 = vadd.f32 %v5960, %v6243
        %v6245 = vpop.f32.mrf.mxu0
        %v6246 = vadd.f32 %v5960, %v6245
        %6247 = vmatmul.bf16.gmra.mxu0 %v5919
        %v6248 = vpop.f32.mrf.mxu0
        %v6249 = vadd.f32 %v5960, %v6248
        %v6250 = vpop.f32.mrf.mxu0
        %v6251 = vadd.f32 %v5960, %v6250
        %6252 = vmatmul.bf16.gmra.mxu0 %v5920
        %v6253 = vpop.f32.mrf.mxu0
        %v6254 = vadd.f32 %v5960, %v6253
        %v6255 = vpop.f32.mrf.mxu0
        %v6256 = vadd.f32 %v5960, %v6255
        %6257 = vmatmul.bf16.gmra.mxu0 %v5921
        %v6258 = vpop.f32.mrf.mxu0
        %v6259 = vadd.f32 %v5960, %v6258
        %v6260 = vpop.f32.mrf.mxu0
        %v6261 = vadd.f32 %v5960, %v6260
        %6262 = vmatmul.bf16.gmra.mxu0 %v5922
        %v6263 = vpop.f32.mrf.mxu0
        %v6264 = vadd.f32 %v5960, %v6263
        %v6265 = vpop.f32.mrf.mxu0
        %v6266 = vadd.f32 %v5960, %v6265
        %6267 = vmatmul.bf16.gmra.mxu0 %v5923
        %v6268 = vpop.f32.mrf.mxu0
        %v6269 = vadd.f32 %v5960, %v6268
        %v6270 = vpop.f32.mrf.mxu0
        %v6271 = vadd.f32 %v5960, %v6270
        %6272 = vdwg.mxu0
        %6273 = vmatpush.bf16.msra.mxu0 %v6093
        %6274 = vmatpush.bf16.msra.mxu0 %v6089
        %6275 = vmatpush.bf16.msra.mxu0 %v6085
        %6276 = vmatpush.bf16.msra.mxu0 %v6081
        %6277 = vmatpush.bf16.msra.mxu0 %v6077
        %6278 = vmatpush.bf16.msra.mxu0 %v6073
        %6279 = vmatpush.bf16.msra.mxu0 %v6069
        %6280 = vmatpush.bf16.msra.mxu0 %v6065
        %6281 = vmatmul.bf16.gmra.mxu0 %v5916
        %v6282 = vpop.f32.mrf.mxu0
        %v6283 = vadd.f32 %v5961, %v6282
        %v6284 = vpop.f32.mrf.mxu0
        %v6285 = vadd.f32 %v5961, %v6284
        %6286 = vmatmul.bf16.gmra.mxu0 %v5917
        %v6287 = vpop.f32.mrf.mxu0
        %v6288 = vadd.f32 %v5961, %v6287
        %v6289 = vpop.f32.mrf.mxu0
        %v6290 = vadd.f32 %v5961, %v6289
        %6291 = vmatmul.bf16.gmra.mxu0 %v5918
        %v6292 = vpop.f32.mrf.mxu0
        %v6293 = vadd.f32 %v5961, %v6292
        %v6294 = vpop.f32.mrf.mxu0
        %v6295 = vadd.f32 %v5961, %v6294
        %6296 = vmatmul.bf16.gmra.mxu0 %v5919
        %v6297 = vpop.f32.mrf.mxu0
        %v6298 = vadd.f32 %v5961, %v6297
        %v6299 = vpop.f32.mrf.mxu0
        %v6300 = vadd.f32 %v5961, %v6299
        %6301 = vmatmul.bf16.gmra.mxu0 %v5920
        %v6302 = vpop.f32.mrf.mxu0
        %v6303 = vadd.f32 %v5961, %v6302
        %v6304 = vpop.f32.mrf.mxu0
        %v6305 = vadd.f32 %v5961, %v6304
        %6306 = vmatmul.bf16.gmra.mxu0 %v5921
        %v6307 = vpop.f32.mrf.mxu0
        %v6308 = vadd.f32 %v5961, %v6307
        %v6309 = vpop.f32.mrf.mxu0
        %v6310 = vadd.f32 %v5961, %v6309
        %6311 = vmatmul.bf16.gmra.mxu0 %v5922
        %v6312 = vpop.f32.mrf.mxu0
        %v6313 = vadd.f32 %v5961, %v6312
        %v6314 = vpop.f32.mrf.mxu0
        %v6315 = vadd.f32 %v5961, %v6314
        %6316 = vmatmul.bf16.gmra.mxu0 %v5923
        %v6317 = vpop.f32.mrf.mxu0
        %v6318 = vadd.f32 %v5961, %v6317
        %v6319 = vpop.f32.mrf.mxu0
        %v6320 = vadd.f32 %v5961, %v6319
        %6321 = vdwg.mxu0
        %vm6322 = vcmp.gt.f32.partialorder %v6136, 0.0
        %vm6323 = vcmp.gt.f32.partialorder %v6185, 0.0
        %vm6324 = vcmp.gt.f32.partialorder %v6234, 0.0
        %vm6325 = vcmp.gt.f32.partialorder %v6283, 0.0
        %vm6326 = vcmp.gt.f32.partialorder %v6138, 0.0
        %vm6327 = vcmp.gt.f32.partialorder %v6187, 0.0
        %vm6328 = vcmp.gt.f32.partialorder %v6236, 0.0
        %vm6329 = vcmp.gt.f32.partialorder %v6285, 0.0
        %vm6330 = vcmp.gt.f32.partialorder %v6141, 0.0
        %vm6331 = vcmp.gt.f32.partialorder %v6190, 0.0
        %vm6332 = vcmp.gt.f32.partialorder %v6239, 0.0
        %vm6333 = vcmp.gt.f32.partialorder %v6288, 0.0
        %vm6334 = vcmp.gt.f32.partialorder %v6143, 0.0
        %vm6335 = vcmp.gt.f32.partialorder %v6192, 0.0
        %vm6336 = vcmp.gt.f32.partialorder %v6241, 0.0
        %vm6337 = vcmp.gt.f32.partialorder %v6290, 0.0
        %vm6338 = vcmp.gt.f32.partialorder %v6146, 0.0
        %vm6339 = vcmp.gt.f32.partialorder %v6195, 0.0
        %vm6340 = vcmp.gt.f32.partialorder %v6244, 0.0
        %vm6341 = vcmp.gt.f32.partialorder %v6293, 0.0
        %vm6342 = vcmp.gt.f32.partialorder %v6148, 0.0
        %vm6343 = vcmp.gt.f32.partialorder %v6197, 0.0
        %vm6344 = vcmp.gt.f32.partialorder %v6246, 0.0
        %vm6345 = vcmp.gt.f32.partialorder %v6295, 0.0
        %vm6346 = vcmp.gt.f32.partialorder %v6151, 0.0
        %vm6347 = vcmp.gt.f32.partialorder %v6200, 0.0
        %vm6348 = vcmp.gt.f32.partialorder %v6249, 0.0
        %vm6349 = vcmp.gt.f32.partialorder %v6298, 0.0
        %vm6350 = vcmp.gt.f32.partialorder %v6153, 0.0
        %vm6351 = vcmp.gt.f32.partialorder %v6202, 0.0
        %vm6352 = vcmp.gt.f32.partialorder %v6251, 0.0
        %vm6353 = vcmp.gt.f32.partialorder %v6300, 0.0
        %vm6354 = vcmp.gt.f32.partialorder %v6156, 0.0
        %vm6355 = vcmp.gt.f32.partialorder %v6205, 0.0
        %vm6356 = vcmp.gt.f32.partialorder %v6254, 0.0
        %vm6357 = vcmp.gt.f32.partialorder %v6303, 0.0
        %vm6358 = vcmp.gt.f32.partialorder %v6158, 0.0
        %vm6359 = vcmp.gt.f32.partialorder %v6207, 0.0
        %vm6360 = vcmp.gt.f32.partialorder %v6256, 0.0
        %vm6361 = vcmp.gt.f32.partialorder %v6305, 0.0
        %vm6362 = vcmp.gt.f32.partialorder %v6161, 0.0
        %vm6363 = vcmp.gt.f32.partialorder %v6210, 0.0
        %vm6364 = vcmp.gt.f32.partialorder %v6259, 0.0
        %vm6365 = vcmp.gt.f32.partialorder %v6308, 0.0
        %vm6366 = vcmp.gt.f32.partialorder %v6163, 0.0
        %vm6367 = vcmp.gt.f32.partialorder %v6212, 0.0
        %vm6368 = vcmp.gt.f32.partialorder %v6261, 0.0
        %vm6369 = vcmp.gt.f32.partialorder %v6310, 0.0
        %vm6370 = vcmp.gt.f32.partialorder %v6166, 0.0
        %vm6371 = vcmp.gt.f32.partialorder %v6215, 0.0
        %vm6372 = vcmp.gt.f32.partialorder %v6264, 0.0
        %vm6373 = vcmp.gt.f32.partialorder %v6313, 0.0
        %vm6374 = vcmp.gt.f32.partialorder %v6168, 0.0
        %vm6375 = vcmp.gt.f32.partialorder %v6217, 0.0
        %vm6376 = vcmp.gt.f32.partialorder %v6266, 0.0
        %vm6377 = vcmp.gt.f32.partialorder %v6315, 0.0
        %vm6378 = vcmp.gt.f32.partialorder %v6171, 0.0
        %vm6379 = vcmp.gt.f32.partialorder %v6220, 0.0
        %vm6380 = vcmp.gt.f32.partialorder %v6269, 0.0
        %vm6381 = vcmp.gt.f32.partialorder %v6318, 0.0
        %vm6382 = vcmp.gt.f32.partialorder %v6173, 0.0
        %vm6383 = vcmp.gt.f32.partialorder %v6222, 0.0
        %vm6384 = vcmp.gt.f32.partialorder %v6271, 0.0
        %vm6385 = vcmp.gt.f32.partialorder %v6320, 0.0
        %v6386 = vstv %s818
        %v6387 = vmul.f32 %v6386, %v6136
        %v6388 = vmul.f32 %v6386, %v6185
        %v6389 = vmul.f32 %v6386, %v6234
        %v6390 = vmul.f32 %v6386, %v6283
        %v6391 = vmul.f32 %v6386, %v6138
        %v6392 = vmul.f32 %v6386, %v6187
        %v6393 = vmul.f32 %v6386, %v6236
        %v6394 = vmul.f32 %v6386, %v6285
        %v6395 = vmul.f32 %v6386, %v6141
        %v6396 = vmul.f32 %v6386, %v6190
        %v6397 = vmul.f32 %v6386, %v6239
        %v6398 = vmul.f32 %v6386, %v6288
        %v6399 = vmul.f32 %v6386, %v6143
        %v6400 = vmul.f32 %v6386, %v6192
        %v6401 = vmul.f32 %v6386, %v6241
        %v6402 = vmul.f32 %v6386, %v6290
        %v6403 = vmul.f32 %v6386, %v6146
        %v6404 = vmul.f32 %v6386, %v6195
        %v6405 = vmul.f32 %v6386, %v6244
        %v6406 = vmul.f32 %v6386, %v6293
        %v6407 = vmul.f32 %v6386, %v6148
        %v6408 = vmul.f32 %v6386, %v6197
        %v6409 = vmul.f32 %v6386, %v6246
        %v6410 = vmul.f32 %v6386, %v6295
        %v6411 = vmul.f32 %v6386, %v6151
        %v6412 = vmul.f32 %v6386, %v6200
        %v6413 = vmul.f32 %v6386, %v6249
        %v6414 = vmul.f32 %v6386, %v6298
        %v6415 = vmul.f32 %v6386, %v6153
        %v6416 = vmul.f32 %v6386, %v6202
        %v6417 = vmul.f32 %v6386, %v6251
        %v6418 = vmul.f32 %v6386, %v6300
        %v6419 = vmul.f32 %v6386, %v6156
        %v6420 = vmul.f32 %v6386, %v6205
        %v6421 = vmul.f32 %v6386, %v6254
        %v6422 = vmul.f32 %v6386, %v6303
        %v6423 = vmul.f32 %v6386, %v6158
        %v6424 = vmul.f32 %v6386, %v6207
        %v6425 = vmul.f32 %v6386, %v6256
        %v6426 = vmul.f32 %v6386, %v6305
        %v6427 = vmul.f32 %v6386, %v6161
        %v6428 = vmul.f32 %v6386, %v6210
        %v6429 = vmul.f32 %v6386, %v6259
        %v6430 = vmul.f32 %v6386, %v6308
        %v6431 = vmul.f32 %v6386, %v6163
        %v6432 = vmul.f32 %v6386, %v6212
        %v6433 = vmul.f32 %v6386, %v6261
        %v6434 = vmul.f32 %v6386, %v6310
        %v6435 = vmul.f32 %v6386, %v6166
        %v6436 = vmul.f32 %v6386, %v6215
        %v6437 = vmul.f32 %v6386, %v6264
        %v6438 = vmul.f32 %v6386, %v6313
        %v6439 = vmul.f32 %v6386, %v6168
        %v6440 = vmul.f32 %v6386, %v6217
        %v6441 = vmul.f32 %v6386, %v6266
        %v6442 = vmul.f32 %v6386, %v6315
        %v6443 = vmul.f32 %v6386, %v6171
        %v6444 = vmul.f32 %v6386, %v6220
        %v6445 = vmul.f32 %v6386, %v6269
        %v6446 = vmul.f32 %v6386, %v6318
        %v6447 = vmul.f32 %v6386, %v6173
        %v6448 = vmul.f32 %v6386, %v6222
        %v6449 = vmul.f32 %v6386, %v6271
        %v6450 = vmul.f32 %v6386, %v6320
        %v6451 = vsel %vm6322, %v6136, %v6387
        %v6452 = vsel %vm6323, %v6185, %v6388
        %v6453 = vsel %vm6324, %v6234, %v6389
        %v6454 = vsel %vm6325, %v6283, %v6390
        %v6455 = vsel %vm6326, %v6138, %v6391
        %v6456 = vsel %vm6327, %v6187, %v6392
        %v6457 = vsel %vm6328, %v6236, %v6393
        %v6458 = vsel %vm6329, %v6285, %v6394
        %v6459 = vsel %vm6330, %v6141, %v6395
        %v6460 = vsel %vm6331, %v6190, %v6396
        %v6461 = vsel %vm6332, %v6239, %v6397
        %v6462 = vsel %vm6333, %v6288, %v6398
        %v6463 = vsel %vm6334, %v6143, %v6399
        %v6464 = vsel %vm6335, %v6192, %v6400
        %v6465 = vsel %vm6336, %v6241, %v6401
        %v6466 = vsel %vm6337, %v6290, %v6402
        %v6467 = vsel %vm6338, %v6146, %v6403
        %v6468 = vsel %vm6339, %v6195, %v6404
        %v6469 = vsel %vm6340, %v6244, %v6405
        %v6470 = vsel %vm6341, %v6293, %v6406
        %v6471 = vsel %vm6342, %v6148, %v6407
        %v6472 = vsel %vm6343, %v6197, %v6408
        %v6473 = vsel %vm6344, %v6246, %v6409
        %v6474 = vsel %vm6345, %v6295, %v6410
        %v6475 = vsel %vm6346, %v6151, %v6411
        %v6476 = vsel %vm6347, %v6200, %v6412
        %v6477 = vsel %vm6348, %v6249, %v6413
        %v6478 = vsel %vm6349, %v6298, %v6414
        %v6479 = vsel %vm6350, %v6153, %v6415
        %v6480 = vsel %vm6351, %v6202, %v6416
        %v6481 = vsel %vm6352, %v6251, %v6417
        %v6482 = vsel %vm6353, %v6300, %v6418
        %v6483 = vsel %vm6354, %v6156, %v6419
        %v6484 = vsel %vm6355, %v6205, %v6420
        %v6485 = vsel %vm6356, %v6254, %v6421
        %v6486 = vsel %vm6357, %v6303, %v6422
        %v6487 = vsel %vm6358, %v6158, %v6423
        %v6488 = vsel %vm6359, %v6207, %v6424
        %v6489 = vsel %vm6360, %v6256, %v6425
        %v6490 = vsel %vm6361, %v6305, %v6426
        %v6491 = vsel %vm6362, %v6161, %v6427
        %v6492 = vsel %vm6363, %v6210, %v6428
        %v6493 = vsel %vm6364, %v6259, %v6429
        %v6494 = vsel %vm6365, %v6308, %v6430
        %v6495 = vsel %vm6366, %v6163, %v6431
        %v6496 = vsel %vm6367, %v6212, %v6432
        %v6497 = vsel %vm6368, %v6261, %v6433
        %v6498 = vsel %vm6369, %v6310, %v6434
        %v6499 = vsel %vm6370, %v6166, %v6435
        %v6500 = vsel %vm6371, %v6215, %v6436
        %v6501 = vsel %vm6372, %v6264, %v6437
        %v6502 = vsel %vm6373, %v6313, %v6438
        %v6503 = vsel %vm6374, %v6168, %v6439
        %v6504 = vsel %vm6375, %v6217, %v6440
        %v6505 = vsel %vm6376, %v6266, %v6441
        %v6506 = vsel %vm6377, %v6315, %v6442
        %v6507 = vsel %vm6378, %v6171, %v6443
        %v6508 = vsel %vm6379, %v6220, %v6444
        %v6509 = vsel %vm6380, %v6269, %v6445
        %v6510 = vsel %vm6381, %v6318, %v6446
        %v6511 = vsel %vm6382, %v6173, %v6447
        %v6512 = vsel %vm6383, %v6222, %v6448
        %v6513 = vsel %vm6384, %v6271, %v6449
        %v6514 = vsel %vm6385, %v6320, %v6450
        %v6515 = vld [vmem:[#allocation24] sm:$0xf]
        %v6516 = vunpack.c.l.bf16 %v6515
        %v6518 = vperm.slane %v6516, 0
        %v6519 = vperm.slane %v6516, 2
        %v6520 = vperm.slane %v6516, 4
        %v6521 = vperm.slane %v6516, 6
        %v6526 = vperm.slane %v6518, 0
        %v6527 = vperm.slane %v6519, 0
        %v6528 = vperm.slane %v6520, 0
        %v6529 = vperm.slane %v6521, 0
        %v6530 = vmul.f32 %v6451, %v6526
        %v6531 = vmul.f32 %v6452, %v6527
        %v6532 = vmul.f32 %v6453, %v6528
        %v6533 = vmul.f32 %v6454, %v6529
        %v6534 = vmul.f32 %v6455, %v6526
        %v6535 = vmul.f32 %v6456, %v6527
        %v6536 = vmul.f32 %v6457, %v6528
        %v6537 = vmul.f32 %v6458, %v6529
        %v6538 = vmul.f32 %v6459, %v6526
        %v6539 = vmul.f32 %v6460, %v6527
        %v6540 = vmul.f32 %v6461, %v6528
        %v6541 = vmul.f32 %v6462, %v6529
        %v6542 = vmul.f32 %v6463, %v6526
        %v6543 = vmul.f32 %v6464, %v6527
        %v6544 = vmul.f32 %v6465, %v6528
        %v6545 = vmul.f32 %v6466, %v6529
        %v6546 = vmul.f32 %v6467, %v6526
        %v6547 = vmul.f32 %v6468, %v6527
        %v6548 = vmul.f32 %v6469, %v6528
        %v6549 = vmul.f32 %v6470, %v6529
        %v6550 = vmul.f32 %v6471, %v6526
        %v6551 = vmul.f32 %v6472, %v6527
        %v6552 = vmul.f32 %v6473, %v6528
        %v6553 = vmul.f32 %v6474, %v6529
        %v6554 = vmul.f32 %v6475, %v6526
        %v6555 = vmul.f32 %v6476, %v6527
        %v6556 = vmul.f32 %v6477, %v6528
        %v6557 = vmul.f32 %v6478, %v6529
        %v6558 = vmul.f32 %v6479, %v6526
        %v6559 = vmul.f32 %v6480, %v6527
        %v6560 = vmul.f32 %v6481, %v6528
        %v6561 = vmul.f32 %v6482, %v6529
        %v6562 = vmul.f32 %v6483, %v6526
        %v6563 = vmul.f32 %v6484, %v6527
        %v6564 = vmul.f32 %v6485, %v6528
        %v6565 = vmul.f32 %v6486, %v6529
        %v6566 = vmul.f32 %v6487, %v6526
        %v6567 = vmul.f32 %v6488, %v6527
        %v6568 = vmul.f32 %v6489, %v6528
        %v6569 = vmul.f32 %v6490, %v6529
        %v6570 = vmul.f32 %v6491, %v6526
        %v6571 = vmul.f32 %v6492, %v6527
        %v6572 = vmul.f32 %v6493, %v6528
        %v6573 = vmul.f32 %v6494, %v6529
        %v6574 = vmul.f32 %v6495, %v6526
        %v6575 = vmul.f32 %v6496, %v6527
        %v6576 = vmul.f32 %v6497, %v6528
        %v6577 = vmul.f32 %v6498, %v6529
        %v6578 = vmul.f32 %v6499, %v6526
        %v6579 = vmul.f32 %v6500, %v6527
        %v6580 = vmul.f32 %v6501, %v6528
        %v6581 = vmul.f32 %v6502, %v6529
        %v6582 = vmul.f32 %v6503, %v6526
        %v6583 = vmul.f32 %v6504, %v6527
        %v6584 = vmul.f32 %v6505, %v6528
        %v6585 = vmul.f32 %v6506, %v6529
        %v6586 = vmul.f32 %v6507, %v6526
        %v6587 = vmul.f32 %v6508, %v6527
        %v6588 = vmul.f32 %v6509, %v6528
        %v6589 = vmul.f32 %v6510, %v6529
        %v6590 = vmul.f32 %v6511, %v6526
        %v6591 = vmul.f32 %v6512, %v6527
        %v6592 = vmul.f32 %v6513, %v6528
        %v6593 = vmul.f32 %v6514, %v6529
        %v6594 = vadd.f32 %v6530, %v6531
        %v6595 = vadd.f32 %v6594, %v6532
        %v6596 = vadd.f32 %v6595, %v6533
        %6597 = vadd.xlane.f32.xlu0 %v6596
        %v6598 = vpop.xlane.xlu0 %6597
        %v6599 = vadd.f32 %v6534, %v6535
        %v6600 = vadd.f32 %v6599, %v6536
        %v6601 = vadd.f32 %v6600, %v6537
        %6602 = vadd.xlane.f32.xlu0 %v6601
        %v6603 = vpop.xlane.xlu0 %6602
        %v6604 = vadd.f32 %v6538, %v6539
        %v6605 = vadd.f32 %v6604, %v6540
        %v6606 = vadd.f32 %v6605, %v6541
        %6607 = vadd.xlane.f32.xlu0 %v6606
        %v6608 = vpop.xlane.xlu0 %6607
        %v6609 = vadd.f32 %v6542, %v6543
        %v6610 = vadd.f32 %v6609, %v6544
        %v6611 = vadd.f32 %v6610, %v6545
        %6612 = vadd.xlane.f32.xlu0 %v6611
        %v6613 = vpop.xlane.xlu0 %6612
        %v6614 = vadd.f32 %v6546, %v6547
        %v6615 = vadd.f32 %v6614, %v6548
        %v6616 = vadd.f32 %v6615, %v6549
        %6617 = vadd.xlane.f32.xlu0 %v6616
        %v6618 = vpop.xlane.xlu0 %6617
        %v6619 = vadd.f32 %v6550, %v6551
        %v6620 = vadd.f32 %v6619, %v6552
        %v6621 = vadd.f32 %v6620, %v6553
        %6622 = vadd.xlane.f32.xlu0 %v6621
        %v6623 = vpop.xlane.xlu0 %6622
        %v6624 = vadd.f32 %v6554, %v6555
        %v6625 = vadd.f32 %v6624, %v6556
        %v6626 = vadd.f32 %v6625, %v6557
        %6627 = vadd.xlane.f32.xlu0 %v6626
        %v6628 = vpop.xlane.xlu0 %6627
        %v6629 = vadd.f32 %v6558, %v6559
        %v6630 = vadd.f32 %v6629, %v6560
        %v6631 = vadd.f32 %v6630, %v6561
        %6632 = vadd.xlane.f32.xlu0 %v6631
        %v6633 = vpop.xlane.xlu0 %6632
        %v6634 = vadd.f32 %v6562, %v6563
        %v6635 = vadd.f32 %v6634, %v6564
        %v6636 = vadd.f32 %v6635, %v6565
        %6637 = vadd.xlane.f32.xlu0 %v6636
        %v6638 = vpop.xlane.xlu0 %6637
        %v6639 = vadd.f32 %v6566, %v6567
        %v6640 = vadd.f32 %v6639, %v6568
        %v6641 = vadd.f32 %v6640, %v6569
        %6642 = vadd.xlane.f32.xlu0 %v6641
        %v6643 = vpop.xlane.xlu0 %6642
        %v6644 = vadd.f32 %v6570, %v6571
        %v6645 = vadd.f32 %v6644, %v6572
        %v6646 = vadd.f32 %v6645, %v6573
        %6647 = vadd.xlane.f32.xlu0 %v6646
        %v6648 = vpop.xlane.xlu0 %6647
        %v6649 = vadd.f32 %v6574, %v6575
        %v6650 = vadd.f32 %v6649, %v6576
        %v6651 = vadd.f32 %v6650, %v6577
        %6652 = vadd.xlane.f32.xlu0 %v6651
        %v6653 = vpop.xlane.xlu0 %6652
        %v6654 = vadd.f32 %v6578, %v6579
        %v6655 = vadd.f32 %v6654, %v6580
        %v6656 = vadd.f32 %v6655, %v6581
        %6657 = vadd.xlane.f32.xlu0 %v6656
        %v6658 = vpop.xlane.xlu0 %6657
        %v6659 = vadd.f32 %v6582, %v6583
        %v6660 = vadd.f32 %v6659, %v6584
        %v6661 = vadd.f32 %v6660, %v6585
        %6662 = vadd.xlane.f32.xlu0 %v6661
        %v6663 = vpop.xlane.xlu0 %6662
        %v6664 = vadd.f32 %v6586, %v6587
        %v6665 = vadd.f32 %v6664, %v6588
        %v6666 = vadd.f32 %v6665, %v6589
        %6667 = vadd.xlane.f32.xlu0 %v6666
        %v6668 = vpop.xlane.xlu0 %6667
        %v6669 = vadd.f32 %v6590, %v6591
        %v6670 = vadd.f32 %v6669, %v6592
        %v6671 = vadd.f32 %v6670, %v6593
        %6672 = vadd.xlane.f32.xlu0 %v6671
        %v6673 = vpop.xlane.xlu0 %6672
        %v6674 = vstv %s819
        %v6675 = vadd.f32 %v6598, %v6674
        %v6676 = vadd.f32 %v6603, %v6674
        %v6677 = vadd.f32 %v6608, %v6674
        %v6678 = vadd.f32 %v6613, %v6674
        %v6679 = vadd.f32 %v6618, %v6674
        %v6680 = vadd.f32 %v6623, %v6674
        %v6681 = vadd.f32 %v6628, %v6674
        %v6682 = vadd.f32 %v6633, %v6674
        %v6683 = vadd.f32 %v6638, %v6674
        %v6684 = vadd.f32 %v6643, %v6674
        %v6685 = vadd.f32 %v6648, %v6674
        %v6686 = vadd.f32 %v6653, %v6674
        %v6687 = vadd.f32 %v6658, %v6674
        %v6688 = vadd.f32 %v6663, %v6674
        %v6689 = vadd.f32 %v6668, %v6674
        %v6690 = vadd.f32 %v6673, %v6674
        %vm6691 = vcmask 7168
        %6692 = vst.msk [vmem:[%s812] sm:$0xff] %vm6691, %v6675
        %6693 = vst.msk [vmem:[%s812 + $0x8] sm:$0xff] %vm6691, %v6676
        %6694 = vst.msk [vmem:[%s812 + $0x10] sm:$0xff] %vm6691, %v6677
        %6695 = vst.msk [vmem:[%s812 + $0x18] sm:$0xff] %vm6691, %v6678
        %6696 = vst.msk [vmem:[%s812 + $0x20] sm:$0xff] %vm6691, %v6679
        %6697 = vst.msk [vmem:[%s812 + $0x28] sm:$0xff] %vm6691, %v6680
        %6698 = vst.msk [vmem:[%s812 + $0x30] sm:$0xff] %vm6691, %v6681
        %6699 = vst.msk [vmem:[%s812 + $0x38] sm:$0xff] %vm6691, %v6682
        %6700 = vst.msk [vmem:[%s812 + $0x40] sm:$0xff] %vm6691, %v6683
        %6701 = vst.msk [vmem:[%s812 + $0x48] sm:$0xff] %vm6691, %v6684
        %6702 = vst.msk [vmem:[%s812 + $0x50] sm:$0xff] %vm6691, %v6685
        %6703 = vst.msk [vmem:[%s812 + $0x58] sm:$0xff] %vm6691, %v6686
        %6704 = vst.msk [vmem:[%s812 + $0x60] sm:$0xff] %vm6691, %v6687
        %6705 = vst.msk [vmem:[%s812 + $0x68] sm:$0xff] %vm6691, %v6688
        %6706 = vst.msk [vmem:[%s812 + $0x70] sm:$0xff] %vm6691, %v6689
        %6707 = vst.msk [vmem:[%s812 + $0x78] sm:$0xff] %vm6691, %v6690
        %s6708 = smul.u32 16, %s48
        %p6709 = scmp.lt.s32.totalorder %s6708, 31
        %s6710 = scalar_select %p6709, %s6708, 31
        %s6711 = smul.addr %s6710, 8
        %s6712 = scalar_lea.vmem %s19, %s6711
        // Predicated region
        $region149: #{tpu_custom_call.1} parent=91 // pred_check
          %p6713 = pneg %p449
        $region150: #{tpu_custom_call.1} parent=91 // pred_check_branch
          %6715 = sbr.rel (%p6713) target = $region152
        $region151: #{tpu_custom_call.1} parent=91 // pred_region
          %s6716 = smul.u32 16, %s48
        $region152: #{tpu_custom_call.1} parent=91 // pred_fallthru
          _
      $region92: #{tpu_custom_call.1} parent=5 // pred_fallthru
        _
      %p6717 = scmp.le.s32.totalorder 2, %s43
      // Predicated region
      $region153: #{tpu_custom_call.1} parent=5 // pred_check
        %p6718 = pneg %p6717
      $region154: #{tpu_custom_call.1} parent=5 // pred_check_branch
        %6720 = sbr.rel (%p6718) target = $region156
      $region155: #{tpu_custom_call.1} parent=5 // pred_region
        %s6721 = ssub.s32 %s43, 2
        // Predicated region
        $region157: #{tpu_custom_call.1} parent=155 // pred_check
          %p6722 = pneg %p455
        $region158: #{tpu_custom_call.1} parent=155 // pred_check_branch
          %6724 = sbr.rel (%p6722) target = $region160
        $region159: #{tpu_custom_call.1} parent=155 // pred_region
          %s6725 = smul.u32 16, %s49
          %p6726 = scmp.lt.s32.totalorder %s6725, 31
          %s6727 = scalar_select %p6726, %s6725, 31
          %s6728 = smul.addr %s6727, 8
          %s6729 = scalar_lea.vmem %s19, %s6728
        $region160: #{tpu_custom_call.1} parent=155 // pred_fallthru
          _
      $region156: #{tpu_custom_call.1} parent=5 // pred_fallthru
        _
    $region6: #{tpu_custom_call.1} parent=1 // loop_footer
      %s47 = sadd.s32 1, %s43
    $region7: #{tpu_custom_call.1} parent=1 // loop_footer_branch
      %42 = sbr.rel target = $region3
    $region8: #{tpu_custom_call.1} parent=1 // loop_exit
      _
    %6730 = vsyncpa [#allocation5], 1
    %s6731 = scalar_lea.sflag [#allocation5], 1
    %6732 = vsyncpa %s6731, 1
    %6733 = vsyncpa [#allocation7], 1
    %6734 = vsyncpa [#allocation10], 1
    %6735 = vsyncpa [#allocation13], 1
    %6736 = vsyncpa [#allocation16], 1
    %6737 = vsyncpa [#allocation19], 1
    %6738 = vsyncpa [#allocation22], 1
    %6739 = vsyncpa [#allocation25], 1

</llo_original>
